<compile_context>
chip_gen: v7x
topology: tpu7x:2x2x1
jax: 0.10.0
libtpu: 0.0.40
codegen_flags: <defaults>
</compile_context>

<pallas_src>
import jax
import jax.numpy as jnp
from jax.experimental import pallas as pl
from jax.experimental.pallas import tpu as pltpu

D_IN, D_IN_PAD = 784, 896        # 896 = 7 * 128 (lane-aligned K for layer-1 matmul)
H1, H2, H3 = 1024, 512, 256
D_OUT, D_OUT_PAD = 1, 128        # lane-dense output slab (unmasked vst)
B_CAT = H1 + H2 + H3 + D_OUT_PAD # 1920 = 15 * 128, concatenated bias vector


def discriminator_kernel(x_ref, w1_ref, w2_ref, w3_ref, w4_ref, b_ref, o_ref):
    # Biases live in one lane-aligned (1, 1920) f32 slab; 128-aligned static slices.
    b1 = b_ref[:, 0:H1]
    b2 = b_ref[:, H1:H1 + H2]
    b3 = b_ref[:, H1 + H2:H1 + H2 + H3]
    b4 = b_ref[:, H1 + H2 + H3:B_CAT]

    # Layer 1: Linear(784->1024) + ReLU.  Dropout(0.3) = identity in eval mode.
    # TODO(synk): training-mode Dropout(0.3) (pltpu.prng_random_bits mask + 1/(1-p) scale) not emitted.
    h = jnp.dot(x_ref[...], w1_ref[...], preferred_element_type=jnp.float32) + b1
    h = jnp.maximum(h, 0.0).astype(jnp.bfloat16)

    # Layer 2: Linear(1024->512) + ReLU
    h = jnp.dot(h, w2_ref[...], preferred_element_type=jnp.float32) + b2
    h = jnp.maximum(h, 0.0).astype(jnp.bfloat16)

    # Layer 3: Linear(512->256) + ReLU
    h = jnp.dot(h, w3_ref[...], preferred_element_type=jnp.float32) + b3
    h = jnp.maximum(h, 0.0).astype(jnp.bfloat16)

    # Layer 4: Linear(256->1) padded to 128 output lanes + Sigmoid (column 0 is the real output).
    logits = jnp.dot(h, w4_ref[...], preferred_element_type=jnp.float32) + b4
    o_ref[...] = jax.nn.sigmoid(logits).astype(o_ref.dtype)


def prepare_params(params):
    """bf16 weights (MXU-native), zero-pad layer-1 K to 896 and layer-4 N to 128,
    concatenate all biases into one lane-aligned f32 vector."""
    w1 = jnp.zeros((D_IN_PAD, H1), jnp.bfloat16).at[:D_IN].set(params["w1"].astype(jnp.bfloat16))
    w2 = params["w2"].astype(jnp.bfloat16)
    w3 = params["w3"].astype(jnp.bfloat16)
    w4 = jnp.zeros((H3, D_OUT_PAD), jnp.bfloat16).at[:, :D_OUT].set(params["w4"].astype(jnp.bfloat16))
    b4 = jnp.zeros((1, D_OUT_PAD), jnp.float32).at[:, :D_OUT].set(params["b4"].astype(jnp.float32))
    b = jnp.concatenate(
        [params["b1"].astype(jnp.float32),
         params["b2"].astype(jnp.float32),
         params["b3"].astype(jnp.float32),
         b4], axis=1)
    return w1, w2, w3, w4, b


def discriminator_forward(x, params, *, tile_b=128):
    """x: (B, 784) float32. params: dict of w1..w4 (in, out) and b1..b4 (1, out).
    tile_b: batch tile (128 is fine everywhere; use 256 for large training batches on v6e/v7x)."""
    B = x.shape[0]
    n_tiles = pl.cdiv(B, tile_b)
    b_pad = n_tiles * tile_b

    # Zero-pad batch to the tile and features to 896 (zero columns contribute nothing).
    x_p = jnp.zeros((b_pad, D_IN_PAD), jnp.bfloat16).at[:B, :D_IN].set(x.astype(jnp.bfloat16))
    w1, w2, w3, w4, b = prepare_params(params)

    flops = 2 * b_pad * (D_IN_PAD * H1 + H1 * H2 + H2 * H3 + H3 * D_OUT_PAD)
    bytes_accessed = (x_p.size * 2
                      + (w1.size + w2.size + w3.size + w4.size) * 2
                      + b.size * 4
                      + b_pad * D_OUT_PAD * 4)

    out = pl.pallas_call(
        discriminator_kernel,
        out_shape=jax.ShapeDtypeStruct((b_pad, D_OUT_PAD), jnp.float32),
        grid=(n_tiles,),
        in_specs=[
            pl.BlockSpec((tile_b, D_IN_PAD), lambda i: (i, 0)),   # x: tiled over batch
            pl.BlockSpec((D_IN_PAD, H1), lambda i: (0, 0)),       # weights: VMEM-resident
            pl.BlockSpec((H1, H2), lambda i: (0, 0)),
            pl.BlockSpec((H2, H3), lambda i: (0, 0)),
            pl.BlockSpec((H3, D_OUT_PAD), lambda i: (0, 0)),
            pl.BlockSpec((1, B_CAT), lambda i: (0, 0)),           # concatenated biases
        ],
        out_specs=pl.BlockSpec((tile_b, D_OUT_PAD), lambda i: (i, 0)),
        compiler_params=pltpu.CompilerParams(
            dimension_semantics=("parallel",),   # shard batch tiles across TCs (v7x megacore)
            vmem_limit_bytes=24 << 20,           # headroom on v7x's 64 MiB physical VMEM
        ),
        cost_estimate=pl.CostEstimate(
            flops=flops,
            transcendentals=b_pad * D_OUT_PAD,
            bytes_accessed=bytes_accessed,
        ),
    )(x_p, w1, w2, w3, w4, b)

    return out[:B, :D_OUT]


def init_params(key):
    """Deterministic init matching PyTorch Linear shapes (weights stored transposed: (in, out))."""
    dims = [(D_IN, H1), (H1, H2), (H2, H3), (H3, D_OUT)]
    params = {}
    for i, (fan_in, fan_out) in enumerate(dims, start=1):
        key, kw, kb = jax.random.split(key, 3)
        bound = 1.0 / jnp.sqrt(fan_in)  # PyTorch default uniform bound
        params[f"w{i}"] = jax.random.uniform(kw, (fan_in, fan_out), jnp.float32, -bound, bound)
        params[f"b{i}"] = jax.random.uniform(kb, (1, fan_out), jnp.float32, -bound, bound)
    return params


def _ref_bf16(x, p):
    """Pure-JAX reference emulating the kernel's precision (bf16 inputs, f32 accumulate)."""
    h = x.astype(jnp.bfloat16)
    h = jnp.maximum(jnp.dot(h, p["w1"].astype(jnp.bfloat16),
                            preferred_element_type=jnp.float32) + p["b1"], 0.0).astype(jnp.bfloat16)
    h = jnp.maximum(jnp.dot(h, p["w2"].astype(jnp.bfloat16),
                            preferred_element_type=jnp.float32) + p["b2"], 0.0).astype(jnp.bfloat16)
    h = jnp.maximum(jnp.dot(h, p["w3"].astype(jnp.bfloat16),
                            preferred_element_type=jnp.float32) + p["b3"], 0.0).astype(jnp.bfloat16)
    return jax.nn.sigmoid(jnp.dot(h, p["w4"].astype(jnp.bfloat16),
                                  preferred_element_type=jnp.float32) + p["b4"])


def _ref_f32(x, p):
    h = jnp.maximum(x @ p["w1"] + p["b1"], 0.0)
    h = jnp.maximum(h @ p["w2"] + p["b2"], 0.0)
    h = jnp.maximum(h @ p["w3"] + p["b3"], 0.0)
    return jax.nn.sigmoid(h @ p["w4"] + p["b4"])


if __name__ == "__main__":
    key = jax.random.PRNGKey(0)
    kx, kp = jax.random.split(key)

    B = 8
    x = jax.random.normal(kx, (B, D_IN), dtype=jnp.float32)
    params = init_params(kp)

    out = discriminator_forward(x, params)
    out = jax.block_until_ready(out)

    ref_b = _ref_bf16(x, params)   # same precision as the kernel
    ref_f = _ref_f32(x, params)    # full f32 reference (eval-mode dropout = identity)

    assert out.shape == (B, 1)
    assert jnp.allclose(out, ref_b, atol=5e-3, rtol=1e-2), "mismatch vs bf16-emulating reference"
    assert jnp.allclose(out, ref_f, atol=5e-2, rtol=5e-2), "mismatch vs f32 reference"
    print("KERNEL_OK")
</pallas_src>

<mosaic_0001>
module attributes {stable_mosaic.version = 11 : i64} {
  func.func @discriminator_kernel(%arg0: i32, %arg1: memref<128x896xbf16, #tpu.memory_space<vmem>>, %arg2: memref<896x1024xbf16, #tpu.memory_space<vmem>>, %arg3: memref<1024x512xbf16, #tpu.memory_space<vmem>>, %arg4: memref<512x256xbf16, #tpu.memory_space<vmem>>, %arg5: memref<256x128xbf16, #tpu.memory_space<vmem>>, %arg6: memref<1x1920xf32, #tpu.memory_space<vmem>>, %arg7: memref<128x128xf32, #tpu.memory_space<vmem>>) attributes {dimension_semantics = [#tpu.dimension_semantics<parallel>], iteration_bounds = array<i64: 1>, scalar_prefetch = 0 : i64, scratch_operands = 0 : i64, tpu.core_type = #tpu.core_type<tc>, window_params = [{transform_indices = @transform_0, window_bounds = array<i64: 128, 896>}, {pipeline_mode = #tpu.pipeline_mode<synchronous>, transform_indices = @transform_1, window_bounds = array<i64: 896, 1024>}, {pipeline_mode = #tpu.pipeline_mode<synchronous>, transform_indices = @transform_2, window_bounds = array<i64: 1024, 512>}, {pipeline_mode = #tpu.pipeline_mode<synchronous>, transform_indices = @transform_3, window_bounds = array<i64: 512, 256>}, {pipeline_mode = #tpu.pipeline_mode<synchronous>, transform_indices = @transform_4, window_bounds = array<i64: 256, 128>}, {pipeline_mode = #tpu.pipeline_mode<synchronous>, transform_indices = @transform_5, window_bounds = array<i64: 1, 1920>}, {transform_indices = @transform_6, window_bounds = array<i64: 128, 128>}]} {
    %c0 = arith.constant 0 : index
    %c0_0 = arith.constant 0 : index
    %0 = vector.load %arg6[%c0, %c0_0] : memref<1x1920xf32, #tpu.memory_space<vmem>>, vector<1x1024xf32>
    %c0_1 = arith.constant 0 : index
    %c1024 = arith.constant 1024 : index
    %1 = vector.load %arg6[%c0_1, %c1024] : memref<1x1920xf32, #tpu.memory_space<vmem>>, vector<1x512xf32>
    %c0_2 = arith.constant 0 : index
    %c1536 = arith.constant 1536 : index
    %2 = vector.load %arg6[%c0_2, %c1536] : memref<1x1920xf32, #tpu.memory_space<vmem>>, vector<1x256xf32>
    %c0_3 = arith.constant 0 : index
    %c1792 = arith.constant 1792 : index
    %3 = vector.load %arg6[%c0_3, %c1792] : memref<1x1920xf32, #tpu.memory_space<vmem>>, vector<1x128xf32>
    %c0_4 = arith.constant 0 : index
    %c0_5 = arith.constant 0 : index
    %4 = vector.load %arg1[%c0_4, %c0_5] : memref<128x896xbf16, #tpu.memory_space<vmem>>, vector<128x896xbf16>
    %c0_6 = arith.constant 0 : index
    %c0_7 = arith.constant 0 : index
    %5 = vector.load %arg2[%c0_6, %c0_7] : memref<896x1024xbf16, #tpu.memory_space<vmem>>, vector<896x1024xbf16>
    %cst = arith.constant dense<0.000000e+00> : vector<128x1024xf32>
    %6 = tpu.matmul %4, %5, %cst {dimension_numbers = #tpu.dot_dimension_numbers<[1], [0], [0], [1], [0, 0, 1, 1], [], []>} : vector<128x896xbf16>, vector<896x1024xbf16>, vector<128x1024xf32> -> vector<128x1024xf32>
    %7 = vector.broadcast %0 : vector<1x1024xf32> to vector<128x1024xf32>
    %8 = arith.addf %6, %7 : vector<128x1024xf32>
    %cst_8 = arith.constant 0.000000e+00 : f32
    %9 = vector.broadcast %cst_8 : f32 to vector<128x1024xf32>
    %10 = arith.maximumf %8, %9 : vector<128x1024xf32>
    %11 = arith.truncf %10 : vector<128x1024xf32> to vector<128x1024xbf16>
    %c0_9 = arith.constant 0 : index
    %c0_10 = arith.constant 0 : index
    %12 = vector.load %arg3[%c0_9, %c0_10] : memref<1024x512xbf16, #tpu.memory_space<vmem>>, vector<1024x512xbf16>
    %cst_11 = arith.constant dense<0.000000e+00> : vector<128x512xf32>
    %13 = tpu.matmul %11, %12, %cst_11 {dimension_numbers = #tpu.dot_dimension_numbers<[1], [0], [0], [1], [0, 0, 1, 1], [], []>} : vector<128x1024xbf16>, vector<1024x512xbf16>, vector<128x512xf32> -> vector<128x512xf32>
    %14 = vector.broadcast %1 : vector<1x512xf32> to vector<128x512xf32>
    %15 = arith.addf %13, %14 : vector<128x512xf32>
    %cst_12 = arith.constant 0.000000e+00 : f32
    %16 = vector.broadcast %cst_12 : f32 to vector<128x512xf32>
    %17 = arith.maximumf %15, %16 : vector<128x512xf32>
    %18 = arith.truncf %17 : vector<128x512xf32> to vector<128x512xbf16>
    %c0_13 = arith.constant 0 : index
    %c0_14 = arith.constant 0 : index
    %19 = vector.load %arg4[%c0_13, %c0_14] : memref<512x256xbf16, #tpu.memory_space<vmem>>, vector<512x256xbf16>
    %cst_15 = arith.constant dense<0.000000e+00> : vector<128x256xf32>
    %20 = tpu.matmul %18, %19, %cst_15 {dimension_numbers = #tpu.dot_dimension_numbers<[1], [0], [0], [1], [0, 0, 1, 1], [], []>} : vector<128x512xbf16>, vector<512x256xbf16>, vector<128x256xf32> -> vector<128x256xf32>
    %21 = vector.broadcast %2 : vector<1x256xf32> to vector<128x256xf32>
    %22 = arith.addf %20, %21 : vector<128x256xf32>
    %cst_16 = arith.constant 0.000000e+00 : f32
    %23 = vector.broadcast %cst_16 : f32 to vector<128x256xf32>
    %24 = arith.maximumf %22, %23 : vector<128x256xf32>
    %25 = arith.truncf %24 : vector<128x256xf32> to vector<128x256xbf16>
    %c0_17 = arith.constant 0 : index
    %c0_18 = arith.constant 0 : index
    %26 = vector.load %arg5[%c0_17, %c0_18] : memref<256x128xbf16, #tpu.memory_space<vmem>>, vector<256x128xbf16>
    %cst_19 = arith.constant dense<0.000000e+00> : vector<128x128xf32>
    %27 = tpu.matmul %25, %26, %cst_19 {dimension_numbers = #tpu.dot_dimension_numbers<[1], [0], [0], [1], [0, 0, 1, 1], [], []>} : vector<128x256xbf16>, vector<256x128xbf16>, vector<128x128xf32> -> vector<128x128xf32>
    %28 = vector.broadcast %3 : vector<1x128xf32> to vector<128x128xf32>
    %29 = arith.addf %27, %28 : vector<128x128xf32>
    %30 = arith.negf %29 : vector<128x128xf32>
    %31 = math.exp %30 : vector<128x128xf32>
    %cst_20 = arith.constant 1.000000e+00 : f32
    %32 = vector.broadcast %cst_20 : f32 to vector<128x128xf32>
    %33 = arith.addf %32, %31 : vector<128x128xf32>
    %34 = arith.divf %32, %33 : vector<128x128xf32>
    %c0_21 = arith.constant 0 : index
    %c0_22 = arith.constant 0 : index
    %35 = vector.load %arg7[%c0_21, %c0_22] : memref<128x128xf32, #tpu.memory_space<vmem>>, vector<128x128xf32>
    tpu.vector_store %arg7[%c0_21, %c0_22], %34 {strides = array<i32>} : memref<128x128xf32, #tpu.memory_space<vmem>>, vector<128x128xf32>,
    return
  }
  func.func @transform_0(%arg0: i32) -> (i32, i32) {
    %c0_i32 = arith.constant 0 : i32
    %c0_i32_0 = arith.constant 0 : i32
    return %arg0, %c0_i32 : i32, i32
  }
  func.func @transform_1(%arg0: i32) -> (i32, i32) {
    %c0_i32 = arith.constant 0 : i32
    %c0_i32_0 = arith.constant 0 : i32
    %c0_i32_1 = arith.constant 0 : i32
    return %c0_i32, %c0_i32_0 : i32, i32
  }
  func.func @transform_2(%arg0: i32) -> (i32, i32) {
    %c0_i32 = arith.constant 0 : i32
    %c0_i32_0 = arith.constant 0 : i32
    %c0_i32_1 = arith.constant 0 : i32
    return %c0_i32, %c0_i32_0 : i32, i32
  }
  func.func @transform_3(%arg0: i32) -> (i32, i32) {
    %c0_i32 = arith.constant 0 : i32
    %c0_i32_0 = arith.constant 0 : i32
    %c0_i32_1 = arith.constant 0 : i32
    return %c0_i32, %c0_i32_0 : i32, i32
  }
  func.func @transform_4(%arg0: i32) -> (i32, i32) {
    %c0_i32 = arith.constant 0 : i32
    %c0_i32_0 = arith.constant 0 : i32
    %c0_i32_1 = arith.constant 0 : i32
    return %c0_i32, %c0_i32_0 : i32, i32
  }
  func.func @transform_5(%arg0: i32) -> (i32, i32) {
    %c0_i32 = arith.constant 0 : i32
    %c0_i32_0 = arith.constant 0 : i32
    %c0_i32_1 = arith.constant 0 : i32
    return %c0_i32, %c0_i32_0 : i32, i32
  }
  func.func @transform_6(%arg0: i32) -> (i32, i32) {
    %c0_i32 = arith.constant 0 : i32
    %c0_i32_0 = arith.constant 0 : i32
    return %arg0, %c0_i32 : i32, i32
  }
}

</mosaic_0001>

<llo_original>
// kernel: tpu_custom_call.1
$region0: #{tpu_custom_call.1}
  #allocation0 [shape = 'u32[]', space=smem, size = 0x4, offset = 0x4, fixed_abs, tag = 'smem constant byte address 0x4 - core index']
  #allocation1 [shape = 'u32[144,128]{1,0:T(1,128)}', space=vmem, size = 0x12000, scoped, tag = 'internal scratch']
  %s0 = inlined_call_operand.hbm [shape: bf16[128,896], index: 0, kind: input, shape index: {}]
  %s1 = inlined_call_operand.hbm [shape: bf16[896,1024], index: 1, kind: input, shape index: {}]
  %s2 = inlined_call_operand.hbm [shape: bf16[1024,512], index: 2, kind: input, shape index: {}]
  %s3 = inlined_call_operand.hbm [shape: bf16[512,256], index: 3, kind: input, shape index: {}]
  %s4 = inlined_call_operand.hbm [shape: bf16[256,128], index: 4, kind: input, shape index: {}]
  %s5 = inlined_call_operand.hbm [shape: f32[1,1920], index: 5, kind: input, shape index: {}]
  %s6 = inlined_call_operand.hbm [shape: f32[128,128], index: 6, kind: output, shape index: {}]
  %s7 = sld [smem:[#allocation0]]
  $region58: #{tpu_custom_call.1} parent=0
    _
  %s9 = ssub.s32 1, %s7
  %s10 = scalar_select 0, %s9, %s7
  $region1: #{tpu_custom_call.1} parent=0
    #allocation2 [shape = 'u8[229376]{0}', space=vmem, size = 0x38000, scoped, tag = 'input window, operand 0, single buffered']
    #allocation3 [shape = 's32[1]{0}', space=sflag, size = 0x4, scoped, tag = 'scoped memory for tpu_custom_call.1']
    #allocation4 [shape = 's32[1]{0}', space=sflag, size = 0x4, scoped, tag = 'scoped memory for tpu_custom_call.1']
    #allocation5 [shape = 'u8[1835008]{0}', space=vmem, size = 0x1c0000, scoped, tag = 'input window, operand 1, single buffered']
    #allocation6 [shape = 's32[1]{0}', space=sflag, size = 0x4, scoped, tag = 'scoped memory for tpu_custom_call.1']
    #allocation7 [shape = 'u8[1048576]{0}', space=vmem, size = 0x100000, scoped, tag = 'input window, operand 2, single buffered']
    #allocation8 [shape = 'u8[262144]{0}', space=vmem, size = 0x40000, scoped, tag = 'input window, operand 3, single buffered']
    #allocation9 [shape = 's32[1]{0}', space=sflag, size = 0x4, scoped, tag = 'scoped memory for tpu_custom_call.1']
    #allocation10 [shape = 'u8[65536]{0}', space=vmem, size = 0x10000, scoped, tag = 'input window, operand 4, single buffered']
    #allocation11 [shape = 'u8[7680]{0}', space=vmem, size = 0x2000, scoped, tag = 'input window, operand 5, single buffered']
    #allocation12 [shape = 's32[1]{0}', space=sflag, size = 0x4, scoped, tag = 'scoped memory for tpu_custom_call.1']
    #allocation13 [shape = 'u8[65536]{0}', space=vmem, size = 0x10000, scoped, tag = 'output window, operand 0, single buffered']
    %11 = vsyncpa [#allocation3], 0
    %12 = vsyncpa [#allocation6], 0
    %13 = vsyncpa [#allocation9], 0
    %14 = vsyncpa [#allocation12], 0
    %15 = vsyncpa [#allocation4], 0
    // Predicated region
    $region2: #{tpu_custom_call.1} parent=1 // pred_check
      _
    $region3: #{tpu_custom_call.1} parent=1 // pred_check_branch
      %17 = sbr.rel (0) target = $region5
    $region4: #{tpu_custom_call.1} parent=1 // pred_region
      %s19 = ssub.s32 7168, 7168
      %20 = vsyncadd [#allocation3], %s19
      %s21 = sshll.u32 [#allocation2], 4
      %s22 = int_to_ptr.vmem [resolvable:$true] %s21
      %27 = dma.hbm_to_vmem [thread:$0]  %s0, 7168, %s22, [#allocation3], 448, 448, 28
    $region5: #{tpu_custom_call.1} parent=1 // pred_fallthru
      _
    // Predicated region
    $region6: #{tpu_custom_call.1} parent=1 // pred_check
      _
    $region7: #{tpu_custom_call.1} parent=1 // pred_check_branch
      %29 = sbr.rel (0) target = $region9
    $region8: #{tpu_custom_call.1} parent=1 // pred_region
      %s31 = ssub.s32 57344, 57344
      %32 = vsyncadd [#allocation6], %s31
      %s33 = sshll.u32 [#allocation5], 4
      %s34 = int_to_ptr.vmem [resolvable:$true] %s33
      %39 = dma.hbm_to_vmem [thread:$0]  %s1, 57344, %s34, [#allocation6], 512, 512, 32
    $region9: #{tpu_custom_call.1} parent=1 // pred_fallthru
      _
    // Predicated region
    $region10: #{tpu_custom_call.1} parent=1 // pred_check
      _
    $region11: #{tpu_custom_call.1} parent=1 // pred_check_branch
      %41 = sbr.rel (0) target = $region13
    $region12: #{tpu_custom_call.1} parent=1 // pred_region
      %s43 = ssub.s32 32768, 32768
      %44 = vsyncadd [#allocation6], %s43
      %s45 = sshll.u32 [#allocation7], 4
      %s46 = int_to_ptr.vmem [resolvable:$true] %s45
      %51 = dma.hbm_to_vmem [thread:$0]  %s2, 32768, %s46, [#allocation6], 256, 256, 16
    $region13: #{tpu_custom_call.1} parent=1 // pred_fallthru
      _
    // Predicated region
    $region14: #{tpu_custom_call.1} parent=1 // pred_check
      _
    $region15: #{tpu_custom_call.1} parent=1 // pred_check_branch
      %53 = sbr.rel (0) target = $region17
    $region16: #{tpu_custom_call.1} parent=1 // pred_region
      %s55 = ssub.s32 8192, 8192
      %56 = vsyncadd [#allocation9], %s55
      %s57 = sshll.u32 [#allocation8], 4
      %s58 = int_to_ptr.vmem [resolvable:$true] %s57
      %63 = dma.hbm_to_vmem [thread:$0]  %s3, 8192, %s58, [#allocation9], 128, 128, 8
    $region17: #{tpu_custom_call.1} parent=1 // pred_fallthru
      _
    // Predicated region
    $region18: #{tpu_custom_call.1} parent=1 // pred_check
      _
    $region19: #{tpu_custom_call.1} parent=1 // pred_check_branch
      %65 = sbr.rel (0) target = $region21
    $region20: #{tpu_custom_call.1} parent=1 // pred_region
      %s67 = ssub.s32 2048, 2048
      %68 = vsyncadd [#allocation9], %s67
      %s69 = sshll.u32 [#allocation10], 4
      %s70 = int_to_ptr.vmem [resolvable:$true] %s69
      %75 = dma.hbm_to_vmem [thread:$0]  %s4, 2048, %s70, [#allocation9], 64, 64, 4
    $region21: #{tpu_custom_call.1} parent=1 // pred_fallthru
      _
    // Predicated region
    $region22: #{tpu_custom_call.1} parent=1 // pred_check
      _
    $region23: #{tpu_custom_call.1} parent=1 // pred_check_branch
      %77 = sbr.rel (0) target = $region25
    $region24: #{tpu_custom_call.1} parent=1 // pred_region
      %s79 = ssub.s32 240, 240
      %80 = vsyncadd [#allocation12], %s79
      %s82 = sshll.u32 [#allocation11], 4
      %s83 = int_to_ptr.vmem [resolvable:$true] %s82
      %85 = dma.hbm_to_vmem [thread:$0]  %s5, 240, %s83, [#allocation12]
    $region25: #{tpu_custom_call.1} parent=1 // pred_fallthru
      _
    // Predicated region
    $region26: #{tpu_custom_call.1} parent=1 // pred_check
      _
    $region27: #{tpu_custom_call.1} parent=1 // pred_check_branch
      %87 = sbr.rel (0) target = $region29
    $region28: #{tpu_custom_call.1} parent=1 // pred_region
      %88 = dma.done [#allocation3], 7168
    $region29: #{tpu_custom_call.1} parent=1 // pred_fallthru
      _
    // Predicated region
    $region30: #{tpu_custom_call.1} parent=1 // pred_check
      _
    $region31: #{tpu_custom_call.1} parent=1 // pred_check_branch
      %90 = sbr.rel (0) target = $region33
    $region32: #{tpu_custom_call.1} parent=1 // pred_region
      %91 = dma.done [#allocation6], 57344
    $region33: #{tpu_custom_call.1} parent=1 // pred_fallthru
      _
    // Predicated region
    $region34: #{tpu_custom_call.1} parent=1 // pred_check
      _
    $region35: #{tpu_custom_call.1} parent=1 // pred_check_branch
      %93 = sbr.rel (0) target = $region37
    $region36: #{tpu_custom_call.1} parent=1 // pred_region
      %94 = dma.done [#allocation6], 32768
    $region37: #{tpu_custom_call.1} parent=1 // pred_fallthru
      _
    // Predicated region
    $region38: #{tpu_custom_call.1} parent=1 // pred_check
      _
    $region39: #{tpu_custom_call.1} parent=1 // pred_check_branch
      %96 = sbr.rel (0) target = $region41
    $region40: #{tpu_custom_call.1} parent=1 // pred_region
      %97 = dma.done [#allocation9], 8192
    $region41: #{tpu_custom_call.1} parent=1 // pred_fallthru
      _
    // Predicated region
    $region42: #{tpu_custom_call.1} parent=1 // pred_check
      _
    $region43: #{tpu_custom_call.1} parent=1 // pred_check_branch
      %99 = sbr.rel (0) target = $region45
    $region44: #{tpu_custom_call.1} parent=1 // pred_region
      %100 = dma.done [#allocation9], 2048
    $region45: #{tpu_custom_call.1} parent=1 // pred_fallthru
      _
    // Predicated region
    $region46: #{tpu_custom_call.1} parent=1 // pred_check
      _
    $region47: #{tpu_custom_call.1} parent=1 // pred_check_branch
      %102 = sbr.rel (0) target = $region49
    $region48: #{tpu_custom_call.1} parent=1 // pred_region
      %103 = dma.done [#allocation12], 240
    $region49: #{tpu_custom_call.1} parent=1 // pred_fallthru
      _
    %v105 = vld [vmem:[#allocation11] sm:$0xff]
    %v106 = vld [vmem:[#allocation11 + $0x8] sm:$0xf]
    %v107 = vld [vmem:[#allocation11 + $0xc] sm:$0x3]
    %v108 = vld [vmem:[#allocation11 + $0xe] sm:$0x1]
    %v109 = vld [vmem:[#allocation2] sm:$0xff]
    %v110 = vld [vmem:[#allocation2 + $0x8] sm:$0xff]
    %v111 = vld [vmem:[#allocation2 + $0x10] sm:$0xff]
    %v112 = vld [vmem:[#allocation2 + $0x18] sm:$0xf]
    %v113 = vld [vmem:[#allocation2 + $0x1c] sm:$0xff]
    %v114 = vld [vmem:[#allocation2 + $0x24] sm:$0xff]
    %v115 = vld [vmem:[#allocation2 + $0x2c] sm:$0xff]
    %v116 = vld [vmem:[#allocation2 + $0x34] sm:$0xf]
    %v117 = vld [vmem:[#allocation2 + $0x38] sm:$0xff]
    %v118 = vld [vmem:[#allocation2 + $0x40] sm:$0xff]
    %v119 = vld [vmem:[#allocation2 + $0x48] sm:$0xff]
    %v120 = vld [vmem:[#allocation2 + $0x50] sm:$0xf]
    %v121 = vld [vmem:[#allocation2 + $0x54] sm:$0xff]
    %v122 = vld [vmem:[#allocation2 + $0x5c] sm:$0xff]
    %v123 = vld [vmem:[#allocation2 + $0x64] sm:$0xff]
    %v124 = vld [vmem:[#allocation2 + $0x6c] sm:$0xf]
    %v125 = vld [vmem:[#allocation2 + $0x70] sm:$0xff]
    %v126 = vld [vmem:[#allocation2 + $0x78] sm:$0xff]
    %v127 = vld [vmem:[#allocation2 + $0x80] sm:$0xff]
    %v128 = vld [vmem:[#allocation2 + $0x88] sm:$0xf]
    %v129 = vld [vmem:[#allocation2 + $0x8c] sm:$0xff]
    %v130 = vld [vmem:[#allocation2 + $0x94] sm:$0xff]
    %v131 = vld [vmem:[#allocation2 + $0x9c] sm:$0xff]
    %v132 = vld [vmem:[#allocation2 + $0xa4] sm:$0xf]
    %v133 = vld [vmem:[#allocation2 + $0xa8] sm:$0xff]
    %v134 = vld [vmem:[#allocation2 + $0xb0] sm:$0xff]
    %v135 = vld [vmem:[#allocation2 + $0xb8] sm:$0xff]
    %v136 = vld [vmem:[#allocation2 + $0xc0] sm:$0xf]
    %v137 = vld [vmem:[#allocation2 + $0xc4] sm:$0xff]
    %v138 = vld [vmem:[#allocation2 + $0xcc] sm:$0xff]
    %v139 = vld [vmem:[#allocation2 + $0xd4] sm:$0xff]
    %v140 = vld [vmem:[#allocation2 + $0xdc] sm:$0xf]
    %v141 = vld [vmem:[#allocation2 + $0xe0] sm:$0xff]
    %v142 = vld [vmem:[#allocation2 + $0xe8] sm:$0xff]
    %v143 = vld [vmem:[#allocation2 + $0xf0] sm:$0xff]
    %v144 = vld [vmem:[#allocation2 + $0xf8] sm:$0xf]
    %v145 = vld [vmem:[#allocation2 + $0xfc] sm:$0xff]
    %v146 = vld [vmem:[#allocation2 + $0x104] sm:$0xff]
    %v147 = vld [vmem:[#allocation2 + $0x10c] sm:$0xff]
    %v148 = vld [vmem:[#allocation2 + $0x114] sm:$0xf]
    %v149 = vld [vmem:[#allocation2 + $0x118] sm:$0xff]
    %v150 = vld [vmem:[#allocation2 + $0x120] sm:$0xff]
    %v151 = vld [vmem:[#allocation2 + $0x128] sm:$0xff]
    %v152 = vld [vmem:[#allocation2 + $0x130] sm:$0xf]
    %v153 = vld [vmem:[#allocation2 + $0x134] sm:$0xff]
    %v154 = vld [vmem:[#allocation2 + $0x13c] sm:$0xff]
    %v155 = vld [vmem:[#allocation2 + $0x144] sm:$0xff]
    %v156 = vld [vmem:[#allocation2 + $0x14c] sm:$0xf]
    %v157 = vld [vmem:[#allocation2 + $0x150] sm:$0xff]
    %v158 = vld [vmem:[#allocation2 + $0x158] sm:$0xff]
    %v159 = vld [vmem:[#allocation2 + $0x160] sm:$0xff]
    %v160 = vld [vmem:[#allocation2 + $0x168] sm:$0xf]
    %v161 = vld [vmem:[#allocation2 + $0x16c] sm:$0xff]
    %v162 = vld [vmem:[#allocation2 + $0x174] sm:$0xff]
    %v163 = vld [vmem:[#allocation2 + $0x17c] sm:$0xff]
    %v164 = vld [vmem:[#allocation2 + $0x184] sm:$0xf]
    %v165 = vld [vmem:[#allocation2 + $0x188] sm:$0xff]
    %v166 = vld [vmem:[#allocation2 + $0x190] sm:$0xff]
    %v167 = vld [vmem:[#allocation2 + $0x198] sm:$0xff]
    %v168 = vld [vmem:[#allocation2 + $0x1a0] sm:$0xf]
    %v169 = vld [vmem:[#allocation2 + $0x1a4] sm:$0xff]
    %v170 = vld [vmem:[#allocation2 + $0x1ac] sm:$0xff]
    %v171 = vld [vmem:[#allocation2 + $0x1b4] sm:$0xff]
    %v172 = vld [vmem:[#allocation2 + $0x1bc] sm:$0xf]
    %v173 = vld [vmem:[#allocation5] sm:$0xff]
    %v174 = vld [vmem:[#allocation5 + $0x8] sm:$0xff]
    %v175 = vld [vmem:[#allocation5 + $0x10] sm:$0xff]
    %v176 = vld [vmem:[#allocation5 + $0x18] sm:$0xff]
    %v177 = vld [vmem:[#allocation5 + $0x20] sm:$0xff]
    %v178 = vld [vmem:[#allocation5 + $0x28] sm:$0xff]
    %v179 = vld [vmem:[#allocation5 + $0x30] sm:$0xff]
    %v180 = vld [vmem:[#allocation5 + $0x38] sm:$0xff]
    %v181 = vld [vmem:[#allocation5 + $0x40] sm:$0xff]
    %v182 = vld [vmem:[#allocation5 + $0x48] sm:$0xff]
    %v183 = vld [vmem:[#allocation5 + $0x50] sm:$0xff]
    %v184 = vld [vmem:[#allocation5 + $0x58] sm:$0xff]
    %v185 = vld [vmem:[#allocation5 + $0x60] sm:$0xff]
    %v186 = vld [vmem:[#allocation5 + $0x68] sm:$0xff]
    %v187 = vld [vmem:[#allocation5 + $0x70] sm:$0xff]
    %v188 = vld [vmem:[#allocation5 + $0x78] sm:$0xff]
    %v189 = vld [vmem:[#allocation5 + $0x80] sm:$0xff]
    %v190 = vld [vmem:[#allocation5 + $0x88] sm:$0xff]
    %v191 = vld [vmem:[#allocation5 + $0x90] sm:$0xff]
    %v192 = vld [vmem:[#allocation5 + $0x98] sm:$0xff]
    %v193 = vld [vmem:[#allocation5 + $0xa0] sm:$0xff]
    %v194 = vld [vmem:[#allocation5 + $0xa8] sm:$0xff]
    %v195 = vld [vmem:[#allocation5 + $0xb0] sm:$0xff]
    %v196 = vld [vmem:[#allocation5 + $0xb8] sm:$0xff]
    %v197 = vld [vmem:[#allocation5 + $0xc0] sm:$0xff]
    %v198 = vld [vmem:[#allocation5 + $0xc8] sm:$0xff]
    %v199 = vld [vmem:[#allocation5 + $0xd0] sm:$0xff]
    %v200 = vld [vmem:[#allocation5 + $0xd8] sm:$0xff]
    %v201 = vld [vmem:[#allocation5 + $0xe0] sm:$0xff]
    %v202 = vld [vmem:[#allocation5 + $0xe8] sm:$0xff]
    %v203 = vld [vmem:[#allocation5 + $0xf0] sm:$0xff]
    %v204 = vld [vmem:[#allocation5 + $0xf8] sm:$0xff]
    %v205 = vld [vmem:[#allocation5 + $0x100] sm:$0xff]
    %v206 = vld [vmem:[#allocation5 + $0x108] sm:$0xff]
    %v207 = vld [vmem:[#allocation5 + $0x110] sm:$0xff]
    %v208 = vld [vmem:[#allocation5 + $0x118] sm:$0xff]
    %v209 = vld [vmem:[#allocation5 + $0x120] sm:$0xff]
    %v210 = vld [vmem:[#allocation5 + $0x128] sm:$0xff]
    %v211 = vld [vmem:[#allocation5 + $0x130] sm:$0xff]
    %v212 = vld [vmem:[#allocation5 + $0x138] sm:$0xff]
    %v213 = vld [vmem:[#allocation5 + $0x140] sm:$0xff]
    %v214 = vld [vmem:[#allocation5 + $0x148] sm:$0xff]
    %v215 = vld [vmem:[#allocation5 + $0x150] sm:$0xff]
    %v216 = vld [vmem:[#allocation5 + $0x158] sm:$0xff]
    %v217 = vld [vmem:[#allocation5 + $0x160] sm:$0xff]
    %v218 = vld [vmem:[#allocation5 + $0x168] sm:$0xff]
    %v219 = vld [vmem:[#allocation5 + $0x170] sm:$0xff]
    %v220 = vld [vmem:[#allocation5 + $0x178] sm:$0xff]
    %v221 = vld [vmem:[#allocation5 + $0x180] sm:$0xff]
    %v222 = vld [vmem:[#allocation5 + $0x188] sm:$0xff]
    %v223 = vld [vmem:[#allocation5 + $0x190] sm:$0xff]
    %v224 = vld [vmem:[#allocation5 + $0x198] sm:$0xff]
    %v225 = vld [vmem:[#allocation5 + $0x1a0] sm:$0xff]
    %v226 = vld [vmem:[#allocation5 + $0x1a8] sm:$0xff]
    %v227 = vld [vmem:[#allocation5 + $0x1b0] sm:$0xff]
    %v228 = vld [vmem:[#allocation5 + $0x1b8] sm:$0xff]
    %v229 = vld [vmem:[#allocation5 + $0x1c0] sm:$0xff]
    %v230 = vld [vmem:[#allocation5 + $0x1c8] sm:$0xff]
    %v231 = vld [vmem:[#allocation5 + $0x1d0] sm:$0xff]
    %v232 = vld [vmem:[#allocation5 + $0x1d8] sm:$0xff]
    %v233 = vld [vmem:[#allocation5 + $0x1e0] sm:$0xff]
    %v234 = vld [vmem:[#allocation5 + $0x1e8] sm:$0xff]
    %v235 = vld [vmem:[#allocation5 + $0x1f0] sm:$0xff]
    %v236 = vld [vmem:[#allocation5 + $0x1f8] sm:$0xff]
    %v237 = vld [vmem:[#allocation5 + $0x200] sm:$0xff]
    %v238 = vld [vmem:[#allocation5 + $0x208] sm:$0xff]
    %v239 = vld [vmem:[#allocation5 + $0x210] sm:$0xff]
    %v240 = vld [vmem:[#allocation5 + $0x218] sm:$0xff]
    %v241 = vld [vmem:[#allocation5 + $0x220] sm:$0xff]
    %v242 = vld [vmem:[#allocation5 + $0x228] sm:$0xff]
    %v243 = vld [vmem:[#allocation5 + $0x230] sm:$0xff]
    %v244 = vld [vmem:[#allocation5 + $0x238] sm:$0xff]
    %v245 = vld [vmem:[#allocation5 + $0x240] sm:$0xff]
    %v246 = vld [vmem:[#allocation5 + $0x248] sm:$0xff]
    %v247 = vld [vmem:[#allocation5 + $0x250] sm:$0xff]
    %v248 = vld [vmem:[#allocation5 + $0x258] sm:$0xff]
    %v249 = vld [vmem:[#allocation5 + $0x260] sm:$0xff]
    %v250 = vld [vmem:[#allocation5 + $0x268] sm:$0xff]
    %v251 = vld [vmem:[#allocation5 + $0x270] sm:$0xff]
    %v252 = vld [vmem:[#allocation5 + $0x278] sm:$0xff]
    %v253 = vld [vmem:[#allocation5 + $0x280] sm:$0xff]
    %v254 = vld [vmem:[#allocation5 + $0x288] sm:$0xff]
    %v255 = vld [vmem:[#allocation5 + $0x290] sm:$0xff]
    %v256 = vld [vmem:[#allocation5 + $0x298] sm:$0xff]
    %v257 = vld [vmem:[#allocation5 + $0x2a0] sm:$0xff]
    %v258 = vld [vmem:[#allocation5 + $0x2a8] sm:$0xff]
    %v259 = vld [vmem:[#allocation5 + $0x2b0] sm:$0xff]
    %v260 = vld [vmem:[#allocation5 + $0x2b8] sm:$0xff]
    %v261 = vld [vmem:[#allocation5 + $0x2c0] sm:$0xff]
    %v262 = vld [vmem:[#allocation5 + $0x2c8] sm:$0xff]
    %v263 = vld [vmem:[#allocation5 + $0x2d0] sm:$0xff]
    %v264 = vld [vmem:[#allocation5 + $0x2d8] sm:$0xff]
    %v265 = vld [vmem:[#allocation5 + $0x2e0] sm:$0xff]
    %v266 = vld [vmem:[#allocation5 + $0x2e8] sm:$0xff]
    %v267 = vld [vmem:[#allocation5 + $0x2f0] sm:$0xff]
    %v268 = vld [vmem:[#allocation5 + $0x2f8] sm:$0xff]
    %v269 = vld [vmem:[#allocation5 + $0x300] sm:$0xff]
    %v270 = vld [vmem:[#allocation5 + $0x308] sm:$0xff]
    %v271 = vld [vmem:[#allocation5 + $0x310] sm:$0xff]
    %v272 = vld [vmem:[#allocation5 + $0x318] sm:$0xff]
    %v273 = vld [vmem:[#allocation5 + $0x320] sm:$0xff]
    %v274 = vld [vmem:[#allocation5 + $0x328] sm:$0xff]
    %v275 = vld [vmem:[#allocation5 + $0x330] sm:$0xff]
    %v276 = vld [vmem:[#allocation5 + $0x338] sm:$0xff]
    %v277 = vld [vmem:[#allocation5 + $0x340] sm:$0xff]
    %v278 = vld [vmem:[#allocation5 + $0x348] sm:$0xff]
    %v279 = vld [vmem:[#allocation5 + $0x350] sm:$0xff]
    %v280 = vld [vmem:[#allocation5 + $0x358] sm:$0xff]
    %v281 = vld [vmem:[#allocation5 + $0x360] sm:$0xff]
    %v282 = vld [vmem:[#allocation5 + $0x368] sm:$0xff]
    %v283 = vld [vmem:[#allocation5 + $0x370] sm:$0xff]
    %v284 = vld [vmem:[#allocation5 + $0x378] sm:$0xff]
    %v285 = vld [vmem:[#allocation5 + $0x380] sm:$0xff]
    %v286 = vld [vmem:[#allocation5 + $0x388] sm:$0xff]
    %v287 = vld [vmem:[#allocation5 + $0x390] sm:$0xff]
    %v288 = vld [vmem:[#allocation5 + $0x398] sm:$0xff]
    %v289 = vld [vmem:[#allocation5 + $0x3a0] sm:$0xff]
    %v290 = vld [vmem:[#allocation5 + $0x3a8] sm:$0xff]
    %v291 = vld [vmem:[#allocation5 + $0x3b0] sm:$0xff]
    %v292 = vld [vmem:[#allocation5 + $0x3b8] sm:$0xff]
    %v293 = vld [vmem:[#allocation5 + $0x3c0] sm:$0xff]
    %v294 = vld [vmem:[#allocation5 + $0x3c8] sm:$0xff]
    %v295 = vld [vmem:[#allocation5 + $0x3d0] sm:$0xff]
    %v296 = vld [vmem:[#allocation5 + $0x3d8] sm:$0xff]
    %v297 = vld [vmem:[#allocation5 + $0x3e0] sm:$0xff]
    %v298 = vld [vmem:[#allocation5 + $0x3e8] sm:$0xff]
    %v299 = vld [vmem:[#allocation5 + $0x3f0] sm:$0xff]
    %v300 = vld [vmem:[#allocation5 + $0x3f8] sm:$0xff]
    %v301 = vld [vmem:[#allocation5 + $0x400] sm:$0xff]
    %v302 = vld [vmem:[#allocation5 + $0x408] sm:$0xff]
    %v303 = vld [vmem:[#allocation5 + $0x410] sm:$0xff]
    %v304 = vld [vmem:[#allocation5 + $0x418] sm:$0xff]
    %v305 = vld [vmem:[#allocation5 + $0x420] sm:$0xff]
    %v306 = vld [vmem:[#allocation5 + $0x428] sm:$0xff]
    %v307 = vld [vmem:[#allocation5 + $0x430] sm:$0xff]
    %v308 = vld [vmem:[#allocation5 + $0x438] sm:$0xff]
    %v309 = vld [vmem:[#allocation5 + $0x440] sm:$0xff]
    %v310 = vld [vmem:[#allocation5 + $0x448] sm:$0xff]
    %v311 = vld [vmem:[#allocation5 + $0x450] sm:$0xff]
    %v312 = vld [vmem:[#allocation5 + $0x458] sm:$0xff]
    %v313 = vld [vmem:[#allocation5 + $0x460] sm:$0xff]
    %v314 = vld [vmem:[#allocation5 + $0x468] sm:$0xff]
    %v315 = vld [vmem:[#allocation5 + $0x470] sm:$0xff]
    %v316 = vld [vmem:[#allocation5 + $0x478] sm:$0xff]
    %v317 = vld [vmem:[#allocation5 + $0x480] sm:$0xff]
    %v318 = vld [vmem:[#allocation5 + $0x488] sm:$0xff]
    %v319 = vld [vmem:[#allocation5 + $0x490] sm:$0xff]
    %v320 = vld [vmem:[#allocation5 + $0x498] sm:$0xff]
    %v321 = vld [vmem:[#allocation5 + $0x4a0] sm:$0xff]
    %v322 = vld [vmem:[#allocation5 + $0x4a8] sm:$0xff]
    %v323 = vld [vmem:[#allocation5 + $0x4b0] sm:$0xff]
    %v324 = vld [vmem:[#allocation5 + $0x4b8] sm:$0xff]
    %v325 = vld [vmem:[#allocation5 + $0x4c0] sm:$0xff]
    %v326 = vld [vmem:[#allocation5 + $0x4c8] sm:$0xff]
    %v327 = vld [vmem:[#allocation5 + $0x4d0] sm:$0xff]
    %v328 = vld [vmem:[#allocation5 + $0x4d8] sm:$0xff]
    %v329 = vld [vmem:[#allocation5 + $0x4e0] sm:$0xff]
    %v330 = vld [vmem:[#allocation5 + $0x4e8] sm:$0xff]
    %v331 = vld [vmem:[#allocation5 + $0x4f0] sm:$0xff]
    %v332 = vld [vmem:[#allocation5 + $0x4f8] sm:$0xff]
    %v333 = vld [vmem:[#allocation5 + $0x500] sm:$0xff]
    %v334 = vld [vmem:[#allocation5 + $0x508] sm:$0xff]
    %v335 = vld [vmem:[#allocation5 + $0x510] sm:$0xff]
    %v336 = vld [vmem:[#allocation5 + $0x518] sm:$0xff]
    %v337 = vld [vmem:[#allocation5 + $0x520] sm:$0xff]
    %v338 = vld [vmem:[#allocation5 + $0x528] sm:$0xff]
    %v339 = vld [vmem:[#allocation5 + $0x530] sm:$0xff]
    %v340 = vld [vmem:[#allocation5 + $0x538] sm:$0xff]
    %v341 = vld [vmem:[#allocation5 + $0x540] sm:$0xff]
    %v342 = vld [vmem:[#allocation5 + $0x548] sm:$0xff]
    %v343 = vld [vmem:[#allocation5 + $0x550] sm:$0xff]
    %v344 = vld [vmem:[#allocation5 + $0x558] sm:$0xff]
    %v345 = vld [vmem:[#allocation5 + $0x560] sm:$0xff]
    %v346 = vld [vmem:[#allocation5 + $0x568] sm:$0xff]
    %v347 = vld [vmem:[#allocation5 + $0x570] sm:$0xff]
    %v348 = vld [vmem:[#allocation5 + $0x578] sm:$0xff]
    %v349 = vld [vmem:[#allocation5 + $0x580] sm:$0xff]
    %v350 = vld [vmem:[#allocation5 + $0x588] sm:$0xff]
    %v351 = vld [vmem:[#allocation5 + $0x590] sm:$0xff]
    %v352 = vld [vmem:[#allocation5 + $0x598] sm:$0xff]
    %v353 = vld [vmem:[#allocation5 + $0x5a0] sm:$0xff]
    %v354 = vld [vmem:[#allocation5 + $0x5a8] sm:$0xff]
    %v355 = vld [vmem:[#allocation5 + $0x5b0] sm:$0xff]
    %v356 = vld [vmem:[#allocation5 + $0x5b8] sm:$0xff]
    %v357 = vld [vmem:[#allocation5 + $0x5c0] sm:$0xff]
    %v358 = vld [vmem:[#allocation5 + $0x5c8] sm:$0xff]
    %v359 = vld [vmem:[#allocation5 + $0x5d0] sm:$0xff]
    %v360 = vld [vmem:[#allocation5 + $0x5d8] sm:$0xff]
    %v361 = vld [vmem:[#allocation5 + $0x5e0] sm:$0xff]
    %v362 = vld [vmem:[#allocation5 + $0x5e8] sm:$0xff]
    %v363 = vld [vmem:[#allocation5 + $0x5f0] sm:$0xff]
    %v364 = vld [vmem:[#allocation5 + $0x5f8] sm:$0xff]
    %v365 = vld [vmem:[#allocation5 + $0x600] sm:$0xff]
    %v366 = vld [vmem:[#allocation5 + $0x608] sm:$0xff]
    %v367 = vld [vmem:[#allocation5 + $0x610] sm:$0xff]
    %v368 = vld [vmem:[#allocation5 + $0x618] sm:$0xff]
    %v369 = vld [vmem:[#allocation5 + $0x620] sm:$0xff]
    %v370 = vld [vmem:[#allocation5 + $0x628] sm:$0xff]
    %v371 = vld [vmem:[#allocation5 + $0x630] sm:$0xff]
    %v372 = vld [vmem:[#allocation5 + $0x638] sm:$0xff]
    %v373 = vld [vmem:[#allocation5 + $0x640] sm:$0xff]
    %v374 = vld [vmem:[#allocation5 + $0x648] sm:$0xff]
    %v375 = vld [vmem:[#allocation5 + $0x650] sm:$0xff]
    %v376 = vld [vmem:[#allocation5 + $0x658] sm:$0xff]
    %v377 = vld [vmem:[#allocation5 + $0x660] sm:$0xff]
    %v378 = vld [vmem:[#allocation5 + $0x668] sm:$0xff]
    %v379 = vld [vmem:[#allocation5 + $0x670] sm:$0xff]
    %v380 = vld [vmem:[#allocation5 + $0x678] sm:$0xff]
    %v381 = vld [vmem:[#allocation5 + $0x680] sm:$0xff]
    %v382 = vld [vmem:[#allocation5 + $0x688] sm:$0xff]
    %v383 = vld [vmem:[#allocation5 + $0x690] sm:$0xff]
    %v384 = vld [vmem:[#allocation5 + $0x698] sm:$0xff]
    %v385 = vld [vmem:[#allocation5 + $0x6a0] sm:$0xff]
    %v386 = vld [vmem:[#allocation5 + $0x6a8] sm:$0xff]
    %v387 = vld [vmem:[#allocation5 + $0x6b0] sm:$0xff]
    %v388 = vld [vmem:[#allocation5 + $0x6b8] sm:$0xff]
    %v389 = vld [vmem:[#allocation5 + $0x6c0] sm:$0xff]
    %v390 = vld [vmem:[#allocation5 + $0x6c8] sm:$0xff]
    %v391 = vld [vmem:[#allocation5 + $0x6d0] sm:$0xff]
    %v392 = vld [vmem:[#allocation5 + $0x6d8] sm:$0xff]
    %v393 = vld [vmem:[#allocation5 + $0x6e0] sm:$0xff]
    %v394 = vld [vmem:[#allocation5 + $0x6e8] sm:$0xff]
    %v395 = vld [vmem:[#allocation5 + $0x6f0] sm:$0xff]
    %v396 = vld [vmem:[#allocation5 + $0x6f8] sm:$0xff]
    %v397 = vld [vmem:[#allocation5 + $0x700] sm:$0xff]
    %v398 = vld [vmem:[#allocation5 + $0x708] sm:$0xff]
    %v399 = vld [vmem:[#allocation5 + $0x710] sm:$0xff]
    %v400 = vld [vmem:[#allocation5 + $0x718] sm:$0xff]
    %v401 = vld [vmem:[#allocation5 + $0x720] sm:$0xff]
    %v402 = vld [vmem:[#allocation5 + $0x728] sm:$0xff]
    %v403 = vld [vmem:[#allocation5 + $0x730] sm:$0xff]
    %v404 = vld [vmem:[#allocation5 + $0x738] sm:$0xff]
    %v405 = vld [vmem:[#allocation5 + $0x740] sm:$0xff]
    %v406 = vld [vmem:[#allocation5 + $0x748] sm:$0xff]
    %v407 = vld [vmem:[#allocation5 + $0x750] sm:$0xff]
    %v408 = vld [vmem:[#allocation5 + $0x758] sm:$0xff]
    %v409 = vld [vmem:[#allocation5 + $0x760] sm:$0xff]
    %v410 = vld [vmem:[#allocation5 + $0x768] sm:$0xff]
    %v411 = vld [vmem:[#allocation5 + $0x770] sm:$0xff]
    %v412 = vld [vmem:[#allocation5 + $0x778] sm:$0xff]
    %v413 = vld [vmem:[#allocation5 + $0x780] sm:$0xff]
    %v414 = vld [vmem:[#allocation5 + $0x788] sm:$0xff]
    %v415 = vld [vmem:[#allocation5 + $0x790] sm:$0xff]
    %v416 = vld [vmem:[#allocation5 + $0x798] sm:$0xff]
    %v417 = vld [vmem:[#allocation5 + $0x7a0] sm:$0xff]
    %v418 = vld [vmem:[#allocation5 + $0x7a8] sm:$0xff]
    %v419 = vld [vmem:[#allocation5 + $0x7b0] sm:$0xff]
    %v420 = vld [vmem:[#allocation5 + $0x7b8] sm:$0xff]
    %v421 = vld [vmem:[#allocation5 + $0x7c0] sm:$0xff]
    %v422 = vld [vmem:[#allocation5 + $0x7c8] sm:$0xff]
    %v423 = vld [vmem:[#allocation5 + $0x7d0] sm:$0xff]
    %v424 = vld [vmem:[#allocation5 + $0x7d8] sm:$0xff]
    %v425 = vld [vmem:[#allocation5 + $0x7e0] sm:$0xff]
    %v426 = vld [vmem:[#allocation5 + $0x7e8] sm:$0xff]
    %v427 = vld [vmem:[#allocation5 + $0x7f0] sm:$0xff]
    %v428 = vld [vmem:[#allocation5 + $0x7f8] sm:$0xff]
    %v429 = vld [vmem:[#allocation5 + $0x800] sm:$0xff]
    %v430 = vld [vmem:[#allocation5 + $0x808] sm:$0xff]
    %v431 = vld [vmem:[#allocation5 + $0x810] sm:$0xff]
    %v432 = vld [vmem:[#allocation5 + $0x818] sm:$0xff]
    %v433 = vld [vmem:[#allocation5 + $0x820] sm:$0xff]
    %v434 = vld [vmem:[#allocation5 + $0x828] sm:$0xff]
    %v435 = vld [vmem:[#allocation5 + $0x830] sm:$0xff]
    %v436 = vld [vmem:[#allocation5 + $0x838] sm:$0xff]
    %v437 = vld [vmem:[#allocation5 + $0x840] sm:$0xff]
    %v438 = vld [vmem:[#allocation5 + $0x848] sm:$0xff]
    %v439 = vld [vmem:[#allocation5 + $0x850] sm:$0xff]
    %v440 = vld [vmem:[#allocation5 + $0x858] sm:$0xff]
    %v441 = vld [vmem:[#allocation5 + $0x860] sm:$0xff]
    %v442 = vld [vmem:[#allocation5 + $0x868] sm:$0xff]
    %v443 = vld [vmem:[#allocation5 + $0x870] sm:$0xff]
    %v444 = vld [vmem:[#allocation5 + $0x878] sm:$0xff]
    %v445 = vld [vmem:[#allocation5 + $0x880] sm:$0xff]
    %v446 = vld [vmem:[#allocation5 + $0x888] sm:$0xff]
    %v447 = vld [vmem:[#allocation5 + $0x890] sm:$0xff]
    %v448 = vld [vmem:[#allocation5 + $0x898] sm:$0xff]
    %v449 = vld [vmem:[#allocation5 + $0x8a0] sm:$0xff]
    %v450 = vld [vmem:[#allocation5 + $0x8a8] sm:$0xff]
    %v451 = vld [vmem:[#allocation5 + $0x8b0] sm:$0xff]
    %v452 = vld [vmem:[#allocation5 + $0x8b8] sm:$0xff]
    %v453 = vld [vmem:[#allocation5 + $0x8c0] sm:$0xff]
    %v454 = vld [vmem:[#allocation5 + $0x8c8] sm:$0xff]
    %v455 = vld [vmem:[#allocation5 + $0x8d0] sm:$0xff]
    %v456 = vld [vmem:[#allocation5 + $0x8d8] sm:$0xff]
    %v457 = vld [vmem:[#allocation5 + $0x8e0] sm:$0xff]
    %v458 = vld [vmem:[#allocation5 + $0x8e8] sm:$0xff]
    %v459 = vld [vmem:[#allocation5 + $0x8f0] sm:$0xff]
    %v460 = vld [vmem:[#allocation5 + $0x8f8] sm:$0xff]
    %v461 = vld [vmem:[#allocation5 + $0x900] sm:$0xff]
    %v462 = vld [vmem:[#allocation5 + $0x908] sm:$0xff]
    %v463 = vld [vmem:[#allocation5 + $0x910] sm:$0xff]
    %v464 = vld [vmem:[#allocation5 + $0x918] sm:$0xff]
    %v465 = vld [vmem:[#allocation5 + $0x920] sm:$0xff]
    %v466 = vld [vmem:[#allocation5 + $0x928] sm:$0xff]
    %v467 = vld [vmem:[#allocation5 + $0x930] sm:$0xff]
    %v468 = vld [vmem:[#allocation5 + $0x938] sm:$0xff]
    %v469 = vld [vmem:[#allocation5 + $0x940] sm:$0xff]
    %v470 = vld [vmem:[#allocation5 + $0x948] sm:$0xff]
    %v471 = vld [vmem:[#allocation5 + $0x950] sm:$0xff]
    %v472 = vld [vmem:[#allocation5 + $0x958] sm:$0xff]
    %v473 = vld [vmem:[#allocation5 + $0x960] sm:$0xff]
    %v474 = vld [vmem:[#allocation5 + $0x968] sm:$0xff]
    %v475 = vld [vmem:[#allocation5 + $0x970] sm:$0xff]
    %v476 = vld [vmem:[#allocation5 + $0x978] sm:$0xff]
    %v477 = vld [vmem:[#allocation5 + $0x980] sm:$0xff]
    %v478 = vld [vmem:[#allocation5 + $0x988] sm:$0xff]
    %v479 = vld [vmem:[#allocation5 + $0x990] sm:$0xff]
    %v480 = vld [vmem:[#allocation5 + $0x998] sm:$0xff]
    %v481 = vld [vmem:[#allocation5 + $0x9a0] sm:$0xff]
    %v482 = vld [vmem:[#allocation5 + $0x9a8] sm:$0xff]
    %v483 = vld [vmem:[#allocation5 + $0x9b0] sm:$0xff]
    %v484 = vld [vmem:[#allocation5 + $0x9b8] sm:$0xff]
    %v485 = vld [vmem:[#allocation5 + $0x9c0] sm:$0xff]
    %v486 = vld [vmem:[#allocation5 + $0x9c8] sm:$0xff]
    %v487 = vld [vmem:[#allocation5 + $0x9d0] sm:$0xff]
    %v488 = vld [vmem:[#allocation5 + $0x9d8] sm:$0xff]
    %v489 = vld [vmem:[#allocation5 + $0x9e0] sm:$0xff]
    %v490 = vld [vmem:[#allocation5 + $0x9e8] sm:$0xff]
    %v491 = vld [vmem:[#allocation5 + $0x9f0] sm:$0xff]
    %v492 = vld [vmem:[#allocation5 + $0x9f8] sm:$0xff]
    %v493 = vld [vmem:[#allocation5 + $0xa00] sm:$0xff]
    %v494 = vld [vmem:[#allocation5 + $0xa08] sm:$0xff]
    %v495 = vld [vmem:[#allocation5 + $0xa10] sm:$0xff]
    %v496 = vld [vmem:[#allocation5 + $0xa18] sm:$0xff]
    %v497 = vld [vmem:[#allocation5 + $0xa20] sm:$0xff]
    %v498 = vld [vmem:[#allocation5 + $0xa28] sm:$0xff]
    %v499 = vld [vmem:[#allocation5 + $0xa30] sm:$0xff]
    %v500 = vld [vmem:[#allocation5 + $0xa38] sm:$0xff]
    %v501 = vld [vmem:[#allocation5 + $0xa40] sm:$0xff]
    %v502 = vld [vmem:[#allocation5 + $0xa48] sm:$0xff]
    %v503 = vld [vmem:[#allocation5 + $0xa50] sm:$0xff]
    %v504 = vld [vmem:[#allocation5 + $0xa58] sm:$0xff]
    %v505 = vld [vmem:[#allocation5 + $0xa60] sm:$0xff]
    %v506 = vld [vmem:[#allocation5 + $0xa68] sm:$0xff]
    %v507 = vld [vmem:[#allocation5 + $0xa70] sm:$0xff]
    %v508 = vld [vmem:[#allocation5 + $0xa78] sm:$0xff]
    %v509 = vld [vmem:[#allocation5 + $0xa80] sm:$0xff]
    %v510 = vld [vmem:[#allocation5 + $0xa88] sm:$0xff]
    %v511 = vld [vmem:[#allocation5 + $0xa90] sm:$0xff]
    %v512 = vld [vmem:[#allocation5 + $0xa98] sm:$0xff]
    %v513 = vld [vmem:[#allocation5 + $0xaa0] sm:$0xff]
    %v514 = vld [vmem:[#allocation5 + $0xaa8] sm:$0xff]
    %v515 = vld [vmem:[#allocation5 + $0xab0] sm:$0xff]
    %v516 = vld [vmem:[#allocation5 + $0xab8] sm:$0xff]
    %v517 = vld [vmem:[#allocation5 + $0xac0] sm:$0xff]
    %v518 = vld [vmem:[#allocation5 + $0xac8] sm:$0xff]
    %v519 = vld [vmem:[#allocation5 + $0xad0] sm:$0xff]
    %v520 = vld [vmem:[#allocation5 + $0xad8] sm:$0xff]
    %v521 = vld [vmem:[#allocation5 + $0xae0] sm:$0xff]
    %v522 = vld [vmem:[#allocation5 + $0xae8] sm:$0xff]
    %v523 = vld [vmem:[#allocation5 + $0xaf0] sm:$0xff]
    %v524 = vld [vmem:[#allocation5 + $0xaf8] sm:$0xff]
    %v525 = vld [vmem:[#allocation5 + $0xb00] sm:$0xff]
    %v526 = vld [vmem:[#allocation5 + $0xb08] sm:$0xff]
    %v527 = vld [vmem:[#allocation5 + $0xb10] sm:$0xff]
    %v528 = vld [vmem:[#allocation5 + $0xb18] sm:$0xff]
    %v529 = vld [vmem:[#allocation5 + $0xb20] sm:$0xff]
    %v530 = vld [vmem:[#allocation5 + $0xb28] sm:$0xff]
    %v531 = vld [vmem:[#allocation5 + $0xb30] sm:$0xff]
    %v532 = vld [vmem:[#allocation5 + $0xb38] sm:$0xff]
    %v533 = vld [vmem:[#allocation5 + $0xb40] sm:$0xff]
    %v534 = vld [vmem:[#allocation5 + $0xb48] sm:$0xff]
    %v535 = vld [vmem:[#allocation5 + $0xb50] sm:$0xff]
    %v536 = vld [vmem:[#allocation5 + $0xb58] sm:$0xff]
    %v537 = vld [vmem:[#allocation5 + $0xb60] sm:$0xff]
    %v538 = vld [vmem:[#allocation5 + $0xb68] sm:$0xff]
    %v539 = vld [vmem:[#allocation5 + $0xb70] sm:$0xff]
    %v540 = vld [vmem:[#allocation5 + $0xb78] sm:$0xff]
    %v541 = vld [vmem:[#allocation5 + $0xb80] sm:$0xff]
    %v542 = vld [vmem:[#allocation5 + $0xb88] sm:$0xff]
    %v543 = vld [vmem:[#allocation5 + $0xb90] sm:$0xff]
    %v544 = vld [vmem:[#allocation5 + $0xb98] sm:$0xff]
    %v545 = vld [vmem:[#allocation5 + $0xba0] sm:$0xff]
    %v546 = vld [vmem:[#allocation5 + $0xba8] sm:$0xff]
    %v547 = vld [vmem:[#allocation5 + $0xbb0] sm:$0xff]
    %v548 = vld [vmem:[#allocation5 + $0xbb8] sm:$0xff]
    %v549 = vld [vmem:[#allocation5 + $0xbc0] sm:$0xff]
    %v550 = vld [vmem:[#allocation5 + $0xbc8] sm:$0xff]
    %v551 = vld [vmem:[#allocation5 + $0xbd0] sm:$0xff]
    %v552 = vld [vmem:[#allocation5 + $0xbd8] sm:$0xff]
    %v553 = vld [vmem:[#allocation5 + $0xbe0] sm:$0xff]
    %v554 = vld [vmem:[#allocation5 + $0xbe8] sm:$0xff]
    %v555 = vld [vmem:[#allocation5 + $0xbf0] sm:$0xff]
    %v556 = vld [vmem:[#allocation5 + $0xbf8] sm:$0xff]
    %v557 = vld [vmem:[#allocation5 + $0xc00] sm:$0xff]
    %v558 = vld [vmem:[#allocation5 + $0xc08] sm:$0xff]
    %v559 = vld [vmem:[#allocation5 + $0xc10] sm:$0xff]
    %v560 = vld [vmem:[#allocation5 + $0xc18] sm:$0xff]
    %v561 = vld [vmem:[#allocation5 + $0xc20] sm:$0xff]
    %v562 = vld [vmem:[#allocation5 + $0xc28] sm:$0xff]
    %v563 = vld [vmem:[#allocation5 + $0xc30] sm:$0xff]
    %v564 = vld [vmem:[#allocation5 + $0xc38] sm:$0xff]
    %v565 = vld [vmem:[#allocation5 + $0xc40] sm:$0xff]
    %v566 = vld [vmem:[#allocation5 + $0xc48] sm:$0xff]
    %v567 = vld [vmem:[#allocation5 + $0xc50] sm:$0xff]
    %v568 = vld [vmem:[#allocation5 + $0xc58] sm:$0xff]
    %v569 = vld [vmem:[#allocation5 + $0xc60] sm:$0xff]
    %v570 = vld [vmem:[#allocation5 + $0xc68] sm:$0xff]
    %v571 = vld [vmem:[#allocation5 + $0xc70] sm:$0xff]
    %v572 = vld [vmem:[#allocation5 + $0xc78] sm:$0xff]
    %v573 = vld [vmem:[#allocation5 + $0xc80] sm:$0xff]
    %v574 = vld [vmem:[#allocation5 + $0xc88] sm:$0xff]
    %v575 = vld [vmem:[#allocation5 + $0xc90] sm:$0xff]
    %v576 = vld [vmem:[#allocation5 + $0xc98] sm:$0xff]
    %v577 = vld [vmem:[#allocation5 + $0xca0] sm:$0xff]
    %v578 = vld [vmem:[#allocation5 + $0xca8] sm:$0xff]
    %v579 = vld [vmem:[#allocation5 + $0xcb0] sm:$0xff]
    %v580 = vld [vmem:[#allocation5 + $0xcb8] sm:$0xff]
    %v581 = vld [vmem:[#allocation5 + $0xcc0] sm:$0xff]
    %v582 = vld [vmem:[#allocation5 + $0xcc8] sm:$0xff]
    %v583 = vld [vmem:[#allocation5 + $0xcd0] sm:$0xff]
    %v584 = vld [vmem:[#allocation5 + $0xcd8] sm:$0xff]
    %v585 = vld [vmem:[#allocation5 + $0xce0] sm:$0xff]
    %v586 = vld [vmem:[#allocation5 + $0xce8] sm:$0xff]
    %v587 = vld [vmem:[#allocation5 + $0xcf0] sm:$0xff]
    %v588 = vld [vmem:[#allocation5 + $0xcf8] sm:$0xff]
    %v589 = vld [vmem:[#allocation5 + $0xd00] sm:$0xff]
    %v590 = vld [vmem:[#allocation5 + $0xd08] sm:$0xff]
    %v591 = vld [vmem:[#allocation5 + $0xd10] sm:$0xff]
    %v592 = vld [vmem:[#allocation5 + $0xd18] sm:$0xff]
    %v593 = vld [vmem:[#allocation5 + $0xd20] sm:$0xff]
    %v594 = vld [vmem:[#allocation5 + $0xd28] sm:$0xff]
    %v595 = vld [vmem:[#allocation5 + $0xd30] sm:$0xff]
    %v596 = vld [vmem:[#allocation5 + $0xd38] sm:$0xff]
    %v597 = vld [vmem:[#allocation5 + $0xd40] sm:$0xff]
    %v598 = vld [vmem:[#allocation5 + $0xd48] sm:$0xff]
    %v599 = vld [vmem:[#allocation5 + $0xd50] sm:$0xff]
    %v600 = vld [vmem:[#allocation5 + $0xd58] sm:$0xff]
    %v601 = vld [vmem:[#allocation5 + $0xd60] sm:$0xff]
    %v602 = vld [vmem:[#allocation5 + $0xd68] sm:$0xff]
    %v603 = vld [vmem:[#allocation5 + $0xd70] sm:$0xff]
    %v604 = vld [vmem:[#allocation5 + $0xd78] sm:$0xff]
    %v605 = vld [vmem:[#allocation5 + $0xd80] sm:$0xff]
    %v606 = vld [vmem:[#allocation5 + $0xd88] sm:$0xff]
    %v607 = vld [vmem:[#allocation5 + $0xd90] sm:$0xff]
    %v608 = vld [vmem:[#allocation5 + $0xd98] sm:$0xff]
    %v609 = vld [vmem:[#allocation5 + $0xda0] sm:$0xff]
    %v610 = vld [vmem:[#allocation5 + $0xda8] sm:$0xff]
    %v611 = vld [vmem:[#allocation5 + $0xdb0] sm:$0xff]
    %v612 = vld [vmem:[#allocation5 + $0xdb8] sm:$0xff]
    %v613 = vld [vmem:[#allocation5 + $0xdc0] sm:$0xff]
    %v614 = vld [vmem:[#allocation5 + $0xdc8] sm:$0xff]
    %v615 = vld [vmem:[#allocation5 + $0xdd0] sm:$0xff]
    %v616 = vld [vmem:[#allocation5 + $0xdd8] sm:$0xff]
    %v617 = vld [vmem:[#allocation5 + $0xde0] sm:$0xff]
    %v618 = vld [vmem:[#allocation5 + $0xde8] sm:$0xff]
    %v619 = vld [vmem:[#allocation5 + $0xdf0] sm:$0xff]
    %v620 = vld [vmem:[#allocation5 + $0xdf8] sm:$0xff]
    %v622 = vlaneseq
    %v623 = vshrl.u32 %v622, 7
    %v624 = vsub.s32 0, %v623
    %v625 = vrot.slane %v105, %v624
    %v626 = vlaneseq
    %v627 = vshrl.u32 %v626, 7
    %v628 = vsub.s32 1, %v627
    %v629 = vrot.slane %v105, %v628
    %v630 = vlaneseq
    %v631 = vshrl.u32 %v630, 7
    %v632 = vsub.s32 2, %v631
    %v633 = vrot.slane %v105, %v632
    %v634 = vlaneseq
    %v635 = vshrl.u32 %v634, 7
    %v636 = vsub.s32 3, %v635
    %v637 = vrot.slane %v105, %v636
    %v638 = vlaneseq
    %v639 = vshrl.u32 %v638, 7
    %v640 = vsub.s32 4, %v639
    %v641 = vrot.slane %v105, %v640
    %v642 = vlaneseq
    %v643 = vshrl.u32 %v642, 7
    %v644 = vsub.s32 5, %v643
    %v645 = vrot.slane %v105, %v644
    %v646 = vlaneseq
    %v647 = vshrl.u32 %v646, 7
    %v648 = vsub.s32 6, %v647
    %v649 = vrot.slane %v105, %v648
    %v650 = vlaneseq
    %v651 = vshrl.u32 %v650, 7
    %v652 = vsub.s32 7, %v651
    %v653 = vrot.slane %v105, %v652
    %v726 = vunpack.c.l.b16 %v109
    %v727 = vunpack.c.h.b16 %v109
    %v728 = vunpack.c.l.b16 %v110
    %v729 = vunpack.c.h.b16 %v110
    %v730 = vunpack.c.l.b16 %v111
    %v731 = vunpack.c.h.b16 %v111
    %v732 = vunpack.c.l.b16 %v112
    %v733 = vunpack.c.l.b16 %v113
    %v734 = vunpack.c.h.b16 %v113
    %v735 = vunpack.c.l.b16 %v114
    %v736 = vunpack.c.h.b16 %v114
    %v737 = vunpack.c.l.b16 %v115
    %v738 = vunpack.c.h.b16 %v115
    %v739 = vunpack.c.l.b16 %v116
    %v740 = vunpack.c.l.b16 %v117
    %v741 = vunpack.c.h.b16 %v117
    %v742 = vunpack.c.l.b16 %v118
    %v743 = vunpack.c.h.b16 %v118
    %v744 = vunpack.c.l.b16 %v119
    %v745 = vunpack.c.h.b16 %v119
    %v746 = vunpack.c.l.b16 %v120
    %v747 = vunpack.c.l.b16 %v121
    %v748 = vunpack.c.h.b16 %v121
    %v749 = vunpack.c.l.b16 %v122
    %v750 = vunpack.c.h.b16 %v122
    %v751 = vunpack.c.l.b16 %v123
    %v752 = vunpack.c.h.b16 %v123
    %v753 = vunpack.c.l.b16 %v124
    %v754 = vunpack.c.l.b16 %v125
    %v755 = vunpack.c.h.b16 %v125
    %v756 = vunpack.c.l.b16 %v126
    %v757 = vunpack.c.h.b16 %v126
    %v758 = vunpack.c.l.b16 %v127
    %v759 = vunpack.c.h.b16 %v127
    %v760 = vunpack.c.l.b16 %v128
    %v761 = vunpack.c.l.b16 %v129
    %v762 = vunpack.c.h.b16 %v129
    %v763 = vunpack.c.l.b16 %v130
    %v764 = vunpack.c.h.b16 %v130
    %v765 = vunpack.c.l.b16 %v131
    %v766 = vunpack.c.h.b16 %v131
    %v767 = vunpack.c.l.b16 %v132
    %v768 = vunpack.c.l.b16 %v133
    %v769 = vunpack.c.h.b16 %v133
    %v770 = vunpack.c.l.b16 %v134
    %v771 = vunpack.c.h.b16 %v134
    %v772 = vunpack.c.l.b16 %v135
    %v773 = vunpack.c.h.b16 %v135
    %v774 = vunpack.c.l.b16 %v136
    %v775 = vunpack.c.l.b16 %v137
    %v776 = vunpack.c.h.b16 %v137
    %v777 = vunpack.c.l.b16 %v138
    %v778 = vunpack.c.h.b16 %v138
    %v779 = vunpack.c.l.b16 %v139
    %v780 = vunpack.c.h.b16 %v139
    %v781 = vunpack.c.l.b16 %v140
    %v782 = vunpack.c.l.b16 %v141
    %v783 = vunpack.c.h.b16 %v141
    %v784 = vunpack.c.l.b16 %v142
    %v785 = vunpack.c.h.b16 %v142
    %v786 = vunpack.c.l.b16 %v143
    %v787 = vunpack.c.h.b16 %v143
    %v788 = vunpack.c.l.b16 %v144
    %v789 = vunpack.c.l.b16 %v145
    %v790 = vunpack.c.h.b16 %v145
    %v791 = vunpack.c.l.b16 %v146
    %v792 = vunpack.c.h.b16 %v146
    %v793 = vunpack.c.l.b16 %v147
    %v794 = vunpack.c.h.b16 %v147
    %v795 = vunpack.c.l.b16 %v148
    %v796 = vunpack.c.l.b16 %v149
    %v797 = vunpack.c.h.b16 %v149
    %v798 = vunpack.c.l.b16 %v150
    %v799 = vunpack.c.h.b16 %v150
    %v800 = vunpack.c.l.b16 %v151
    %v801 = vunpack.c.h.b16 %v151
    %v802 = vunpack.c.l.b16 %v152
    %v803 = vunpack.c.l.b16 %v153
    %v804 = vunpack.c.h.b16 %v153
    %v805 = vunpack.c.l.b16 %v154
    %v806 = vunpack.c.h.b16 %v154
    %v807 = vunpack.c.l.b16 %v155
    %v808 = vunpack.c.h.b16 %v155
    %v809 = vunpack.c.l.b16 %v156
    %v810 = vunpack.c.l.b16 %v157
    %v811 = vunpack.c.h.b16 %v157
    %v812 = vunpack.c.l.b16 %v158
    %v813 = vunpack.c.h.b16 %v158
    %v814 = vunpack.c.l.b16 %v159
    %v815 = vunpack.c.h.b16 %v159
    %v816 = vunpack.c.l.b16 %v160
    %v817 = vunpack.c.l.b16 %v161
    %v818 = vunpack.c.h.b16 %v161
    %v819 = vunpack.c.l.b16 %v162
    %v820 = vunpack.c.h.b16 %v162
    %v821 = vunpack.c.l.b16 %v163
    %v822 = vunpack.c.h.b16 %v163
    %v823 = vunpack.c.l.b16 %v164
    %v824 = vunpack.c.l.b16 %v165
    %v825 = vunpack.c.h.b16 %v165
    %v826 = vunpack.c.l.b16 %v166
    %v827 = vunpack.c.h.b16 %v166
    %v828 = vunpack.c.l.b16 %v167
    %v829 = vunpack.c.h.b16 %v167
    %v830 = vunpack.c.l.b16 %v168
    %v831 = vunpack.c.l.b16 %v169
    %v832 = vunpack.c.h.b16 %v169
    %v833 = vunpack.c.l.b16 %v170
    %v834 = vunpack.c.h.b16 %v170
    %v835 = vunpack.c.l.b16 %v171
    %v836 = vunpack.c.h.b16 %v171
    %v837 = vunpack.c.l.b16 %v172
    %v838 = vpack.c.b16 %v733, %v726
    %v839 = vpack.c.b16 %v734, %v727
    %v840 = vpack.c.b16 %v735, %v728
    %v841 = vpack.c.b16 %v736, %v729
    %v842 = vpack.c.b16 %v737, %v730
    %v843 = vpack.c.b16 %v738, %v731
    %v844 = vpack.c.b16 %v739, %v732
    %v845 = vpack.c.b16 %v747, %v740
    %v846 = vpack.c.b16 %v748, %v741
    %v847 = vpack.c.b16 %v749, %v742
    %v848 = vpack.c.b16 %v750, %v743
    %v849 = vpack.c.b16 %v751, %v744
    %v850 = vpack.c.b16 %v752, %v745
    %v851 = vpack.c.b16 %v753, %v746
    %v852 = vpack.c.b16 %v761, %v754
    %v853 = vpack.c.b16 %v762, %v755
    %v854 = vpack.c.b16 %v763, %v756
    %v855 = vpack.c.b16 %v764, %v757
    %v856 = vpack.c.b16 %v765, %v758
    %v857 = vpack.c.b16 %v766, %v759
    %v858 = vpack.c.b16 %v767, %v760
    %v859 = vpack.c.b16 %v775, %v768
    %v860 = vpack.c.b16 %v776, %v769
    %v861 = vpack.c.b16 %v777, %v770
    %v862 = vpack.c.b16 %v778, %v771
    %v863 = vpack.c.b16 %v779, %v772
    %v864 = vpack.c.b16 %v780, %v773
    %v865 = vpack.c.b16 %v781, %v774
    %v866 = vpack.c.b16 %v789, %v782
    %v867 = vpack.c.b16 %v790, %v783
    %v868 = vpack.c.b16 %v791, %v784
    %v869 = vpack.c.b16 %v792, %v785
    %v870 = vpack.c.b16 %v793, %v786
    %v871 = vpack.c.b16 %v794, %v787
    %v872 = vpack.c.b16 %v795, %v788
    %v873 = vpack.c.b16 %v803, %v796
    %v874 = vpack.c.b16 %v804, %v797
    %v875 = vpack.c.b16 %v805, %v798
    %v876 = vpack.c.b16 %v806, %v799
    %v877 = vpack.c.b16 %v807, %v800
    %v878 = vpack.c.b16 %v808, %v801
    %v879 = vpack.c.b16 %v809, %v802
    %v880 = vpack.c.b16 %v817, %v810
    %v881 = vpack.c.b16 %v818, %v811
    %v882 = vpack.c.b16 %v819, %v812
    %v883 = vpack.c.b16 %v820, %v813
    %v884 = vpack.c.b16 %v821, %v814
    %v885 = vpack.c.b16 %v822, %v815
    %v886 = vpack.c.b16 %v823, %v816
    %v887 = vpack.c.b16 %v831, %v824
    %v888 = vpack.c.b16 %v832, %v825
    %v889 = vpack.c.b16 %v833, %v826
    %v890 = vpack.c.b16 %v834, %v827
    %v891 = vpack.c.b16 %v835, %v828
    %v892 = vpack.c.b16 %v836, %v829
    %v893 = vpack.c.b16 %v837, %v830
    %v1398 = vunpack.c.l.b16 %v173
    %v1399 = vunpack.c.h.b16 %v173
    %v1400 = vunpack.c.l.b16 %v174
    %v1401 = vunpack.c.h.b16 %v174
    %v1402 = vunpack.c.l.b16 %v175
    %v1403 = vunpack.c.h.b16 %v175
    %v1404 = vunpack.c.l.b16 %v176
    %v1405 = vunpack.c.h.b16 %v176
    %v1406 = vunpack.c.l.b16 %v177
    %v1407 = vunpack.c.h.b16 %v177
    %v1408 = vunpack.c.l.b16 %v178
    %v1409 = vunpack.c.h.b16 %v178
    %v1410 = vunpack.c.l.b16 %v179
    %v1411 = vunpack.c.h.b16 %v179
    %v1412 = vunpack.c.l.b16 %v180
    %v1413 = vunpack.c.h.b16 %v180
    %v1414 = vunpack.c.l.b16 %v181
    %v1415 = vunpack.c.h.b16 %v181
    %v1416 = vunpack.c.l.b16 %v182
    %v1417 = vunpack.c.h.b16 %v182
    %v1418 = vunpack.c.l.b16 %v183
    %v1419 = vunpack.c.h.b16 %v183
    %v1420 = vunpack.c.l.b16 %v184
    %v1421 = vunpack.c.h.b16 %v184
    %v1422 = vunpack.c.l.b16 %v185
    %v1423 = vunpack.c.h.b16 %v185
    %v1424 = vunpack.c.l.b16 %v186
    %v1425 = vunpack.c.h.b16 %v186
    %v1426 = vunpack.c.l.b16 %v187
    %v1427 = vunpack.c.h.b16 %v187
    %v1428 = vunpack.c.l.b16 %v188
    %v1429 = vunpack.c.h.b16 %v188
    %v1430 = vunpack.c.l.b16 %v189
    %v1431 = vunpack.c.h.b16 %v189
    %v1432 = vunpack.c.l.b16 %v190
    %v1433 = vunpack.c.h.b16 %v190
    %v1434 = vunpack.c.l.b16 %v191
    %v1435 = vunpack.c.h.b16 %v191
    %v1436 = vunpack.c.l.b16 %v192
    %v1437 = vunpack.c.h.b16 %v192
    %v1438 = vunpack.c.l.b16 %v193
    %v1439 = vunpack.c.h.b16 %v193
    %v1440 = vunpack.c.l.b16 %v194
    %v1441 = vunpack.c.h.b16 %v194
    %v1442 = vunpack.c.l.b16 %v195
    %v1443 = vunpack.c.h.b16 %v195
    %v1444 = vunpack.c.l.b16 %v196
    %v1445 = vunpack.c.h.b16 %v196
    %v1446 = vunpack.c.l.b16 %v197
    %v1447 = vunpack.c.h.b16 %v197
    %v1448 = vunpack.c.l.b16 %v198
    %v1449 = vunpack.c.h.b16 %v198
    %v1450 = vunpack.c.l.b16 %v199
    %v1451 = vunpack.c.h.b16 %v199
    %v1452 = vunpack.c.l.b16 %v200
    %v1453 = vunpack.c.h.b16 %v200
    %v1454 = vunpack.c.l.b16 %v201
    %v1455 = vunpack.c.h.b16 %v201
    %v1456 = vunpack.c.l.b16 %v202
    %v1457 = vunpack.c.h.b16 %v202
    %v1458 = vunpack.c.l.b16 %v203
    %v1459 = vunpack.c.h.b16 %v203
    %v1460 = vunpack.c.l.b16 %v204
    %v1461 = vunpack.c.h.b16 %v204
    %v1462 = vunpack.c.l.b16 %v205
    %v1463 = vunpack.c.h.b16 %v205
    %v1464 = vunpack.c.l.b16 %v206
    %v1465 = vunpack.c.h.b16 %v206
    %v1466 = vunpack.c.l.b16 %v207
    %v1467 = vunpack.c.h.b16 %v207
    %v1468 = vunpack.c.l.b16 %v208
    %v1469 = vunpack.c.h.b16 %v208
    %v1470 = vunpack.c.l.b16 %v209
    %v1471 = vunpack.c.h.b16 %v209
    %v1472 = vunpack.c.l.b16 %v210
    %v1473 = vunpack.c.h.b16 %v210
    %v1474 = vunpack.c.l.b16 %v211
    %v1475 = vunpack.c.h.b16 %v211
    %v1476 = vunpack.c.l.b16 %v212
    %v1477 = vunpack.c.h.b16 %v212
    %v1478 = vunpack.c.l.b16 %v213
    %v1479 = vunpack.c.h.b16 %v213
    %v1480 = vunpack.c.l.b16 %v214
    %v1481 = vunpack.c.h.b16 %v214
    %v1482 = vunpack.c.l.b16 %v215
    %v1483 = vunpack.c.h.b16 %v215
    %v1484 = vunpack.c.l.b16 %v216
    %v1485 = vunpack.c.h.b16 %v216
    %v1486 = vunpack.c.l.b16 %v217
    %v1487 = vunpack.c.h.b16 %v217
    %v1488 = vunpack.c.l.b16 %v218
    %v1489 = vunpack.c.h.b16 %v218
    %v1490 = vunpack.c.l.b16 %v219
    %v1491 = vunpack.c.h.b16 %v219
    %v1492 = vunpack.c.l.b16 %v220
    %v1493 = vunpack.c.h.b16 %v220
    %v1494 = vunpack.c.l.b16 %v221
    %v1495 = vunpack.c.h.b16 %v221
    %v1496 = vunpack.c.l.b16 %v222
    %v1497 = vunpack.c.h.b16 %v222
    %v1498 = vunpack.c.l.b16 %v223
    %v1499 = vunpack.c.h.b16 %v223
    %v1500 = vunpack.c.l.b16 %v224
    %v1501 = vunpack.c.h.b16 %v224
    %v1502 = vunpack.c.l.b16 %v225
    %v1503 = vunpack.c.h.b16 %v225
    %v1504 = vunpack.c.l.b16 %v226
    %v1505 = vunpack.c.h.b16 %v226
    %v1506 = vunpack.c.l.b16 %v227
    %v1507 = vunpack.c.h.b16 %v227
    %v1508 = vunpack.c.l.b16 %v228
    %v1509 = vunpack.c.h.b16 %v228
    %v1510 = vunpack.c.l.b16 %v229
    %v1511 = vunpack.c.h.b16 %v229
    %v1512 = vunpack.c.l.b16 %v230
    %v1513 = vunpack.c.h.b16 %v230
    %v1514 = vunpack.c.l.b16 %v231
    %v1515 = vunpack.c.h.b16 %v231
    %v1516 = vunpack.c.l.b16 %v232
    %v1517 = vunpack.c.h.b16 %v232
    %v1518 = vunpack.c.l.b16 %v233
    %v1519 = vunpack.c.h.b16 %v233
    %v1520 = vunpack.c.l.b16 %v234
    %v1521 = vunpack.c.h.b16 %v234
    %v1522 = vunpack.c.l.b16 %v235
    %v1523 = vunpack.c.h.b16 %v235
    %v1524 = vunpack.c.l.b16 %v236
    %v1525 = vunpack.c.h.b16 %v236
    %v1526 = vunpack.c.l.b16 %v237
    %v1527 = vunpack.c.h.b16 %v237
    %v1528 = vunpack.c.l.b16 %v238
    %v1529 = vunpack.c.h.b16 %v238
    %v1530 = vunpack.c.l.b16 %v239
    %v1531 = vunpack.c.h.b16 %v239
    %v1532 = vunpack.c.l.b16 %v240
    %v1533 = vunpack.c.h.b16 %v240
    %v1534 = vunpack.c.l.b16 %v241
    %v1535 = vunpack.c.h.b16 %v241
    %v1536 = vunpack.c.l.b16 %v242
    %v1537 = vunpack.c.h.b16 %v242
    %v1538 = vunpack.c.l.b16 %v243
    %v1539 = vunpack.c.h.b16 %v243
    %v1540 = vunpack.c.l.b16 %v244
    %v1541 = vunpack.c.h.b16 %v244
    %v1542 = vunpack.c.l.b16 %v245
    %v1543 = vunpack.c.h.b16 %v245
    %v1544 = vunpack.c.l.b16 %v246
    %v1545 = vunpack.c.h.b16 %v246
    %v1546 = vunpack.c.l.b16 %v247
    %v1547 = vunpack.c.h.b16 %v247
    %v1548 = vunpack.c.l.b16 %v248
    %v1549 = vunpack.c.h.b16 %v248
    %v1550 = vunpack.c.l.b16 %v249
    %v1551 = vunpack.c.h.b16 %v249
    %v1552 = vunpack.c.l.b16 %v250
    %v1553 = vunpack.c.h.b16 %v250
    %v1554 = vunpack.c.l.b16 %v251
    %v1555 = vunpack.c.h.b16 %v251
    %v1556 = vunpack.c.l.b16 %v252
    %v1557 = vunpack.c.h.b16 %v252
    %v1558 = vunpack.c.l.b16 %v253
    %v1559 = vunpack.c.h.b16 %v253
    %v1560 = vunpack.c.l.b16 %v254
    %v1561 = vunpack.c.h.b16 %v254
    %v1562 = vunpack.c.l.b16 %v255
    %v1563 = vunpack.c.h.b16 %v255
    %v1564 = vunpack.c.l.b16 %v256
    %v1565 = vunpack.c.h.b16 %v256
    %v1566 = vunpack.c.l.b16 %v257
    %v1567 = vunpack.c.h.b16 %v257
    %v1568 = vunpack.c.l.b16 %v258
    %v1569 = vunpack.c.h.b16 %v258
    %v1570 = vunpack.c.l.b16 %v259
    %v1571 = vunpack.c.h.b16 %v259
    %v1572 = vunpack.c.l.b16 %v260
    %v1573 = vunpack.c.h.b16 %v260
    %v1574 = vunpack.c.l.b16 %v261
    %v1575 = vunpack.c.h.b16 %v261
    %v1576 = vunpack.c.l.b16 %v262
    %v1577 = vunpack.c.h.b16 %v262
    %v1578 = vunpack.c.l.b16 %v263
    %v1579 = vunpack.c.h.b16 %v263
    %v1580 = vunpack.c.l.b16 %v264
    %v1581 = vunpack.c.h.b16 %v264
    %v1582 = vunpack.c.l.b16 %v265
    %v1583 = vunpack.c.h.b16 %v265
    %v1584 = vunpack.c.l.b16 %v266
    %v1585 = vunpack.c.h.b16 %v266
    %v1586 = vunpack.c.l.b16 %v267
    %v1587 = vunpack.c.h.b16 %v267
    %v1588 = vunpack.c.l.b16 %v268
    %v1589 = vunpack.c.h.b16 %v268
    %v1590 = vunpack.c.l.b16 %v269
    %v1591 = vunpack.c.h.b16 %v269
    %v1592 = vunpack.c.l.b16 %v270
    %v1593 = vunpack.c.h.b16 %v270
    %v1594 = vunpack.c.l.b16 %v271
    %v1595 = vunpack.c.h.b16 %v271
    %v1596 = vunpack.c.l.b16 %v272
    %v1597 = vunpack.c.h.b16 %v272
    %v1598 = vunpack.c.l.b16 %v273
    %v1599 = vunpack.c.h.b16 %v273
    %v1600 = vunpack.c.l.b16 %v274
    %v1601 = vunpack.c.h.b16 %v274
    %v1602 = vunpack.c.l.b16 %v275
    %v1603 = vunpack.c.h.b16 %v275
    %v1604 = vunpack.c.l.b16 %v276
    %v1605 = vunpack.c.h.b16 %v276
    %v1606 = vunpack.c.l.b16 %v277
    %v1607 = vunpack.c.h.b16 %v277
    %v1608 = vunpack.c.l.b16 %v278
    %v1609 = vunpack.c.h.b16 %v278
    %v1610 = vunpack.c.l.b16 %v279
    %v1611 = vunpack.c.h.b16 %v279
    %v1612 = vunpack.c.l.b16 %v280
    %v1613 = vunpack.c.h.b16 %v280
    %v1614 = vunpack.c.l.b16 %v281
    %v1615 = vunpack.c.h.b16 %v281
    %v1616 = vunpack.c.l.b16 %v282
    %v1617 = vunpack.c.h.b16 %v282
    %v1618 = vunpack.c.l.b16 %v283
    %v1619 = vunpack.c.h.b16 %v283
    %v1620 = vunpack.c.l.b16 %v284
    %v1621 = vunpack.c.h.b16 %v284
    %v1622 = vunpack.c.l.b16 %v285
    %v1623 = vunpack.c.h.b16 %v285
    %v1624 = vunpack.c.l.b16 %v286
    %v1625 = vunpack.c.h.b16 %v286
    %v1626 = vunpack.c.l.b16 %v287
    %v1627 = vunpack.c.h.b16 %v287
    %v1628 = vunpack.c.l.b16 %v288
    %v1629 = vunpack.c.h.b16 %v288
    %v1630 = vunpack.c.l.b16 %v289
    %v1631 = vunpack.c.h.b16 %v289
    %v1632 = vunpack.c.l.b16 %v290
    %v1633 = vunpack.c.h.b16 %v290
    %v1634 = vunpack.c.l.b16 %v291
    %v1635 = vunpack.c.h.b16 %v291
    %v1636 = vunpack.c.l.b16 %v292
    %v1637 = vunpack.c.h.b16 %v292
    %v1638 = vunpack.c.l.b16 %v293
    %v1639 = vunpack.c.h.b16 %v293
    %v1640 = vunpack.c.l.b16 %v294
    %v1641 = vunpack.c.h.b16 %v294
    %v1642 = vunpack.c.l.b16 %v295
    %v1643 = vunpack.c.h.b16 %v295
    %v1644 = vunpack.c.l.b16 %v296
    %v1645 = vunpack.c.h.b16 %v296
    %v1646 = vunpack.c.l.b16 %v297
    %v1647 = vunpack.c.h.b16 %v297
    %v1648 = vunpack.c.l.b16 %v298
    %v1649 = vunpack.c.h.b16 %v298
    %v1650 = vunpack.c.l.b16 %v299
    %v1651 = vunpack.c.h.b16 %v299
    %v1652 = vunpack.c.l.b16 %v300
    %v1653 = vunpack.c.h.b16 %v300
    %v1654 = vunpack.c.l.b16 %v301
    %v1655 = vunpack.c.h.b16 %v301
    %v1656 = vunpack.c.l.b16 %v302
    %v1657 = vunpack.c.h.b16 %v302
    %v1658 = vunpack.c.l.b16 %v303
    %v1659 = vunpack.c.h.b16 %v303
    %v1660 = vunpack.c.l.b16 %v304
    %v1661 = vunpack.c.h.b16 %v304
    %v1662 = vunpack.c.l.b16 %v305
    %v1663 = vunpack.c.h.b16 %v305
    %v1664 = vunpack.c.l.b16 %v306
    %v1665 = vunpack.c.h.b16 %v306
    %v1666 = vunpack.c.l.b16 %v307
    %v1667 = vunpack.c.h.b16 %v307
    %v1668 = vunpack.c.l.b16 %v308
    %v1669 = vunpack.c.h.b16 %v308
    %v1670 = vunpack.c.l.b16 %v309
    %v1671 = vunpack.c.h.b16 %v309
    %v1672 = vunpack.c.l.b16 %v310
    %v1673 = vunpack.c.h.b16 %v310
    %v1674 = vunpack.c.l.b16 %v311
    %v1675 = vunpack.c.h.b16 %v311
    %v1676 = vunpack.c.l.b16 %v312
    %v1677 = vunpack.c.h.b16 %v312
    %v1678 = vunpack.c.l.b16 %v313
    %v1679 = vunpack.c.h.b16 %v313
    %v1680 = vunpack.c.l.b16 %v314
    %v1681 = vunpack.c.h.b16 %v314
    %v1682 = vunpack.c.l.b16 %v315
    %v1683 = vunpack.c.h.b16 %v315
    %v1684 = vunpack.c.l.b16 %v316
    %v1685 = vunpack.c.h.b16 %v316
    %v1686 = vunpack.c.l.b16 %v317
    %v1687 = vunpack.c.h.b16 %v317
    %v1688 = vunpack.c.l.b16 %v318
    %v1689 = vunpack.c.h.b16 %v318
    %v1690 = vunpack.c.l.b16 %v319
    %v1691 = vunpack.c.h.b16 %v319
    %v1692 = vunpack.c.l.b16 %v320
    %v1693 = vunpack.c.h.b16 %v320
    %v1694 = vunpack.c.l.b16 %v321
    %v1695 = vunpack.c.h.b16 %v321
    %v1696 = vunpack.c.l.b16 %v322
    %v1697 = vunpack.c.h.b16 %v322
    %v1698 = vunpack.c.l.b16 %v323
    %v1699 = vunpack.c.h.b16 %v323
    %v1700 = vunpack.c.l.b16 %v324
    %v1701 = vunpack.c.h.b16 %v324
    %v1702 = vunpack.c.l.b16 %v325
    %v1703 = vunpack.c.h.b16 %v325
    %v1704 = vunpack.c.l.b16 %v326
    %v1705 = vunpack.c.h.b16 %v326
    %v1706 = vunpack.c.l.b16 %v327
    %v1707 = vunpack.c.h.b16 %v327
    %v1708 = vunpack.c.l.b16 %v328
    %v1709 = vunpack.c.h.b16 %v328
    %v1710 = vunpack.c.l.b16 %v329
    %v1711 = vunpack.c.h.b16 %v329
    %v1712 = vunpack.c.l.b16 %v330
    %v1713 = vunpack.c.h.b16 %v330
    %v1714 = vunpack.c.l.b16 %v331
    %v1715 = vunpack.c.h.b16 %v331
    %v1716 = vunpack.c.l.b16 %v332
    %v1717 = vunpack.c.h.b16 %v332
    %v1718 = vunpack.c.l.b16 %v333
    %v1719 = vunpack.c.h.b16 %v333
    %v1720 = vunpack.c.l.b16 %v334
    %v1721 = vunpack.c.h.b16 %v334
    %v1722 = vunpack.c.l.b16 %v335
    %v1723 = vunpack.c.h.b16 %v335
    %v1724 = vunpack.c.l.b16 %v336
    %v1725 = vunpack.c.h.b16 %v336
    %v1726 = vunpack.c.l.b16 %v337
    %v1727 = vunpack.c.h.b16 %v337
    %v1728 = vunpack.c.l.b16 %v338
    %v1729 = vunpack.c.h.b16 %v338
    %v1730 = vunpack.c.l.b16 %v339
    %v1731 = vunpack.c.h.b16 %v339
    %v1732 = vunpack.c.l.b16 %v340
    %v1733 = vunpack.c.h.b16 %v340
    %v1734 = vunpack.c.l.b16 %v341
    %v1735 = vunpack.c.h.b16 %v341
    %v1736 = vunpack.c.l.b16 %v342
    %v1737 = vunpack.c.h.b16 %v342
    %v1738 = vunpack.c.l.b16 %v343
    %v1739 = vunpack.c.h.b16 %v343
    %v1740 = vunpack.c.l.b16 %v344
    %v1741 = vunpack.c.h.b16 %v344
    %v1742 = vunpack.c.l.b16 %v345
    %v1743 = vunpack.c.h.b16 %v345
    %v1744 = vunpack.c.l.b16 %v346
    %v1745 = vunpack.c.h.b16 %v346
    %v1746 = vunpack.c.l.b16 %v347
    %v1747 = vunpack.c.h.b16 %v347
    %v1748 = vunpack.c.l.b16 %v348
    %v1749 = vunpack.c.h.b16 %v348
    %v1750 = vunpack.c.l.b16 %v349
    %v1751 = vunpack.c.h.b16 %v349
    %v1752 = vunpack.c.l.b16 %v350
    %v1753 = vunpack.c.h.b16 %v350
    %v1754 = vunpack.c.l.b16 %v351
    %v1755 = vunpack.c.h.b16 %v351
    %v1756 = vunpack.c.l.b16 %v352
    %v1757 = vunpack.c.h.b16 %v352
    %v1758 = vunpack.c.l.b16 %v353
    %v1759 = vunpack.c.h.b16 %v353
    %v1760 = vunpack.c.l.b16 %v354
    %v1761 = vunpack.c.h.b16 %v354
    %v1762 = vunpack.c.l.b16 %v355
    %v1763 = vunpack.c.h.b16 %v355
    %v1764 = vunpack.c.l.b16 %v356
    %v1765 = vunpack.c.h.b16 %v356
    %v1766 = vunpack.c.l.b16 %v357
    %v1767 = vunpack.c.h.b16 %v357
    %v1768 = vunpack.c.l.b16 %v358
    %v1769 = vunpack.c.h.b16 %v358
    %v1770 = vunpack.c.l.b16 %v359
    %v1771 = vunpack.c.h.b16 %v359
    %v1772 = vunpack.c.l.b16 %v360
    %v1773 = vunpack.c.h.b16 %v360
    %v1774 = vunpack.c.l.b16 %v361
    %v1775 = vunpack.c.h.b16 %v361
    %v1776 = vunpack.c.l.b16 %v362
    %v1777 = vunpack.c.h.b16 %v362
    %v1778 = vunpack.c.l.b16 %v363
    %v1779 = vunpack.c.h.b16 %v363
    %v1780 = vunpack.c.l.b16 %v364
    %v1781 = vunpack.c.h.b16 %v364
    %v1782 = vunpack.c.l.b16 %v365
    %v1783 = vunpack.c.h.b16 %v365
    %v1784 = vunpack.c.l.b16 %v366
    %v1785 = vunpack.c.h.b16 %v366
    %v1786 = vunpack.c.l.b16 %v367
    %v1787 = vunpack.c.h.b16 %v367
    %v1788 = vunpack.c.l.b16 %v368
    %v1789 = vunpack.c.h.b16 %v368
    %v1790 = vunpack.c.l.b16 %v369
    %v1791 = vunpack.c.h.b16 %v369
    %v1792 = vunpack.c.l.b16 %v370
    %v1793 = vunpack.c.h.b16 %v370
    %v1794 = vunpack.c.l.b16 %v371
    %v1795 = vunpack.c.h.b16 %v371
    %v1796 = vunpack.c.l.b16 %v372
    %v1797 = vunpack.c.h.b16 %v372
    %v1798 = vunpack.c.l.b16 %v373
    %v1799 = vunpack.c.h.b16 %v373
    %v1800 = vunpack.c.l.b16 %v374
    %v1801 = vunpack.c.h.b16 %v374
    %v1802 = vunpack.c.l.b16 %v375
    %v1803 = vunpack.c.h.b16 %v375
    %v1804 = vunpack.c.l.b16 %v376
    %v1805 = vunpack.c.h.b16 %v376
    %v1806 = vunpack.c.l.b16 %v377
    %v1807 = vunpack.c.h.b16 %v377
    %v1808 = vunpack.c.l.b16 %v378
    %v1809 = vunpack.c.h.b16 %v378
    %v1810 = vunpack.c.l.b16 %v379
    %v1811 = vunpack.c.h.b16 %v379
    %v1812 = vunpack.c.l.b16 %v380
    %v1813 = vunpack.c.h.b16 %v380
    %v1814 = vunpack.c.l.b16 %v381
    %v1815 = vunpack.c.h.b16 %v381
    %v1816 = vunpack.c.l.b16 %v382
    %v1817 = vunpack.c.h.b16 %v382
    %v1818 = vunpack.c.l.b16 %v383
    %v1819 = vunpack.c.h.b16 %v383
    %v1820 = vunpack.c.l.b16 %v384
    %v1821 = vunpack.c.h.b16 %v384
    %v1822 = vunpack.c.l.b16 %v385
    %v1823 = vunpack.c.h.b16 %v385
    %v1824 = vunpack.c.l.b16 %v386
    %v1825 = vunpack.c.h.b16 %v386
    %v1826 = vunpack.c.l.b16 %v387
    %v1827 = vunpack.c.h.b16 %v387
    %v1828 = vunpack.c.l.b16 %v388
    %v1829 = vunpack.c.h.b16 %v388
    %v1830 = vunpack.c.l.b16 %v389
    %v1831 = vunpack.c.h.b16 %v389
    %v1832 = vunpack.c.l.b16 %v390
    %v1833 = vunpack.c.h.b16 %v390
    %v1834 = vunpack.c.l.b16 %v391
    %v1835 = vunpack.c.h.b16 %v391
    %v1836 = vunpack.c.l.b16 %v392
    %v1837 = vunpack.c.h.b16 %v392
    %v1838 = vunpack.c.l.b16 %v393
    %v1839 = vunpack.c.h.b16 %v393
    %v1840 = vunpack.c.l.b16 %v394
    %v1841 = vunpack.c.h.b16 %v394
    %v1842 = vunpack.c.l.b16 %v395
    %v1843 = vunpack.c.h.b16 %v395
    %v1844 = vunpack.c.l.b16 %v396
    %v1845 = vunpack.c.h.b16 %v396
    %v1846 = vunpack.c.l.b16 %v397
    %v1847 = vunpack.c.h.b16 %v397
    %v1848 = vunpack.c.l.b16 %v398
    %v1849 = vunpack.c.h.b16 %v398
    %v1850 = vunpack.c.l.b16 %v399
    %v1851 = vunpack.c.h.b16 %v399
    %v1852 = vunpack.c.l.b16 %v400
    %v1853 = vunpack.c.h.b16 %v400
    %v1854 = vunpack.c.l.b16 %v401
    %v1855 = vunpack.c.h.b16 %v401
    %v1856 = vunpack.c.l.b16 %v402
    %v1857 = vunpack.c.h.b16 %v402
    %v1858 = vunpack.c.l.b16 %v403
    %v1859 = vunpack.c.h.b16 %v403
    %v1860 = vunpack.c.l.b16 %v404
    %v1861 = vunpack.c.h.b16 %v404
    %v1862 = vunpack.c.l.b16 %v405
    %v1863 = vunpack.c.h.b16 %v405
    %v1864 = vunpack.c.l.b16 %v406
    %v1865 = vunpack.c.h.b16 %v406
    %v1866 = vunpack.c.l.b16 %v407
    %v1867 = vunpack.c.h.b16 %v407
    %v1868 = vunpack.c.l.b16 %v408
    %v1869 = vunpack.c.h.b16 %v408
    %v1870 = vunpack.c.l.b16 %v409
    %v1871 = vunpack.c.h.b16 %v409
    %v1872 = vunpack.c.l.b16 %v410
    %v1873 = vunpack.c.h.b16 %v410
    %v1874 = vunpack.c.l.b16 %v411
    %v1875 = vunpack.c.h.b16 %v411
    %v1876 = vunpack.c.l.b16 %v412
    %v1877 = vunpack.c.h.b16 %v412
    %v1878 = vunpack.c.l.b16 %v413
    %v1879 = vunpack.c.h.b16 %v413
    %v1880 = vunpack.c.l.b16 %v414
    %v1881 = vunpack.c.h.b16 %v414
    %v1882 = vunpack.c.l.b16 %v415
    %v1883 = vunpack.c.h.b16 %v415
    %v1884 = vunpack.c.l.b16 %v416
    %v1885 = vunpack.c.h.b16 %v416
    %v1886 = vunpack.c.l.b16 %v417
    %v1887 = vunpack.c.h.b16 %v417
    %v1888 = vunpack.c.l.b16 %v418
    %v1889 = vunpack.c.h.b16 %v418
    %v1890 = vunpack.c.l.b16 %v419
    %v1891 = vunpack.c.h.b16 %v419
    %v1892 = vunpack.c.l.b16 %v420
    %v1893 = vunpack.c.h.b16 %v420
    %v1894 = vunpack.c.l.b16 %v421
    %v1895 = vunpack.c.h.b16 %v421
    %v1896 = vunpack.c.l.b16 %v422
    %v1897 = vunpack.c.h.b16 %v422
    %v1898 = vunpack.c.l.b16 %v423
    %v1899 = vunpack.c.h.b16 %v423
    %v1900 = vunpack.c.l.b16 %v424
    %v1901 = vunpack.c.h.b16 %v424
    %v1902 = vunpack.c.l.b16 %v425
    %v1903 = vunpack.c.h.b16 %v425
    %v1904 = vunpack.c.l.b16 %v426
    %v1905 = vunpack.c.h.b16 %v426
    %v1906 = vunpack.c.l.b16 %v427
    %v1907 = vunpack.c.h.b16 %v427
    %v1908 = vunpack.c.l.b16 %v428
    %v1909 = vunpack.c.h.b16 %v428
    %v1910 = vunpack.c.l.b16 %v429
    %v1911 = vunpack.c.h.b16 %v429
    %v1912 = vunpack.c.l.b16 %v430
    %v1913 = vunpack.c.h.b16 %v430
    %v1914 = vunpack.c.l.b16 %v431
    %v1915 = vunpack.c.h.b16 %v431
    %v1916 = vunpack.c.l.b16 %v432
    %v1917 = vunpack.c.h.b16 %v432
    %v1918 = vunpack.c.l.b16 %v433
    %v1919 = vunpack.c.h.b16 %v433
    %v1920 = vunpack.c.l.b16 %v434
    %v1921 = vunpack.c.h.b16 %v434
    %v1922 = vunpack.c.l.b16 %v435
    %v1923 = vunpack.c.h.b16 %v435
    %v1924 = vunpack.c.l.b16 %v436
    %v1925 = vunpack.c.h.b16 %v436
    %v1926 = vunpack.c.l.b16 %v437
    %v1927 = vunpack.c.h.b16 %v437
    %v1928 = vunpack.c.l.b16 %v438
    %v1929 = vunpack.c.h.b16 %v438
    %v1930 = vunpack.c.l.b16 %v439
    %v1931 = vunpack.c.h.b16 %v439
    %v1932 = vunpack.c.l.b16 %v440
    %v1933 = vunpack.c.h.b16 %v440
    %v1934 = vunpack.c.l.b16 %v441
    %v1935 = vunpack.c.h.b16 %v441
    %v1936 = vunpack.c.l.b16 %v442
    %v1937 = vunpack.c.h.b16 %v442
    %v1938 = vunpack.c.l.b16 %v443
    %v1939 = vunpack.c.h.b16 %v443
    %v1940 = vunpack.c.l.b16 %v444
    %v1941 = vunpack.c.h.b16 %v444
    %v1942 = vunpack.c.l.b16 %v445
    %v1943 = vunpack.c.h.b16 %v445
    %v1944 = vunpack.c.l.b16 %v446
    %v1945 = vunpack.c.h.b16 %v446
    %v1946 = vunpack.c.l.b16 %v447
    %v1947 = vunpack.c.h.b16 %v447
    %v1948 = vunpack.c.l.b16 %v448
    %v1949 = vunpack.c.h.b16 %v448
    %v1950 = vunpack.c.l.b16 %v449
    %v1951 = vunpack.c.h.b16 %v449
    %v1952 = vunpack.c.l.b16 %v450
    %v1953 = vunpack.c.h.b16 %v450
    %v1954 = vunpack.c.l.b16 %v451
    %v1955 = vunpack.c.h.b16 %v451
    %v1956 = vunpack.c.l.b16 %v452
    %v1957 = vunpack.c.h.b16 %v452
    %v1958 = vunpack.c.l.b16 %v453
    %v1959 = vunpack.c.h.b16 %v453
    %v1960 = vunpack.c.l.b16 %v454
    %v1961 = vunpack.c.h.b16 %v454
    %v1962 = vunpack.c.l.b16 %v455
    %v1963 = vunpack.c.h.b16 %v455
    %v1964 = vunpack.c.l.b16 %v456
    %v1965 = vunpack.c.h.b16 %v456
    %v1966 = vunpack.c.l.b16 %v457
    %v1967 = vunpack.c.h.b16 %v457
    %v1968 = vunpack.c.l.b16 %v458
    %v1969 = vunpack.c.h.b16 %v458
    %v1970 = vunpack.c.l.b16 %v459
    %v1971 = vunpack.c.h.b16 %v459
    %v1972 = vunpack.c.l.b16 %v460
    %v1973 = vunpack.c.h.b16 %v460
    %v1974 = vunpack.c.l.b16 %v461
    %v1975 = vunpack.c.h.b16 %v461
    %v1976 = vunpack.c.l.b16 %v462
    %v1977 = vunpack.c.h.b16 %v462
    %v1978 = vunpack.c.l.b16 %v463
    %v1979 = vunpack.c.h.b16 %v463
    %v1980 = vunpack.c.l.b16 %v464
    %v1981 = vunpack.c.h.b16 %v464
    %v1982 = vunpack.c.l.b16 %v465
    %v1983 = vunpack.c.h.b16 %v465
    %v1984 = vunpack.c.l.b16 %v466
    %v1985 = vunpack.c.h.b16 %v466
    %v1986 = vunpack.c.l.b16 %v467
    %v1987 = vunpack.c.h.b16 %v467
    %v1988 = vunpack.c.l.b16 %v468
    %v1989 = vunpack.c.h.b16 %v468
    %v1990 = vunpack.c.l.b16 %v469
    %v1991 = vunpack.c.h.b16 %v469
    %v1992 = vunpack.c.l.b16 %v470
    %v1993 = vunpack.c.h.b16 %v470
    %v1994 = vunpack.c.l.b16 %v471
    %v1995 = vunpack.c.h.b16 %v471
    %v1996 = vunpack.c.l.b16 %v472
    %v1997 = vunpack.c.h.b16 %v472
    %v1998 = vunpack.c.l.b16 %v473
    %v1999 = vunpack.c.h.b16 %v473
    %v2000 = vunpack.c.l.b16 %v474
    %v2001 = vunpack.c.h.b16 %v474
    %v2002 = vunpack.c.l.b16 %v475
    %v2003 = vunpack.c.h.b16 %v475
    %v2004 = vunpack.c.l.b16 %v476
    %v2005 = vunpack.c.h.b16 %v476
    %v2006 = vunpack.c.l.b16 %v477
    %v2007 = vunpack.c.h.b16 %v477
    %v2008 = vunpack.c.l.b16 %v478
    %v2009 = vunpack.c.h.b16 %v478
    %v2010 = vunpack.c.l.b16 %v479
    %v2011 = vunpack.c.h.b16 %v479
    %v2012 = vunpack.c.l.b16 %v480
    %v2013 = vunpack.c.h.b16 %v480
    %v2014 = vunpack.c.l.b16 %v481
    %v2015 = vunpack.c.h.b16 %v481
    %v2016 = vunpack.c.l.b16 %v482
    %v2017 = vunpack.c.h.b16 %v482
    %v2018 = vunpack.c.l.b16 %v483
    %v2019 = vunpack.c.h.b16 %v483
    %v2020 = vunpack.c.l.b16 %v484
    %v2021 = vunpack.c.h.b16 %v484
    %v2022 = vunpack.c.l.b16 %v485
    %v2023 = vunpack.c.h.b16 %v485
    %v2024 = vunpack.c.l.b16 %v486
    %v2025 = vunpack.c.h.b16 %v486
    %v2026 = vunpack.c.l.b16 %v487
    %v2027 = vunpack.c.h.b16 %v487
    %v2028 = vunpack.c.l.b16 %v488
    %v2029 = vunpack.c.h.b16 %v488
    %v2030 = vunpack.c.l.b16 %v489
    %v2031 = vunpack.c.h.b16 %v489
    %v2032 = vunpack.c.l.b16 %v490
    %v2033 = vunpack.c.h.b16 %v490
    %v2034 = vunpack.c.l.b16 %v491
    %v2035 = vunpack.c.h.b16 %v491
    %v2036 = vunpack.c.l.b16 %v492
    %v2037 = vunpack.c.h.b16 %v492
    %v2038 = vunpack.c.l.b16 %v493
    %v2039 = vunpack.c.h.b16 %v493
    %v2040 = vunpack.c.l.b16 %v494
    %v2041 = vunpack.c.h.b16 %v494
    %v2042 = vunpack.c.l.b16 %v495
    %v2043 = vunpack.c.h.b16 %v495
    %v2044 = vunpack.c.l.b16 %v496
    %v2045 = vunpack.c.h.b16 %v496
    %v2046 = vunpack.c.l.b16 %v497
    %v2047 = vunpack.c.h.b16 %v497
    %v2048 = vunpack.c.l.b16 %v498
    %v2049 = vunpack.c.h.b16 %v498
    %v2050 = vunpack.c.l.b16 %v499
    %v2051 = vunpack.c.h.b16 %v499
    %v2052 = vunpack.c.l.b16 %v500
    %v2053 = vunpack.c.h.b16 %v500
    %v2054 = vunpack.c.l.b16 %v501
    %v2055 = vunpack.c.h.b16 %v501
    %v2056 = vunpack.c.l.b16 %v502
    %v2057 = vunpack.c.h.b16 %v502
    %v2058 = vunpack.c.l.b16 %v503
    %v2059 = vunpack.c.h.b16 %v503
    %v2060 = vunpack.c.l.b16 %v504
    %v2061 = vunpack.c.h.b16 %v504
    %v2062 = vunpack.c.l.b16 %v505
    %v2063 = vunpack.c.h.b16 %v505
    %v2064 = vunpack.c.l.b16 %v506
    %v2065 = vunpack.c.h.b16 %v506
    %v2066 = vunpack.c.l.b16 %v507
    %v2067 = vunpack.c.h.b16 %v507
    %v2068 = vunpack.c.l.b16 %v508
    %v2069 = vunpack.c.h.b16 %v508
    %v2070 = vunpack.c.l.b16 %v509
    %v2071 = vunpack.c.h.b16 %v509
    %v2072 = vunpack.c.l.b16 %v510
    %v2073 = vunpack.c.h.b16 %v510
    %v2074 = vunpack.c.l.b16 %v511
    %v2075 = vunpack.c.h.b16 %v511
    %v2076 = vunpack.c.l.b16 %v512
    %v2077 = vunpack.c.h.b16 %v512
    %v2078 = vunpack.c.l.b16 %v513
    %v2079 = vunpack.c.h.b16 %v513
    %v2080 = vunpack.c.l.b16 %v514
    %v2081 = vunpack.c.h.b16 %v514
    %v2082 = vunpack.c.l.b16 %v515
    %v2083 = vunpack.c.h.b16 %v515
    %v2084 = vunpack.c.l.b16 %v516
    %v2085 = vunpack.c.h.b16 %v516
    %v2086 = vunpack.c.l.b16 %v517
    %v2087 = vunpack.c.h.b16 %v517
    %v2088 = vunpack.c.l.b16 %v518
    %v2089 = vunpack.c.h.b16 %v518
    %v2090 = vunpack.c.l.b16 %v519
    %v2091 = vunpack.c.h.b16 %v519
    %v2092 = vunpack.c.l.b16 %v520
    %v2093 = vunpack.c.h.b16 %v520
    %v2094 = vunpack.c.l.b16 %v521
    %v2095 = vunpack.c.h.b16 %v521
    %v2096 = vunpack.c.l.b16 %v522
    %v2097 = vunpack.c.h.b16 %v522
    %v2098 = vunpack.c.l.b16 %v523
    %v2099 = vunpack.c.h.b16 %v523
    %v2100 = vunpack.c.l.b16 %v524
    %v2101 = vunpack.c.h.b16 %v524
    %v2102 = vunpack.c.l.b16 %v525
    %v2103 = vunpack.c.h.b16 %v525
    %v2104 = vunpack.c.l.b16 %v526
    %v2105 = vunpack.c.h.b16 %v526
    %v2106 = vunpack.c.l.b16 %v527
    %v2107 = vunpack.c.h.b16 %v527
    %v2108 = vunpack.c.l.b16 %v528
    %v2109 = vunpack.c.h.b16 %v528
    %v2110 = vunpack.c.l.b16 %v529
    %v2111 = vunpack.c.h.b16 %v529
    %v2112 = vunpack.c.l.b16 %v530
    %v2113 = vunpack.c.h.b16 %v530
    %v2114 = vunpack.c.l.b16 %v531
    %v2115 = vunpack.c.h.b16 %v531
    %v2116 = vunpack.c.l.b16 %v532
    %v2117 = vunpack.c.h.b16 %v532
    %v2118 = vunpack.c.l.b16 %v533
    %v2119 = vunpack.c.h.b16 %v533
    %v2120 = vunpack.c.l.b16 %v534
    %v2121 = vunpack.c.h.b16 %v534
    %v2122 = vunpack.c.l.b16 %v535
    %v2123 = vunpack.c.h.b16 %v535
    %v2124 = vunpack.c.l.b16 %v536
    %v2125 = vunpack.c.h.b16 %v536
    %v2126 = vunpack.c.l.b16 %v537
    %v2127 = vunpack.c.h.b16 %v537
    %v2128 = vunpack.c.l.b16 %v538
    %v2129 = vunpack.c.h.b16 %v538
    %v2130 = vunpack.c.l.b16 %v539
    %v2131 = vunpack.c.h.b16 %v539
    %v2132 = vunpack.c.l.b16 %v540
    %v2133 = vunpack.c.h.b16 %v540
    %v2134 = vunpack.c.l.b16 %v541
    %v2135 = vunpack.c.h.b16 %v541
    %v2136 = vunpack.c.l.b16 %v542
    %v2137 = vunpack.c.h.b16 %v542
    %v2138 = vunpack.c.l.b16 %v543
    %v2139 = vunpack.c.h.b16 %v543
    %v2140 = vunpack.c.l.b16 %v544
    %v2141 = vunpack.c.h.b16 %v544
    %v2142 = vunpack.c.l.b16 %v545
    %v2143 = vunpack.c.h.b16 %v545
    %v2144 = vunpack.c.l.b16 %v546
    %v2145 = vunpack.c.h.b16 %v546
    %v2146 = vunpack.c.l.b16 %v547
    %v2147 = vunpack.c.h.b16 %v547
    %v2148 = vunpack.c.l.b16 %v548
    %v2149 = vunpack.c.h.b16 %v548
    %v2150 = vunpack.c.l.b16 %v549
    %v2151 = vunpack.c.h.b16 %v549
    %v2152 = vunpack.c.l.b16 %v550
    %v2153 = vunpack.c.h.b16 %v550
    %v2154 = vunpack.c.l.b16 %v551
    %v2155 = vunpack.c.h.b16 %v551
    %v2156 = vunpack.c.l.b16 %v552
    %v2157 = vunpack.c.h.b16 %v552
    %v2158 = vunpack.c.l.b16 %v553
    %v2159 = vunpack.c.h.b16 %v553
    %v2160 = vunpack.c.l.b16 %v554
    %v2161 = vunpack.c.h.b16 %v554
    %v2162 = vunpack.c.l.b16 %v555
    %v2163 = vunpack.c.h.b16 %v555
    %v2164 = vunpack.c.l.b16 %v556
    %v2165 = vunpack.c.h.b16 %v556
    %v2166 = vunpack.c.l.b16 %v557
    %v2167 = vunpack.c.h.b16 %v557
    %v2168 = vunpack.c.l.b16 %v558
    %v2169 = vunpack.c.h.b16 %v558
    %v2170 = vunpack.c.l.b16 %v559
    %v2171 = vunpack.c.h.b16 %v559
    %v2172 = vunpack.c.l.b16 %v560
    %v2173 = vunpack.c.h.b16 %v560
    %v2174 = vunpack.c.l.b16 %v561
    %v2175 = vunpack.c.h.b16 %v561
    %v2176 = vunpack.c.l.b16 %v562
    %v2177 = vunpack.c.h.b16 %v562
    %v2178 = vunpack.c.l.b16 %v563
    %v2179 = vunpack.c.h.b16 %v563
    %v2180 = vunpack.c.l.b16 %v564
    %v2181 = vunpack.c.h.b16 %v564
    %v2182 = vunpack.c.l.b16 %v565
    %v2183 = vunpack.c.h.b16 %v565
    %v2184 = vunpack.c.l.b16 %v566
    %v2185 = vunpack.c.h.b16 %v566
    %v2186 = vunpack.c.l.b16 %v567
    %v2187 = vunpack.c.h.b16 %v567
    %v2188 = vunpack.c.l.b16 %v568
    %v2189 = vunpack.c.h.b16 %v568
    %v2190 = vunpack.c.l.b16 %v569
    %v2191 = vunpack.c.h.b16 %v569
    %v2192 = vunpack.c.l.b16 %v570
    %v2193 = vunpack.c.h.b16 %v570
    %v2194 = vunpack.c.l.b16 %v571
    %v2195 = vunpack.c.h.b16 %v571
    %v2196 = vunpack.c.l.b16 %v572
    %v2197 = vunpack.c.h.b16 %v572
    %v2198 = vunpack.c.l.b16 %v573
    %v2199 = vunpack.c.h.b16 %v573
    %v2200 = vunpack.c.l.b16 %v574
    %v2201 = vunpack.c.h.b16 %v574
    %v2202 = vunpack.c.l.b16 %v575
    %v2203 = vunpack.c.h.b16 %v575
    %v2204 = vunpack.c.l.b16 %v576
    %v2205 = vunpack.c.h.b16 %v576
    %v2206 = vunpack.c.l.b16 %v577
    %v2207 = vunpack.c.h.b16 %v577
    %v2208 = vunpack.c.l.b16 %v578
    %v2209 = vunpack.c.h.b16 %v578
    %v2210 = vunpack.c.l.b16 %v579
    %v2211 = vunpack.c.h.b16 %v579
    %v2212 = vunpack.c.l.b16 %v580
    %v2213 = vunpack.c.h.b16 %v580
    %v2214 = vunpack.c.l.b16 %v581
    %v2215 = vunpack.c.h.b16 %v581
    %v2216 = vunpack.c.l.b16 %v582
    %v2217 = vunpack.c.h.b16 %v582
    %v2218 = vunpack.c.l.b16 %v583
    %v2219 = vunpack.c.h.b16 %v583
    %v2220 = vunpack.c.l.b16 %v584
    %v2221 = vunpack.c.h.b16 %v584
    %v2222 = vunpack.c.l.b16 %v585
    %v2223 = vunpack.c.h.b16 %v585
    %v2224 = vunpack.c.l.b16 %v586
    %v2225 = vunpack.c.h.b16 %v586
    %v2226 = vunpack.c.l.b16 %v587
    %v2227 = vunpack.c.h.b16 %v587
    %v2228 = vunpack.c.l.b16 %v588
    %v2229 = vunpack.c.h.b16 %v588
    %v2230 = vunpack.c.l.b16 %v589
    %v2231 = vunpack.c.h.b16 %v589
    %v2232 = vunpack.c.l.b16 %v590
    %v2233 = vunpack.c.h.b16 %v590
    %v2234 = vunpack.c.l.b16 %v591
    %v2235 = vunpack.c.h.b16 %v591
    %v2236 = vunpack.c.l.b16 %v592
    %v2237 = vunpack.c.h.b16 %v592
    %v2238 = vunpack.c.l.b16 %v593
    %v2239 = vunpack.c.h.b16 %v593
    %v2240 = vunpack.c.l.b16 %v594
    %v2241 = vunpack.c.h.b16 %v594
    %v2242 = vunpack.c.l.b16 %v595
    %v2243 = vunpack.c.h.b16 %v595
    %v2244 = vunpack.c.l.b16 %v596
    %v2245 = vunpack.c.h.b16 %v596
    %v2246 = vunpack.c.l.b16 %v597
    %v2247 = vunpack.c.h.b16 %v597
    %v2248 = vunpack.c.l.b16 %v598
    %v2249 = vunpack.c.h.b16 %v598
    %v2250 = vunpack.c.l.b16 %v599
    %v2251 = vunpack.c.h.b16 %v599
    %v2252 = vunpack.c.l.b16 %v600
    %v2253 = vunpack.c.h.b16 %v600
    %v2254 = vunpack.c.l.b16 %v601
    %v2255 = vunpack.c.h.b16 %v601
    %v2256 = vunpack.c.l.b16 %v602
    %v2257 = vunpack.c.h.b16 %v602
    %v2258 = vunpack.c.l.b16 %v603
    %v2259 = vunpack.c.h.b16 %v603
    %v2260 = vunpack.c.l.b16 %v604
    %v2261 = vunpack.c.h.b16 %v604
    %v2262 = vunpack.c.l.b16 %v605
    %v2263 = vunpack.c.h.b16 %v605
    %v2264 = vunpack.c.l.b16 %v606
    %v2265 = vunpack.c.h.b16 %v606
    %v2266 = vunpack.c.l.b16 %v607
    %v2267 = vunpack.c.h.b16 %v607
    %v2268 = vunpack.c.l.b16 %v608
    %v2269 = vunpack.c.h.b16 %v608
    %v2270 = vunpack.c.l.b16 %v609
    %v2271 = vunpack.c.h.b16 %v609
    %v2272 = vunpack.c.l.b16 %v610
    %v2273 = vunpack.c.h.b16 %v610
    %v2274 = vunpack.c.l.b16 %v611
    %v2275 = vunpack.c.h.b16 %v611
    %v2276 = vunpack.c.l.b16 %v612
    %v2277 = vunpack.c.h.b16 %v612
    %v2278 = vunpack.c.l.b16 %v613
    %v2279 = vunpack.c.h.b16 %v613
    %v2280 = vunpack.c.l.b16 %v614
    %v2281 = vunpack.c.h.b16 %v614
    %v2282 = vunpack.c.l.b16 %v615
    %v2283 = vunpack.c.h.b16 %v615
    %v2284 = vunpack.c.l.b16 %v616
    %v2285 = vunpack.c.h.b16 %v616
    %v2286 = vunpack.c.l.b16 %v617
    %v2287 = vunpack.c.h.b16 %v617
    %v2288 = vunpack.c.l.b16 %v618
    %v2289 = vunpack.c.h.b16 %v618
    %v2290 = vunpack.c.l.b16 %v619
    %v2291 = vunpack.c.h.b16 %v619
    %v2292 = vunpack.c.l.b16 %v620
    %v2293 = vunpack.c.h.b16 %v620
    %v2294 = vpack.c.b16 %v1406, %v1398
    %v2295 = vpack.c.b16 %v1407, %v1399
    %v2296 = vpack.c.b16 %v1408, %v1400
    %v2297 = vpack.c.b16 %v1409, %v1401
    %v2298 = vpack.c.b16 %v1410, %v1402
    %v2299 = vpack.c.b16 %v1411, %v1403
    %v2300 = vpack.c.b16 %v1412, %v1404
    %v2301 = vpack.c.b16 %v1413, %v1405
    %v2302 = vpack.c.b16 %v1422, %v1414
    %v2303 = vpack.c.b16 %v1423, %v1415
    %v2304 = vpack.c.b16 %v1424, %v1416
    %v2305 = vpack.c.b16 %v1425, %v1417
    %v2306 = vpack.c.b16 %v1426, %v1418
    %v2307 = vpack.c.b16 %v1427, %v1419
    %v2308 = vpack.c.b16 %v1428, %v1420
    %v2309 = vpack.c.b16 %v1429, %v1421
    %v2310 = vpack.c.b16 %v1438, %v1430
    %v2311 = vpack.c.b16 %v1439, %v1431
    %v2312 = vpack.c.b16 %v1440, %v1432
    %v2313 = vpack.c.b16 %v1441, %v1433
    %v2314 = vpack.c.b16 %v1442, %v1434
    %v2315 = vpack.c.b16 %v1443, %v1435
    %v2316 = vpack.c.b16 %v1444, %v1436
    %v2317 = vpack.c.b16 %v1445, %v1437
    %v2318 = vpack.c.b16 %v1454, %v1446
    %v2319 = vpack.c.b16 %v1455, %v1447
    %v2320 = vpack.c.b16 %v1456, %v1448
    %v2321 = vpack.c.b16 %v1457, %v1449
    %v2322 = vpack.c.b16 %v1458, %v1450
    %v2323 = vpack.c.b16 %v1459, %v1451
    %v2324 = vpack.c.b16 %v1460, %v1452
    %v2325 = vpack.c.b16 %v1461, %v1453
    %v2326 = vpack.c.b16 %v1470, %v1462
    %v2327 = vpack.c.b16 %v1471, %v1463
    %v2328 = vpack.c.b16 %v1472, %v1464
    %v2329 = vpack.c.b16 %v1473, %v1465
    %v2330 = vpack.c.b16 %v1474, %v1466
    %v2331 = vpack.c.b16 %v1475, %v1467
    %v2332 = vpack.c.b16 %v1476, %v1468
    %v2333 = vpack.c.b16 %v1477, %v1469
    %v2334 = vpack.c.b16 %v1486, %v1478
    %v2335 = vpack.c.b16 %v1487, %v1479
    %v2336 = vpack.c.b16 %v1488, %v1480
    %v2337 = vpack.c.b16 %v1489, %v1481
    %v2338 = vpack.c.b16 %v1490, %v1482
    %v2339 = vpack.c.b16 %v1491, %v1483
    %v2340 = vpack.c.b16 %v1492, %v1484
    %v2341 = vpack.c.b16 %v1493, %v1485
    %v2342 = vpack.c.b16 %v1502, %v1494
    %v2343 = vpack.c.b16 %v1503, %v1495
    %v2344 = vpack.c.b16 %v1504, %v1496
    %v2345 = vpack.c.b16 %v1505, %v1497
    %v2346 = vpack.c.b16 %v1506, %v1498
    %v2347 = vpack.c.b16 %v1507, %v1499
    %v2348 = vpack.c.b16 %v1508, %v1500
    %v2349 = vpack.c.b16 %v1509, %v1501
    %v2350 = vpack.c.b16 %v1518, %v1510
    %v2351 = vpack.c.b16 %v1519, %v1511
    %v2352 = vpack.c.b16 %v1520, %v1512
    %v2353 = vpack.c.b16 %v1521, %v1513
    %v2354 = vpack.c.b16 %v1522, %v1514
    %v2355 = vpack.c.b16 %v1523, %v1515
    %v2356 = vpack.c.b16 %v1524, %v1516
    %v2357 = vpack.c.b16 %v1525, %v1517
    %v2358 = vpack.c.b16 %v1534, %v1526
    %v2359 = vpack.c.b16 %v1535, %v1527
    %v2360 = vpack.c.b16 %v1536, %v1528
    %v2361 = vpack.c.b16 %v1537, %v1529
    %v2362 = vpack.c.b16 %v1538, %v1530
    %v2363 = vpack.c.b16 %v1539, %v1531
    %v2364 = vpack.c.b16 %v1540, %v1532
    %v2365 = vpack.c.b16 %v1541, %v1533
    %v2366 = vpack.c.b16 %v1550, %v1542
    %v2367 = vpack.c.b16 %v1551, %v1543
    %v2368 = vpack.c.b16 %v1552, %v1544
    %v2369 = vpack.c.b16 %v1553, %v1545
    %v2370 = vpack.c.b16 %v1554, %v1546
    %v2371 = vpack.c.b16 %v1555, %v1547
    %v2372 = vpack.c.b16 %v1556, %v1548
    %v2373 = vpack.c.b16 %v1557, %v1549
    %v2374 = vpack.c.b16 %v1566, %v1558
    %v2375 = vpack.c.b16 %v1567, %v1559
    %v2376 = vpack.c.b16 %v1568, %v1560
    %v2377 = vpack.c.b16 %v1569, %v1561
    %v2378 = vpack.c.b16 %v1570, %v1562
    %v2379 = vpack.c.b16 %v1571, %v1563
    %v2380 = vpack.c.b16 %v1572, %v1564
    %v2381 = vpack.c.b16 %v1573, %v1565
    %v2382 = vpack.c.b16 %v1582, %v1574
    %v2383 = vpack.c.b16 %v1583, %v1575
    %v2384 = vpack.c.b16 %v1584, %v1576
    %v2385 = vpack.c.b16 %v1585, %v1577
    %v2386 = vpack.c.b16 %v1586, %v1578
    %v2387 = vpack.c.b16 %v1587, %v1579
    %v2388 = vpack.c.b16 %v1588, %v1580
    %v2389 = vpack.c.b16 %v1589, %v1581
    %v2390 = vpack.c.b16 %v1598, %v1590
    %v2391 = vpack.c.b16 %v1599, %v1591
    %v2392 = vpack.c.b16 %v1600, %v1592
    %v2393 = vpack.c.b16 %v1601, %v1593
    %v2394 = vpack.c.b16 %v1602, %v1594
    %v2395 = vpack.c.b16 %v1603, %v1595
    %v2396 = vpack.c.b16 %v1604, %v1596
    %v2397 = vpack.c.b16 %v1605, %v1597
    %v2398 = vpack.c.b16 %v1614, %v1606
    %v2399 = vpack.c.b16 %v1615, %v1607
    %v2400 = vpack.c.b16 %v1616, %v1608
    %v2401 = vpack.c.b16 %v1617, %v1609
    %v2402 = vpack.c.b16 %v1618, %v1610
    %v2403 = vpack.c.b16 %v1619, %v1611
    %v2404 = vpack.c.b16 %v1620, %v1612
    %v2405 = vpack.c.b16 %v1621, %v1613
    %v2406 = vpack.c.b16 %v1630, %v1622
    %v2407 = vpack.c.b16 %v1631, %v1623
    %v2408 = vpack.c.b16 %v1632, %v1624
    %v2409 = vpack.c.b16 %v1633, %v1625
    %v2410 = vpack.c.b16 %v1634, %v1626
    %v2411 = vpack.c.b16 %v1635, %v1627
    %v2412 = vpack.c.b16 %v1636, %v1628
    %v2413 = vpack.c.b16 %v1637, %v1629
    %v2414 = vpack.c.b16 %v1646, %v1638
    %v2415 = vpack.c.b16 %v1647, %v1639
    %v2416 = vpack.c.b16 %v1648, %v1640
    %v2417 = vpack.c.b16 %v1649, %v1641
    %v2418 = vpack.c.b16 %v1650, %v1642
    %v2419 = vpack.c.b16 %v1651, %v1643
    %v2420 = vpack.c.b16 %v1652, %v1644
    %v2421 = vpack.c.b16 %v1653, %v1645
    %v2422 = vpack.c.b16 %v1662, %v1654
    %v2423 = vpack.c.b16 %v1663, %v1655
    %v2424 = vpack.c.b16 %v1664, %v1656
    %v2425 = vpack.c.b16 %v1665, %v1657
    %v2426 = vpack.c.b16 %v1666, %v1658
    %v2427 = vpack.c.b16 %v1667, %v1659
    %v2428 = vpack.c.b16 %v1668, %v1660
    %v2429 = vpack.c.b16 %v1669, %v1661
    %v2430 = vpack.c.b16 %v1678, %v1670
    %v2431 = vpack.c.b16 %v1679, %v1671
    %v2432 = vpack.c.b16 %v1680, %v1672
    %v2433 = vpack.c.b16 %v1681, %v1673
    %v2434 = vpack.c.b16 %v1682, %v1674
    %v2435 = vpack.c.b16 %v1683, %v1675
    %v2436 = vpack.c.b16 %v1684, %v1676
    %v2437 = vpack.c.b16 %v1685, %v1677
    %v2438 = vpack.c.b16 %v1694, %v1686
    %v2439 = vpack.c.b16 %v1695, %v1687
    %v2440 = vpack.c.b16 %v1696, %v1688
    %v2441 = vpack.c.b16 %v1697, %v1689
    %v2442 = vpack.c.b16 %v1698, %v1690
    %v2443 = vpack.c.b16 %v1699, %v1691
    %v2444 = vpack.c.b16 %v1700, %v1692
    %v2445 = vpack.c.b16 %v1701, %v1693
    %v2446 = vpack.c.b16 %v1710, %v1702
    %v2447 = vpack.c.b16 %v1711, %v1703
    %v2448 = vpack.c.b16 %v1712, %v1704
    %v2449 = vpack.c.b16 %v1713, %v1705
    %v2450 = vpack.c.b16 %v1714, %v1706
    %v2451 = vpack.c.b16 %v1715, %v1707
    %v2452 = vpack.c.b16 %v1716, %v1708
    %v2453 = vpack.c.b16 %v1717, %v1709
    %v2454 = vpack.c.b16 %v1726, %v1718
    %v2455 = vpack.c.b16 %v1727, %v1719
    %v2456 = vpack.c.b16 %v1728, %v1720
    %v2457 = vpack.c.b16 %v1729, %v1721
    %v2458 = vpack.c.b16 %v1730, %v1722
    %v2459 = vpack.c.b16 %v1731, %v1723
    %v2460 = vpack.c.b16 %v1732, %v1724
    %v2461 = vpack.c.b16 %v1733, %v1725
    %v2462 = vpack.c.b16 %v1742, %v1734
    %v2463 = vpack.c.b16 %v1743, %v1735
    %v2464 = vpack.c.b16 %v1744, %v1736
    %v2465 = vpack.c.b16 %v1745, %v1737
    %v2466 = vpack.c.b16 %v1746, %v1738
    %v2467 = vpack.c.b16 %v1747, %v1739
    %v2468 = vpack.c.b16 %v1748, %v1740
    %v2469 = vpack.c.b16 %v1749, %v1741
    %v2470 = vpack.c.b16 %v1758, %v1750
    %v2471 = vpack.c.b16 %v1759, %v1751
    %v2472 = vpack.c.b16 %v1760, %v1752
    %v2473 = vpack.c.b16 %v1761, %v1753
    %v2474 = vpack.c.b16 %v1762, %v1754
    %v2475 = vpack.c.b16 %v1763, %v1755
    %v2476 = vpack.c.b16 %v1764, %v1756
    %v2477 = vpack.c.b16 %v1765, %v1757
    %v2478 = vpack.c.b16 %v1774, %v1766
    %v2479 = vpack.c.b16 %v1775, %v1767
    %v2480 = vpack.c.b16 %v1776, %v1768
    %v2481 = vpack.c.b16 %v1777, %v1769
    %v2482 = vpack.c.b16 %v1778, %v1770
    %v2483 = vpack.c.b16 %v1779, %v1771
    %v2484 = vpack.c.b16 %v1780, %v1772
    %v2485 = vpack.c.b16 %v1781, %v1773
    %v2486 = vpack.c.b16 %v1790, %v1782
    %v2487 = vpack.c.b16 %v1791, %v1783
    %v2488 = vpack.c.b16 %v1792, %v1784
    %v2489 = vpack.c.b16 %v1793, %v1785
    %v2490 = vpack.c.b16 %v1794, %v1786
    %v2491 = vpack.c.b16 %v1795, %v1787
    %v2492 = vpack.c.b16 %v1796, %v1788
    %v2493 = vpack.c.b16 %v1797, %v1789
    %v2494 = vpack.c.b16 %v1806, %v1798
    %v2495 = vpack.c.b16 %v1807, %v1799
    %v2496 = vpack.c.b16 %v1808, %v1800
    %v2497 = vpack.c.b16 %v1809, %v1801
    %v2498 = vpack.c.b16 %v1810, %v1802
    %v2499 = vpack.c.b16 %v1811, %v1803
    %v2500 = vpack.c.b16 %v1812, %v1804
    %v2501 = vpack.c.b16 %v1813, %v1805
    %v2502 = vpack.c.b16 %v1822, %v1814
    %v2503 = vpack.c.b16 %v1823, %v1815
    %v2504 = vpack.c.b16 %v1824, %v1816
    %v2505 = vpack.c.b16 %v1825, %v1817
    %v2506 = vpack.c.b16 %v1826, %v1818
    %v2507 = vpack.c.b16 %v1827, %v1819
    %v2508 = vpack.c.b16 %v1828, %v1820
    %v2509 = vpack.c.b16 %v1829, %v1821
    %v2510 = vpack.c.b16 %v1838, %v1830
    %v2511 = vpack.c.b16 %v1839, %v1831
    %v2512 = vpack.c.b16 %v1840, %v1832
    %v2513 = vpack.c.b16 %v1841, %v1833
    %v2514 = vpack.c.b16 %v1842, %v1834
    %v2515 = vpack.c.b16 %v1843, %v1835
    %v2516 = vpack.c.b16 %v1844, %v1836
    %v2517 = vpack.c.b16 %v1845, %v1837
    %v2518 = vpack.c.b16 %v1854, %v1846
    %v2519 = vpack.c.b16 %v1855, %v1847
    %v2520 = vpack.c.b16 %v1856, %v1848
    %v2521 = vpack.c.b16 %v1857, %v1849
    %v2522 = vpack.c.b16 %v1858, %v1850
    %v2523 = vpack.c.b16 %v1859, %v1851
    %v2524 = vpack.c.b16 %v1860, %v1852
    %v2525 = vpack.c.b16 %v1861, %v1853
    %v2526 = vpack.c.b16 %v1870, %v1862
    %v2527 = vpack.c.b16 %v1871, %v1863
    %v2528 = vpack.c.b16 %v1872, %v1864
    %v2529 = vpack.c.b16 %v1873, %v1865
    %v2530 = vpack.c.b16 %v1874, %v1866
    %v2531 = vpack.c.b16 %v1875, %v1867
    %v2532 = vpack.c.b16 %v1876, %v1868
    %v2533 = vpack.c.b16 %v1877, %v1869
    %v2534 = vpack.c.b16 %v1886, %v1878
    %v2535 = vpack.c.b16 %v1887, %v1879
    %v2536 = vpack.c.b16 %v1888, %v1880
    %v2537 = vpack.c.b16 %v1889, %v1881
    %v2538 = vpack.c.b16 %v1890, %v1882
    %v2539 = vpack.c.b16 %v1891, %v1883
    %v2540 = vpack.c.b16 %v1892, %v1884
    %v2541 = vpack.c.b16 %v1893, %v1885
    %v2542 = vpack.c.b16 %v1902, %v1894
    %v2543 = vpack.c.b16 %v1903, %v1895
    %v2544 = vpack.c.b16 %v1904, %v1896
    %v2545 = vpack.c.b16 %v1905, %v1897
    %v2546 = vpack.c.b16 %v1906, %v1898
    %v2547 = vpack.c.b16 %v1907, %v1899
    %v2548 = vpack.c.b16 %v1908, %v1900
    %v2549 = vpack.c.b16 %v1909, %v1901
    %v2550 = vpack.c.b16 %v1918, %v1910
    %v2551 = vpack.c.b16 %v1919, %v1911
    %v2552 = vpack.c.b16 %v1920, %v1912
    %v2553 = vpack.c.b16 %v1921, %v1913
    %v2554 = vpack.c.b16 %v1922, %v1914
    %v2555 = vpack.c.b16 %v1923, %v1915
    %v2556 = vpack.c.b16 %v1924, %v1916
    %v2557 = vpack.c.b16 %v1925, %v1917
    %v2558 = vpack.c.b16 %v1934, %v1926
    %v2559 = vpack.c.b16 %v1935, %v1927
    %v2560 = vpack.c.b16 %v1936, %v1928
    %v2561 = vpack.c.b16 %v1937, %v1929
    %v2562 = vpack.c.b16 %v1938, %v1930
    %v2563 = vpack.c.b16 %v1939, %v1931
    %v2564 = vpack.c.b16 %v1940, %v1932
    %v2565 = vpack.c.b16 %v1941, %v1933
    %v2566 = vpack.c.b16 %v1950, %v1942
    %v2567 = vpack.c.b16 %v1951, %v1943
    %v2568 = vpack.c.b16 %v1952, %v1944
    %v2569 = vpack.c.b16 %v1953, %v1945
    %v2570 = vpack.c.b16 %v1954, %v1946
    %v2571 = vpack.c.b16 %v1955, %v1947
    %v2572 = vpack.c.b16 %v1956, %v1948
    %v2573 = vpack.c.b16 %v1957, %v1949
    %v2574 = vpack.c.b16 %v1966, %v1958
    %v2575 = vpack.c.b16 %v1967, %v1959
    %v2576 = vpack.c.b16 %v1968, %v1960
    %v2577 = vpack.c.b16 %v1969, %v1961
    %v2578 = vpack.c.b16 %v1970, %v1962
    %v2579 = vpack.c.b16 %v1971, %v1963
    %v2580 = vpack.c.b16 %v1972, %v1964
    %v2581 = vpack.c.b16 %v1973, %v1965
    %v2582 = vpack.c.b16 %v1982, %v1974
    %v2583 = vpack.c.b16 %v1983, %v1975
    %v2584 = vpack.c.b16 %v1984, %v1976
    %v2585 = vpack.c.b16 %v1985, %v1977
    %v2586 = vpack.c.b16 %v1986, %v1978
    %v2587 = vpack.c.b16 %v1987, %v1979
    %v2588 = vpack.c.b16 %v1988, %v1980
    %v2589 = vpack.c.b16 %v1989, %v1981
    %v2590 = vpack.c.b16 %v1998, %v1990
    %v2591 = vpack.c.b16 %v1999, %v1991
    %v2592 = vpack.c.b16 %v2000, %v1992
    %v2593 = vpack.c.b16 %v2001, %v1993
    %v2594 = vpack.c.b16 %v2002, %v1994
    %v2595 = vpack.c.b16 %v2003, %v1995
    %v2596 = vpack.c.b16 %v2004, %v1996
    %v2597 = vpack.c.b16 %v2005, %v1997
    %v2598 = vpack.c.b16 %v2014, %v2006
    %v2599 = vpack.c.b16 %v2015, %v2007
    %v2600 = vpack.c.b16 %v2016, %v2008
    %v2601 = vpack.c.b16 %v2017, %v2009
    %v2602 = vpack.c.b16 %v2018, %v2010
    %v2603 = vpack.c.b16 %v2019, %v2011
    %v2604 = vpack.c.b16 %v2020, %v2012
    %v2605 = vpack.c.b16 %v2021, %v2013
    %v2606 = vpack.c.b16 %v2030, %v2022
    %v2607 = vpack.c.b16 %v2031, %v2023
    %v2608 = vpack.c.b16 %v2032, %v2024
    %v2609 = vpack.c.b16 %v2033, %v2025
    %v2610 = vpack.c.b16 %v2034, %v2026
    %v2611 = vpack.c.b16 %v2035, %v2027
    %v2612 = vpack.c.b16 %v2036, %v2028
    %v2613 = vpack.c.b16 %v2037, %v2029
    %v2614 = vpack.c.b16 %v2046, %v2038
    %v2615 = vpack.c.b16 %v2047, %v2039
    %v2616 = vpack.c.b16 %v2048, %v2040
    %v2617 = vpack.c.b16 %v2049, %v2041
    %v2618 = vpack.c.b16 %v2050, %v2042
    %v2619 = vpack.c.b16 %v2051, %v2043
    %v2620 = vpack.c.b16 %v2052, %v2044
    %v2621 = vpack.c.b16 %v2053, %v2045
    %v2622 = vpack.c.b16 %v2062, %v2054
    %v2623 = vpack.c.b16 %v2063, %v2055
    %v2624 = vpack.c.b16 %v2064, %v2056
    %v2625 = vpack.c.b16 %v2065, %v2057
    %v2626 = vpack.c.b16 %v2066, %v2058
    %v2627 = vpack.c.b16 %v2067, %v2059
    %v2628 = vpack.c.b16 %v2068, %v2060
    %v2629 = vpack.c.b16 %v2069, %v2061
    %v2630 = vpack.c.b16 %v2078, %v2070
    %v2631 = vpack.c.b16 %v2079, %v2071
    %v2632 = vpack.c.b16 %v2080, %v2072
    %v2633 = vpack.c.b16 %v2081, %v2073
    %v2634 = vpack.c.b16 %v2082, %v2074
    %v2635 = vpack.c.b16 %v2083, %v2075
    %v2636 = vpack.c.b16 %v2084, %v2076
    %v2637 = vpack.c.b16 %v2085, %v2077
    %v2638 = vpack.c.b16 %v2094, %v2086
    %v2639 = vpack.c.b16 %v2095, %v2087
    %v2640 = vpack.c.b16 %v2096, %v2088
    %v2641 = vpack.c.b16 %v2097, %v2089
    %v2642 = vpack.c.b16 %v2098, %v2090
    %v2643 = vpack.c.b16 %v2099, %v2091
    %v2644 = vpack.c.b16 %v2100, %v2092
    %v2645 = vpack.c.b16 %v2101, %v2093
    %v2646 = vpack.c.b16 %v2110, %v2102
    %v2647 = vpack.c.b16 %v2111, %v2103
    %v2648 = vpack.c.b16 %v2112, %v2104
    %v2649 = vpack.c.b16 %v2113, %v2105
    %v2650 = vpack.c.b16 %v2114, %v2106
    %v2651 = vpack.c.b16 %v2115, %v2107
    %v2652 = vpack.c.b16 %v2116, %v2108
    %v2653 = vpack.c.b16 %v2117, %v2109
    %v2654 = vpack.c.b16 %v2126, %v2118
    %v2655 = vpack.c.b16 %v2127, %v2119
    %v2656 = vpack.c.b16 %v2128, %v2120
    %v2657 = vpack.c.b16 %v2129, %v2121
    %v2658 = vpack.c.b16 %v2130, %v2122
    %v2659 = vpack.c.b16 %v2131, %v2123
    %v2660 = vpack.c.b16 %v2132, %v2124
    %v2661 = vpack.c.b16 %v2133, %v2125
    %v2662 = vpack.c.b16 %v2142, %v2134
    %v2663 = vpack.c.b16 %v2143, %v2135
    %v2664 = vpack.c.b16 %v2144, %v2136
    %v2665 = vpack.c.b16 %v2145, %v2137
    %v2666 = vpack.c.b16 %v2146, %v2138
    %v2667 = vpack.c.b16 %v2147, %v2139
    %v2668 = vpack.c.b16 %v2148, %v2140
    %v2669 = vpack.c.b16 %v2149, %v2141
    %v2670 = vpack.c.b16 %v2158, %v2150
    %v2671 = vpack.c.b16 %v2159, %v2151
    %v2672 = vpack.c.b16 %v2160, %v2152
    %v2673 = vpack.c.b16 %v2161, %v2153
    %v2674 = vpack.c.b16 %v2162, %v2154
    %v2675 = vpack.c.b16 %v2163, %v2155
    %v2676 = vpack.c.b16 %v2164, %v2156
    %v2677 = vpack.c.b16 %v2165, %v2157
    %v2678 = vpack.c.b16 %v2174, %v2166
    %v2679 = vpack.c.b16 %v2175, %v2167
    %v2680 = vpack.c.b16 %v2176, %v2168
    %v2681 = vpack.c.b16 %v2177, %v2169
    %v2682 = vpack.c.b16 %v2178, %v2170
    %v2683 = vpack.c.b16 %v2179, %v2171
    %v2684 = vpack.c.b16 %v2180, %v2172
    %v2685 = vpack.c.b16 %v2181, %v2173
    %v2686 = vpack.c.b16 %v2190, %v2182
    %v2687 = vpack.c.b16 %v2191, %v2183
    %v2688 = vpack.c.b16 %v2192, %v2184
    %v2689 = vpack.c.b16 %v2193, %v2185
    %v2690 = vpack.c.b16 %v2194, %v2186
    %v2691 = vpack.c.b16 %v2195, %v2187
    %v2692 = vpack.c.b16 %v2196, %v2188
    %v2693 = vpack.c.b16 %v2197, %v2189
    %v2694 = vpack.c.b16 %v2206, %v2198
    %v2695 = vpack.c.b16 %v2207, %v2199
    %v2696 = vpack.c.b16 %v2208, %v2200
    %v2697 = vpack.c.b16 %v2209, %v2201
    %v2698 = vpack.c.b16 %v2210, %v2202
    %v2699 = vpack.c.b16 %v2211, %v2203
    %v2700 = vpack.c.b16 %v2212, %v2204
    %v2701 = vpack.c.b16 %v2213, %v2205
    %v2702 = vpack.c.b16 %v2222, %v2214
    %v2703 = vpack.c.b16 %v2223, %v2215
    %v2704 = vpack.c.b16 %v2224, %v2216
    %v2705 = vpack.c.b16 %v2225, %v2217
    %v2706 = vpack.c.b16 %v2226, %v2218
    %v2707 = vpack.c.b16 %v2227, %v2219
    %v2708 = vpack.c.b16 %v2228, %v2220
    %v2709 = vpack.c.b16 %v2229, %v2221
    %v2710 = vpack.c.b16 %v2238, %v2230
    %v2711 = vpack.c.b16 %v2239, %v2231
    %v2712 = vpack.c.b16 %v2240, %v2232
    %v2713 = vpack.c.b16 %v2241, %v2233
    %v2714 = vpack.c.b16 %v2242, %v2234
    %v2715 = vpack.c.b16 %v2243, %v2235
    %v2716 = vpack.c.b16 %v2244, %v2236
    %v2717 = vpack.c.b16 %v2245, %v2237
    %v2718 = vpack.c.b16 %v2254, %v2246
    %v2719 = vpack.c.b16 %v2255, %v2247
    %v2720 = vpack.c.b16 %v2256, %v2248
    %v2721 = vpack.c.b16 %v2257, %v2249
    %v2722 = vpack.c.b16 %v2258, %v2250
    %v2723 = vpack.c.b16 %v2259, %v2251
    %v2724 = vpack.c.b16 %v2260, %v2252
    %v2725 = vpack.c.b16 %v2261, %v2253
    %v2726 = vpack.c.b16 %v2270, %v2262
    %v2727 = vpack.c.b16 %v2271, %v2263
    %v2728 = vpack.c.b16 %v2272, %v2264
    %v2729 = vpack.c.b16 %v2273, %v2265
    %v2730 = vpack.c.b16 %v2274, %v2266
    %v2731 = vpack.c.b16 %v2275, %v2267
    %v2732 = vpack.c.b16 %v2276, %v2268
    %v2733 = vpack.c.b16 %v2277, %v2269
    %v2734 = vpack.c.b16 %v2286, %v2278
    %v2735 = vpack.c.b16 %v2287, %v2279
    %v2736 = vpack.c.b16 %v2288, %v2280
    %v2737 = vpack.c.b16 %v2289, %v2281
    %v2738 = vpack.c.b16 %v2290, %v2282
    %v2739 = vpack.c.b16 %v2291, %v2283
    %v2740 = vpack.c.b16 %v2292, %v2284
    %v2741 = vpack.c.b16 %v2293, %v2285
    %3190 = vmatprep.subr.bf16.mxu0 %v2295
    %3191 = vmatpush1.bf16.msra.mxu0 %v2294
    %3192 = vmatprep.subr.bf16.mxu0 %v2303
    %3193 = vmatpush1.bf16.msra.mxu0 %v2302
    %3194 = vmatprep.subr.bf16.mxu0 %v2311
    %3195 = vmatpush1.bf16.msra.mxu0 %v2310
    %3196 = vmatprep.subr.bf16.mxu0 %v2319
    %3197 = vmatpush1.bf16.msra.mxu0 %v2318
    %3198 = vmatprep.subr.bf16.mxu0 %v2327
    %3199 = vmatpush1.bf16.msra.mxu0 %v2326
    %3200 = vmatprep.subr.bf16.mxu0 %v2335
    %3201 = vmatpush1.bf16.msra.mxu0 %v2334
    %3202 = vmatprep.subr.bf16.mxu0 %v2343
    %3203 = vmatpush1.bf16.msra.mxu0 %v2342
    %3204 = vmatprep.subr.bf16.mxu0 %v2351
    %3205 = vmatpush1.bf16.msra.mxu0 %v2350
    %3206 = vmatprep.subr.bf16.mxu0 %v2359
    %3207 = vmatpush1.bf16.msra.mxu0 %v2358
    %3208 = vmatprep.subr.bf16.mxu0 %v2367
    %3209 = vmatpush1.bf16.msra.mxu0 %v2366
    %3210 = vmatprep.subr.bf16.mxu0 %v2375
    %3211 = vmatpush1.bf16.msra.mxu0 %v2374
    %3212 = vmatprep.subr.bf16.mxu0 %v2383
    %3213 = vmatpush1.bf16.msra.mxu0 %v2382
    %3214 = vmatprep.subr.bf16.mxu0 %v2391
    %3215 = vmatpush1.bf16.msra.mxu0 %v2390
    %3216 = vmatprep.subr.bf16.mxu0 %v2399
    %3217 = vmatpush1.bf16.msra.mxu0 %v2398
    %3218 = vmatprep.subr.bf16.mxu0 %v2407
    %3219 = vmatpush1.bf16.msra.mxu0 %v2406
    %3220 = vmatprep.subr.bf16.mxu0 %v2415
    %3221 = vmatpush1.bf16.msra.mxu0 %v2414
    %3222 = vmatprep.mubr.bf16.mxu0 %v839
    %3223 = vmatmul.mubr.bf16.gmra.mrb[0].mxu0 %v838
    %v3224 = vpop.f32.mrb[0].mxu0
    %v3225 = vadd.f32 %v625, %v3224
    %v3226 = vpop.f32.mrb[0].mxu0
    %v3227 = vadd.f32 %v629, %v3226
    %v3228 = vpop.f32.mrb[0].mxu0
    %v3229 = vadd.f32 %v625, %v3228
    %v3230 = vpop.f32.mrb[0].mxu0
    %v3231 = vadd.f32 %v629, %v3230
    %3232 = vmatprep.mubr.bf16.mxu0 %v846
    %3233 = vmatmul.mubr.bf16.gmra.mrb[0].mxu0 %v845
    %v3234 = vpop.f32.mrb[0].mxu0
    %v3235 = vadd.f32 %v625, %v3234
    %v3236 = vpop.f32.mrb[0].mxu0
    %v3237 = vadd.f32 %v629, %v3236
    %v3238 = vpop.f32.mrb[0].mxu0
    %v3239 = vadd.f32 %v625, %v3238
    %v3240 = vpop.f32.mrb[0].mxu0
    %v3241 = vadd.f32 %v629, %v3240
    %3242 = vmatprep.mubr.bf16.mxu0 %v853
    %3243 = vmatmul.mubr.bf16.gmra.mrb[0].mxu0 %v852
    %v3244 = vpop.f32.mrb[0].mxu0
    %v3245 = vadd.f32 %v625, %v3244
    %v3246 = vpop.f32.mrb[0].mxu0
    %v3247 = vadd.f32 %v629, %v3246
    %v3248 = vpop.f32.mrb[0].mxu0
    %v3249 = vadd.f32 %v625, %v3248
    %v3250 = vpop.f32.mrb[0].mxu0
    %v3251 = vadd.f32 %v629, %v3250
    %3252 = vmatprep.mubr.bf16.mxu0 %v860
    %3253 = vmatmul.mubr.bf16.gmra.mrb[0].mxu0 %v859
    %v3254 = vpop.f32.mrb[0].mxu0
    %v3255 = vadd.f32 %v625, %v3254
    %v3256 = vpop.f32.mrb[0].mxu0
    %v3257 = vadd.f32 %v629, %v3256
    %v3258 = vpop.f32.mrb[0].mxu0
    %v3259 = vadd.f32 %v625, %v3258
    %v3260 = vpop.f32.mrb[0].mxu0
    %v3261 = vadd.f32 %v629, %v3260
    %3262 = vmatprep.mubr.bf16.mxu0 %v867
    %3263 = vmatmul.mubr.bf16.gmra.mrb[0].mxu0 %v866
    %v3264 = vpop.f32.mrb[0].mxu0
    %v3265 = vadd.f32 %v625, %v3264
    %v3266 = vpop.f32.mrb[0].mxu0
    %v3267 = vadd.f32 %v629, %v3266
    %v3268 = vpop.f32.mrb[0].mxu0
    %v3269 = vadd.f32 %v625, %v3268
    %v3270 = vpop.f32.mrb[0].mxu0
    %v3271 = vadd.f32 %v629, %v3270
    %3272 = vmatprep.mubr.bf16.mxu0 %v874
    %3273 = vmatmul.mubr.bf16.gmra.mrb[0].mxu0 %v873
    %v3274 = vpop.f32.mrb[0].mxu0
    %v3275 = vadd.f32 %v625, %v3274
    %v3276 = vpop.f32.mrb[0].mxu0
    %v3277 = vadd.f32 %v629, %v3276
    %v3278 = vpop.f32.mrb[0].mxu0
    %v3279 = vadd.f32 %v625, %v3278
    %v3280 = vpop.f32.mrb[0].mxu0
    %v3281 = vadd.f32 %v629, %v3280
    %3282 = vmatprep.mubr.bf16.mxu0 %v881
    %3283 = vmatmul.mubr.bf16.gmra.mrb[0].mxu0 %v880
    %v3284 = vpop.f32.mrb[0].mxu0
    %v3285 = vadd.f32 %v625, %v3284
    %v3286 = vpop.f32.mrb[0].mxu0
    %v3287 = vadd.f32 %v629, %v3286
    %v3288 = vpop.f32.mrb[0].mxu0
    %v3289 = vadd.f32 %v625, %v3288
    %v3290 = vpop.f32.mrb[0].mxu0
    %v3291 = vadd.f32 %v629, %v3290
    %3292 = vmatprep.mubr.bf16.mxu0 %v888
    %3293 = vmatmul.mubr.bf16.gmra.mrb[0].mxu0 %v887
    %v3294 = vpop.f32.mrb[0].mxu0
    %v3295 = vadd.f32 %v625, %v3294
    %v3296 = vpop.f32.mrb[0].mxu0
    %v3297 = vadd.f32 %v629, %v3296
    %v3298 = vpop.f32.mrb[0].mxu0
    %v3299 = vadd.f32 %v625, %v3298
    %v3300 = vpop.f32.mrb[0].mxu0
    %v3301 = vadd.f32 %v629, %v3300
    %3302 = vdwg.mxu0
    %3303 = vmatprep.subr.bf16.mxu0 %v2423
    %3304 = vmatpush1.bf16.msra.mxu0 %v2422
    %3305 = vmatprep.subr.bf16.mxu0 %v2431
    %3306 = vmatpush1.bf16.msra.mxu0 %v2430
    %3307 = vmatprep.subr.bf16.mxu0 %v2439
    %3308 = vmatpush1.bf16.msra.mxu0 %v2438
    %3309 = vmatprep.subr.bf16.mxu0 %v2447
    %3310 = vmatpush1.bf16.msra.mxu0 %v2446
    %3311 = vmatprep.subr.bf16.mxu0 %v2455
    %3312 = vmatpush1.bf16.msra.mxu0 %v2454
    %3313 = vmatprep.subr.bf16.mxu0 %v2463
    %3314 = vmatpush1.bf16.msra.mxu0 %v2462
    %3315 = vmatprep.subr.bf16.mxu0 %v2471
    %3316 = vmatpush1.bf16.msra.mxu0 %v2470
    %3317 = vmatprep.subr.bf16.mxu0 %v2479
    %3318 = vmatpush1.bf16.msra.mxu0 %v2478
    %3319 = vmatprep.subr.bf16.mxu0 %v2487
    %3320 = vmatpush1.bf16.msra.mxu0 %v2486
    %3321 = vmatprep.subr.bf16.mxu0 %v2495
    %3322 = vmatpush1.bf16.msra.mxu0 %v2494
    %3323 = vmatprep.subr.bf16.mxu0 %v2503
    %3324 = vmatpush1.bf16.msra.mxu0 %v2502
    %3325 = vmatprep.subr.bf16.mxu0 %v2511
    %3326 = vmatpush1.bf16.msra.mxu0 %v2510
    %3327 = vmatprep.subr.bf16.mxu0 %v2519
    %3328 = vmatpush1.bf16.msra.mxu0 %v2518
    %3329 = vmatprep.subr.bf16.mxu0 %v2527
    %3330 = vmatpush1.bf16.msra.mxu0 %v2526
    %3331 = vmatprep.subr.bf16.mxu0 %v2535
    %3332 = vmatpush1.bf16.msra.mxu0 %v2534
    %3333 = vmatprep.subr.bf16.mxu0 %v2543
    %3334 = vmatpush1.bf16.msra.mxu0 %v2542
    %3335 = vmatprep.mubr.bf16.mxu0 %v841
    %3336 = vmatmul.mubr.bf16.gmra.mrb[0].mxu0 %v840
    %v3337 = vpop.f32.mrb[0].mxu0
    %v3338 = vadd.f32 %v3225, %v3337
    %v3339 = vpop.f32.mrb[0].mxu0
    %v3340 = vadd.f32 %v3227, %v3339
    %v3341 = vpop.f32.mrb[0].mxu0
    %v3342 = vadd.f32 %v3229, %v3341
    %v3343 = vpop.f32.mrb[0].mxu0
    %v3344 = vadd.f32 %v3231, %v3343
    %3345 = vmatprep.mubr.bf16.mxu0 %v848
    %3346 = vmatmul.mubr.bf16.gmra.mrb[0].mxu0 %v847
    %v3347 = vpop.f32.mrb[0].mxu0
    %v3348 = vadd.f32 %v3235, %v3347
    %v3349 = vpop.f32.mrb[0].mxu0
    %v3350 = vadd.f32 %v3237, %v3349
    %v3351 = vpop.f32.mrb[0].mxu0
    %v3352 = vadd.f32 %v3239, %v3351
    %v3353 = vpop.f32.mrb[0].mxu0
    %v3354 = vadd.f32 %v3241, %v3353
    %3355 = vmatprep.mubr.bf16.mxu0 %v855
    %3356 = vmatmul.mubr.bf16.gmra.mrb[0].mxu0 %v854
    %v3357 = vpop.f32.mrb[0].mxu0
    %v3358 = vadd.f32 %v3245, %v3357
    %v3359 = vpop.f32.mrb[0].mxu0
    %v3360 = vadd.f32 %v3247, %v3359
    %v3361 = vpop.f32.mrb[0].mxu0
    %v3362 = vadd.f32 %v3249, %v3361
    %v3363 = vpop.f32.mrb[0].mxu0
    %v3364 = vadd.f32 %v3251, %v3363
    %3365 = vmatprep.mubr.bf16.mxu0 %v862
    %3366 = vmatmul.mubr.bf16.gmra.mrb[0].mxu0 %v861
    %v3367 = vpop.f32.mrb[0].mxu0
    %v3368 = vadd.f32 %v3255, %v3367
    %v3369 = vpop.f32.mrb[0].mxu0
    %v3370 = vadd.f32 %v3257, %v3369
    %v3371 = vpop.f32.mrb[0].mxu0
    %v3372 = vadd.f32 %v3259, %v3371
    %v3373 = vpop.f32.mrb[0].mxu0
    %v3374 = vadd.f32 %v3261, %v3373
    %3375 = vmatprep.mubr.bf16.mxu0 %v869
    %3376 = vmatmul.mubr.bf16.gmra.mrb[0].mxu0 %v868
    %v3377 = vpop.f32.mrb[0].mxu0
    %v3378 = vadd.f32 %v3265, %v3377
    %v3379 = vpop.f32.mrb[0].mxu0
    %v3380 = vadd.f32 %v3267, %v3379
    %v3381 = vpop.f32.mrb[0].mxu0
    %v3382 = vadd.f32 %v3269, %v3381
    %v3383 = vpop.f32.mrb[0].mxu0
    %v3384 = vadd.f32 %v3271, %v3383
    %3385 = vmatprep.mubr.bf16.mxu0 %v876
    %3386 = vmatmul.mubr.bf16.gmra.mrb[0].mxu0 %v875
    %v3387 = vpop.f32.mrb[0].mxu0
    %v3388 = vadd.f32 %v3275, %v3387
    %v3389 = vpop.f32.mrb[0].mxu0
    %v3390 = vadd.f32 %v3277, %v3389
    %v3391 = vpop.f32.mrb[0].mxu0
    %v3392 = vadd.f32 %v3279, %v3391
    %v3393 = vpop.f32.mrb[0].mxu0
    %v3394 = vadd.f32 %v3281, %v3393
    %3395 = vmatprep.mubr.bf16.mxu0 %v883
    %3396 = vmatmul.mubr.bf16.gmra.mrb[0].mxu0 %v882
    %v3397 = vpop.f32.mrb[0].mxu0
    %v3398 = vadd.f32 %v3285, %v3397
    %v3399 = vpop.f32.mrb[0].mxu0
    %v3400 = vadd.f32 %v3287, %v3399
    %v3401 = vpop.f32.mrb[0].mxu0
    %v3402 = vadd.f32 %v3289, %v3401
    %v3403 = vpop.f32.mrb[0].mxu0
    %v3404 = vadd.f32 %v3291, %v3403
    %3405 = vmatprep.mubr.bf16.mxu0 %v890
    %3406 = vmatmul.mubr.bf16.gmra.mrb[0].mxu0 %v889
    %v3407 = vpop.f32.mrb[0].mxu0
    %v3408 = vadd.f32 %v3295, %v3407
    %v3409 = vpop.f32.mrb[0].mxu0
    %v3410 = vadd.f32 %v3297, %v3409
    %v3411 = vpop.f32.mrb[0].mxu0
    %v3412 = vadd.f32 %v3299, %v3411
    %v3413 = vpop.f32.mrb[0].mxu0
    %v3414 = vadd.f32 %v3301, %v3413
    %3415 = vdwg.mxu0
    %3416 = vmatprep.subr.bf16.mxu0 %v2551
    %3417 = vmatpush1.bf16.msra.mxu0 %v2550
    %3418 = vmatprep.subr.bf16.mxu0 %v2559
    %3419 = vmatpush1.bf16.msra.mxu0 %v2558
    %3420 = vmatprep.subr.bf16.mxu0 %v2567
    %3421 = vmatpush1.bf16.msra.mxu0 %v2566
    %3422 = vmatprep.subr.bf16.mxu0 %v2575
    %3423 = vmatpush1.bf16.msra.mxu0 %v2574
    %3424 = vmatprep.subr.bf16.mxu0 %v2583
    %3425 = vmatpush1.bf16.msra.mxu0 %v2582
    %3426 = vmatprep.subr.bf16.mxu0 %v2591
    %3427 = vmatpush1.bf16.msra.mxu0 %v2590
    %3428 = vmatprep.subr.bf16.mxu0 %v2599
    %3429 = vmatpush1.bf16.msra.mxu0 %v2598
    %3430 = vmatprep.subr.bf16.mxu0 %v2607
    %3431 = vmatpush1.bf16.msra.mxu0 %v2606
    %3432 = vmatprep.subr.bf16.mxu0 %v2615
    %3433 = vmatpush1.bf16.msra.mxu0 %v2614
    %3434 = vmatprep.subr.bf16.mxu0 %v2623
    %3435 = vmatpush1.bf16.msra.mxu0 %v2622
    %3436 = vmatprep.subr.bf16.mxu0 %v2631
    %3437 = vmatpush1.bf16.msra.mxu0 %v2630
    %3438 = vmatprep.subr.bf16.mxu0 %v2639
    %3439 = vmatpush1.bf16.msra.mxu0 %v2638
    %3440 = vmatprep.subr.bf16.mxu0 %v2647
    %3441 = vmatpush1.bf16.msra.mxu0 %v2646
    %3442 = vmatprep.subr.bf16.mxu0 %v2655
    %3443 = vmatpush1.bf16.msra.mxu0 %v2654
    %3444 = vmatprep.subr.bf16.mxu0 %v2663
    %3445 = vmatpush1.bf16.msra.mxu0 %v2662
    %3446 = vmatprep.subr.bf16.mxu0 %v2671
    %3447 = vmatpush1.bf16.msra.mxu0 %v2670
    %3448 = vmatprep.mubr.bf16.mxu0 %v843
    %3449 = vmatmul.mubr.bf16.gmra.mrb[0].mxu0 %v842
    %v3450 = vpop.f32.mrb[0].mxu0
    %v3451 = vadd.f32 %v3338, %v3450
    %v3452 = vpop.f32.mrb[0].mxu0
    %v3453 = vadd.f32 %v3340, %v3452
    %v3454 = vpop.f32.mrb[0].mxu0
    %v3455 = vadd.f32 %v3342, %v3454
    %v3456 = vpop.f32.mrb[0].mxu0
    %v3457 = vadd.f32 %v3344, %v3456
    %3458 = vmatprep.mubr.bf16.mxu0 %v850
    %3459 = vmatmul.mubr.bf16.gmra.mrb[0].mxu0 %v849
    %v3460 = vpop.f32.mrb[0].mxu0
    %v3461 = vadd.f32 %v3348, %v3460
    %v3462 = vpop.f32.mrb[0].mxu0
    %v3463 = vadd.f32 %v3350, %v3462
    %v3464 = vpop.f32.mrb[0].mxu0
    %v3465 = vadd.f32 %v3352, %v3464
    %v3466 = vpop.f32.mrb[0].mxu0
    %v3467 = vadd.f32 %v3354, %v3466
    %3468 = vmatprep.mubr.bf16.mxu0 %v857
    %3469 = vmatmul.mubr.bf16.gmra.mrb[0].mxu0 %v856
    %v3470 = vpop.f32.mrb[0].mxu0
    %v3471 = vadd.f32 %v3358, %v3470
    %v3472 = vpop.f32.mrb[0].mxu0
    %v3473 = vadd.f32 %v3360, %v3472
    %v3474 = vpop.f32.mrb[0].mxu0
    %v3475 = vadd.f32 %v3362, %v3474
    %v3476 = vpop.f32.mrb[0].mxu0
    %v3477 = vadd.f32 %v3364, %v3476
    %3478 = vmatprep.mubr.bf16.mxu0 %v864
    %3479 = vmatmul.mubr.bf16.gmra.mrb[0].mxu0 %v863
    %v3480 = vpop.f32.mrb[0].mxu0
    %v3481 = vadd.f32 %v3368, %v3480
    %v3482 = vpop.f32.mrb[0].mxu0
    %v3483 = vadd.f32 %v3370, %v3482
    %v3484 = vpop.f32.mrb[0].mxu0
    %v3485 = vadd.f32 %v3372, %v3484
    %v3486 = vpop.f32.mrb[0].mxu0
    %v3487 = vadd.f32 %v3374, %v3486
    %3488 = vmatprep.mubr.bf16.mxu0 %v871
    %3489 = vmatmul.mubr.bf16.gmra.mrb[0].mxu0 %v870
    %v3490 = vpop.f32.mrb[0].mxu0
    %v3491 = vadd.f32 %v3378, %v3490
    %v3492 = vpop.f32.mrb[0].mxu0
    %v3493 = vadd.f32 %v3380, %v3492
    %v3494 = vpop.f32.mrb[0].mxu0
    %v3495 = vadd.f32 %v3382, %v3494
    %v3496 = vpop.f32.mrb[0].mxu0
    %v3497 = vadd.f32 %v3384, %v3496
    %3498 = vmatprep.mubr.bf16.mxu0 %v878
    %3499 = vmatmul.mubr.bf16.gmra.mrb[0].mxu0 %v877
    %v3500 = vpop.f32.mrb[0].mxu0
    %v3501 = vadd.f32 %v3388, %v3500
    %v3502 = vpop.f32.mrb[0].mxu0
    %v3503 = vadd.f32 %v3390, %v3502
    %v3504 = vpop.f32.mrb[0].mxu0
    %v3505 = vadd.f32 %v3392, %v3504
    %v3506 = vpop.f32.mrb[0].mxu0
    %v3507 = vadd.f32 %v3394, %v3506
    %3508 = vmatprep.mubr.bf16.mxu0 %v885
    %3509 = vmatmul.mubr.bf16.gmra.mrb[0].mxu0 %v884
    %v3510 = vpop.f32.mrb[0].mxu0
    %v3511 = vadd.f32 %v3398, %v3510
    %v3512 = vpop.f32.mrb[0].mxu0
    %v3513 = vadd.f32 %v3400, %v3512
    %v3514 = vpop.f32.mrb[0].mxu0
    %v3515 = vadd.f32 %v3402, %v3514
    %v3516 = vpop.f32.mrb[0].mxu0
    %v3517 = vadd.f32 %v3404, %v3516
    %3518 = vmatprep.mubr.bf16.mxu0 %v892
    %3519 = vmatmul.mubr.bf16.gmra.mrb[0].mxu0 %v891
    %v3520 = vpop.f32.mrb[0].mxu0
    %v3521 = vadd.f32 %v3408, %v3520
    %v3522 = vpop.f32.mrb[0].mxu0
    %v3523 = vadd.f32 %v3410, %v3522
    %v3524 = vpop.f32.mrb[0].mxu0
    %v3525 = vadd.f32 %v3412, %v3524
    %v3526 = vpop.f32.mrb[0].mxu0
    %v3527 = vadd.f32 %v3414, %v3526
    %3528 = vdwg.mxu0
    %3529 = vmatprep.subr.bf16.mxu0 %v2679
    %3530 = vmatpush1.bf16.msra.mxu0 %v2678
    %3531 = vmatprep.subr.bf16.mxu0 %v2687
    %3532 = vmatpush1.bf16.msra.mxu0 %v2686
    %3533 = vmatprep.subr.bf16.mxu0 %v2695
    %3534 = vmatpush1.bf16.msra.mxu0 %v2694
    %3535 = vmatprep.subr.bf16.mxu0 %v2703
    %3536 = vmatpush1.bf16.msra.mxu0 %v2702
    %3537 = vmatprep.subr.bf16.mxu0 %v2711
    %3538 = vmatpush1.bf16.msra.mxu0 %v2710
    %3539 = vmatprep.subr.bf16.mxu0 %v2719
    %3540 = vmatpush1.bf16.msra.mxu0 %v2718
    %3541 = vmatprep.subr.bf16.mxu0 %v2727
    %3542 = vmatpush1.bf16.msra.mxu0 %v2726
    %3543 = vmatprep.subr.bf16.mxu0 %v2735
    %3544 = vmatpush1.bf16.msra.mxu0 %v2734
    %3545 = vmatprep.subr.bf16.mxu0 0
    %3546 = vmatpush1.bf16.msra.mxu0 0
    %3547 = vmatprep.subr.bf16.mxu0 0
    %3548 = vmatpush1.bf16.msra.mxu0 0
    %3549 = vmatprep.subr.bf16.mxu0 0
    %3550 = vmatpush1.bf16.msra.mxu0 0
    %3551 = vmatprep.subr.bf16.mxu0 0
    %3552 = vmatpush1.bf16.msra.mxu0 0
    %3553 = vmatprep.subr.bf16.mxu0 0
    %3554 = vmatpush1.bf16.msra.mxu0 0
    %3555 = vmatprep.subr.bf16.mxu0 0
    %3556 = vmatpush1.bf16.msra.mxu0 0
    %3557 = vmatprep.subr.bf16.mxu0 0
    %3558 = vmatpush1.bf16.msra.mxu0 0
    %3559 = vmatprep.subr.bf16.mxu0 0
    %3560 = vmatpush1.bf16.msra.mxu0 0
    %3561 = vmatprep.mubr.bf16.mxu0 0
    %3562 = vmatmul.mubr.bf16.gmra.mrb[0].mxu0 %v844
    %v3563 = vpop.f32.mrb[0].mxu0
    %v3564 = vadd.f32 %v3451, %v3563
    %v3565 = vpop.f32.mrb[0].mxu0
    %v3566 = vadd.f32 %v3453, %v3565
    %v3567 = vpop.f32.mrb[0].mxu0
    %v3568 = vadd.f32 %v3455, %v3567
    %v3569 = vpop.f32.mrb[0].mxu0
    %v3570 = vadd.f32 %v3457, %v3569
    %3571 = vmatprep.mubr.bf16.mxu0 0
    %3572 = vmatmul.mubr.bf16.gmra.mrb[0].mxu0 %v851
    %v3573 = vpop.f32.mrb[0].mxu0
    %v3574 = vadd.f32 %v3461, %v3573
    %v3575 = vpop.f32.mrb[0].mxu0
    %v3576 = vadd.f32 %v3463, %v3575
    %v3577 = vpop.f32.mrb[0].mxu0
    %v3578 = vadd.f32 %v3465, %v3577
    %v3579 = vpop.f32.mrb[0].mxu0
    %v3580 = vadd.f32 %v3467, %v3579
    %3581 = vmatprep.mubr.bf16.mxu0 0
    %3582 = vmatmul.mubr.bf16.gmra.mrb[0].mxu0 %v858
    %v3583 = vpop.f32.mrb[0].mxu0
    %v3584 = vadd.f32 %v3471, %v3583
    %v3585 = vpop.f32.mrb[0].mxu0
    %v3586 = vadd.f32 %v3473, %v3585
    %v3587 = vpop.f32.mrb[0].mxu0
    %v3588 = vadd.f32 %v3475, %v3587
    %v3589 = vpop.f32.mrb[0].mxu0
    %v3590 = vadd.f32 %v3477, %v3589
    %3591 = vmatprep.mubr.bf16.mxu0 0
    %3592 = vmatmul.mubr.bf16.gmra.mrb[0].mxu0 %v865
    %v3593 = vpop.f32.mrb[0].mxu0
    %v3594 = vadd.f32 %v3481, %v3593
    %v3595 = vpop.f32.mrb[0].mxu0
    %v3596 = vadd.f32 %v3483, %v3595
    %v3597 = vpop.f32.mrb[0].mxu0
    %v3598 = vadd.f32 %v3485, %v3597
    %v3599 = vpop.f32.mrb[0].mxu0
    %v3600 = vadd.f32 %v3487, %v3599
    %3601 = vmatprep.mubr.bf16.mxu0 0
    %3602 = vmatmul.mubr.bf16.gmra.mrb[0].mxu0 %v872
    %v3603 = vpop.f32.mrb[0].mxu0
    %v3604 = vadd.f32 %v3491, %v3603
    %v3605 = vpop.f32.mrb[0].mxu0
    %v3606 = vadd.f32 %v3493, %v3605
    %v3607 = vpop.f32.mrb[0].mxu0
    %v3608 = vadd.f32 %v3495, %v3607
    %v3609 = vpop.f32.mrb[0].mxu0
    %v3610 = vadd.f32 %v3497, %v3609
    %3611 = vmatprep.mubr.bf16.mxu0 0
    %3612 = vmatmul.mubr.bf16.gmra.mrb[0].mxu0 %v879
    %v3613 = vpop.f32.mrb[0].mxu0
    %v3614 = vadd.f32 %v3501, %v3613
    %v3615 = vpop.f32.mrb[0].mxu0
    %v3616 = vadd.f32 %v3503, %v3615
    %v3617 = vpop.f32.mrb[0].mxu0
    %v3618 = vadd.f32 %v3505, %v3617
    %v3619 = vpop.f32.mrb[0].mxu0
    %v3620 = vadd.f32 %v3507, %v3619
    %3621 = vmatprep.mubr.bf16.mxu0 0
    %3622 = vmatmul.mubr.bf16.gmra.mrb[0].mxu0 %v886
    %v3623 = vpop.f32.mrb[0].mxu0
    %v3624 = vadd.f32 %v3511, %v3623
    %v3625 = vpop.f32.mrb[0].mxu0
    %v3626 = vadd.f32 %v3513, %v3625
    %v3627 = vpop.f32.mrb[0].mxu0
    %v3628 = vadd.f32 %v3515, %v3627
    %v3629 = vpop.f32.mrb[0].mxu0
    %v3630 = vadd.f32 %v3517, %v3629
    %3631 = vmatprep.mubr.bf16.mxu0 0
    %3632 = vmatmul.mubr.bf16.gmra.mrb[0].mxu0 %v893
    %v3633 = vpop.f32.mrb[0].mxu0
    %v3634 = vadd.f32 %v3521, %v3633
    %v3635 = vpop.f32.mrb[0].mxu0
    %v3636 = vadd.f32 %v3523, %v3635
    %v3637 = vpop.f32.mrb[0].mxu0
    %v3638 = vadd.f32 %v3525, %v3637
    %v3639 = vpop.f32.mrb[0].mxu0
    %v3640 = vadd.f32 %v3527, %v3639
    %3641 = vdwg.mxu0
    %3642 = vmatprep.subr.bf16.mxu0 %v2297
    %3643 = vmatpush1.bf16.msra.mxu0 %v2296
    %3644 = vmatprep.subr.bf16.mxu0 %v2305
    %3645 = vmatpush1.bf16.msra.mxu0 %v2304
    %3646 = vmatprep.subr.bf16.mxu0 %v2313
    %3647 = vmatpush1.bf16.msra.mxu0 %v2312
    %3648 = vmatprep.subr.bf16.mxu0 %v2321
    %3649 = vmatpush1.bf16.msra.mxu0 %v2320
    %3650 = vmatprep.subr.bf16.mxu0 %v2329
    %3651 = vmatpush1.bf16.msra.mxu0 %v2328
    %3652 = vmatprep.subr.bf16.mxu0 %v2337
    %3653 = vmatpush1.bf16.msra.mxu0 %v2336
    %3654 = vmatprep.subr.bf16.mxu0 %v2345
    %3655 = vmatpush1.bf16.msra.mxu0 %v2344
    %3656 = vmatprep.subr.bf16.mxu0 %v2353
    %3657 = vmatpush1.bf16.msra.mxu0 %v2352
    %3658 = vmatprep.subr.bf16.mxu0 %v2361
    %3659 = vmatpush1.bf16.msra.mxu0 %v2360
    %3660 = vmatprep.subr.bf16.mxu0 %v2369
    %3661 = vmatpush1.bf16.msra.mxu0 %v2368
    %3662 = vmatprep.subr.bf16.mxu0 %v2377
    %3663 = vmatpush1.bf16.msra.mxu0 %v2376
    %3664 = vmatprep.subr.bf16.mxu0 %v2385
    %3665 = vmatpush1.bf16.msra.mxu0 %v2384
    %3666 = vmatprep.subr.bf16.mxu0 %v2393
    %3667 = vmatpush1.bf16.msra.mxu0 %v2392
    %3668 = vmatprep.subr.bf16.mxu0 %v2401
    %3669 = vmatpush1.bf16.msra.mxu0 %v2400
    %3670 = vmatprep.subr.bf16.mxu0 %v2409
    %3671 = vmatpush1.bf16.msra.mxu0 %v2408
    %3672 = vmatprep.subr.bf16.mxu0 %v2417
    %3673 = vmatpush1.bf16.msra.mxu0 %v2416
    %3674 = vmatprep.mubr.bf16.mxu0 %v839
    %3675 = vmatmul.mubr.bf16.gmra.mrb[0].mxu0 %v838
    %v3676 = vpop.f32.mrb[0].mxu0
    %v3677 = vadd.f32 %v633, %v3676
    %v3678 = vpop.f32.mrb[0].mxu0
    %v3679 = vadd.f32 %v637, %v3678
    %v3680 = vpop.f32.mrb[0].mxu0
    %v3681 = vadd.f32 %v633, %v3680
    %v3682 = vpop.f32.mrb[0].mxu0
    %v3683 = vadd.f32 %v637, %v3682
    %3684 = vmatprep.mubr.bf16.mxu0 %v846
    %3685 = vmatmul.mubr.bf16.gmra.mrb[0].mxu0 %v845
    %v3686 = vpop.f32.mrb[0].mxu0
    %v3687 = vadd.f32 %v633, %v3686
    %v3688 = vpop.f32.mrb[0].mxu0
    %v3689 = vadd.f32 %v637, %v3688
    %v3690 = vpop.f32.mrb[0].mxu0
    %v3691 = vadd.f32 %v633, %v3690
    %v3692 = vpop.f32.mrb[0].mxu0
    %v3693 = vadd.f32 %v637, %v3692
    %3694 = vmatprep.mubr.bf16.mxu0 %v853
    %3695 = vmatmul.mubr.bf16.gmra.mrb[0].mxu0 %v852
    %v3696 = vpop.f32.mrb[0].mxu0
    %v3697 = vadd.f32 %v633, %v3696
    %v3698 = vpop.f32.mrb[0].mxu0
    %v3699 = vadd.f32 %v637, %v3698
    %v3700 = vpop.f32.mrb[0].mxu0
    %v3701 = vadd.f32 %v633, %v3700
    %v3702 = vpop.f32.mrb[0].mxu0
    %v3703 = vadd.f32 %v637, %v3702
    %3704 = vmatprep.mubr.bf16.mxu0 %v860
    %3705 = vmatmul.mubr.bf16.gmra.mrb[0].mxu0 %v859
    %v3706 = vpop.f32.mrb[0].mxu0
    %v3707 = vadd.f32 %v633, %v3706
    %v3708 = vpop.f32.mrb[0].mxu0
    %v3709 = vadd.f32 %v637, %v3708
    %v3710 = vpop.f32.mrb[0].mxu0
    %v3711 = vadd.f32 %v633, %v3710
    %v3712 = vpop.f32.mrb[0].mxu0
    %v3713 = vadd.f32 %v637, %v3712
    %3714 = vmatprep.mubr.bf16.mxu0 %v867
    %3715 = vmatmul.mubr.bf16.gmra.mrb[0].mxu0 %v866
    %v3716 = vpop.f32.mrb[0].mxu0
    %v3717 = vadd.f32 %v633, %v3716
    %v3718 = vpop.f32.mrb[0].mxu0
    %v3719 = vadd.f32 %v637, %v3718
    %v3720 = vpop.f32.mrb[0].mxu0
    %v3721 = vadd.f32 %v633, %v3720
    %v3722 = vpop.f32.mrb[0].mxu0
    %v3723 = vadd.f32 %v637, %v3722
    %3724 = vmatprep.mubr.bf16.mxu0 %v874
    %3725 = vmatmul.mubr.bf16.gmra.mrb[0].mxu0 %v873
    %v3726 = vpop.f32.mrb[0].mxu0
    %v3727 = vadd.f32 %v633, %v3726
    %v3728 = vpop.f32.mrb[0].mxu0
    %v3729 = vadd.f32 %v637, %v3728
    %v3730 = vpop.f32.mrb[0].mxu0
    %v3731 = vadd.f32 %v633, %v3730
    %v3732 = vpop.f32.mrb[0].mxu0
    %v3733 = vadd.f32 %v637, %v3732
    %3734 = vmatprep.mubr.bf16.mxu0 %v881
    %3735 = vmatmul.mubr.bf16.gmra.mrb[0].mxu0 %v880
    %v3736 = vpop.f32.mrb[0].mxu0
    %v3737 = vadd.f32 %v633, %v3736
    %v3738 = vpop.f32.mrb[0].mxu0
    %v3739 = vadd.f32 %v637, %v3738
    %v3740 = vpop.f32.mrb[0].mxu0
    %v3741 = vadd.f32 %v633, %v3740
    %v3742 = vpop.f32.mrb[0].mxu0
    %v3743 = vadd.f32 %v637, %v3742
    %3744 = vmatprep.mubr.bf16.mxu0 %v888
    %3745 = vmatmul.mubr.bf16.gmra.mrb[0].mxu0 %v887
    %v3746 = vpop.f32.mrb[0].mxu0
    %v3747 = vadd.f32 %v633, %v3746
    %v3748 = vpop.f32.mrb[0].mxu0
    %v3749 = vadd.f32 %v637, %v3748
    %v3750 = vpop.f32.mrb[0].mxu0
    %v3751 = vadd.f32 %v633, %v3750
    %v3752 = vpop.f32.mrb[0].mxu0
    %v3753 = vadd.f32 %v637, %v3752
    %3754 = vdwg.mxu0
    %3755 = vmatprep.subr.bf16.mxu0 %v2425
    %3756 = vmatpush1.bf16.msra.mxu0 %v2424
    %3757 = vmatprep.subr.bf16.mxu0 %v2433
    %3758 = vmatpush1.bf16.msra.mxu0 %v2432
    %3759 = vmatprep.subr.bf16.mxu0 %v2441
    %3760 = vmatpush1.bf16.msra.mxu0 %v2440
    %3761 = vmatprep.subr.bf16.mxu0 %v2449
    %3762 = vmatpush1.bf16.msra.mxu0 %v2448
    %3763 = vmatprep.subr.bf16.mxu0 %v2457
    %3764 = vmatpush1.bf16.msra.mxu0 %v2456
    %3765 = vmatprep.subr.bf16.mxu0 %v2465
    %3766 = vmatpush1.bf16.msra.mxu0 %v2464
    %3767 = vmatprep.subr.bf16.mxu0 %v2473
    %3768 = vmatpush1.bf16.msra.mxu0 %v2472
    %3769 = vmatprep.subr.bf16.mxu0 %v2481
    %3770 = vmatpush1.bf16.msra.mxu0 %v2480
    %3771 = vmatprep.subr.bf16.mxu0 %v2489
    %3772 = vmatpush1.bf16.msra.mxu0 %v2488
    %3773 = vmatprep.subr.bf16.mxu0 %v2497
    %3774 = vmatpush1.bf16.msra.mxu0 %v2496
    %3775 = vmatprep.subr.bf16.mxu0 %v2505
    %3776 = vmatpush1.bf16.msra.mxu0 %v2504
    %3777 = vmatprep.subr.bf16.mxu0 %v2513
    %3778 = vmatpush1.bf16.msra.mxu0 %v2512
    %3779 = vmatprep.subr.bf16.mxu0 %v2521
    %3780 = vmatpush1.bf16.msra.mxu0 %v2520
    %3781 = vmatprep.subr.bf16.mxu0 %v2529
    %3782 = vmatpush1.bf16.msra.mxu0 %v2528
    %3783 = vmatprep.subr.bf16.mxu0 %v2537
    %3784 = vmatpush1.bf16.msra.mxu0 %v2536
    %3785 = vmatprep.subr.bf16.mxu0 %v2545
    %3786 = vmatpush1.bf16.msra.mxu0 %v2544
    %3787 = vmatprep.mubr.bf16.mxu0 %v841
    %3788 = vmatmul.mubr.bf16.gmra.mrb[0].mxu0 %v840
    %v3789 = vpop.f32.mrb[0].mxu0
    %v3790 = vadd.f32 %v3677, %v3789
    %v3791 = vpop.f32.mrb[0].mxu0
    %v3792 = vadd.f32 %v3679, %v3791
    %v3793 = vpop.f32.mrb[0].mxu0
    %v3794 = vadd.f32 %v3681, %v3793
    %v3795 = vpop.f32.mrb[0].mxu0
    %v3796 = vadd.f32 %v3683, %v3795
    %3797 = vmatprep.mubr.bf16.mxu0 %v848
    %3798 = vmatmul.mubr.bf16.gmra.mrb[0].mxu0 %v847
    %v3799 = vpop.f32.mrb[0].mxu0
    %v3800 = vadd.f32 %v3687, %v3799
    %v3801 = vpop.f32.mrb[0].mxu0
    %v3802 = vadd.f32 %v3689, %v3801
    %v3803 = vpop.f32.mrb[0].mxu0
    %v3804 = vadd.f32 %v3691, %v3803
    %v3805 = vpop.f32.mrb[0].mxu0
    %v3806 = vadd.f32 %v3693, %v3805
    %3807 = vmatprep.mubr.bf16.mxu0 %v855
    %3808 = vmatmul.mubr.bf16.gmra.mrb[0].mxu0 %v854
    %v3809 = vpop.f32.mrb[0].mxu0
    %v3810 = vadd.f32 %v3697, %v3809
    %v3811 = vpop.f32.mrb[0].mxu0
    %v3812 = vadd.f32 %v3699, %v3811
    %v3813 = vpop.f32.mrb[0].mxu0
    %v3814 = vadd.f32 %v3701, %v3813
    %v3815 = vpop.f32.mrb[0].mxu0
    %v3816 = vadd.f32 %v3703, %v3815
    %3817 = vmatprep.mubr.bf16.mxu0 %v862
    %3818 = vmatmul.mubr.bf16.gmra.mrb[0].mxu0 %v861
    %v3819 = vpop.f32.mrb[0].mxu0
    %v3820 = vadd.f32 %v3707, %v3819
    %v3821 = vpop.f32.mrb[0].mxu0
    %v3822 = vadd.f32 %v3709, %v3821
    %v3823 = vpop.f32.mrb[0].mxu0
    %v3824 = vadd.f32 %v3711, %v3823
    %v3825 = vpop.f32.mrb[0].mxu0
    %v3826 = vadd.f32 %v3713, %v3825
    %3827 = vmatprep.mubr.bf16.mxu0 %v869
    %3828 = vmatmul.mubr.bf16.gmra.mrb[0].mxu0 %v868
    %v3829 = vpop.f32.mrb[0].mxu0
    %v3830 = vadd.f32 %v3717, %v3829
    %v3831 = vpop.f32.mrb[0].mxu0
    %v3832 = vadd.f32 %v3719, %v3831
    %v3833 = vpop.f32.mrb[0].mxu0
    %v3834 = vadd.f32 %v3721, %v3833
    %v3835 = vpop.f32.mrb[0].mxu0
    %v3836 = vadd.f32 %v3723, %v3835
    %3837 = vmatprep.mubr.bf16.mxu0 %v876
    %3838 = vmatmul.mubr.bf16.gmra.mrb[0].mxu0 %v875
    %v3839 = vpop.f32.mrb[0].mxu0
    %v3840 = vadd.f32 %v3727, %v3839
    %v3841 = vpop.f32.mrb[0].mxu0
    %v3842 = vadd.f32 %v3729, %v3841
    %v3843 = vpop.f32.mrb[0].mxu0
    %v3844 = vadd.f32 %v3731, %v3843
    %v3845 = vpop.f32.mrb[0].mxu0
    %v3846 = vadd.f32 %v3733, %v3845
    %3847 = vmatprep.mubr.bf16.mxu0 %v883
    %3848 = vmatmul.mubr.bf16.gmra.mrb[0].mxu0 %v882
    %v3849 = vpop.f32.mrb[0].mxu0
    %v3850 = vadd.f32 %v3737, %v3849
    %v3851 = vpop.f32.mrb[0].mxu0
    %v3852 = vadd.f32 %v3739, %v3851
    %v3853 = vpop.f32.mrb[0].mxu0
    %v3854 = vadd.f32 %v3741, %v3853
    %v3855 = vpop.f32.mrb[0].mxu0
    %v3856 = vadd.f32 %v3743, %v3855
    %3857 = vmatprep.mubr.bf16.mxu0 %v890
    %3858 = vmatmul.mubr.bf16.gmra.mrb[0].mxu0 %v889
    %v3859 = vpop.f32.mrb[0].mxu0
    %v3860 = vadd.f32 %v3747, %v3859
    %v3861 = vpop.f32.mrb[0].mxu0
    %v3862 = vadd.f32 %v3749, %v3861
    %v3863 = vpop.f32.mrb[0].mxu0
    %v3864 = vadd.f32 %v3751, %v3863
    %v3865 = vpop.f32.mrb[0].mxu0
    %v3866 = vadd.f32 %v3753, %v3865
    %3867 = vdwg.mxu0
    %3868 = vmatprep.subr.bf16.mxu0 %v2553
    %3869 = vmatpush1.bf16.msra.mxu0 %v2552
    %3870 = vmatprep.subr.bf16.mxu0 %v2561
    %3871 = vmatpush1.bf16.msra.mxu0 %v2560
    %3872 = vmatprep.subr.bf16.mxu0 %v2569
    %3873 = vmatpush1.bf16.msra.mxu0 %v2568
    %3874 = vmatprep.subr.bf16.mxu0 %v2577
    %3875 = vmatpush1.bf16.msra.mxu0 %v2576
    %3876 = vmatprep.subr.bf16.mxu0 %v2585
    %3877 = vmatpush1.bf16.msra.mxu0 %v2584
    %3878 = vmatprep.subr.bf16.mxu0 %v2593
    %3879 = vmatpush1.bf16.msra.mxu0 %v2592
    %3880 = vmatprep.subr.bf16.mxu0 %v2601
    %3881 = vmatpush1.bf16.msra.mxu0 %v2600
    %3882 = vmatprep.subr.bf16.mxu0 %v2609
    %3883 = vmatpush1.bf16.msra.mxu0 %v2608
    %3884 = vmatprep.subr.bf16.mxu0 %v2617
    %3885 = vmatpush1.bf16.msra.mxu0 %v2616
    %3886 = vmatprep.subr.bf16.mxu0 %v2625
    %3887 = vmatpush1.bf16.msra.mxu0 %v2624
    %3888 = vmatprep.subr.bf16.mxu0 %v2633
    %3889 = vmatpush1.bf16.msra.mxu0 %v2632
    %3890 = vmatprep.subr.bf16.mxu0 %v2641
    %3891 = vmatpush1.bf16.msra.mxu0 %v2640
    %3892 = vmatprep.subr.bf16.mxu0 %v2649
    %3893 = vmatpush1.bf16.msra.mxu0 %v2648
    %3894 = vmatprep.subr.bf16.mxu0 %v2657
    %3895 = vmatpush1.bf16.msra.mxu0 %v2656
    %3896 = vmatprep.subr.bf16.mxu0 %v2665
    %3897 = vmatpush1.bf16.msra.mxu0 %v2664
    %3898 = vmatprep.subr.bf16.mxu0 %v2673
    %3899 = vmatpush1.bf16.msra.mxu0 %v2672
    %3900 = vmatprep.mubr.bf16.mxu0 %v843
    %3901 = vmatmul.mubr.bf16.gmra.mrb[0].mxu0 %v842
    %v3902 = vpop.f32.mrb[0].mxu0
    %v3903 = vadd.f32 %v3790, %v3902
    %v3904 = vpop.f32.mrb[0].mxu0
    %v3905 = vadd.f32 %v3792, %v3904
    %v3906 = vpop.f32.mrb[0].mxu0
    %v3907 = vadd.f32 %v3794, %v3906
    %v3908 = vpop.f32.mrb[0].mxu0
    %v3909 = vadd.f32 %v3796, %v3908
    %3910 = vmatprep.mubr.bf16.mxu0 %v850
    %3911 = vmatmul.mubr.bf16.gmra.mrb[0].mxu0 %v849
    %v3912 = vpop.f32.mrb[0].mxu0
    %v3913 = vadd.f32 %v3800, %v3912
    %v3914 = vpop.f32.mrb[0].mxu0
    %v3915 = vadd.f32 %v3802, %v3914
    %v3916 = vpop.f32.mrb[0].mxu0
    %v3917 = vadd.f32 %v3804, %v3916
    %v3918 = vpop.f32.mrb[0].mxu0
    %v3919 = vadd.f32 %v3806, %v3918
    %3920 = vmatprep.mubr.bf16.mxu0 %v857
    %3921 = vmatmul.mubr.bf16.gmra.mrb[0].mxu0 %v856
    %v3922 = vpop.f32.mrb[0].mxu0
    %v3923 = vadd.f32 %v3810, %v3922
    %v3924 = vpop.f32.mrb[0].mxu0
    %v3925 = vadd.f32 %v3812, %v3924
    %v3926 = vpop.f32.mrb[0].mxu0
    %v3927 = vadd.f32 %v3814, %v3926
    %v3928 = vpop.f32.mrb[0].mxu0
    %v3929 = vadd.f32 %v3816, %v3928
    %3930 = vmatprep.mubr.bf16.mxu0 %v864
    %3931 = vmatmul.mubr.bf16.gmra.mrb[0].mxu0 %v863
    %v3932 = vpop.f32.mrb[0].mxu0
    %v3933 = vadd.f32 %v3820, %v3932
    %v3934 = vpop.f32.mrb[0].mxu0
    %v3935 = vadd.f32 %v3822, %v3934
    %v3936 = vpop.f32.mrb[0].mxu0
    %v3937 = vadd.f32 %v3824, %v3936
    %v3938 = vpop.f32.mrb[0].mxu0
    %v3939 = vadd.f32 %v3826, %v3938
    %3940 = vmatprep.mubr.bf16.mxu0 %v871
    %3941 = vmatmul.mubr.bf16.gmra.mrb[0].mxu0 %v870
    %v3942 = vpop.f32.mrb[0].mxu0
    %v3943 = vadd.f32 %v3830, %v3942
    %v3944 = vpop.f32.mrb[0].mxu0
    %v3945 = vadd.f32 %v3832, %v3944
    %v3946 = vpop.f32.mrb[0].mxu0
    %v3947 = vadd.f32 %v3834, %v3946
    %v3948 = vpop.f32.mrb[0].mxu0
    %v3949 = vadd.f32 %v3836, %v3948
    %3950 = vmatprep.mubr.bf16.mxu0 %v878
    %3951 = vmatmul.mubr.bf16.gmra.mrb[0].mxu0 %v877
    %v3952 = vpop.f32.mrb[0].mxu0
    %v3953 = vadd.f32 %v3840, %v3952
    %v3954 = vpop.f32.mrb[0].mxu0
    %v3955 = vadd.f32 %v3842, %v3954
    %v3956 = vpop.f32.mrb[0].mxu0
    %v3957 = vadd.f32 %v3844, %v3956
    %v3958 = vpop.f32.mrb[0].mxu0
    %v3959 = vadd.f32 %v3846, %v3958
    %3960 = vmatprep.mubr.bf16.mxu0 %v885
    %3961 = vmatmul.mubr.bf16.gmra.mrb[0].mxu0 %v884
    %v3962 = vpop.f32.mrb[0].mxu0
    %v3963 = vadd.f32 %v3850, %v3962
    %v3964 = vpop.f32.mrb[0].mxu0
    %v3965 = vadd.f32 %v3852, %v3964
    %v3966 = vpop.f32.mrb[0].mxu0
    %v3967 = vadd.f32 %v3854, %v3966
    %v3968 = vpop.f32.mrb[0].mxu0
    %v3969 = vadd.f32 %v3856, %v3968
    %3970 = vmatprep.mubr.bf16.mxu0 %v892
    %3971 = vmatmul.mubr.bf16.gmra.mrb[0].mxu0 %v891
    %v3972 = vpop.f32.mrb[0].mxu0
    %v3973 = vadd.f32 %v3860, %v3972
    %v3974 = vpop.f32.mrb[0].mxu0
    %v3975 = vadd.f32 %v3862, %v3974
    %v3976 = vpop.f32.mrb[0].mxu0
    %v3977 = vadd.f32 %v3864, %v3976
    %v3978 = vpop.f32.mrb[0].mxu0
    %v3979 = vadd.f32 %v3866, %v3978
    %3980 = vdwg.mxu0
    %3981 = vmatprep.subr.bf16.mxu0 %v2681
    %3982 = vmatpush1.bf16.msra.mxu0 %v2680
    %3983 = vmatprep.subr.bf16.mxu0 %v2689
    %3984 = vmatpush1.bf16.msra.mxu0 %v2688
    %3985 = vmatprep.subr.bf16.mxu0 %v2697
    %3986 = vmatpush1.bf16.msra.mxu0 %v2696
    %3987 = vmatprep.subr.bf16.mxu0 %v2705
    %3988 = vmatpush1.bf16.msra.mxu0 %v2704
    %3989 = vmatprep.subr.bf16.mxu0 %v2713
    %3990 = vmatpush1.bf16.msra.mxu0 %v2712
    %3991 = vmatprep.subr.bf16.mxu0 %v2721
    %3992 = vmatpush1.bf16.msra.mxu0 %v2720
    %3993 = vmatprep.subr.bf16.mxu0 %v2729
    %3994 = vmatpush1.bf16.msra.mxu0 %v2728
    %3995 = vmatprep.subr.bf16.mxu0 %v2737
    %3996 = vmatpush1.bf16.msra.mxu0 %v2736
    %3997 = vmatprep.subr.bf16.mxu0 0
    %3998 = vmatpush1.bf16.msra.mxu0 0
    %3999 = vmatprep.subr.bf16.mxu0 0
    %4000 = vmatpush1.bf16.msra.mxu0 0
    %4001 = vmatprep.subr.bf16.mxu0 0
    %4002 = vmatpush1.bf16.msra.mxu0 0
    %4003 = vmatprep.subr.bf16.mxu0 0
    %4004 = vmatpush1.bf16.msra.mxu0 0
    %4005 = vmatprep.subr.bf16.mxu0 0
    %4006 = vmatpush1.bf16.msra.mxu0 0
    %4007 = vmatprep.subr.bf16.mxu0 0
    %4008 = vmatpush1.bf16.msra.mxu0 0
    %4009 = vmatprep.subr.bf16.mxu0 0
    %4010 = vmatpush1.bf16.msra.mxu0 0
    %4011 = vmatprep.subr.bf16.mxu0 0
    %4012 = vmatpush1.bf16.msra.mxu0 0
    %4013 = vmatprep.mubr.bf16.mxu0 0
    %4014 = vmatmul.mubr.bf16.gmra.mrb[0].mxu0 %v844
    %v4015 = vpop.f32.mrb[0].mxu0
    %v4016 = vadd.f32 %v3903, %v4015
    %v4017 = vpop.f32.mrb[0].mxu0
    %v4018 = vadd.f32 %v3905, %v4017
    %v4019 = vpop.f32.mrb[0].mxu0
    %v4020 = vadd.f32 %v3907, %v4019
    %v4021 = vpop.f32.mrb[0].mxu0
    %v4022 = vadd.f32 %v3909, %v4021
    %4023 = vmatprep.mubr.bf16.mxu0 0
    %4024 = vmatmul.mubr.bf16.gmra.mrb[0].mxu0 %v851
    %v4025 = vpop.f32.mrb[0].mxu0
    %v4026 = vadd.f32 %v3913, %v4025
    %v4027 = vpop.f32.mrb[0].mxu0
    %v4028 = vadd.f32 %v3915, %v4027
    %v4029 = vpop.f32.mrb[0].mxu0
    %v4030 = vadd.f32 %v3917, %v4029
    %v4031 = vpop.f32.mrb[0].mxu0
    %v4032 = vadd.f32 %v3919, %v4031
    %4033 = vmatprep.mubr.bf16.mxu0 0
    %4034 = vmatmul.mubr.bf16.gmra.mrb[0].mxu0 %v858
    %v4035 = vpop.f32.mrb[0].mxu0
    %v4036 = vadd.f32 %v3923, %v4035
    %v4037 = vpop.f32.mrb[0].mxu0
    %v4038 = vadd.f32 %v3925, %v4037
    %v4039 = vpop.f32.mrb[0].mxu0
    %v4040 = vadd.f32 %v3927, %v4039
    %v4041 = vpop.f32.mrb[0].mxu0
    %v4042 = vadd.f32 %v3929, %v4041
    %4043 = vmatprep.mubr.bf16.mxu0 0
    %4044 = vmatmul.mubr.bf16.gmra.mrb[0].mxu0 %v865
    %v4045 = vpop.f32.mrb[0].mxu0
    %v4046 = vadd.f32 %v3933, %v4045
    %v4047 = vpop.f32.mrb[0].mxu0
    %v4048 = vadd.f32 %v3935, %v4047
    %v4049 = vpop.f32.mrb[0].mxu0
    %v4050 = vadd.f32 %v3937, %v4049
    %v4051 = vpop.f32.mrb[0].mxu0
    %v4052 = vadd.f32 %v3939, %v4051
    %4053 = vmatprep.mubr.bf16.mxu0 0
    %4054 = vmatmul.mubr.bf16.gmra.mrb[0].mxu0 %v872
    %v4055 = vpop.f32.mrb[0].mxu0
    %v4056 = vadd.f32 %v3943, %v4055
    %v4057 = vpop.f32.mrb[0].mxu0
    %v4058 = vadd.f32 %v3945, %v4057
    %v4059 = vpop.f32.mrb[0].mxu0
    %v4060 = vadd.f32 %v3947, %v4059
    %v4061 = vpop.f32.mrb[0].mxu0
    %v4062 = vadd.f32 %v3949, %v4061
    %4063 = vmatprep.mubr.bf16.mxu0 0
    %4064 = vmatmul.mubr.bf16.gmra.mrb[0].mxu0 %v879
    %v4065 = vpop.f32.mrb[0].mxu0
    %v4066 = vadd.f32 %v3953, %v4065
    %v4067 = vpop.f32.mrb[0].mxu0
    %v4068 = vadd.f32 %v3955, %v4067
    %v4069 = vpop.f32.mrb[0].mxu0
    %v4070 = vadd.f32 %v3957, %v4069
    %v4071 = vpop.f32.mrb[0].mxu0
    %v4072 = vadd.f32 %v3959, %v4071
    %4073 = vmatprep.mubr.bf16.mxu0 0
    %4074 = vmatmul.mubr.bf16.gmra.mrb[0].mxu0 %v886
    %v4075 = vpop.f32.mrb[0].mxu0
    %v4076 = vadd.f32 %v3963, %v4075
    %v4077 = vpop.f32.mrb[0].mxu0
    %v4078 = vadd.f32 %v3965, %v4077
    %v4079 = vpop.f32.mrb[0].mxu0
    %v4080 = vadd.f32 %v3967, %v4079
    %v4081 = vpop.f32.mrb[0].mxu0
    %v4082 = vadd.f32 %v3969, %v4081
    %4083 = vmatprep.mubr.bf16.mxu0 0
    %4084 = vmatmul.mubr.bf16.gmra.mrb[0].mxu0 %v893
    %v4085 = vpop.f32.mrb[0].mxu0
    %v4086 = vadd.f32 %v3973, %v4085
    %v4087 = vpop.f32.mrb[0].mxu0
    %v4088 = vadd.f32 %v3975, %v4087
    %v4089 = vpop.f32.mrb[0].mxu0
    %v4090 = vadd.f32 %v3977, %v4089
    %v4091 = vpop.f32.mrb[0].mxu0
    %v4092 = vadd.f32 %v3979, %v4091
    %4093 = vdwg.mxu0
    %4094 = vmatprep.subr.bf16.mxu0 %v2299
    %4095 = vmatpush1.bf16.msra.mxu0 %v2298
    %4096 = vmatprep.subr.bf16.mxu0 %v2307
    %4097 = vmatpush1.bf16.msra.mxu0 %v2306
    %4098 = vmatprep.subr.bf16.mxu0 %v2315
    %4099 = vmatpush1.bf16.msra.mxu0 %v2314
    %4100 = vmatprep.subr.bf16.mxu0 %v2323
    %4101 = vmatpush1.bf16.msra.mxu0 %v2322
    %4102 = vmatprep.subr.bf16.mxu0 %v2331
    %4103 = vmatpush1.bf16.msra.mxu0 %v2330
    %4104 = vmatprep.subr.bf16.mxu0 %v2339
    %4105 = vmatpush1.bf16.msra.mxu0 %v2338
    %4106 = vmatprep.subr.bf16.mxu0 %v2347
    %4107 = vmatpush1.bf16.msra.mxu0 %v2346
    %4108 = vmatprep.subr.bf16.mxu0 %v2355
    %4109 = vmatpush1.bf16.msra.mxu0 %v2354
    %4110 = vmatprep.subr.bf16.mxu0 %v2363
    %4111 = vmatpush1.bf16.msra.mxu0 %v2362
    %4112 = vmatprep.subr.bf16.mxu0 %v2371
    %4113 = vmatpush1.bf16.msra.mxu0 %v2370
    %4114 = vmatprep.subr.bf16.mxu0 %v2379
    %4115 = vmatpush1.bf16.msra.mxu0 %v2378
    %4116 = vmatprep.subr.bf16.mxu0 %v2387
    %4117 = vmatpush1.bf16.msra.mxu0 %v2386
    %4118 = vmatprep.subr.bf16.mxu0 %v2395
    %4119 = vmatpush1.bf16.msra.mxu0 %v2394
    %4120 = vmatprep.subr.bf16.mxu0 %v2403
    %4121 = vmatpush1.bf16.msra.mxu0 %v2402
    %4122 = vmatprep.subr.bf16.mxu0 %v2411
    %4123 = vmatpush1.bf16.msra.mxu0 %v2410
    %4124 = vmatprep.subr.bf16.mxu0 %v2419
    %4125 = vmatpush1.bf16.msra.mxu0 %v2418
    %4126 = vmatprep.mubr.bf16.mxu0 %v839
    %4127 = vmatmul.mubr.bf16.gmra.mrb[0].mxu0 %v838
    %v4128 = vpop.f32.mrb[0].mxu0
    %v4129 = vadd.f32 %v641, %v4128
    %v4130 = vpop.f32.mrb[0].mxu0
    %v4131 = vadd.f32 %v645, %v4130
    %v4132 = vpop.f32.mrb[0].mxu0
    %v4133 = vadd.f32 %v641, %v4132
    %v4134 = vpop.f32.mrb[0].mxu0
    %v4135 = vadd.f32 %v645, %v4134
    %4136 = vmatprep.mubr.bf16.mxu0 %v846
    %4137 = vmatmul.mubr.bf16.gmra.mrb[0].mxu0 %v845
    %v4138 = vpop.f32.mrb[0].mxu0
    %v4139 = vadd.f32 %v641, %v4138
    %v4140 = vpop.f32.mrb[0].mxu0
    %v4141 = vadd.f32 %v645, %v4140
    %v4142 = vpop.f32.mrb[0].mxu0
    %v4143 = vadd.f32 %v641, %v4142
    %v4144 = vpop.f32.mrb[0].mxu0
    %v4145 = vadd.f32 %v645, %v4144
    %4146 = vmatprep.mubr.bf16.mxu0 %v853
    %4147 = vmatmul.mubr.bf16.gmra.mrb[0].mxu0 %v852
    %v4148 = vpop.f32.mrb[0].mxu0
    %v4149 = vadd.f32 %v641, %v4148
    %v4150 = vpop.f32.mrb[0].mxu0
    %v4151 = vadd.f32 %v645, %v4150
    %v4152 = vpop.f32.mrb[0].mxu0
    %v4153 = vadd.f32 %v641, %v4152
    %v4154 = vpop.f32.mrb[0].mxu0
    %v4155 = vadd.f32 %v645, %v4154
    %4156 = vmatprep.mubr.bf16.mxu0 %v860
    %4157 = vmatmul.mubr.bf16.gmra.mrb[0].mxu0 %v859
    %v4158 = vpop.f32.mrb[0].mxu0
    %v4159 = vadd.f32 %v641, %v4158
    %v4160 = vpop.f32.mrb[0].mxu0
    %v4161 = vadd.f32 %v645, %v4160
    %v4162 = vpop.f32.mrb[0].mxu0
    %v4163 = vadd.f32 %v641, %v4162
    %v4164 = vpop.f32.mrb[0].mxu0
    %v4165 = vadd.f32 %v645, %v4164
    %4166 = vmatprep.mubr.bf16.mxu0 %v867
    %4167 = vmatmul.mubr.bf16.gmra.mrb[0].mxu0 %v866
    %v4168 = vpop.f32.mrb[0].mxu0
    %v4169 = vadd.f32 %v641, %v4168
    %v4170 = vpop.f32.mrb[0].mxu0
    %v4171 = vadd.f32 %v645, %v4170
    %v4172 = vpop.f32.mrb[0].mxu0
    %v4173 = vadd.f32 %v641, %v4172
    %v4174 = vpop.f32.mrb[0].mxu0
    %v4175 = vadd.f32 %v645, %v4174
    %4176 = vmatprep.mubr.bf16.mxu0 %v874
    %4177 = vmatmul.mubr.bf16.gmra.mrb[0].mxu0 %v873
    %v4178 = vpop.f32.mrb[0].mxu0
    %v4179 = vadd.f32 %v641, %v4178
    %v4180 = vpop.f32.mrb[0].mxu0
    %v4181 = vadd.f32 %v645, %v4180
    %v4182 = vpop.f32.mrb[0].mxu0
    %v4183 = vadd.f32 %v641, %v4182
    %v4184 = vpop.f32.mrb[0].mxu0
    %v4185 = vadd.f32 %v645, %v4184
    %4186 = vmatprep.mubr.bf16.mxu0 %v881
    %4187 = vmatmul.mubr.bf16.gmra.mrb[0].mxu0 %v880
    %v4188 = vpop.f32.mrb[0].mxu0
    %v4189 = vadd.f32 %v641, %v4188
    %v4190 = vpop.f32.mrb[0].mxu0
    %v4191 = vadd.f32 %v645, %v4190
    %v4192 = vpop.f32.mrb[0].mxu0
    %v4193 = vadd.f32 %v641, %v4192
    %v4194 = vpop.f32.mrb[0].mxu0
    %v4195 = vadd.f32 %v645, %v4194
    %4196 = vmatprep.mubr.bf16.mxu0 %v888
    %4197 = vmatmul.mubr.bf16.gmra.mrb[0].mxu0 %v887
    %v4198 = vpop.f32.mrb[0].mxu0
    %v4199 = vadd.f32 %v641, %v4198
    %v4200 = vpop.f32.mrb[0].mxu0
    %v4201 = vadd.f32 %v645, %v4200
    %v4202 = vpop.f32.mrb[0].mxu0
    %v4203 = vadd.f32 %v641, %v4202
    %v4204 = vpop.f32.mrb[0].mxu0
    %v4205 = vadd.f32 %v645, %v4204
    %4206 = vdwg.mxu0
    %4207 = vmatprep.subr.bf16.mxu0 %v2427
    %4208 = vmatpush1.bf16.msra.mxu0 %v2426
    %4209 = vmatprep.subr.bf16.mxu0 %v2435
    %4210 = vmatpush1.bf16.msra.mxu0 %v2434
    %4211 = vmatprep.subr.bf16.mxu0 %v2443
    %4212 = vmatpush1.bf16.msra.mxu0 %v2442
    %4213 = vmatprep.subr.bf16.mxu0 %v2451
    %4214 = vmatpush1.bf16.msra.mxu0 %v2450
    %4215 = vmatprep.subr.bf16.mxu0 %v2459
    %4216 = vmatpush1.bf16.msra.mxu0 %v2458
    %4217 = vmatprep.subr.bf16.mxu0 %v2467
    %4218 = vmatpush1.bf16.msra.mxu0 %v2466
    %4219 = vmatprep.subr.bf16.mxu0 %v2475
    %4220 = vmatpush1.bf16.msra.mxu0 %v2474
    %4221 = vmatprep.subr.bf16.mxu0 %v2483
    %4222 = vmatpush1.bf16.msra.mxu0 %v2482
    %4223 = vmatprep.subr.bf16.mxu0 %v2491
    %4224 = vmatpush1.bf16.msra.mxu0 %v2490
    %4225 = vmatprep.subr.bf16.mxu0 %v2499
    %4226 = vmatpush1.bf16.msra.mxu0 %v2498
    %4227 = vmatprep.subr.bf16.mxu0 %v2507
    %4228 = vmatpush1.bf16.msra.mxu0 %v2506
    %4229 = vmatprep.subr.bf16.mxu0 %v2515
    %4230 = vmatpush1.bf16.msra.mxu0 %v2514
    %4231 = vmatprep.subr.bf16.mxu0 %v2523
    %4232 = vmatpush1.bf16.msra.mxu0 %v2522
    %4233 = vmatprep.subr.bf16.mxu0 %v2531
    %4234 = vmatpush1.bf16.msra.mxu0 %v2530
    %4235 = vmatprep.subr.bf16.mxu0 %v2539
    %4236 = vmatpush1.bf16.msra.mxu0 %v2538
    %4237 = vmatprep.subr.bf16.mxu0 %v2547
    %4238 = vmatpush1.bf16.msra.mxu0 %v2546
    %4239 = vmatprep.mubr.bf16.mxu0 %v841
    %4240 = vmatmul.mubr.bf16.gmra.mrb[0].mxu0 %v840
    %v4241 = vpop.f32.mrb[0].mxu0
    %v4242 = vadd.f32 %v4129, %v4241
    %v4243 = vpop.f32.mrb[0].mxu0
    %v4244 = vadd.f32 %v4131, %v4243
    %v4245 = vpop.f32.mrb[0].mxu0
    %v4246 = vadd.f32 %v4133, %v4245
    %v4247 = vpop.f32.mrb[0].mxu0
    %v4248 = vadd.f32 %v4135, %v4247
    %4249 = vmatprep.mubr.bf16.mxu0 %v848
    %4250 = vmatmul.mubr.bf16.gmra.mrb[0].mxu0 %v847
    %v4251 = vpop.f32.mrb[0].mxu0
    %v4252 = vadd.f32 %v4139, %v4251
    %v4253 = vpop.f32.mrb[0].mxu0
    %v4254 = vadd.f32 %v4141, %v4253
    %v4255 = vpop.f32.mrb[0].mxu0
    %v4256 = vadd.f32 %v4143, %v4255
    %v4257 = vpop.f32.mrb[0].mxu0
    %v4258 = vadd.f32 %v4145, %v4257
    %4259 = vmatprep.mubr.bf16.mxu0 %v855
    %4260 = vmatmul.mubr.bf16.gmra.mrb[0].mxu0 %v854
    %v4261 = vpop.f32.mrb[0].mxu0
    %v4262 = vadd.f32 %v4149, %v4261
    %v4263 = vpop.f32.mrb[0].mxu0
    %v4264 = vadd.f32 %v4151, %v4263
    %v4265 = vpop.f32.mrb[0].mxu0
    %v4266 = vadd.f32 %v4153, %v4265
    %v4267 = vpop.f32.mrb[0].mxu0
    %v4268 = vadd.f32 %v4155, %v4267
    %4269 = vmatprep.mubr.bf16.mxu0 %v862
    %4270 = vmatmul.mubr.bf16.gmra.mrb[0].mxu0 %v861
    %v4271 = vpop.f32.mrb[0].mxu0
    %v4272 = vadd.f32 %v4159, %v4271
    %v4273 = vpop.f32.mrb[0].mxu0
    %v4274 = vadd.f32 %v4161, %v4273
    %v4275 = vpop.f32.mrb[0].mxu0
    %v4276 = vadd.f32 %v4163, %v4275
    %v4277 = vpop.f32.mrb[0].mxu0
    %v4278 = vadd.f32 %v4165, %v4277
    %4279 = vmatprep.mubr.bf16.mxu0 %v869
    %4280 = vmatmul.mubr.bf16.gmra.mrb[0].mxu0 %v868
    %v4281 = vpop.f32.mrb[0].mxu0
    %v4282 = vadd.f32 %v4169, %v4281
    %v4283 = vpop.f32.mrb[0].mxu0
    %v4284 = vadd.f32 %v4171, %v4283
    %v4285 = vpop.f32.mrb[0].mxu0
    %v4286 = vadd.f32 %v4173, %v4285
    %v4287 = vpop.f32.mrb[0].mxu0
    %v4288 = vadd.f32 %v4175, %v4287
    %4289 = vmatprep.mubr.bf16.mxu0 %v876
    %4290 = vmatmul.mubr.bf16.gmra.mrb[0].mxu0 %v875
    %v4291 = vpop.f32.mrb[0].mxu0
    %v4292 = vadd.f32 %v4179, %v4291
    %v4293 = vpop.f32.mrb[0].mxu0
    %v4294 = vadd.f32 %v4181, %v4293
    %v4295 = vpop.f32.mrb[0].mxu0
    %v4296 = vadd.f32 %v4183, %v4295
    %v4297 = vpop.f32.mrb[0].mxu0
    %v4298 = vadd.f32 %v4185, %v4297
    %4299 = vmatprep.mubr.bf16.mxu0 %v883
    %4300 = vmatmul.mubr.bf16.gmra.mrb[0].mxu0 %v882
    %v4301 = vpop.f32.mrb[0].mxu0
    %v4302 = vadd.f32 %v4189, %v4301
    %v4303 = vpop.f32.mrb[0].mxu0
    %v4304 = vadd.f32 %v4191, %v4303
    %v4305 = vpop.f32.mrb[0].mxu0
    %v4306 = vadd.f32 %v4193, %v4305
    %v4307 = vpop.f32.mrb[0].mxu0
    %v4308 = vadd.f32 %v4195, %v4307
    %4309 = vmatprep.mubr.bf16.mxu0 %v890
    %4310 = vmatmul.mubr.bf16.gmra.mrb[0].mxu0 %v889
    %v4311 = vpop.f32.mrb[0].mxu0
    %v4312 = vadd.f32 %v4199, %v4311
    %v4313 = vpop.f32.mrb[0].mxu0
    %v4314 = vadd.f32 %v4201, %v4313
    %v4315 = vpop.f32.mrb[0].mxu0
    %v4316 = vadd.f32 %v4203, %v4315
    %v4317 = vpop.f32.mrb[0].mxu0
    %v4318 = vadd.f32 %v4205, %v4317
    %4319 = vdwg.mxu0
    %4320 = vmatprep.subr.bf16.mxu0 %v2555
    %4321 = vmatpush1.bf16.msra.mxu0 %v2554
    %4322 = vmatprep.subr.bf16.mxu0 %v2563
    %4323 = vmatpush1.bf16.msra.mxu0 %v2562
    %4324 = vmatprep.subr.bf16.mxu0 %v2571
    %4325 = vmatpush1.bf16.msra.mxu0 %v2570
    %4326 = vmatprep.subr.bf16.mxu0 %v2579
    %4327 = vmatpush1.bf16.msra.mxu0 %v2578
    %4328 = vmatprep.subr.bf16.mxu0 %v2587
    %4329 = vmatpush1.bf16.msra.mxu0 %v2586
    %4330 = vmatprep.subr.bf16.mxu0 %v2595
    %4331 = vmatpush1.bf16.msra.mxu0 %v2594
    %4332 = vmatprep.subr.bf16.mxu0 %v2603
    %4333 = vmatpush1.bf16.msra.mxu0 %v2602
    %4334 = vmatprep.subr.bf16.mxu0 %v2611
    %4335 = vmatpush1.bf16.msra.mxu0 %v2610
    %4336 = vmatprep.subr.bf16.mxu0 %v2619
    %4337 = vmatpush1.bf16.msra.mxu0 %v2618
    %4338 = vmatprep.subr.bf16.mxu0 %v2627
    %4339 = vmatpush1.bf16.msra.mxu0 %v2626
    %4340 = vmatprep.subr.bf16.mxu0 %v2635
    %4341 = vmatpush1.bf16.msra.mxu0 %v2634
    %4342 = vmatprep.subr.bf16.mxu0 %v2643
    %4343 = vmatpush1.bf16.msra.mxu0 %v2642
    %4344 = vmatprep.subr.bf16.mxu0 %v2651
    %4345 = vmatpush1.bf16.msra.mxu0 %v2650
    %4346 = vmatprep.subr.bf16.mxu0 %v2659
    %4347 = vmatpush1.bf16.msra.mxu0 %v2658
    %4348 = vmatprep.subr.bf16.mxu0 %v2667
    %4349 = vmatpush1.bf16.msra.mxu0 %v2666
    %4350 = vmatprep.subr.bf16.mxu0 %v2675
    %4351 = vmatpush1.bf16.msra.mxu0 %v2674
    %4352 = vmatprep.mubr.bf16.mxu0 %v843
    %4353 = vmatmul.mubr.bf16.gmra.mrb[0].mxu0 %v842
    %v4354 = vpop.f32.mrb[0].mxu0
    %v4355 = vadd.f32 %v4242, %v4354
    %v4356 = vpop.f32.mrb[0].mxu0
    %v4357 = vadd.f32 %v4244, %v4356
    %v4358 = vpop.f32.mrb[0].mxu0
    %v4359 = vadd.f32 %v4246, %v4358
    %v4360 = vpop.f32.mrb[0].mxu0
    %v4361 = vadd.f32 %v4248, %v4360
    %4362 = vmatprep.mubr.bf16.mxu0 %v850
    %4363 = vmatmul.mubr.bf16.gmra.mrb[0].mxu0 %v849
    %v4364 = vpop.f32.mrb[0].mxu0
    %v4365 = vadd.f32 %v4252, %v4364
    %v4366 = vpop.f32.mrb[0].mxu0
    %v4367 = vadd.f32 %v4254, %v4366
    %v4368 = vpop.f32.mrb[0].mxu0
    %v4369 = vadd.f32 %v4256, %v4368
    %v4370 = vpop.f32.mrb[0].mxu0
    %v4371 = vadd.f32 %v4258, %v4370
    %4372 = vmatprep.mubr.bf16.mxu0 %v857
    %4373 = vmatmul.mubr.bf16.gmra.mrb[0].mxu0 %v856
    %v4374 = vpop.f32.mrb[0].mxu0
    %v4375 = vadd.f32 %v4262, %v4374
    %v4376 = vpop.f32.mrb[0].mxu0
    %v4377 = vadd.f32 %v4264, %v4376
    %v4378 = vpop.f32.mrb[0].mxu0
    %v4379 = vadd.f32 %v4266, %v4378
    %v4380 = vpop.f32.mrb[0].mxu0
    %v4381 = vadd.f32 %v4268, %v4380
    %4382 = vmatprep.mubr.bf16.mxu0 %v864
    %4383 = vmatmul.mubr.bf16.gmra.mrb[0].mxu0 %v863
    %v4384 = vpop.f32.mrb[0].mxu0
    %v4385 = vadd.f32 %v4272, %v4384
    %v4386 = vpop.f32.mrb[0].mxu0
    %v4387 = vadd.f32 %v4274, %v4386
    %v4388 = vpop.f32.mrb[0].mxu0
    %v4389 = vadd.f32 %v4276, %v4388
    %v4390 = vpop.f32.mrb[0].mxu0
    %v4391 = vadd.f32 %v4278, %v4390
    %4392 = vmatprep.mubr.bf16.mxu0 %v871
    %4393 = vmatmul.mubr.bf16.gmra.mrb[0].mxu0 %v870
    %v4394 = vpop.f32.mrb[0].mxu0
    %v4395 = vadd.f32 %v4282, %v4394
    %v4396 = vpop.f32.mrb[0].mxu0
    %v4397 = vadd.f32 %v4284, %v4396
    %v4398 = vpop.f32.mrb[0].mxu0
    %v4399 = vadd.f32 %v4286, %v4398
    %v4400 = vpop.f32.mrb[0].mxu0
    %v4401 = vadd.f32 %v4288, %v4400
    %4402 = vmatprep.mubr.bf16.mxu0 %v878
    %4403 = vmatmul.mubr.bf16.gmra.mrb[0].mxu0 %v877
    %v4404 = vpop.f32.mrb[0].mxu0
    %v4405 = vadd.f32 %v4292, %v4404
    %v4406 = vpop.f32.mrb[0].mxu0
    %v4407 = vadd.f32 %v4294, %v4406
    %v4408 = vpop.f32.mrb[0].mxu0
    %v4409 = vadd.f32 %v4296, %v4408
    %v4410 = vpop.f32.mrb[0].mxu0
    %v4411 = vadd.f32 %v4298, %v4410
    %4412 = vmatprep.mubr.bf16.mxu0 %v885
    %4413 = vmatmul.mubr.bf16.gmra.mrb[0].mxu0 %v884
    %v4414 = vpop.f32.mrb[0].mxu0
    %v4415 = vadd.f32 %v4302, %v4414
    %v4416 = vpop.f32.mrb[0].mxu0
    %v4417 = vadd.f32 %v4304, %v4416
    %v4418 = vpop.f32.mrb[0].mxu0
    %v4419 = vadd.f32 %v4306, %v4418
    %v4420 = vpop.f32.mrb[0].mxu0
    %v4421 = vadd.f32 %v4308, %v4420
    %4422 = vmatprep.mubr.bf16.mxu0 %v892
    %4423 = vmatmul.mubr.bf16.gmra.mrb[0].mxu0 %v891
    %v4424 = vpop.f32.mrb[0].mxu0
    %v4425 = vadd.f32 %v4312, %v4424
    %v4426 = vpop.f32.mrb[0].mxu0
    %v4427 = vadd.f32 %v4314, %v4426
    %v4428 = vpop.f32.mrb[0].mxu0
    %v4429 = vadd.f32 %v4316, %v4428
    %v4430 = vpop.f32.mrb[0].mxu0
    %v4431 = vadd.f32 %v4318, %v4430
    %4432 = vdwg.mxu0
    %4433 = vmatprep.subr.bf16.mxu0 %v2683
    %4434 = vmatpush1.bf16.msra.mxu0 %v2682
    %4435 = vmatprep.subr.bf16.mxu0 %v2691
    %4436 = vmatpush1.bf16.msra.mxu0 %v2690
    %4437 = vmatprep.subr.bf16.mxu0 %v2699
    %4438 = vmatpush1.bf16.msra.mxu0 %v2698
    %4439 = vmatprep.subr.bf16.mxu0 %v2707
    %4440 = vmatpush1.bf16.msra.mxu0 %v2706
    %4441 = vmatprep.subr.bf16.mxu0 %v2715
    %4442 = vmatpush1.bf16.msra.mxu0 %v2714
    %4443 = vmatprep.subr.bf16.mxu0 %v2723
    %4444 = vmatpush1.bf16.msra.mxu0 %v2722
    %4445 = vmatprep.subr.bf16.mxu0 %v2731
    %4446 = vmatpush1.bf16.msra.mxu0 %v2730
    %4447 = vmatprep.subr.bf16.mxu0 %v2739
    %4448 = vmatpush1.bf16.msra.mxu0 %v2738
    %4449 = vmatprep.subr.bf16.mxu0 0
    %4450 = vmatpush1.bf16.msra.mxu0 0
    %4451 = vmatprep.subr.bf16.mxu0 0
    %4452 = vmatpush1.bf16.msra.mxu0 0
    %4453 = vmatprep.subr.bf16.mxu0 0
    %4454 = vmatpush1.bf16.msra.mxu0 0
    %4455 = vmatprep.subr.bf16.mxu0 0
    %4456 = vmatpush1.bf16.msra.mxu0 0
    %4457 = vmatprep.subr.bf16.mxu0 0
    %4458 = vmatpush1.bf16.msra.mxu0 0
    %4459 = vmatprep.subr.bf16.mxu0 0
    %4460 = vmatpush1.bf16.msra.mxu0 0
    %4461 = vmatprep.subr.bf16.mxu0 0
    %4462 = vmatpush1.bf16.msra.mxu0 0
    %4463 = vmatprep.subr.bf16.mxu0 0
    %4464 = vmatpush1.bf16.msra.mxu0 0
    %4465 = vmatprep.mubr.bf16.mxu0 0
    %4466 = vmatmul.mubr.bf16.gmra.mrb[0].mxu0 %v844
    %v4467 = vpop.f32.mrb[0].mxu0
    %v4468 = vadd.f32 %v4355, %v4467
    %v4469 = vpop.f32.mrb[0].mxu0
    %v4470 = vadd.f32 %v4357, %v4469
    %v4471 = vpop.f32.mrb[0].mxu0
    %v4472 = vadd.f32 %v4359, %v4471
    %v4473 = vpop.f32.mrb[0].mxu0
    %v4474 = vadd.f32 %v4361, %v4473
    %4475 = vmatprep.mubr.bf16.mxu0 0
    %4476 = vmatmul.mubr.bf16.gmra.mrb[0].mxu0 %v851
    %v4477 = vpop.f32.mrb[0].mxu0
    %v4478 = vadd.f32 %v4365, %v4477
    %v4479 = vpop.f32.mrb[0].mxu0
    %v4480 = vadd.f32 %v4367, %v4479
    %v4481 = vpop.f32.mrb[0].mxu0
    %v4482 = vadd.f32 %v4369, %v4481
    %v4483 = vpop.f32.mrb[0].mxu0
    %v4484 = vadd.f32 %v4371, %v4483
    %4485 = vmatprep.mubr.bf16.mxu0 0
    %4486 = vmatmul.mubr.bf16.gmra.mrb[0].mxu0 %v858
    %v4487 = vpop.f32.mrb[0].mxu0
    %v4488 = vadd.f32 %v4375, %v4487
    %v4489 = vpop.f32.mrb[0].mxu0
    %v4490 = vadd.f32 %v4377, %v4489
    %v4491 = vpop.f32.mrb[0].mxu0
    %v4492 = vadd.f32 %v4379, %v4491
    %v4493 = vpop.f32.mrb[0].mxu0
    %v4494 = vadd.f32 %v4381, %v4493
    %4495 = vmatprep.mubr.bf16.mxu0 0
    %4496 = vmatmul.mubr.bf16.gmra.mrb[0].mxu0 %v865
    %v4497 = vpop.f32.mrb[0].mxu0
    %v4498 = vadd.f32 %v4385, %v4497
    %v4499 = vpop.f32.mrb[0].mxu0
    %v4500 = vadd.f32 %v4387, %v4499
    %v4501 = vpop.f32.mrb[0].mxu0
    %v4502 = vadd.f32 %v4389, %v4501
    %v4503 = vpop.f32.mrb[0].mxu0
    %v4504 = vadd.f32 %v4391, %v4503
    %4505 = vmatprep.mubr.bf16.mxu0 0
    %4506 = vmatmul.mubr.bf16.gmra.mrb[0].mxu0 %v872
    %v4507 = vpop.f32.mrb[0].mxu0
    %v4508 = vadd.f32 %v4395, %v4507
    %v4509 = vpop.f32.mrb[0].mxu0
    %v4510 = vadd.f32 %v4397, %v4509
    %v4511 = vpop.f32.mrb[0].mxu0
    %v4512 = vadd.f32 %v4399, %v4511
    %v4513 = vpop.f32.mrb[0].mxu0
    %v4514 = vadd.f32 %v4401, %v4513
    %4515 = vmatprep.mubr.bf16.mxu0 0
    %4516 = vmatmul.mubr.bf16.gmra.mrb[0].mxu0 %v879
    %v4517 = vpop.f32.mrb[0].mxu0
    %v4518 = vadd.f32 %v4405, %v4517
    %v4519 = vpop.f32.mrb[0].mxu0
    %v4520 = vadd.f32 %v4407, %v4519
    %v4521 = vpop.f32.mrb[0].mxu0
    %v4522 = vadd.f32 %v4409, %v4521
    %v4523 = vpop.f32.mrb[0].mxu0
    %v4524 = vadd.f32 %v4411, %v4523
    %4525 = vmatprep.mubr.bf16.mxu0 0
    %4526 = vmatmul.mubr.bf16.gmra.mrb[0].mxu0 %v886
    %v4527 = vpop.f32.mrb[0].mxu0
    %v4528 = vadd.f32 %v4415, %v4527
    %v4529 = vpop.f32.mrb[0].mxu0
    %v4530 = vadd.f32 %v4417, %v4529
    %v4531 = vpop.f32.mrb[0].mxu0
    %v4532 = vadd.f32 %v4419, %v4531
    %v4533 = vpop.f32.mrb[0].mxu0
    %v4534 = vadd.f32 %v4421, %v4533
    %4535 = vmatprep.mubr.bf16.mxu0 0
    %4536 = vmatmul.mubr.bf16.gmra.mrb[0].mxu0 %v893
    %v4537 = vpop.f32.mrb[0].mxu0
    %v4538 = vadd.f32 %v4425, %v4537
    %v4539 = vpop.f32.mrb[0].mxu0
    %v4540 = vadd.f32 %v4427, %v4539
    %v4541 = vpop.f32.mrb[0].mxu0
    %v4542 = vadd.f32 %v4429, %v4541
    %v4543 = vpop.f32.mrb[0].mxu0
    %v4544 = vadd.f32 %v4431, %v4543
    %4545 = vdwg.mxu0
    %4546 = vmatprep.subr.bf16.mxu0 %v2301
    %4547 = vmatpush1.bf16.msra.mxu0 %v2300
    %4548 = vmatprep.subr.bf16.mxu0 %v2309
    %4549 = vmatpush1.bf16.msra.mxu0 %v2308
    %4550 = vmatprep.subr.bf16.mxu0 %v2317
    %4551 = vmatpush1.bf16.msra.mxu0 %v2316
    %4552 = vmatprep.subr.bf16.mxu0 %v2325
    %4553 = vmatpush1.bf16.msra.mxu0 %v2324
    %4554 = vmatprep.subr.bf16.mxu0 %v2333
    %4555 = vmatpush1.bf16.msra.mxu0 %v2332
    %4556 = vmatprep.subr.bf16.mxu0 %v2341
    %4557 = vmatpush1.bf16.msra.mxu0 %v2340
    %4558 = vmatprep.subr.bf16.mxu0 %v2349
    %4559 = vmatpush1.bf16.msra.mxu0 %v2348
    %4560 = vmatprep.subr.bf16.mxu0 %v2357
    %4561 = vmatpush1.bf16.msra.mxu0 %v2356
    %4562 = vmatprep.subr.bf16.mxu0 %v2365
    %4563 = vmatpush1.bf16.msra.mxu0 %v2364
    %4564 = vmatprep.subr.bf16.mxu0 %v2373
    %4565 = vmatpush1.bf16.msra.mxu0 %v2372
    %4566 = vmatprep.subr.bf16.mxu0 %v2381
    %4567 = vmatpush1.bf16.msra.mxu0 %v2380
    %4568 = vmatprep.subr.bf16.mxu0 %v2389
    %4569 = vmatpush1.bf16.msra.mxu0 %v2388
    %4570 = vmatprep.subr.bf16.mxu0 %v2397
    %4571 = vmatpush1.bf16.msra.mxu0 %v2396
    %4572 = vmatprep.subr.bf16.mxu0 %v2405
    %4573 = vmatpush1.bf16.msra.mxu0 %v2404
    %4574 = vmatprep.subr.bf16.mxu0 %v2413
    %4575 = vmatpush1.bf16.msra.mxu0 %v2412
    %4576 = vmatprep.subr.bf16.mxu0 %v2421
    %4577 = vmatpush1.bf16.msra.mxu0 %v2420
    %4578 = vmatprep.mubr.bf16.mxu0 %v839
    %4579 = vmatmul.mubr.bf16.gmra.mrb[0].mxu0 %v838
    %v4580 = vpop.f32.mrb[0].mxu0
    %v4581 = vadd.f32 %v649, %v4580
    %v4582 = vpop.f32.mrb[0].mxu0
    %v4583 = vadd.f32 %v653, %v4582
    %v4584 = vpop.f32.mrb[0].mxu0
    %v4585 = vadd.f32 %v649, %v4584
    %v4586 = vpop.f32.mrb[0].mxu0
    %v4587 = vadd.f32 %v653, %v4586
    %4588 = vmatprep.mubr.bf16.mxu0 %v846
    %4589 = vmatmul.mubr.bf16.gmra.mrb[0].mxu0 %v845
    %v4590 = vpop.f32.mrb[0].mxu0
    %v4591 = vadd.f32 %v649, %v4590
    %v4592 = vpop.f32.mrb[0].mxu0
    %v4593 = vadd.f32 %v653, %v4592
    %v4594 = vpop.f32.mrb[0].mxu0
    %v4595 = vadd.f32 %v649, %v4594
    %v4596 = vpop.f32.mrb[0].mxu0
    %v4597 = vadd.f32 %v653, %v4596
    %4598 = vmatprep.mubr.bf16.mxu0 %v853
    %4599 = vmatmul.mubr.bf16.gmra.mrb[0].mxu0 %v852
    %v4600 = vpop.f32.mrb[0].mxu0
    %v4601 = vadd.f32 %v649, %v4600
    %v4602 = vpop.f32.mrb[0].mxu0
    %v4603 = vadd.f32 %v653, %v4602
    %v4604 = vpop.f32.mrb[0].mxu0
    %v4605 = vadd.f32 %v649, %v4604
    %v4606 = vpop.f32.mrb[0].mxu0
    %v4607 = vadd.f32 %v653, %v4606
    %4608 = vmatprep.mubr.bf16.mxu0 %v860
    %4609 = vmatmul.mubr.bf16.gmra.mrb[0].mxu0 %v859
    %v4610 = vpop.f32.mrb[0].mxu0
    %v4611 = vadd.f32 %v649, %v4610
    %v4612 = vpop.f32.mrb[0].mxu0
    %v4613 = vadd.f32 %v653, %v4612
    %v4614 = vpop.f32.mrb[0].mxu0
    %v4615 = vadd.f32 %v649, %v4614
    %v4616 = vpop.f32.mrb[0].mxu0
    %v4617 = vadd.f32 %v653, %v4616
    %4618 = vmatprep.mubr.bf16.mxu0 %v867
    %4619 = vmatmul.mubr.bf16.gmra.mrb[0].mxu0 %v866
    %v4620 = vpop.f32.mrb[0].mxu0
    %v4621 = vadd.f32 %v649, %v4620
    %v4622 = vpop.f32.mrb[0].mxu0
    %v4623 = vadd.f32 %v653, %v4622
    %v4624 = vpop.f32.mrb[0].mxu0
    %v4625 = vadd.f32 %v649, %v4624
    %v4626 = vpop.f32.mrb[0].mxu0
    %v4627 = vadd.f32 %v653, %v4626
    %4628 = vmatprep.mubr.bf16.mxu0 %v874
    %4629 = vmatmul.mubr.bf16.gmra.mrb[0].mxu0 %v873
    %v4630 = vpop.f32.mrb[0].mxu0
    %v4631 = vadd.f32 %v649, %v4630
    %v4632 = vpop.f32.mrb[0].mxu0
    %v4633 = vadd.f32 %v653, %v4632
    %v4634 = vpop.f32.mrb[0].mxu0
    %v4635 = vadd.f32 %v649, %v4634
    %v4636 = vpop.f32.mrb[0].mxu0
    %v4637 = vadd.f32 %v653, %v4636
    %4638 = vmatprep.mubr.bf16.mxu0 %v881
    %4639 = vmatmul.mubr.bf16.gmra.mrb[0].mxu0 %v880
    %v4640 = vpop.f32.mrb[0].mxu0
    %v4641 = vadd.f32 %v649, %v4640
    %v4642 = vpop.f32.mrb[0].mxu0
    %v4643 = vadd.f32 %v653, %v4642
    %v4644 = vpop.f32.mrb[0].mxu0
    %v4645 = vadd.f32 %v649, %v4644
    %v4646 = vpop.f32.mrb[0].mxu0
    %v4647 = vadd.f32 %v653, %v4646
    %4648 = vmatprep.mubr.bf16.mxu0 %v888
    %4649 = vmatmul.mubr.bf16.gmra.mrb[0].mxu0 %v887
    %v4650 = vpop.f32.mrb[0].mxu0
    %v4651 = vadd.f32 %v649, %v4650
    %v4652 = vpop.f32.mrb[0].mxu0
    %v4653 = vadd.f32 %v653, %v4652
    %v4654 = vpop.f32.mrb[0].mxu0
    %v4655 = vadd.f32 %v649, %v4654
    %v4656 = vpop.f32.mrb[0].mxu0
    %v4657 = vadd.f32 %v653, %v4656
    %4658 = vdwg.mxu0
    %4659 = vmatprep.subr.bf16.mxu0 %v2429
    %4660 = vmatpush1.bf16.msra.mxu0 %v2428
    %4661 = vmatprep.subr.bf16.mxu0 %v2437
    %4662 = vmatpush1.bf16.msra.mxu0 %v2436
    %4663 = vmatprep.subr.bf16.mxu0 %v2445
    %4664 = vmatpush1.bf16.msra.mxu0 %v2444
    %4665 = vmatprep.subr.bf16.mxu0 %v2453
    %4666 = vmatpush1.bf16.msra.mxu0 %v2452
    %4667 = vmatprep.subr.bf16.mxu0 %v2461
    %4668 = vmatpush1.bf16.msra.mxu0 %v2460
    %4669 = vmatprep.subr.bf16.mxu0 %v2469
    %4670 = vmatpush1.bf16.msra.mxu0 %v2468
    %4671 = vmatprep.subr.bf16.mxu0 %v2477
    %4672 = vmatpush1.bf16.msra.mxu0 %v2476
    %4673 = vmatprep.subr.bf16.mxu0 %v2485
    %4674 = vmatpush1.bf16.msra.mxu0 %v2484
    %4675 = vmatprep.subr.bf16.mxu0 %v2493
    %4676 = vmatpush1.bf16.msra.mxu0 %v2492
    %4677 = vmatprep.subr.bf16.mxu0 %v2501
    %4678 = vmatpush1.bf16.msra.mxu0 %v2500
    %4679 = vmatprep.subr.bf16.mxu0 %v2509
    %4680 = vmatpush1.bf16.msra.mxu0 %v2508
    %4681 = vmatprep.subr.bf16.mxu0 %v2517
    %4682 = vmatpush1.bf16.msra.mxu0 %v2516
    %4683 = vmatprep.subr.bf16.mxu0 %v2525
    %4684 = vmatpush1.bf16.msra.mxu0 %v2524
    %4685 = vmatprep.subr.bf16.mxu0 %v2533
    %4686 = vmatpush1.bf16.msra.mxu0 %v2532
    %4687 = vmatprep.subr.bf16.mxu0 %v2541
    %4688 = vmatpush1.bf16.msra.mxu0 %v2540
    %4689 = vmatprep.subr.bf16.mxu0 %v2549
    %4690 = vmatpush1.bf16.msra.mxu0 %v2548
    %4691 = vmatprep.mubr.bf16.mxu0 %v841
    %4692 = vmatmul.mubr.bf16.gmra.mrb[0].mxu0 %v840
    %v4693 = vpop.f32.mrb[0].mxu0
    %v4694 = vadd.f32 %v4581, %v4693
    %v4695 = vpop.f32.mrb[0].mxu0
    %v4696 = vadd.f32 %v4583, %v4695
    %v4697 = vpop.f32.mrb[0].mxu0
    %v4698 = vadd.f32 %v4585, %v4697
    %v4699 = vpop.f32.mrb[0].mxu0
    %v4700 = vadd.f32 %v4587, %v4699
    %4701 = vmatprep.mubr.bf16.mxu0 %v848
    %4702 = vmatmul.mubr.bf16.gmra.mrb[0].mxu0 %v847
    %v4703 = vpop.f32.mrb[0].mxu0
    %v4704 = vadd.f32 %v4591, %v4703
    %v4705 = vpop.f32.mrb[0].mxu0
    %v4706 = vadd.f32 %v4593, %v4705
    %v4707 = vpop.f32.mrb[0].mxu0
    %v4708 = vadd.f32 %v4595, %v4707
    %v4709 = vpop.f32.mrb[0].mxu0
    %v4710 = vadd.f32 %v4597, %v4709
    %4711 = vmatprep.mubr.bf16.mxu0 %v855
    %4712 = vmatmul.mubr.bf16.gmra.mrb[0].mxu0 %v854
    %v4713 = vpop.f32.mrb[0].mxu0
    %v4714 = vadd.f32 %v4601, %v4713
    %v4715 = vpop.f32.mrb[0].mxu0
    %v4716 = vadd.f32 %v4603, %v4715
    %v4717 = vpop.f32.mrb[0].mxu0
    %v4718 = vadd.f32 %v4605, %v4717
    %v4719 = vpop.f32.mrb[0].mxu0
    %v4720 = vadd.f32 %v4607, %v4719
    %4721 = vmatprep.mubr.bf16.mxu0 %v862
    %4722 = vmatmul.mubr.bf16.gmra.mrb[0].mxu0 %v861
    %v4723 = vpop.f32.mrb[0].mxu0
    %v4724 = vadd.f32 %v4611, %v4723
    %v4725 = vpop.f32.mrb[0].mxu0
    %v4726 = vadd.f32 %v4613, %v4725
    %v4727 = vpop.f32.mrb[0].mxu0
    %v4728 = vadd.f32 %v4615, %v4727
    %v4729 = vpop.f32.mrb[0].mxu0
    %v4730 = vadd.f32 %v4617, %v4729
    %4731 = vmatprep.mubr.bf16.mxu0 %v869
    %4732 = vmatmul.mubr.bf16.gmra.mrb[0].mxu0 %v868
    %v4733 = vpop.f32.mrb[0].mxu0
    %v4734 = vadd.f32 %v4621, %v4733
    %v4735 = vpop.f32.mrb[0].mxu0
    %v4736 = vadd.f32 %v4623, %v4735
    %v4737 = vpop.f32.mrb[0].mxu0
    %v4738 = vadd.f32 %v4625, %v4737
    %v4739 = vpop.f32.mrb[0].mxu0
    %v4740 = vadd.f32 %v4627, %v4739
    %4741 = vmatprep.mubr.bf16.mxu0 %v876
    %4742 = vmatmul.mubr.bf16.gmra.mrb[0].mxu0 %v875
    %v4743 = vpop.f32.mrb[0].mxu0
    %v4744 = vadd.f32 %v4631, %v4743
    %v4745 = vpop.f32.mrb[0].mxu0
    %v4746 = vadd.f32 %v4633, %v4745
    %v4747 = vpop.f32.mrb[0].mxu0
    %v4748 = vadd.f32 %v4635, %v4747
    %v4749 = vpop.f32.mrb[0].mxu0
    %v4750 = vadd.f32 %v4637, %v4749
    %4751 = vmatprep.mubr.bf16.mxu0 %v883
    %4752 = vmatmul.mubr.bf16.gmra.mrb[0].mxu0 %v882
    %v4753 = vpop.f32.mrb[0].mxu0
    %v4754 = vadd.f32 %v4641, %v4753
    %v4755 = vpop.f32.mrb[0].mxu0
    %v4756 = vadd.f32 %v4643, %v4755
    %v4757 = vpop.f32.mrb[0].mxu0
    %v4758 = vadd.f32 %v4645, %v4757
    %v4759 = vpop.f32.mrb[0].mxu0
    %v4760 = vadd.f32 %v4647, %v4759
    %4761 = vmatprep.mubr.bf16.mxu0 %v890
    %4762 = vmatmul.mubr.bf16.gmra.mrb[0].mxu0 %v889
    %v4763 = vpop.f32.mrb[0].mxu0
    %v4764 = vadd.f32 %v4651, %v4763
    %v4765 = vpop.f32.mrb[0].mxu0
    %v4766 = vadd.f32 %v4653, %v4765
    %v4767 = vpop.f32.mrb[0].mxu0
    %v4768 = vadd.f32 %v4655, %v4767
    %v4769 = vpop.f32.mrb[0].mxu0
    %v4770 = vadd.f32 %v4657, %v4769
    %4771 = vdwg.mxu0
    %4772 = vmatprep.subr.bf16.mxu0 %v2557
    %4773 = vmatpush1.bf16.msra.mxu0 %v2556
    %4774 = vmatprep.subr.bf16.mxu0 %v2565
    %4775 = vmatpush1.bf16.msra.mxu0 %v2564
    %4776 = vmatprep.subr.bf16.mxu0 %v2573
    %4777 = vmatpush1.bf16.msra.mxu0 %v2572
    %4778 = vmatprep.subr.bf16.mxu0 %v2581
    %4779 = vmatpush1.bf16.msra.mxu0 %v2580
    %4780 = vmatprep.subr.bf16.mxu0 %v2589
    %4781 = vmatpush1.bf16.msra.mxu0 %v2588
    %4782 = vmatprep.subr.bf16.mxu0 %v2597
    %4783 = vmatpush1.bf16.msra.mxu0 %v2596
    %4784 = vmatprep.subr.bf16.mxu0 %v2605
    %4785 = vmatpush1.bf16.msra.mxu0 %v2604
    %4786 = vmatprep.subr.bf16.mxu0 %v2613
    %4787 = vmatpush1.bf16.msra.mxu0 %v2612
    %4788 = vmatprep.subr.bf16.mxu0 %v2621
    %4789 = vmatpush1.bf16.msra.mxu0 %v2620
    %4790 = vmatprep.subr.bf16.mxu0 %v2629
    %4791 = vmatpush1.bf16.msra.mxu0 %v2628
    %4792 = vmatprep.subr.bf16.mxu0 %v2637
    %4793 = vmatpush1.bf16.msra.mxu0 %v2636
    %4794 = vmatprep.subr.bf16.mxu0 %v2645
    %4795 = vmatpush1.bf16.msra.mxu0 %v2644
    %4796 = vmatprep.subr.bf16.mxu0 %v2653
    %4797 = vmatpush1.bf16.msra.mxu0 %v2652
    %4798 = vmatprep.subr.bf16.mxu0 %v2661
    %4799 = vmatpush1.bf16.msra.mxu0 %v2660
    %4800 = vmatprep.subr.bf16.mxu0 %v2669
    %4801 = vmatpush1.bf16.msra.mxu0 %v2668
    %4802 = vmatprep.subr.bf16.mxu0 %v2677
    %4803 = vmatpush1.bf16.msra.mxu0 %v2676
    %4804 = vmatprep.mubr.bf16.mxu0 %v843
    %4805 = vmatmul.mubr.bf16.gmra.mrb[0].mxu0 %v842
    %v4806 = vpop.f32.mrb[0].mxu0
    %v4807 = vadd.f32 %v4694, %v4806
    %v4808 = vpop.f32.mrb[0].mxu0
    %v4809 = vadd.f32 %v4696, %v4808
    %v4810 = vpop.f32.mrb[0].mxu0
    %v4811 = vadd.f32 %v4698, %v4810
    %v4812 = vpop.f32.mrb[0].mxu0
    %v4813 = vadd.f32 %v4700, %v4812
    %4814 = vmatprep.mubr.bf16.mxu0 %v850
    %4815 = vmatmul.mubr.bf16.gmra.mrb[0].mxu0 %v849
    %v4816 = vpop.f32.mrb[0].mxu0
    %v4817 = vadd.f32 %v4704, %v4816
    %v4818 = vpop.f32.mrb[0].mxu0
    %v4819 = vadd.f32 %v4706, %v4818
    %v4820 = vpop.f32.mrb[0].mxu0
    %v4821 = vadd.f32 %v4708, %v4820
    %v4822 = vpop.f32.mrb[0].mxu0
    %v4823 = vadd.f32 %v4710, %v4822
    %4824 = vmatprep.mubr.bf16.mxu0 %v857
    %4825 = vmatmul.mubr.bf16.gmra.mrb[0].mxu0 %v856
    %v4826 = vpop.f32.mrb[0].mxu0
    %v4827 = vadd.f32 %v4714, %v4826
    %v4828 = vpop.f32.mrb[0].mxu0
    %v4829 = vadd.f32 %v4716, %v4828
    %v4830 = vpop.f32.mrb[0].mxu0
    %v4831 = vadd.f32 %v4718, %v4830
    %v4832 = vpop.f32.mrb[0].mxu0
    %v4833 = vadd.f32 %v4720, %v4832
    %4834 = vmatprep.mubr.bf16.mxu0 %v864
    %4835 = vmatmul.mubr.bf16.gmra.mrb[0].mxu0 %v863
    %v4836 = vpop.f32.mrb[0].mxu0
    %v4837 = vadd.f32 %v4724, %v4836
    %v4838 = vpop.f32.mrb[0].mxu0
    %v4839 = vadd.f32 %v4726, %v4838
    %v4840 = vpop.f32.mrb[0].mxu0
    %v4841 = vadd.f32 %v4728, %v4840
    %v4842 = vpop.f32.mrb[0].mxu0
    %v4843 = vadd.f32 %v4730, %v4842
    %4844 = vmatprep.mubr.bf16.mxu0 %v871
    %4845 = vmatmul.mubr.bf16.gmra.mrb[0].mxu0 %v870
    %v4846 = vpop.f32.mrb[0].mxu0
    %v4847 = vadd.f32 %v4734, %v4846
    %v4848 = vpop.f32.mrb[0].mxu0
    %v4849 = vadd.f32 %v4736, %v4848
    %v4850 = vpop.f32.mrb[0].mxu0
    %v4851 = vadd.f32 %v4738, %v4850
    %v4852 = vpop.f32.mrb[0].mxu0
    %v4853 = vadd.f32 %v4740, %v4852
    %4854 = vmatprep.mubr.bf16.mxu0 %v878
    %4855 = vmatmul.mubr.bf16.gmra.mrb[0].mxu0 %v877
    %v4856 = vpop.f32.mrb[0].mxu0
    %v4857 = vadd.f32 %v4744, %v4856
    %v4858 = vpop.f32.mrb[0].mxu0
    %v4859 = vadd.f32 %v4746, %v4858
    %v4860 = vpop.f32.mrb[0].mxu0
    %v4861 = vadd.f32 %v4748, %v4860
    %v4862 = vpop.f32.mrb[0].mxu0
    %v4863 = vadd.f32 %v4750, %v4862
    %4864 = vmatprep.mubr.bf16.mxu0 %v885
    %4865 = vmatmul.mubr.bf16.gmra.mrb[0].mxu0 %v884
    %v4866 = vpop.f32.mrb[0].mxu0
    %v4867 = vadd.f32 %v4754, %v4866
    %v4868 = vpop.f32.mrb[0].mxu0
    %v4869 = vadd.f32 %v4756, %v4868
    %v4870 = vpop.f32.mrb[0].mxu0
    %v4871 = vadd.f32 %v4758, %v4870
    %v4872 = vpop.f32.mrb[0].mxu0
    %v4873 = vadd.f32 %v4760, %v4872
    %4874 = vmatprep.mubr.bf16.mxu0 %v892
    %4875 = vmatmul.mubr.bf16.gmra.mrb[0].mxu0 %v891
    %v4876 = vpop.f32.mrb[0].mxu0
    %v4877 = vadd.f32 %v4764, %v4876
    %v4878 = vpop.f32.mrb[0].mxu0
    %v4879 = vadd.f32 %v4766, %v4878
    %v4880 = vpop.f32.mrb[0].mxu0
    %v4881 = vadd.f32 %v4768, %v4880
    %v4882 = vpop.f32.mrb[0].mxu0
    %v4883 = vadd.f32 %v4770, %v4882
    %4884 = vdwg.mxu0
    %4885 = vmatprep.subr.bf16.mxu0 %v2685
    %4886 = vmatpush1.bf16.msra.mxu0 %v2684
    %4887 = vmatprep.subr.bf16.mxu0 %v2693
    %4888 = vmatpush1.bf16.msra.mxu0 %v2692
    %4889 = vmatprep.subr.bf16.mxu0 %v2701
    %4890 = vmatpush1.bf16.msra.mxu0 %v2700
    %4891 = vmatprep.subr.bf16.mxu0 %v2709
    %4892 = vmatpush1.bf16.msra.mxu0 %v2708
    %4893 = vmatprep.subr.bf16.mxu0 %v2717
    %4894 = vmatpush1.bf16.msra.mxu0 %v2716
    %4895 = vmatprep.subr.bf16.mxu0 %v2725
    %4896 = vmatpush1.bf16.msra.mxu0 %v2724
    %4897 = vmatprep.subr.bf16.mxu0 %v2733
    %4898 = vmatpush1.bf16.msra.mxu0 %v2732
    %4899 = vmatprep.subr.bf16.mxu0 %v2741
    %4900 = vmatpush1.bf16.msra.mxu0 %v2740
    %4901 = vmatprep.subr.bf16.mxu0 0
    %4902 = vmatpush1.bf16.msra.mxu0 0
    %4903 = vmatprep.subr.bf16.mxu0 0
    %4904 = vmatpush1.bf16.msra.mxu0 0
    %4905 = vmatprep.subr.bf16.mxu0 0
    %4906 = vmatpush1.bf16.msra.mxu0 0
    %4907 = vmatprep.subr.bf16.mxu0 0
    %4908 = vmatpush1.bf16.msra.mxu0 0
    %4909 = vmatprep.subr.bf16.mxu0 0
    %4910 = vmatpush1.bf16.msra.mxu0 0
    %4911 = vmatprep.subr.bf16.mxu0 0
    %4912 = vmatpush1.bf16.msra.mxu0 0
    %4913 = vmatprep.subr.bf16.mxu0 0
    %4914 = vmatpush1.bf16.msra.mxu0 0
    %4915 = vmatprep.subr.bf16.mxu0 0
    %4916 = vmatpush1.bf16.msra.mxu0 0
    %4917 = vmatprep.mubr.bf16.mxu0 0
    %4918 = vmatmul.mubr.bf16.gmra.mrb[0].mxu0 %v844
    %v4919 = vpop.f32.mrb[0].mxu0
    %v4920 = vadd.f32 %v4807, %v4919
    %v4921 = vpop.f32.mrb[0].mxu0
    %v4922 = vadd.f32 %v4809, %v4921
    %v4923 = vpop.f32.mrb[0].mxu0
    %v4924 = vadd.f32 %v4811, %v4923
    %v4925 = vpop.f32.mrb[0].mxu0
    %v4926 = vadd.f32 %v4813, %v4925
    %4927 = vmatprep.mubr.bf16.mxu0 0
    %4928 = vmatmul.mubr.bf16.gmra.mrb[0].mxu0 %v851
    %v4929 = vpop.f32.mrb[0].mxu0
    %v4930 = vadd.f32 %v4817, %v4929
    %v4931 = vpop.f32.mrb[0].mxu0
    %v4932 = vadd.f32 %v4819, %v4931
    %v4933 = vpop.f32.mrb[0].mxu0
    %v4934 = vadd.f32 %v4821, %v4933
    %v4935 = vpop.f32.mrb[0].mxu0
    %v4936 = vadd.f32 %v4823, %v4935
    %4937 = vmatprep.mubr.bf16.mxu0 0
    %4938 = vmatmul.mubr.bf16.gmra.mrb[0].mxu0 %v858
    %v4939 = vpop.f32.mrb[0].mxu0
    %v4940 = vadd.f32 %v4827, %v4939
    %v4941 = vpop.f32.mrb[0].mxu0
    %v4942 = vadd.f32 %v4829, %v4941
    %v4943 = vpop.f32.mrb[0].mxu0
    %v4944 = vadd.f32 %v4831, %v4943
    %v4945 = vpop.f32.mrb[0].mxu0
    %v4946 = vadd.f32 %v4833, %v4945
    %4947 = vmatprep.mubr.bf16.mxu0 0
    %4948 = vmatmul.mubr.bf16.gmra.mrb[0].mxu0 %v865
    %v4949 = vpop.f32.mrb[0].mxu0
    %v4950 = vadd.f32 %v4837, %v4949
    %v4951 = vpop.f32.mrb[0].mxu0
    %v4952 = vadd.f32 %v4839, %v4951
    %v4953 = vpop.f32.mrb[0].mxu0
    %v4954 = vadd.f32 %v4841, %v4953
    %v4955 = vpop.f32.mrb[0].mxu0
    %v4956 = vadd.f32 %v4843, %v4955
    %4957 = vmatprep.mubr.bf16.mxu0 0
    %4958 = vmatmul.mubr.bf16.gmra.mrb[0].mxu0 %v872
    %v4959 = vpop.f32.mrb[0].mxu0
    %v4960 = vadd.f32 %v4847, %v4959
    %v4961 = vpop.f32.mrb[0].mxu0
    %v4962 = vadd.f32 %v4849, %v4961
    %v4963 = vpop.f32.mrb[0].mxu0
    %v4964 = vadd.f32 %v4851, %v4963
    %v4965 = vpop.f32.mrb[0].mxu0
    %v4966 = vadd.f32 %v4853, %v4965
    %4967 = vmatprep.mubr.bf16.mxu0 0
    %4968 = vmatmul.mubr.bf16.gmra.mrb[0].mxu0 %v879
    %v4969 = vpop.f32.mrb[0].mxu0
    %v4970 = vadd.f32 %v4857, %v4969
    %v4971 = vpop.f32.mrb[0].mxu0
    %v4972 = vadd.f32 %v4859, %v4971
    %v4973 = vpop.f32.mrb[0].mxu0
    %v4974 = vadd.f32 %v4861, %v4973
    %v4975 = vpop.f32.mrb[0].mxu0
    %v4976 = vadd.f32 %v4863, %v4975
    %4977 = vmatprep.mubr.bf16.mxu0 0
    %4978 = vmatmul.mubr.bf16.gmra.mrb[0].mxu0 %v886
    %v4979 = vpop.f32.mrb[0].mxu0
    %v4980 = vadd.f32 %v4867, %v4979
    %v4981 = vpop.f32.mrb[0].mxu0
    %v4982 = vadd.f32 %v4869, %v4981
    %v4983 = vpop.f32.mrb[0].mxu0
    %v4984 = vadd.f32 %v4871, %v4983
    %v4985 = vpop.f32.mrb[0].mxu0
    %v4986 = vadd.f32 %v4873, %v4985
    %4987 = vmatprep.mubr.bf16.mxu0 0
    %4988 = vmatmul.mubr.bf16.gmra.mrb[0].mxu0 %v893
    %v4989 = vpop.f32.mrb[0].mxu0
    %v4990 = vadd.f32 %v4877, %v4989
    %v4991 = vpop.f32.mrb[0].mxu0
    %v4992 = vadd.f32 %v4879, %v4991
    %v4993 = vpop.f32.mrb[0].mxu0
    %v4994 = vadd.f32 %v4881, %v4993
    %v4995 = vpop.f32.mrb[0].mxu0
    %v4996 = vadd.f32 %v4883, %v4995
    %4997 = vdwg.mxu0
    %v4998 = vmax.f32 %v3564, 0.0
    %v4999 = vmax.f32 %v3566, 0.0
    %v5000 = vmax.f32 %v4016, 0.0
    %v5001 = vmax.f32 %v4018, 0.0
    %v5002 = vmax.f32 %v4468, 0.0
    %v5003 = vmax.f32 %v4470, 0.0
    %v5004 = vmax.f32 %v4920, 0.0
    %v5005 = vmax.f32 %v4922, 0.0
    %v5006 = vmax.f32 %v3568, 0.0
    %v5007 = vmax.f32 %v3570, 0.0
    %v5008 = vmax.f32 %v4020, 0.0
    %v5009 = vmax.f32 %v4022, 0.0
    %v5010 = vmax.f32 %v4472, 0.0
    %v5011 = vmax.f32 %v4474, 0.0
    %v5012 = vmax.f32 %v4924, 0.0
    %v5013 = vmax.f32 %v4926, 0.0
    %v5014 = vmax.f32 %v3574, 0.0
    %v5015 = vmax.f32 %v3576, 0.0
    %v5016 = vmax.f32 %v4026, 0.0
    %v5017 = vmax.f32 %v4028, 0.0
    %v5018 = vmax.f32 %v4478, 0.0
    %v5019 = vmax.f32 %v4480, 0.0
    %v5020 = vmax.f32 %v4930, 0.0
    %v5021 = vmax.f32 %v4932, 0.0
    %v5022 = vmax.f32 %v3578, 0.0
    %v5023 = vmax.f32 %v3580, 0.0
    %v5024 = vmax.f32 %v4030, 0.0
    %v5025 = vmax.f32 %v4032, 0.0
    %v5026 = vmax.f32 %v4482, 0.0
    %v5027 = vmax.f32 %v4484, 0.0
    %v5028 = vmax.f32 %v4934, 0.0
    %v5029 = vmax.f32 %v4936, 0.0
    %v5030 = vmax.f32 %v3584, 0.0
    %v5031 = vmax.f32 %v3586, 0.0
    %v5032 = vmax.f32 %v4036, 0.0
    %v5033 = vmax.f32 %v4038, 0.0
    %v5034 = vmax.f32 %v4488, 0.0
    %v5035 = vmax.f32 %v4490, 0.0
    %v5036 = vmax.f32 %v4940, 0.0
    %v5037 = vmax.f32 %v4942, 0.0
    %v5038 = vmax.f32 %v3588, 0.0
    %v5039 = vmax.f32 %v3590, 0.0
    %v5040 = vmax.f32 %v4040, 0.0
    %v5041 = vmax.f32 %v4042, 0.0
    %v5042 = vmax.f32 %v4492, 0.0
    %v5043 = vmax.f32 %v4494, 0.0
    %v5044 = vmax.f32 %v4944, 0.0
    %v5045 = vmax.f32 %v4946, 0.0
    %v5046 = vmax.f32 %v3594, 0.0
    %v5047 = vmax.f32 %v3596, 0.0
    %v5048 = vmax.f32 %v4046, 0.0
    %v5049 = vmax.f32 %v4048, 0.0
    %v5050 = vmax.f32 %v4498, 0.0
    %v5051 = vmax.f32 %v4500, 0.0
    %v5052 = vmax.f32 %v4950, 0.0
    %v5053 = vmax.f32 %v4952, 0.0
    %v5054 = vmax.f32 %v3598, 0.0
    %v5055 = vmax.f32 %v3600, 0.0
    %v5056 = vmax.f32 %v4050, 0.0
    %v5057 = vmax.f32 %v4052, 0.0
    %v5058 = vmax.f32 %v4502, 0.0
    %v5059 = vmax.f32 %v4504, 0.0
    %v5060 = vmax.f32 %v4954, 0.0
    %v5061 = vmax.f32 %v4956, 0.0
    %v5062 = vmax.f32 %v3604, 0.0
    %v5063 = vmax.f32 %v3606, 0.0
    %v5064 = vmax.f32 %v4056, 0.0
    %v5065 = vmax.f32 %v4058, 0.0
    %v5066 = vmax.f32 %v4508, 0.0
    %v5067 = vmax.f32 %v4510, 0.0
    %v5068 = vmax.f32 %v4960, 0.0
    %v5069 = vmax.f32 %v4962, 0.0
    %v5070 = vmax.f32 %v3608, 0.0
    %v5071 = vmax.f32 %v3610, 0.0
    %v5072 = vmax.f32 %v4060, 0.0
    %v5073 = vmax.f32 %v4062, 0.0
    %v5074 = vmax.f32 %v4512, 0.0
    %v5075 = vmax.f32 %v4514, 0.0
    %v5076 = vmax.f32 %v4964, 0.0
    %v5077 = vmax.f32 %v4966, 0.0
    %v5078 = vmax.f32 %v3614, 0.0
    %v5079 = vmax.f32 %v3616, 0.0
    %v5080 = vmax.f32 %v4066, 0.0
    %v5081 = vmax.f32 %v4068, 0.0
    %v5082 = vmax.f32 %v4518, 0.0
    %v5083 = vmax.f32 %v4520, 0.0
    %v5084 = vmax.f32 %v4970, 0.0
    %v5085 = vmax.f32 %v4972, 0.0
    %v5086 = vmax.f32 %v3618, 0.0
    %v5087 = vmax.f32 %v3620, 0.0
    %v5088 = vmax.f32 %v4070, 0.0
    %v5089 = vmax.f32 %v4072, 0.0
    %v5090 = vmax.f32 %v4522, 0.0
    %v5091 = vmax.f32 %v4524, 0.0
    %v5092 = vmax.f32 %v4974, 0.0
    %v5093 = vmax.f32 %v4976, 0.0
    %v5094 = vmax.f32 %v3624, 0.0
    %v5095 = vmax.f32 %v3626, 0.0
    %v5096 = vmax.f32 %v4076, 0.0
    %v5097 = vmax.f32 %v4078, 0.0
    %v5098 = vmax.f32 %v4528, 0.0
    %v5099 = vmax.f32 %v4530, 0.0
    %v5100 = vmax.f32 %v4980, 0.0
    %v5101 = vmax.f32 %v4982, 0.0
    %v5102 = vmax.f32 %v3628, 0.0
    %v5103 = vmax.f32 %v3630, 0.0
    %v5104 = vmax.f32 %v4080, 0.0
    %v5105 = vmax.f32 %v4082, 0.0
    %v5106 = vmax.f32 %v4532, 0.0
    %v5107 = vmax.f32 %v4534, 0.0
    %v5108 = vmax.f32 %v4984, 0.0
    %v5109 = vmax.f32 %v4986, 0.0
    %v5110 = vmax.f32 %v3634, 0.0
    %v5111 = vmax.f32 %v3636, 0.0
    %v5112 = vmax.f32 %v4086, 0.0
    %v5113 = vmax.f32 %v4088, 0.0
    %v5114 = vmax.f32 %v4538, 0.0
    %v5115 = vmax.f32 %v4540, 0.0
    %v5116 = vmax.f32 %v4990, 0.0
    %v5117 = vmax.f32 %v4992, 0.0
    %v5118 = vmax.f32 %v3638, 0.0
    %v5119 = vmax.f32 %v3640, 0.0
    %v5120 = vmax.f32 %v4090, 0.0
    %v5121 = vmax.f32 %v4092, 0.0
    %v5122 = vmax.f32 %v4542, 0.0
    %v5123 = vmax.f32 %v4544, 0.0
    %v5124 = vmax.f32 %v4994, 0.0
    %v5125 = vmax.f32 %v4996, 0.0
    %v5126 = vpack.c.bf16 %v5006, %v4998
    %v5127 = vpack.c.bf16 %v5007, %v4999
    %v5128 = vpack.c.bf16 %v5008, %v5000
    %v5129 = vpack.c.bf16 %v5009, %v5001
    %v5130 = vpack.c.bf16 %v5010, %v5002
    %v5131 = vpack.c.bf16 %v5011, %v5003
    %v5132 = vpack.c.bf16 %v5012, %v5004
    %v5133 = vpack.c.bf16 %v5013, %v5005
    %v5134 = vpack.c.bf16 %v5022, %v5014
    %v5135 = vpack.c.bf16 %v5023, %v5015
    %v5136 = vpack.c.bf16 %v5024, %v5016
    %v5137 = vpack.c.bf16 %v5025, %v5017
    %v5138 = vpack.c.bf16 %v5026, %v5018
    %v5139 = vpack.c.bf16 %v5027, %v5019
    %v5140 = vpack.c.bf16 %v5028, %v5020
    %v5141 = vpack.c.bf16 %v5029, %v5021
    %v5142 = vpack.c.bf16 %v5038, %v5030
    %v5143 = vpack.c.bf16 %v5039, %v5031
    %v5144 = vpack.c.bf16 %v5040, %v5032
    %v5145 = vpack.c.bf16 %v5041, %v5033
    %v5146 = vpack.c.bf16 %v5042, %v5034
    %v5147 = vpack.c.bf16 %v5043, %v5035
    %v5148 = vpack.c.bf16 %v5044, %v5036
    %v5149 = vpack.c.bf16 %v5045, %v5037
    %v5150 = vpack.c.bf16 %v5054, %v5046
    %v5151 = vpack.c.bf16 %v5055, %v5047
    %v5152 = vpack.c.bf16 %v5056, %v5048
    %v5153 = vpack.c.bf16 %v5057, %v5049
    %v5154 = vpack.c.bf16 %v5058, %v5050
    %v5155 = vpack.c.bf16 %v5059, %v5051
    %v5156 = vpack.c.bf16 %v5060, %v5052
    %v5157 = vpack.c.bf16 %v5061, %v5053
    %v5158 = vpack.c.bf16 %v5070, %v5062
    %v5159 = vpack.c.bf16 %v5071, %v5063
    %v5160 = vpack.c.bf16 %v5072, %v5064
    %v5161 = vpack.c.bf16 %v5073, %v5065
    %v5162 = vpack.c.bf16 %v5074, %v5066
    %v5163 = vpack.c.bf16 %v5075, %v5067
    %v5164 = vpack.c.bf16 %v5076, %v5068
    %v5165 = vpack.c.bf16 %v5077, %v5069
    %v5166 = vpack.c.bf16 %v5086, %v5078
    %v5167 = vpack.c.bf16 %v5087, %v5079
    %v5168 = vpack.c.bf16 %v5088, %v5080
    %v5169 = vpack.c.bf16 %v5089, %v5081
    %v5170 = vpack.c.bf16 %v5090, %v5082
    %v5171 = vpack.c.bf16 %v5091, %v5083
    %v5172 = vpack.c.bf16 %v5092, %v5084
    %v5173 = vpack.c.bf16 %v5093, %v5085
    %v5174 = vpack.c.bf16 %v5102, %v5094
    %v5175 = vpack.c.bf16 %v5103, %v5095
    %v5176 = vpack.c.bf16 %v5104, %v5096
    %v5177 = vpack.c.bf16 %v5105, %v5097
    %v5178 = vpack.c.bf16 %v5106, %v5098
    %v5179 = vpack.c.bf16 %v5107, %v5099
    %v5180 = vpack.c.bf16 %v5108, %v5100
    %v5181 = vpack.c.bf16 %v5109, %v5101
    %v5182 = vpack.c.bf16 %v5118, %v5110
    %v5183 = vpack.c.bf16 %v5119, %v5111
    %v5184 = vpack.c.bf16 %v5120, %v5112
    %v5185 = vpack.c.bf16 %v5121, %v5113
    %v5186 = vpack.c.bf16 %v5122, %v5114
    %v5187 = vpack.c.bf16 %v5123, %v5115
    %v5188 = vpack.c.bf16 %v5124, %v5116
    %v5189 = vpack.c.bf16 %v5125, %v5117
    %v5190 = vld [vmem:[#allocation7] sm:$0xff]
    %v5191 = vld [vmem:[#allocation7 + $0x8] sm:$0xff]
    %v5192 = vld [vmem:[#allocation7 + $0x10] sm:$0xff]
    %v5193 = vld [vmem:[#allocation7 + $0x18] sm:$0xff]
    %v5194 = vld [vmem:[#allocation7 + $0x20] sm:$0xff]
    %v5195 = vld [vmem:[#allocation7 + $0x28] sm:$0xff]
    %v5196 = vld [vmem:[#allocation7 + $0x30] sm:$0xff]
    %v5197 = vld [vmem:[#allocation7 + $0x38] sm:$0xff]
    %v5198 = vld [vmem:[#allocation7 + $0x40] sm:$0xff]
    %v5199 = vld [vmem:[#allocation7 + $0x48] sm:$0xff]
    %v5200 = vld [vmem:[#allocation7 + $0x50] sm:$0xff]
    %v5201 = vld [vmem:[#allocation7 + $0x58] sm:$0xff]
    %v5202 = vld [vmem:[#allocation7 + $0x60] sm:$0xff]
    %v5203 = vld [vmem:[#allocation7 + $0x68] sm:$0xff]
    %v5204 = vld [vmem:[#allocation7 + $0x70] sm:$0xff]
    %v5205 = vld [vmem:[#allocation7 + $0x78] sm:$0xff]
    %v5206 = vld [vmem:[#allocation7 + $0x80] sm:$0xff]
    %v5207 = vld [vmem:[#allocation7 + $0x88] sm:$0xff]
    %v5208 = vld [vmem:[#allocation7 + $0x90] sm:$0xff]
    %v5209 = vld [vmem:[#allocation7 + $0x98] sm:$0xff]
    %v5210 = vld [vmem:[#allocation7 + $0xa0] sm:$0xff]
    %v5211 = vld [vmem:[#allocation7 + $0xa8] sm:$0xff]
    %v5212 = vld [vmem:[#allocation7 + $0xb0] sm:$0xff]
    %v5213 = vld [vmem:[#allocation7 + $0xb8] sm:$0xff]
    %v5214 = vld [vmem:[#allocation7 + $0xc0] sm:$0xff]
    %v5215 = vld [vmem:[#allocation7 + $0xc8] sm:$0xff]
    %v5216 = vld [vmem:[#allocation7 + $0xd0] sm:$0xff]
    %v5217 = vld [vmem:[#allocation7 + $0xd8] sm:$0xff]
    %v5218 = vld [vmem:[#allocation7 + $0xe0] sm:$0xff]
    %v5219 = vld [vmem:[#allocation7 + $0xe8] sm:$0xff]
    %v5220 = vld [vmem:[#allocation7 + $0xf0] sm:$0xff]
    %v5221 = vld [vmem:[#allocation7 + $0xf8] sm:$0xff]
    %v5222 = vld [vmem:[#allocation7 + $0x100] sm:$0xff]
    %v5223 = vld [vmem:[#allocation7 + $0x108] sm:$0xff]
    %v5224 = vld [vmem:[#allocation7 + $0x110] sm:$0xff]
    %v5225 = vld [vmem:[#allocation7 + $0x118] sm:$0xff]
    %v5226 = vld [vmem:[#allocation7 + $0x120] sm:$0xff]
    %v5227 = vld [vmem:[#allocation7 + $0x128] sm:$0xff]
    %v5228 = vld [vmem:[#allocation7 + $0x130] sm:$0xff]
    %v5229 = vld [vmem:[#allocation7 + $0x138] sm:$0xff]
    %v5230 = vld [vmem:[#allocation7 + $0x140] sm:$0xff]
    %v5231 = vld [vmem:[#allocation7 + $0x148] sm:$0xff]
    %v5232 = vld [vmem:[#allocation7 + $0x150] sm:$0xff]
    %v5233 = vld [vmem:[#allocation7 + $0x158] sm:$0xff]
    %v5234 = vld [vmem:[#allocation7 + $0x160] sm:$0xff]
    %v5235 = vld [vmem:[#allocation7 + $0x168] sm:$0xff]
    %v5236 = vld [vmem:[#allocation7 + $0x170] sm:$0xff]
    %v5237 = vld [vmem:[#allocation7 + $0x178] sm:$0xff]
    %v5238 = vld [vmem:[#allocation7 + $0x180] sm:$0xff]
    %v5239 = vld [vmem:[#allocation7 + $0x188] sm:$0xff]
    %v5240 = vld [vmem:[#allocation7 + $0x190] sm:$0xff]
    %v5241 = vld [vmem:[#allocation7 + $0x198] sm:$0xff]
    %v5242 = vld [vmem:[#allocation7 + $0x1a0] sm:$0xff]
    %v5243 = vld [vmem:[#allocation7 + $0x1a8] sm:$0xff]
    %v5244 = vld [vmem:[#allocation7 + $0x1b0] sm:$0xff]
    %v5245 = vld [vmem:[#allocation7 + $0x1b8] sm:$0xff]
    %v5246 = vld [vmem:[#allocation7 + $0x1c0] sm:$0xff]
    %v5247 = vld [vmem:[#allocation7 + $0x1c8] sm:$0xff]
    %v5248 = vld [vmem:[#allocation7 + $0x1d0] sm:$0xff]
    %v5249 = vld [vmem:[#allocation7 + $0x1d8] sm:$0xff]
    %v5250 = vld [vmem:[#allocation7 + $0x1e0] sm:$0xff]
    %v5251 = vld [vmem:[#allocation7 + $0x1e8] sm:$0xff]
    %v5252 = vld [vmem:[#allocation7 + $0x1f0] sm:$0xff]
    %v5253 = vld [vmem:[#allocation7 + $0x1f8] sm:$0xff]
    %v5254 = vld [vmem:[#allocation7 + $0x200] sm:$0xff]
    %v5255 = vld [vmem:[#allocation7 + $0x208] sm:$0xff]
    %v5256 = vld [vmem:[#allocation7 + $0x210] sm:$0xff]
    %v5257 = vld [vmem:[#allocation7 + $0x218] sm:$0xff]
    %v5258 = vld [vmem:[#allocation7 + $0x220] sm:$0xff]
    %v5259 = vld [vmem:[#allocation7 + $0x228] sm:$0xff]
    %v5260 = vld [vmem:[#allocation7 + $0x230] sm:$0xff]
    %v5261 = vld [vmem:[#allocation7 + $0x238] sm:$0xff]
    %v5262 = vld [vmem:[#allocation7 + $0x240] sm:$0xff]
    %v5263 = vld [vmem:[#allocation7 + $0x248] sm:$0xff]
    %v5264 = vld [vmem:[#allocation7 + $0x250] sm:$0xff]
    %v5265 = vld [vmem:[#allocation7 + $0x258] sm:$0xff]
    %v5266 = vld [vmem:[#allocation7 + $0x260] sm:$0xff]
    %v5267 = vld [vmem:[#allocation7 + $0x268] sm:$0xff]
    %v5268 = vld [vmem:[#allocation7 + $0x270] sm:$0xff]
    %v5269 = vld [vmem:[#allocation7 + $0x278] sm:$0xff]
    %v5270 = vld [vmem:[#allocation7 + $0x280] sm:$0xff]
    %v5271 = vld [vmem:[#allocation7 + $0x288] sm:$0xff]
    %v5272 = vld [vmem:[#allocation7 + $0x290] sm:$0xff]
    %v5273 = vld [vmem:[#allocation7 + $0x298] sm:$0xff]
    %v5274 = vld [vmem:[#allocation7 + $0x2a0] sm:$0xff]
    %v5275 = vld [vmem:[#allocation7 + $0x2a8] sm:$0xff]
    %v5276 = vld [vmem:[#allocation7 + $0x2b0] sm:$0xff]
    %v5277 = vld [vmem:[#allocation7 + $0x2b8] sm:$0xff]
    %v5278 = vld [vmem:[#allocation7 + $0x2c0] sm:$0xff]
    %v5279 = vld [vmem:[#allocation7 + $0x2c8] sm:$0xff]
    %v5280 = vld [vmem:[#allocation7 + $0x2d0] sm:$0xff]
    %v5281 = vld [vmem:[#allocation7 + $0x2d8] sm:$0xff]
    %v5282 = vld [vmem:[#allocation7 + $0x2e0] sm:$0xff]
    %v5283 = vld [vmem:[#allocation7 + $0x2e8] sm:$0xff]
    %v5284 = vld [vmem:[#allocation7 + $0x2f0] sm:$0xff]
    %v5285 = vld [vmem:[#allocation7 + $0x2f8] sm:$0xff]
    %v5286 = vld [vmem:[#allocation7 + $0x300] sm:$0xff]
    %v5287 = vld [vmem:[#allocation7 + $0x308] sm:$0xff]
    %v5288 = vld [vmem:[#allocation7 + $0x310] sm:$0xff]
    %v5289 = vld [vmem:[#allocation7 + $0x318] sm:$0xff]
    %v5290 = vld [vmem:[#allocation7 + $0x320] sm:$0xff]
    %v5291 = vld [vmem:[#allocation7 + $0x328] sm:$0xff]
    %v5292 = vld [vmem:[#allocation7 + $0x330] sm:$0xff]
    %v5293 = vld [vmem:[#allocation7 + $0x338] sm:$0xff]
    %v5294 = vld [vmem:[#allocation7 + $0x340] sm:$0xff]
    %v5295 = vld [vmem:[#allocation7 + $0x348] sm:$0xff]
    %v5296 = vld [vmem:[#allocation7 + $0x350] sm:$0xff]
    %v5297 = vld [vmem:[#allocation7 + $0x358] sm:$0xff]
    %v5298 = vld [vmem:[#allocation7 + $0x360] sm:$0xff]
    %v5299 = vld [vmem:[#allocation7 + $0x368] sm:$0xff]
    %v5300 = vld [vmem:[#allocation7 + $0x370] sm:$0xff]
    %v5301 = vld [vmem:[#allocation7 + $0x378] sm:$0xff]
    %v5302 = vld [vmem:[#allocation7 + $0x380] sm:$0xff]
    %v5303 = vld [vmem:[#allocation7 + $0x388] sm:$0xff]
    %v5304 = vld [vmem:[#allocation7 + $0x390] sm:$0xff]
    %v5305 = vld [vmem:[#allocation7 + $0x398] sm:$0xff]
    %v5306 = vld [vmem:[#allocation7 + $0x3a0] sm:$0xff]
    %v5307 = vld [vmem:[#allocation7 + $0x3a8] sm:$0xff]
    %v5308 = vld [vmem:[#allocation7 + $0x3b0] sm:$0xff]
    %v5309 = vld [vmem:[#allocation7 + $0x3b8] sm:$0xff]
    %v5310 = vld [vmem:[#allocation7 + $0x3c0] sm:$0xff]
    %v5311 = vld [vmem:[#allocation7 + $0x3c8] sm:$0xff]
    %v5312 = vld [vmem:[#allocation7 + $0x3d0] sm:$0xff]
    %v5313 = vld [vmem:[#allocation7 + $0x3d8] sm:$0xff]
    %v5314 = vld [vmem:[#allocation7 + $0x3e0] sm:$0xff]
    %v5315 = vld [vmem:[#allocation7 + $0x3e8] sm:$0xff]
    %v5316 = vld [vmem:[#allocation7 + $0x3f0] sm:$0xff]
    %v5317 = vld [vmem:[#allocation7 + $0x3f8] sm:$0xff]
    %v5318 = vld [vmem:[#allocation7 + $0x400] sm:$0xff]
    %v5319 = vld [vmem:[#allocation7 + $0x408] sm:$0xff]
    %v5320 = vld [vmem:[#allocation7 + $0x410] sm:$0xff]
    %v5321 = vld [vmem:[#allocation7 + $0x418] sm:$0xff]
    %v5322 = vld [vmem:[#allocation7 + $0x420] sm:$0xff]
    %v5323 = vld [vmem:[#allocation7 + $0x428] sm:$0xff]
    %v5324 = vld [vmem:[#allocation7 + $0x430] sm:$0xff]
    %v5325 = vld [vmem:[#allocation7 + $0x438] sm:$0xff]
    %v5326 = vld [vmem:[#allocation7 + $0x440] sm:$0xff]
    %v5327 = vld [vmem:[#allocation7 + $0x448] sm:$0xff]
    %v5328 = vld [vmem:[#allocation7 + $0x450] sm:$0xff]
    %v5329 = vld [vmem:[#allocation7 + $0x458] sm:$0xff]
    %v5330 = vld [vmem:[#allocation7 + $0x460] sm:$0xff]
    %v5331 = vld [vmem:[#allocation7 + $0x468] sm:$0xff]
    %v5332 = vld [vmem:[#allocation7 + $0x470] sm:$0xff]
    %v5333 = vld [vmem:[#allocation7 + $0x478] sm:$0xff]
    %v5334 = vld [vmem:[#allocation7 + $0x480] sm:$0xff]
    %v5335 = vld [vmem:[#allocation7 + $0x488] sm:$0xff]
    %v5336 = vld [vmem:[#allocation7 + $0x490] sm:$0xff]
    %v5337 = vld [vmem:[#allocation7 + $0x498] sm:$0xff]
    %v5338 = vld [vmem:[#allocation7 + $0x4a0] sm:$0xff]
    %v5339 = vld [vmem:[#allocation7 + $0x4a8] sm:$0xff]
    %v5340 = vld [vmem:[#allocation7 + $0x4b0] sm:$0xff]
    %v5341 = vld [vmem:[#allocation7 + $0x4b8] sm:$0xff]
    %v5342 = vld [vmem:[#allocation7 + $0x4c0] sm:$0xff]
    %v5343 = vld [vmem:[#allocation7 + $0x4c8] sm:$0xff]
    %v5344 = vld [vmem:[#allocation7 + $0x4d0] sm:$0xff]
    %v5345 = vld [vmem:[#allocation7 + $0x4d8] sm:$0xff]
    %v5346 = vld [vmem:[#allocation7 + $0x4e0] sm:$0xff]
    %v5347 = vld [vmem:[#allocation7 + $0x4e8] sm:$0xff]
    %v5348 = vld [vmem:[#allocation7 + $0x4f0] sm:$0xff]
    %v5349 = vld [vmem:[#allocation7 + $0x4f8] sm:$0xff]
    %v5350 = vld [vmem:[#allocation7 + $0x500] sm:$0xff]
    %v5351 = vld [vmem:[#allocation7 + $0x508] sm:$0xff]
    %v5352 = vld [vmem:[#allocation7 + $0x510] sm:$0xff]
    %v5353 = vld [vmem:[#allocation7 + $0x518] sm:$0xff]
    %v5354 = vld [vmem:[#allocation7 + $0x520] sm:$0xff]
    %v5355 = vld [vmem:[#allocation7 + $0x528] sm:$0xff]
    %v5356 = vld [vmem:[#allocation7 + $0x530] sm:$0xff]
    %v5357 = vld [vmem:[#allocation7 + $0x538] sm:$0xff]
    %v5358 = vld [vmem:[#allocation7 + $0x540] sm:$0xff]
    %v5359 = vld [vmem:[#allocation7 + $0x548] sm:$0xff]
    %v5360 = vld [vmem:[#allocation7 + $0x550] sm:$0xff]
    %v5361 = vld [vmem:[#allocation7 + $0x558] sm:$0xff]
    %v5362 = vld [vmem:[#allocation7 + $0x560] sm:$0xff]
    %v5363 = vld [vmem:[#allocation7 + $0x568] sm:$0xff]
    %v5364 = vld [vmem:[#allocation7 + $0x570] sm:$0xff]
    %v5365 = vld [vmem:[#allocation7 + $0x578] sm:$0xff]
    %v5366 = vld [vmem:[#allocation7 + $0x580] sm:$0xff]
    %v5367 = vld [vmem:[#allocation7 + $0x588] sm:$0xff]
    %v5368 = vld [vmem:[#allocation7 + $0x590] sm:$0xff]
    %v5369 = vld [vmem:[#allocation7 + $0x598] sm:$0xff]
    %v5370 = vld [vmem:[#allocation7 + $0x5a0] sm:$0xff]
    %v5371 = vld [vmem:[#allocation7 + $0x5a8] sm:$0xff]
    %v5372 = vld [vmem:[#allocation7 + $0x5b0] sm:$0xff]
    %v5373 = vld [vmem:[#allocation7 + $0x5b8] sm:$0xff]
    %v5374 = vld [vmem:[#allocation7 + $0x5c0] sm:$0xff]
    %v5375 = vld [vmem:[#allocation7 + $0x5c8] sm:$0xff]
    %v5376 = vld [vmem:[#allocation7 + $0x5d0] sm:$0xff]
    %v5377 = vld [vmem:[#allocation7 + $0x5d8] sm:$0xff]
    %v5378 = vld [vmem:[#allocation7 + $0x5e0] sm:$0xff]
    %v5379 = vld [vmem:[#allocation7 + $0x5e8] sm:$0xff]
    %v5380 = vld [vmem:[#allocation7 + $0x5f0] sm:$0xff]
    %v5381 = vld [vmem:[#allocation7 + $0x5f8] sm:$0xff]
    %v5382 = vld [vmem:[#allocation7 + $0x600] sm:$0xff]
    %v5383 = vld [vmem:[#allocation7 + $0x608] sm:$0xff]
    %v5384 = vld [vmem:[#allocation7 + $0x610] sm:$0xff]
    %v5385 = vld [vmem:[#allocation7 + $0x618] sm:$0xff]
    %v5386 = vld [vmem:[#allocation7 + $0x620] sm:$0xff]
    %v5387 = vld [vmem:[#allocation7 + $0x628] sm:$0xff]
    %v5388 = vld [vmem:[#allocation7 + $0x630] sm:$0xff]
    %v5389 = vld [vmem:[#allocation7 + $0x638] sm:$0xff]
    %v5390 = vld [vmem:[#allocation7 + $0x640] sm:$0xff]
    %v5391 = vld [vmem:[#allocation7 + $0x648] sm:$0xff]
    %v5392 = vld [vmem:[#allocation7 + $0x650] sm:$0xff]
    %v5393 = vld [vmem:[#allocation7 + $0x658] sm:$0xff]
    %v5394 = vld [vmem:[#allocation7 + $0x660] sm:$0xff]
    %v5395 = vld [vmem:[#allocation7 + $0x668] sm:$0xff]
    %v5396 = vld [vmem:[#allocation7 + $0x670] sm:$0xff]
    %v5397 = vld [vmem:[#allocation7 + $0x678] sm:$0xff]
    %v5398 = vld [vmem:[#allocation7 + $0x680] sm:$0xff]
    %v5399 = vld [vmem:[#allocation7 + $0x688] sm:$0xff]
    %v5400 = vld [vmem:[#allocation7 + $0x690] sm:$0xff]
    %v5401 = vld [vmem:[#allocation7 + $0x698] sm:$0xff]
    %v5402 = vld [vmem:[#allocation7 + $0x6a0] sm:$0xff]
    %v5403 = vld [vmem:[#allocation7 + $0x6a8] sm:$0xff]
    %v5404 = vld [vmem:[#allocation7 + $0x6b0] sm:$0xff]
    %v5405 = vld [vmem:[#allocation7 + $0x6b8] sm:$0xff]
    %v5406 = vld [vmem:[#allocation7 + $0x6c0] sm:$0xff]
    %v5407 = vld [vmem:[#allocation7 + $0x6c8] sm:$0xff]
    %v5408 = vld [vmem:[#allocation7 + $0x6d0] sm:$0xff]
    %v5409 = vld [vmem:[#allocation7 + $0x6d8] sm:$0xff]
    %v5410 = vld [vmem:[#allocation7 + $0x6e0] sm:$0xff]
    %v5411 = vld [vmem:[#allocation7 + $0x6e8] sm:$0xff]
    %v5412 = vld [vmem:[#allocation7 + $0x6f0] sm:$0xff]
    %v5413 = vld [vmem:[#allocation7 + $0x6f8] sm:$0xff]
    %v5414 = vld [vmem:[#allocation7 + $0x700] sm:$0xff]
    %v5415 = vld [vmem:[#allocation7 + $0x708] sm:$0xff]
    %v5416 = vld [vmem:[#allocation7 + $0x710] sm:$0xff]
    %v5417 = vld [vmem:[#allocation7 + $0x718] sm:$0xff]
    %v5418 = vld [vmem:[#allocation7 + $0x720] sm:$0xff]
    %v5419 = vld [vmem:[#allocation7 + $0x728] sm:$0xff]
    %v5420 = vld [vmem:[#allocation7 + $0x730] sm:$0xff]
    %v5421 = vld [vmem:[#allocation7 + $0x738] sm:$0xff]
    %v5422 = vld [vmem:[#allocation7 + $0x740] sm:$0xff]
    %v5423 = vld [vmem:[#allocation7 + $0x748] sm:$0xff]
    %v5424 = vld [vmem:[#allocation7 + $0x750] sm:$0xff]
    %v5425 = vld [vmem:[#allocation7 + $0x758] sm:$0xff]
    %v5426 = vld [vmem:[#allocation7 + $0x760] sm:$0xff]
    %v5427 = vld [vmem:[#allocation7 + $0x768] sm:$0xff]
    %v5428 = vld [vmem:[#allocation7 + $0x770] sm:$0xff]
    %v5429 = vld [vmem:[#allocation7 + $0x778] sm:$0xff]
    %v5430 = vld [vmem:[#allocation7 + $0x780] sm:$0xff]
    %v5431 = vld [vmem:[#allocation7 + $0x788] sm:$0xff]
    %v5432 = vld [vmem:[#allocation7 + $0x790] sm:$0xff]
    %v5433 = vld [vmem:[#allocation7 + $0x798] sm:$0xff]
    %v5434 = vld [vmem:[#allocation7 + $0x7a0] sm:$0xff]
    %v5435 = vld [vmem:[#allocation7 + $0x7a8] sm:$0xff]
    %v5436 = vld [vmem:[#allocation7 + $0x7b0] sm:$0xff]
    %v5437 = vld [vmem:[#allocation7 + $0x7b8] sm:$0xff]
    %v5438 = vld [vmem:[#allocation7 + $0x7c0] sm:$0xff]
    %v5439 = vld [vmem:[#allocation7 + $0x7c8] sm:$0xff]
    %v5440 = vld [vmem:[#allocation7 + $0x7d0] sm:$0xff]
    %v5441 = vld [vmem:[#allocation7 + $0x7d8] sm:$0xff]
    %v5442 = vld [vmem:[#allocation7 + $0x7e0] sm:$0xff]
    %v5443 = vld [vmem:[#allocation7 + $0x7e8] sm:$0xff]
    %v5444 = vld [vmem:[#allocation7 + $0x7f0] sm:$0xff]
    %v5445 = vld [vmem:[#allocation7 + $0x7f8] sm:$0xff]
    %v5447 = vlaneseq
    %v5448 = vshrl.u32 %v5447, 7
    %v5449 = vsub.s32 0, %v5448
    %v5450 = vrot.slane %v106, %v5449
    %v5451 = vlaneseq
    %v5452 = vshrl.u32 %v5451, 7
    %v5453 = vsub.s32 1, %v5452
    %v5454 = vrot.slane %v106, %v5453
    %v5455 = vlaneseq
    %v5456 = vshrl.u32 %v5455, 7
    %v5457 = vsub.s32 2, %v5456
    %v5458 = vrot.slane %v106, %v5457
    %v5459 = vlaneseq
    %v5460 = vshrl.u32 %v5459, 7
    %v5461 = vsub.s32 3, %v5460
    %v5462 = vrot.slane %v106, %v5461
    %v5723 = vunpack.c.l.b16 %v5190
    %v5724 = vunpack.c.h.b16 %v5190
    %v5725 = vunpack.c.l.b16 %v5191
    %v5726 = vunpack.c.h.b16 %v5191
    %v5727 = vunpack.c.l.b16 %v5192
    %v5728 = vunpack.c.h.b16 %v5192
    %v5729 = vunpack.c.l.b16 %v5193
    %v5730 = vunpack.c.h.b16 %v5193
    %v5731 = vunpack.c.l.b16 %v5194
    %v5732 = vunpack.c.h.b16 %v5194
    %v5733 = vunpack.c.l.b16 %v5195
    %v5734 = vunpack.c.h.b16 %v5195
    %v5735 = vunpack.c.l.b16 %v5196
    %v5736 = vunpack.c.h.b16 %v5196
    %v5737 = vunpack.c.l.b16 %v5197
    %v5738 = vunpack.c.h.b16 %v5197
    %v5739 = vunpack.c.l.b16 %v5198
    %v5740 = vunpack.c.h.b16 %v5198
    %v5741 = vunpack.c.l.b16 %v5199
    %v5742 = vunpack.c.h.b16 %v5199
    %v5743 = vunpack.c.l.b16 %v5200
    %v5744 = vunpack.c.h.b16 %v5200
    %v5745 = vunpack.c.l.b16 %v5201
    %v5746 = vunpack.c.h.b16 %v5201
    %v5747 = vunpack.c.l.b16 %v5202
    %v5748 = vunpack.c.h.b16 %v5202
    %v5749 = vunpack.c.l.b16 %v5203
    %v5750 = vunpack.c.h.b16 %v5203
    %v5751 = vunpack.c.l.b16 %v5204
    %v5752 = vunpack.c.h.b16 %v5204
    %v5753 = vunpack.c.l.b16 %v5205
    %v5754 = vunpack.c.h.b16 %v5205
    %v5755 = vunpack.c.l.b16 %v5206
    %v5756 = vunpack.c.h.b16 %v5206
    %v5757 = vunpack.c.l.b16 %v5207
    %v5758 = vunpack.c.h.b16 %v5207
    %v5759 = vunpack.c.l.b16 %v5208
    %v5760 = vunpack.c.h.b16 %v5208
    %v5761 = vunpack.c.l.b16 %v5209
    %v5762 = vunpack.c.h.b16 %v5209
    %v5763 = vunpack.c.l.b16 %v5210
    %v5764 = vunpack.c.h.b16 %v5210
    %v5765 = vunpack.c.l.b16 %v5211
    %v5766 = vunpack.c.h.b16 %v5211
    %v5767 = vunpack.c.l.b16 %v5212
    %v5768 = vunpack.c.h.b16 %v5212
    %v5769 = vunpack.c.l.b16 %v5213
    %v5770 = vunpack.c.h.b16 %v5213
    %v5771 = vunpack.c.l.b16 %v5214
    %v5772 = vunpack.c.h.b16 %v5214
    %v5773 = vunpack.c.l.b16 %v5215
    %v5774 = vunpack.c.h.b16 %v5215
    %v5775 = vunpack.c.l.b16 %v5216
    %v5776 = vunpack.c.h.b16 %v5216
    %v5777 = vunpack.c.l.b16 %v5217
    %v5778 = vunpack.c.h.b16 %v5217
    %v5779 = vunpack.c.l.b16 %v5218
    %v5780 = vunpack.c.h.b16 %v5218
    %v5781 = vunpack.c.l.b16 %v5219
    %v5782 = vunpack.c.h.b16 %v5219
    %v5783 = vunpack.c.l.b16 %v5220
    %v5784 = vunpack.c.h.b16 %v5220
    %v5785 = vunpack.c.l.b16 %v5221
    %v5786 = vunpack.c.h.b16 %v5221
    %v5787 = vunpack.c.l.b16 %v5222
    %v5788 = vunpack.c.h.b16 %v5222
    %v5789 = vunpack.c.l.b16 %v5223
    %v5790 = vunpack.c.h.b16 %v5223
    %v5791 = vunpack.c.l.b16 %v5224
    %v5792 = vunpack.c.h.b16 %v5224
    %v5793 = vunpack.c.l.b16 %v5225
    %v5794 = vunpack.c.h.b16 %v5225
    %v5795 = vunpack.c.l.b16 %v5226
    %v5796 = vunpack.c.h.b16 %v5226
    %v5797 = vunpack.c.l.b16 %v5227
    %v5798 = vunpack.c.h.b16 %v5227
    %v5799 = vunpack.c.l.b16 %v5228
    %v5800 = vunpack.c.h.b16 %v5228
    %v5801 = vunpack.c.l.b16 %v5229
    %v5802 = vunpack.c.h.b16 %v5229
    %v5803 = vunpack.c.l.b16 %v5230
    %v5804 = vunpack.c.h.b16 %v5230
    %v5805 = vunpack.c.l.b16 %v5231
    %v5806 = vunpack.c.h.b16 %v5231
    %v5807 = vunpack.c.l.b16 %v5232
    %v5808 = vunpack.c.h.b16 %v5232
    %v5809 = vunpack.c.l.b16 %v5233
    %v5810 = vunpack.c.h.b16 %v5233
    %v5811 = vunpack.c.l.b16 %v5234
    %v5812 = vunpack.c.h.b16 %v5234
    %v5813 = vunpack.c.l.b16 %v5235
    %v5814 = vunpack.c.h.b16 %v5235
    %v5815 = vunpack.c.l.b16 %v5236
    %v5816 = vunpack.c.h.b16 %v5236
    %v5817 = vunpack.c.l.b16 %v5237
    %v5818 = vunpack.c.h.b16 %v5237
    %v5819 = vunpack.c.l.b16 %v5238
    %v5820 = vunpack.c.h.b16 %v5238
    %v5821 = vunpack.c.l.b16 %v5239
    %v5822 = vunpack.c.h.b16 %v5239
    %v5823 = vunpack.c.l.b16 %v5240
    %v5824 = vunpack.c.h.b16 %v5240
    %v5825 = vunpack.c.l.b16 %v5241
    %v5826 = vunpack.c.h.b16 %v5241
    %v5827 = vunpack.c.l.b16 %v5242
    %v5828 = vunpack.c.h.b16 %v5242
    %v5829 = vunpack.c.l.b16 %v5243
    %v5830 = vunpack.c.h.b16 %v5243
    %v5831 = vunpack.c.l.b16 %v5244
    %v5832 = vunpack.c.h.b16 %v5244
    %v5833 = vunpack.c.l.b16 %v5245
    %v5834 = vunpack.c.h.b16 %v5245
    %v5835 = vunpack.c.l.b16 %v5246
    %v5836 = vunpack.c.h.b16 %v5246
    %v5837 = vunpack.c.l.b16 %v5247
    %v5838 = vunpack.c.h.b16 %v5247
    %v5839 = vunpack.c.l.b16 %v5248
    %v5840 = vunpack.c.h.b16 %v5248
    %v5841 = vunpack.c.l.b16 %v5249
    %v5842 = vunpack.c.h.b16 %v5249
    %v5843 = vunpack.c.l.b16 %v5250
    %v5844 = vunpack.c.h.b16 %v5250
    %v5845 = vunpack.c.l.b16 %v5251
    %v5846 = vunpack.c.h.b16 %v5251
    %v5847 = vunpack.c.l.b16 %v5252
    %v5848 = vunpack.c.h.b16 %v5252
    %v5849 = vunpack.c.l.b16 %v5253
    %v5850 = vunpack.c.h.b16 %v5253
    %v5851 = vunpack.c.l.b16 %v5254
    %v5852 = vunpack.c.h.b16 %v5254
    %v5853 = vunpack.c.l.b16 %v5255
    %v5854 = vunpack.c.h.b16 %v5255
    %v5855 = vunpack.c.l.b16 %v5256
    %v5856 = vunpack.c.h.b16 %v5256
    %v5857 = vunpack.c.l.b16 %v5257
    %v5858 = vunpack.c.h.b16 %v5257
    %v5859 = vunpack.c.l.b16 %v5258
    %v5860 = vunpack.c.h.b16 %v5258
    %v5861 = vunpack.c.l.b16 %v5259
    %v5862 = vunpack.c.h.b16 %v5259
    %v5863 = vunpack.c.l.b16 %v5260
    %v5864 = vunpack.c.h.b16 %v5260
    %v5865 = vunpack.c.l.b16 %v5261
    %v5866 = vunpack.c.h.b16 %v5261
    %v5867 = vunpack.c.l.b16 %v5262
    %v5868 = vunpack.c.h.b16 %v5262
    %v5869 = vunpack.c.l.b16 %v5263
    %v5870 = vunpack.c.h.b16 %v5263
    %v5871 = vunpack.c.l.b16 %v5264
    %v5872 = vunpack.c.h.b16 %v5264
    %v5873 = vunpack.c.l.b16 %v5265
    %v5874 = vunpack.c.h.b16 %v5265
    %v5875 = vunpack.c.l.b16 %v5266
    %v5876 = vunpack.c.h.b16 %v5266
    %v5877 = vunpack.c.l.b16 %v5267
    %v5878 = vunpack.c.h.b16 %v5267
    %v5879 = vunpack.c.l.b16 %v5268
    %v5880 = vunpack.c.h.b16 %v5268
    %v5881 = vunpack.c.l.b16 %v5269
    %v5882 = vunpack.c.h.b16 %v5269
    %v5883 = vunpack.c.l.b16 %v5270
    %v5884 = vunpack.c.h.b16 %v5270
    %v5885 = vunpack.c.l.b16 %v5271
    %v5886 = vunpack.c.h.b16 %v5271
    %v5887 = vunpack.c.l.b16 %v5272
    %v5888 = vunpack.c.h.b16 %v5272
    %v5889 = vunpack.c.l.b16 %v5273
    %v5890 = vunpack.c.h.b16 %v5273
    %v5891 = vunpack.c.l.b16 %v5274
    %v5892 = vunpack.c.h.b16 %v5274
    %v5893 = vunpack.c.l.b16 %v5275
    %v5894 = vunpack.c.h.b16 %v5275
    %v5895 = vunpack.c.l.b16 %v5276
    %v5896 = vunpack.c.h.b16 %v5276
    %v5897 = vunpack.c.l.b16 %v5277
    %v5898 = vunpack.c.h.b16 %v5277
    %v5899 = vunpack.c.l.b16 %v5278
    %v5900 = vunpack.c.h.b16 %v5278
    %v5901 = vunpack.c.l.b16 %v5279
    %v5902 = vunpack.c.h.b16 %v5279
    %v5903 = vunpack.c.l.b16 %v5280
    %v5904 = vunpack.c.h.b16 %v5280
    %v5905 = vunpack.c.l.b16 %v5281
    %v5906 = vunpack.c.h.b16 %v5281
    %v5907 = vunpack.c.l.b16 %v5282
    %v5908 = vunpack.c.h.b16 %v5282
    %v5909 = vunpack.c.l.b16 %v5283
    %v5910 = vunpack.c.h.b16 %v5283
    %v5911 = vunpack.c.l.b16 %v5284
    %v5912 = vunpack.c.h.b16 %v5284
    %v5913 = vunpack.c.l.b16 %v5285
    %v5914 = vunpack.c.h.b16 %v5285
    %v5915 = vunpack.c.l.b16 %v5286
    %v5916 = vunpack.c.h.b16 %v5286
    %v5917 = vunpack.c.l.b16 %v5287
    %v5918 = vunpack.c.h.b16 %v5287
    %v5919 = vunpack.c.l.b16 %v5288
    %v5920 = vunpack.c.h.b16 %v5288
    %v5921 = vunpack.c.l.b16 %v5289
    %v5922 = vunpack.c.h.b16 %v5289
    %v5923 = vunpack.c.l.b16 %v5290
    %v5924 = vunpack.c.h.b16 %v5290
    %v5925 = vunpack.c.l.b16 %v5291
    %v5926 = vunpack.c.h.b16 %v5291
    %v5927 = vunpack.c.l.b16 %v5292
    %v5928 = vunpack.c.h.b16 %v5292
    %v5929 = vunpack.c.l.b16 %v5293
    %v5930 = vunpack.c.h.b16 %v5293
    %v5931 = vunpack.c.l.b16 %v5294
    %v5932 = vunpack.c.h.b16 %v5294
    %v5933 = vunpack.c.l.b16 %v5295
    %v5934 = vunpack.c.h.b16 %v5295
    %v5935 = vunpack.c.l.b16 %v5296
    %v5936 = vunpack.c.h.b16 %v5296
    %v5937 = vunpack.c.l.b16 %v5297
    %v5938 = vunpack.c.h.b16 %v5297
    %v5939 = vunpack.c.l.b16 %v5298
    %v5940 = vunpack.c.h.b16 %v5298
    %v5941 = vunpack.c.l.b16 %v5299
    %v5942 = vunpack.c.h.b16 %v5299
    %v5943 = vunpack.c.l.b16 %v5300
    %v5944 = vunpack.c.h.b16 %v5300
    %v5945 = vunpack.c.l.b16 %v5301
    %v5946 = vunpack.c.h.b16 %v5301
    %v5947 = vunpack.c.l.b16 %v5302
    %v5948 = vunpack.c.h.b16 %v5302
    %v5949 = vunpack.c.l.b16 %v5303
    %v5950 = vunpack.c.h.b16 %v5303
    %v5951 = vunpack.c.l.b16 %v5304
    %v5952 = vunpack.c.h.b16 %v5304
    %v5953 = vunpack.c.l.b16 %v5305
    %v5954 = vunpack.c.h.b16 %v5305
    %v5955 = vunpack.c.l.b16 %v5306
    %v5956 = vunpack.c.h.b16 %v5306
    %v5957 = vunpack.c.l.b16 %v5307
    %v5958 = vunpack.c.h.b16 %v5307
    %v5959 = vunpack.c.l.b16 %v5308
    %v5960 = vunpack.c.h.b16 %v5308
    %v5961 = vunpack.c.l.b16 %v5309
    %v5962 = vunpack.c.h.b16 %v5309
    %v5963 = vunpack.c.l.b16 %v5310
    %v5964 = vunpack.c.h.b16 %v5310
    %v5965 = vunpack.c.l.b16 %v5311
    %v5966 = vunpack.c.h.b16 %v5311
    %v5967 = vunpack.c.l.b16 %v5312
    %v5968 = vunpack.c.h.b16 %v5312
    %v5969 = vunpack.c.l.b16 %v5313
    %v5970 = vunpack.c.h.b16 %v5313
    %v5971 = vunpack.c.l.b16 %v5314
    %v5972 = vunpack.c.h.b16 %v5314
    %v5973 = vunpack.c.l.b16 %v5315
    %v5974 = vunpack.c.h.b16 %v5315
    %v5975 = vunpack.c.l.b16 %v5316
    %v5976 = vunpack.c.h.b16 %v5316
    %v5977 = vunpack.c.l.b16 %v5317
    %v5978 = vunpack.c.h.b16 %v5317
    %v5979 = vunpack.c.l.b16 %v5318
    %v5980 = vunpack.c.h.b16 %v5318
    %v5981 = vunpack.c.l.b16 %v5319
    %v5982 = vunpack.c.h.b16 %v5319
    %v5983 = vunpack.c.l.b16 %v5320
    %v5984 = vunpack.c.h.b16 %v5320
    %v5985 = vunpack.c.l.b16 %v5321
    %v5986 = vunpack.c.h.b16 %v5321
    %v5987 = vunpack.c.l.b16 %v5322
    %v5988 = vunpack.c.h.b16 %v5322
    %v5989 = vunpack.c.l.b16 %v5323
    %v5990 = vunpack.c.h.b16 %v5323
    %v5991 = vunpack.c.l.b16 %v5324
    %v5992 = vunpack.c.h.b16 %v5324
    %v5993 = vunpack.c.l.b16 %v5325
    %v5994 = vunpack.c.h.b16 %v5325
    %v5995 = vunpack.c.l.b16 %v5326
    %v5996 = vunpack.c.h.b16 %v5326
    %v5997 = vunpack.c.l.b16 %v5327
    %v5998 = vunpack.c.h.b16 %v5327
    %v5999 = vunpack.c.l.b16 %v5328
    %v6000 = vunpack.c.h.b16 %v5328
    %v6001 = vunpack.c.l.b16 %v5329
    %v6002 = vunpack.c.h.b16 %v5329
    %v6003 = vunpack.c.l.b16 %v5330
    %v6004 = vunpack.c.h.b16 %v5330
    %v6005 = vunpack.c.l.b16 %v5331
    %v6006 = vunpack.c.h.b16 %v5331
    %v6007 = vunpack.c.l.b16 %v5332
    %v6008 = vunpack.c.h.b16 %v5332
    %v6009 = vunpack.c.l.b16 %v5333
    %v6010 = vunpack.c.h.b16 %v5333
    %v6011 = vunpack.c.l.b16 %v5334
    %v6012 = vunpack.c.h.b16 %v5334
    %v6013 = vunpack.c.l.b16 %v5335
    %v6014 = vunpack.c.h.b16 %v5335
    %v6015 = vunpack.c.l.b16 %v5336
    %v6016 = vunpack.c.h.b16 %v5336
    %v6017 = vunpack.c.l.b16 %v5337
    %v6018 = vunpack.c.h.b16 %v5337
    %v6019 = vunpack.c.l.b16 %v5338
    %v6020 = vunpack.c.h.b16 %v5338
    %v6021 = vunpack.c.l.b16 %v5339
    %v6022 = vunpack.c.h.b16 %v5339
    %v6023 = vunpack.c.l.b16 %v5340
    %v6024 = vunpack.c.h.b16 %v5340
    %v6025 = vunpack.c.l.b16 %v5341
    %v6026 = vunpack.c.h.b16 %v5341
    %v6027 = vunpack.c.l.b16 %v5342
    %v6028 = vunpack.c.h.b16 %v5342
    %v6029 = vunpack.c.l.b16 %v5343
    %v6030 = vunpack.c.h.b16 %v5343
    %v6031 = vunpack.c.l.b16 %v5344
    %v6032 = vunpack.c.h.b16 %v5344
    %v6033 = vunpack.c.l.b16 %v5345
    %v6034 = vunpack.c.h.b16 %v5345
    %v6035 = vunpack.c.l.b16 %v5346
    %v6036 = vunpack.c.h.b16 %v5346
    %v6037 = vunpack.c.l.b16 %v5347
    %v6038 = vunpack.c.h.b16 %v5347
    %v6039 = vunpack.c.l.b16 %v5348
    %v6040 = vunpack.c.h.b16 %v5348
    %v6041 = vunpack.c.l.b16 %v5349
    %v6042 = vunpack.c.h.b16 %v5349
    %v6043 = vunpack.c.l.b16 %v5350
    %v6044 = vunpack.c.h.b16 %v5350
    %v6045 = vunpack.c.l.b16 %v5351
    %v6046 = vunpack.c.h.b16 %v5351
    %v6047 = vunpack.c.l.b16 %v5352
    %v6048 = vunpack.c.h.b16 %v5352
    %v6049 = vunpack.c.l.b16 %v5353
    %v6050 = vunpack.c.h.b16 %v5353
    %v6051 = vunpack.c.l.b16 %v5354
    %v6052 = vunpack.c.h.b16 %v5354
    %v6053 = vunpack.c.l.b16 %v5355
    %v6054 = vunpack.c.h.b16 %v5355
    %v6055 = vunpack.c.l.b16 %v5356
    %v6056 = vunpack.c.h.b16 %v5356
    %v6057 = vunpack.c.l.b16 %v5357
    %v6058 = vunpack.c.h.b16 %v5357
    %v6059 = vunpack.c.l.b16 %v5358
    %v6060 = vunpack.c.h.b16 %v5358
    %v6061 = vunpack.c.l.b16 %v5359
    %v6062 = vunpack.c.h.b16 %v5359
    %v6063 = vunpack.c.l.b16 %v5360
    %v6064 = vunpack.c.h.b16 %v5360
    %v6065 = vunpack.c.l.b16 %v5361
    %v6066 = vunpack.c.h.b16 %v5361
    %v6067 = vunpack.c.l.b16 %v5362
    %v6068 = vunpack.c.h.b16 %v5362
    %v6069 = vunpack.c.l.b16 %v5363
    %v6070 = vunpack.c.h.b16 %v5363
    %v6071 = vunpack.c.l.b16 %v5364
    %v6072 = vunpack.c.h.b16 %v5364
    %v6073 = vunpack.c.l.b16 %v5365
    %v6074 = vunpack.c.h.b16 %v5365
    %v6075 = vunpack.c.l.b16 %v5366
    %v6076 = vunpack.c.h.b16 %v5366
    %v6077 = vunpack.c.l.b16 %v5367
    %v6078 = vunpack.c.h.b16 %v5367
    %v6079 = vunpack.c.l.b16 %v5368
    %v6080 = vunpack.c.h.b16 %v5368
    %v6081 = vunpack.c.l.b16 %v5369
    %v6082 = vunpack.c.h.b16 %v5369
    %v6083 = vunpack.c.l.b16 %v5370
    %v6084 = vunpack.c.h.b16 %v5370
    %v6085 = vunpack.c.l.b16 %v5371
    %v6086 = vunpack.c.h.b16 %v5371
    %v6087 = vunpack.c.l.b16 %v5372
    %v6088 = vunpack.c.h.b16 %v5372
    %v6089 = vunpack.c.l.b16 %v5373
    %v6090 = vunpack.c.h.b16 %v5373
    %v6091 = vunpack.c.l.b16 %v5374
    %v6092 = vunpack.c.h.b16 %v5374
    %v6093 = vunpack.c.l.b16 %v5375
    %v6094 = vunpack.c.h.b16 %v5375
    %v6095 = vunpack.c.l.b16 %v5376
    %v6096 = vunpack.c.h.b16 %v5376
    %v6097 = vunpack.c.l.b16 %v5377
    %v6098 = vunpack.c.h.b16 %v5377
    %v6099 = vunpack.c.l.b16 %v5378
    %v6100 = vunpack.c.h.b16 %v5378
    %v6101 = vunpack.c.l.b16 %v5379
    %v6102 = vunpack.c.h.b16 %v5379
    %v6103 = vunpack.c.l.b16 %v5380
    %v6104 = vunpack.c.h.b16 %v5380
    %v6105 = vunpack.c.l.b16 %v5381
    %v6106 = vunpack.c.h.b16 %v5381
    %v6107 = vunpack.c.l.b16 %v5382
    %v6108 = vunpack.c.h.b16 %v5382
    %v6109 = vunpack.c.l.b16 %v5383
    %v6110 = vunpack.c.h.b16 %v5383
    %v6111 = vunpack.c.l.b16 %v5384
    %v6112 = vunpack.c.h.b16 %v5384
    %v6113 = vunpack.c.l.b16 %v5385
    %v6114 = vunpack.c.h.b16 %v5385
    %v6115 = vunpack.c.l.b16 %v5386
    %v6116 = vunpack.c.h.b16 %v5386
    %v6117 = vunpack.c.l.b16 %v5387
    %v6118 = vunpack.c.h.b16 %v5387
    %v6119 = vunpack.c.l.b16 %v5388
    %v6120 = vunpack.c.h.b16 %v5388
    %v6121 = vunpack.c.l.b16 %v5389
    %v6122 = vunpack.c.h.b16 %v5389
    %v6123 = vunpack.c.l.b16 %v5390
    %v6124 = vunpack.c.h.b16 %v5390
    %v6125 = vunpack.c.l.b16 %v5391
    %v6126 = vunpack.c.h.b16 %v5391
    %v6127 = vunpack.c.l.b16 %v5392
    %v6128 = vunpack.c.h.b16 %v5392
    %v6129 = vunpack.c.l.b16 %v5393
    %v6130 = vunpack.c.h.b16 %v5393
    %v6131 = vunpack.c.l.b16 %v5394
    %v6132 = vunpack.c.h.b16 %v5394
    %v6133 = vunpack.c.l.b16 %v5395
    %v6134 = vunpack.c.h.b16 %v5395
    %v6135 = vunpack.c.l.b16 %v5396
    %v6136 = vunpack.c.h.b16 %v5396
    %v6137 = vunpack.c.l.b16 %v5397
    %v6138 = vunpack.c.h.b16 %v5397
    %v6139 = vunpack.c.l.b16 %v5398
    %v6140 = vunpack.c.h.b16 %v5398
    %v6141 = vunpack.c.l.b16 %v5399
    %v6142 = vunpack.c.h.b16 %v5399
    %v6143 = vunpack.c.l.b16 %v5400
    %v6144 = vunpack.c.h.b16 %v5400
    %v6145 = vunpack.c.l.b16 %v5401
    %v6146 = vunpack.c.h.b16 %v5401
    %v6147 = vunpack.c.l.b16 %v5402
    %v6148 = vunpack.c.h.b16 %v5402
    %v6149 = vunpack.c.l.b16 %v5403
    %v6150 = vunpack.c.h.b16 %v5403
    %v6151 = vunpack.c.l.b16 %v5404
    %v6152 = vunpack.c.h.b16 %v5404
    %v6153 = vunpack.c.l.b16 %v5405
    %v6154 = vunpack.c.h.b16 %v5405
    %v6155 = vunpack.c.l.b16 %v5406
    %v6156 = vunpack.c.h.b16 %v5406
    %v6157 = vunpack.c.l.b16 %v5407
    %v6158 = vunpack.c.h.b16 %v5407
    %v6159 = vunpack.c.l.b16 %v5408
    %v6160 = vunpack.c.h.b16 %v5408
    %v6161 = vunpack.c.l.b16 %v5409
    %v6162 = vunpack.c.h.b16 %v5409
    %v6163 = vunpack.c.l.b16 %v5410
    %v6164 = vunpack.c.h.b16 %v5410
    %v6165 = vunpack.c.l.b16 %v5411
    %v6166 = vunpack.c.h.b16 %v5411
    %v6167 = vunpack.c.l.b16 %v5412
    %v6168 = vunpack.c.h.b16 %v5412
    %v6169 = vunpack.c.l.b16 %v5413
    %v6170 = vunpack.c.h.b16 %v5413
    %v6171 = vunpack.c.l.b16 %v5414
    %v6172 = vunpack.c.h.b16 %v5414
    %v6173 = vunpack.c.l.b16 %v5415
    %v6174 = vunpack.c.h.b16 %v5415
    %v6175 = vunpack.c.l.b16 %v5416
    %v6176 = vunpack.c.h.b16 %v5416
    %v6177 = vunpack.c.l.b16 %v5417
    %v6178 = vunpack.c.h.b16 %v5417
    %v6179 = vunpack.c.l.b16 %v5418
    %v6180 = vunpack.c.h.b16 %v5418
    %v6181 = vunpack.c.l.b16 %v5419
    %v6182 = vunpack.c.h.b16 %v5419
    %v6183 = vunpack.c.l.b16 %v5420
    %v6184 = vunpack.c.h.b16 %v5420
    %v6185 = vunpack.c.l.b16 %v5421
    %v6186 = vunpack.c.h.b16 %v5421
    %v6187 = vunpack.c.l.b16 %v5422
    %v6188 = vunpack.c.h.b16 %v5422
    %v6189 = vunpack.c.l.b16 %v5423
    %v6190 = vunpack.c.h.b16 %v5423
    %v6191 = vunpack.c.l.b16 %v5424
    %v6192 = vunpack.c.h.b16 %v5424
    %v6193 = vunpack.c.l.b16 %v5425
    %v6194 = vunpack.c.h.b16 %v5425
    %v6195 = vunpack.c.l.b16 %v5426
    %v6196 = vunpack.c.h.b16 %v5426
    %v6197 = vunpack.c.l.b16 %v5427
    %v6198 = vunpack.c.h.b16 %v5427
    %v6199 = vunpack.c.l.b16 %v5428
    %v6200 = vunpack.c.h.b16 %v5428
    %v6201 = vunpack.c.l.b16 %v5429
    %v6202 = vunpack.c.h.b16 %v5429
    %v6203 = vunpack.c.l.b16 %v5430
    %v6204 = vunpack.c.h.b16 %v5430
    %v6205 = vunpack.c.l.b16 %v5431
    %v6206 = vunpack.c.h.b16 %v5431
    %v6207 = vunpack.c.l.b16 %v5432
    %v6208 = vunpack.c.h.b16 %v5432
    %v6209 = vunpack.c.l.b16 %v5433
    %v6210 = vunpack.c.h.b16 %v5433
    %v6211 = vunpack.c.l.b16 %v5434
    %v6212 = vunpack.c.h.b16 %v5434
    %v6213 = vunpack.c.l.b16 %v5435
    %v6214 = vunpack.c.h.b16 %v5435
    %v6215 = vunpack.c.l.b16 %v5436
    %v6216 = vunpack.c.h.b16 %v5436
    %v6217 = vunpack.c.l.b16 %v5437
    %v6218 = vunpack.c.h.b16 %v5437
    %v6219 = vunpack.c.l.b16 %v5438
    %v6220 = vunpack.c.h.b16 %v5438
    %v6221 = vunpack.c.l.b16 %v5439
    %v6222 = vunpack.c.h.b16 %v5439
    %v6223 = vunpack.c.l.b16 %v5440
    %v6224 = vunpack.c.h.b16 %v5440
    %v6225 = vunpack.c.l.b16 %v5441
    %v6226 = vunpack.c.h.b16 %v5441
    %v6227 = vunpack.c.l.b16 %v5442
    %v6228 = vunpack.c.h.b16 %v5442
    %v6229 = vunpack.c.l.b16 %v5443
    %v6230 = vunpack.c.h.b16 %v5443
    %v6231 = vunpack.c.l.b16 %v5444
    %v6232 = vunpack.c.h.b16 %v5444
    %v6233 = vunpack.c.l.b16 %v5445
    %v6234 = vunpack.c.h.b16 %v5445
    %v6235 = vpack.c.b16 %v5727, %v5723
    %v6236 = vpack.c.b16 %v5728, %v5724
    %v6237 = vpack.c.b16 %v5729, %v5725
    %v6238 = vpack.c.b16 %v5730, %v5726
    %v6239 = vpack.c.b16 %v5735, %v5731
    %v6240 = vpack.c.b16 %v5736, %v5732
    %v6241 = vpack.c.b16 %v5737, %v5733
    %v6242 = vpack.c.b16 %v5738, %v5734
    %v6243 = vpack.c.b16 %v5743, %v5739
    %v6244 = vpack.c.b16 %v5744, %v5740
    %v6245 = vpack.c.b16 %v5745, %v5741
    %v6246 = vpack.c.b16 %v5746, %v5742
    %v6247 = vpack.c.b16 %v5751, %v5747
    %v6248 = vpack.c.b16 %v5752, %v5748
    %v6249 = vpack.c.b16 %v5753, %v5749
    %v6250 = vpack.c.b16 %v5754, %v5750
    %v6251 = vpack.c.b16 %v5759, %v5755
    %v6252 = vpack.c.b16 %v5760, %v5756
    %v6253 = vpack.c.b16 %v5761, %v5757
    %v6254 = vpack.c.b16 %v5762, %v5758
    %v6255 = vpack.c.b16 %v5767, %v5763
    %v6256 = vpack.c.b16 %v5768, %v5764
    %v6257 = vpack.c.b16 %v5769, %v5765
    %v6258 = vpack.c.b16 %v5770, %v5766
    %v6259 = vpack.c.b16 %v5775, %v5771
    %v6260 = vpack.c.b16 %v5776, %v5772
    %v6261 = vpack.c.b16 %v5777, %v5773
    %v6262 = vpack.c.b16 %v5778, %v5774
    %v6263 = vpack.c.b16 %v5783, %v5779
    %v6264 = vpack.c.b16 %v5784, %v5780
    %v6265 = vpack.c.b16 %v5785, %v5781
    %v6266 = vpack.c.b16 %v5786, %v5782
    %v6267 = vpack.c.b16 %v5791, %v5787
    %v6268 = vpack.c.b16 %v5792, %v5788
    %v6269 = vpack.c.b16 %v5793, %v5789
    %v6270 = vpack.c.b16 %v5794, %v5790
    %v6271 = vpack.c.b16 %v5799, %v5795
    %v6272 = vpack.c.b16 %v5800, %v5796
    %v6273 = vpack.c.b16 %v5801, %v5797
    %v6274 = vpack.c.b16 %v5802, %v5798
    %v6275 = vpack.c.b16 %v5807, %v5803
    %v6276 = vpack.c.b16 %v5808, %v5804
    %v6277 = vpack.c.b16 %v5809, %v5805
    %v6278 = vpack.c.b16 %v5810, %v5806
    %v6279 = vpack.c.b16 %v5815, %v5811
    %v6280 = vpack.c.b16 %v5816, %v5812
    %v6281 = vpack.c.b16 %v5817, %v5813
    %v6282 = vpack.c.b16 %v5818, %v5814
    %v6283 = vpack.c.b16 %v5823, %v5819
    %v6284 = vpack.c.b16 %v5824, %v5820
    %v6285 = vpack.c.b16 %v5825, %v5821
    %v6286 = vpack.c.b16 %v5826, %v5822
    %v6287 = vpack.c.b16 %v5831, %v5827
    %v6288 = vpack.c.b16 %v5832, %v5828
    %v6289 = vpack.c.b16 %v5833, %v5829
    %v6290 = vpack.c.b16 %v5834, %v5830
    %v6291 = vpack.c.b16 %v5839, %v5835
    %v6292 = vpack.c.b16 %v5840, %v5836
    %v6293 = vpack.c.b16 %v5841, %v5837
    %v6294 = vpack.c.b16 %v5842, %v5838
    %v6295 = vpack.c.b16 %v5847, %v5843
    %v6296 = vpack.c.b16 %v5848, %v5844
    %v6297 = vpack.c.b16 %v5849, %v5845
    %v6298 = vpack.c.b16 %v5850, %v5846
    %v6299 = vpack.c.b16 %v5855, %v5851
    %v6300 = vpack.c.b16 %v5856, %v5852
    %v6301 = vpack.c.b16 %v5857, %v5853
    %v6302 = vpack.c.b16 %v5858, %v5854
    %v6303 = vpack.c.b16 %v5863, %v5859
    %v6304 = vpack.c.b16 %v5864, %v5860
    %v6305 = vpack.c.b16 %v5865, %v5861
    %v6306 = vpack.c.b16 %v5866, %v5862
    %v6307 = vpack.c.b16 %v5871, %v5867
    %v6308 = vpack.c.b16 %v5872, %v5868
    %v6309 = vpack.c.b16 %v5873, %v5869
    %v6310 = vpack.c.b16 %v5874, %v5870
    %v6311 = vpack.c.b16 %v5879, %v5875
    %v6312 = vpack.c.b16 %v5880, %v5876
    %v6313 = vpack.c.b16 %v5881, %v5877
    %v6314 = vpack.c.b16 %v5882, %v5878
    %v6315 = vpack.c.b16 %v5887, %v5883
    %v6316 = vpack.c.b16 %v5888, %v5884
    %v6317 = vpack.c.b16 %v5889, %v5885
    %v6318 = vpack.c.b16 %v5890, %v5886
    %v6319 = vpack.c.b16 %v5895, %v5891
    %v6320 = vpack.c.b16 %v5896, %v5892
    %v6321 = vpack.c.b16 %v5897, %v5893
    %v6322 = vpack.c.b16 %v5898, %v5894
    %v6323 = vpack.c.b16 %v5903, %v5899
    %v6324 = vpack.c.b16 %v5904, %v5900
    %v6325 = vpack.c.b16 %v5905, %v5901
    %v6326 = vpack.c.b16 %v5906, %v5902
    %v6327 = vpack.c.b16 %v5911, %v5907
    %v6328 = vpack.c.b16 %v5912, %v5908
    %v6329 = vpack.c.b16 %v5913, %v5909
    %v6330 = vpack.c.b16 %v5914, %v5910
    %v6331 = vpack.c.b16 %v5919, %v5915
    %v6332 = vpack.c.b16 %v5920, %v5916
    %v6333 = vpack.c.b16 %v5921, %v5917
    %v6334 = vpack.c.b16 %v5922, %v5918
    %v6335 = vpack.c.b16 %v5927, %v5923
    %v6336 = vpack.c.b16 %v5928, %v5924
    %v6337 = vpack.c.b16 %v5929, %v5925
    %v6338 = vpack.c.b16 %v5930, %v5926
    %v6339 = vpack.c.b16 %v5935, %v5931
    %v6340 = vpack.c.b16 %v5936, %v5932
    %v6341 = vpack.c.b16 %v5937, %v5933
    %v6342 = vpack.c.b16 %v5938, %v5934
    %v6343 = vpack.c.b16 %v5943, %v5939
    %v6344 = vpack.c.b16 %v5944, %v5940
    %v6345 = vpack.c.b16 %v5945, %v5941
    %v6346 = vpack.c.b16 %v5946, %v5942
    %v6347 = vpack.c.b16 %v5951, %v5947
    %v6348 = vpack.c.b16 %v5952, %v5948
    %v6349 = vpack.c.b16 %v5953, %v5949
    %v6350 = vpack.c.b16 %v5954, %v5950
    %v6351 = vpack.c.b16 %v5959, %v5955
    %v6352 = vpack.c.b16 %v5960, %v5956
    %v6353 = vpack.c.b16 %v5961, %v5957
    %v6354 = vpack.c.b16 %v5962, %v5958
    %v6355 = vpack.c.b16 %v5967, %v5963
    %v6356 = vpack.c.b16 %v5968, %v5964
    %v6357 = vpack.c.b16 %v5969, %v5965
    %v6358 = vpack.c.b16 %v5970, %v5966
    %v6359 = vpack.c.b16 %v5975, %v5971
    %v6360 = vpack.c.b16 %v5976, %v5972
    %v6361 = vpack.c.b16 %v5977, %v5973
    %v6362 = vpack.c.b16 %v5978, %v5974
    %v6363 = vpack.c.b16 %v5983, %v5979
    %v6364 = vpack.c.b16 %v5984, %v5980
    %v6365 = vpack.c.b16 %v5985, %v5981
    %v6366 = vpack.c.b16 %v5986, %v5982
    %v6367 = vpack.c.b16 %v5991, %v5987
    %v6368 = vpack.c.b16 %v5992, %v5988
    %v6369 = vpack.c.b16 %v5993, %v5989
    %v6370 = vpack.c.b16 %v5994, %v5990
    %v6371 = vpack.c.b16 %v5999, %v5995
    %v6372 = vpack.c.b16 %v6000, %v5996
    %v6373 = vpack.c.b16 %v6001, %v5997
    %v6374 = vpack.c.b16 %v6002, %v5998
    %v6375 = vpack.c.b16 %v6007, %v6003
    %v6376 = vpack.c.b16 %v6008, %v6004
    %v6377 = vpack.c.b16 %v6009, %v6005
    %v6378 = vpack.c.b16 %v6010, %v6006
    %v6379 = vpack.c.b16 %v6015, %v6011
    %v6380 = vpack.c.b16 %v6016, %v6012
    %v6381 = vpack.c.b16 %v6017, %v6013
    %v6382 = vpack.c.b16 %v6018, %v6014
    %v6383 = vpack.c.b16 %v6023, %v6019
    %v6384 = vpack.c.b16 %v6024, %v6020
    %v6385 = vpack.c.b16 %v6025, %v6021
    %v6386 = vpack.c.b16 %v6026, %v6022
    %v6387 = vpack.c.b16 %v6031, %v6027
    %v6388 = vpack.c.b16 %v6032, %v6028
    %v6389 = vpack.c.b16 %v6033, %v6029
    %v6390 = vpack.c.b16 %v6034, %v6030
    %v6391 = vpack.c.b16 %v6039, %v6035
    %v6392 = vpack.c.b16 %v6040, %v6036
    %v6393 = vpack.c.b16 %v6041, %v6037
    %v6394 = vpack.c.b16 %v6042, %v6038
    %v6395 = vpack.c.b16 %v6047, %v6043
    %v6396 = vpack.c.b16 %v6048, %v6044
    %v6397 = vpack.c.b16 %v6049, %v6045
    %v6398 = vpack.c.b16 %v6050, %v6046
    %v6399 = vpack.c.b16 %v6055, %v6051
    %v6400 = vpack.c.b16 %v6056, %v6052
    %v6401 = vpack.c.b16 %v6057, %v6053
    %v6402 = vpack.c.b16 %v6058, %v6054
    %v6403 = vpack.c.b16 %v6063, %v6059
    %v6404 = vpack.c.b16 %v6064, %v6060
    %v6405 = vpack.c.b16 %v6065, %v6061
    %v6406 = vpack.c.b16 %v6066, %v6062
    %v6407 = vpack.c.b16 %v6071, %v6067
    %v6408 = vpack.c.b16 %v6072, %v6068
    %v6409 = vpack.c.b16 %v6073, %v6069
    %v6410 = vpack.c.b16 %v6074, %v6070
    %v6411 = vpack.c.b16 %v6079, %v6075
    %v6412 = vpack.c.b16 %v6080, %v6076
    %v6413 = vpack.c.b16 %v6081, %v6077
    %v6414 = vpack.c.b16 %v6082, %v6078
    %v6415 = vpack.c.b16 %v6087, %v6083
    %v6416 = vpack.c.b16 %v6088, %v6084
    %v6417 = vpack.c.b16 %v6089, %v6085
    %v6418 = vpack.c.b16 %v6090, %v6086
    %v6419 = vpack.c.b16 %v6095, %v6091
    %v6420 = vpack.c.b16 %v6096, %v6092
    %v6421 = vpack.c.b16 %v6097, %v6093
    %v6422 = vpack.c.b16 %v6098, %v6094
    %v6423 = vpack.c.b16 %v6103, %v6099
    %v6424 = vpack.c.b16 %v6104, %v6100
    %v6425 = vpack.c.b16 %v6105, %v6101
    %v6426 = vpack.c.b16 %v6106, %v6102
    %v6427 = vpack.c.b16 %v6111, %v6107
    %v6428 = vpack.c.b16 %v6112, %v6108
    %v6429 = vpack.c.b16 %v6113, %v6109
    %v6430 = vpack.c.b16 %v6114, %v6110
    %v6431 = vpack.c.b16 %v6119, %v6115
    %v6432 = vpack.c.b16 %v6120, %v6116
    %v6433 = vpack.c.b16 %v6121, %v6117
    %v6434 = vpack.c.b16 %v6122, %v6118
    %v6435 = vpack.c.b16 %v6127, %v6123
    %v6436 = vpack.c.b16 %v6128, %v6124
    %v6437 = vpack.c.b16 %v6129, %v6125
    %v6438 = vpack.c.b16 %v6130, %v6126
    %v6439 = vpack.c.b16 %v6135, %v6131
    %v6440 = vpack.c.b16 %v6136, %v6132
    %v6441 = vpack.c.b16 %v6137, %v6133
    %v6442 = vpack.c.b16 %v6138, %v6134
    %v6443 = vpack.c.b16 %v6143, %v6139
    %v6444 = vpack.c.b16 %v6144, %v6140
    %v6445 = vpack.c.b16 %v6145, %v6141
    %v6446 = vpack.c.b16 %v6146, %v6142
    %v6447 = vpack.c.b16 %v6151, %v6147
    %v6448 = vpack.c.b16 %v6152, %v6148
    %v6449 = vpack.c.b16 %v6153, %v6149
    %v6450 = vpack.c.b16 %v6154, %v6150
    %v6451 = vpack.c.b16 %v6159, %v6155
    %v6452 = vpack.c.b16 %v6160, %v6156
    %v6453 = vpack.c.b16 %v6161, %v6157
    %v6454 = vpack.c.b16 %v6162, %v6158
    %v6455 = vpack.c.b16 %v6167, %v6163
    %v6456 = vpack.c.b16 %v6168, %v6164
    %v6457 = vpack.c.b16 %v6169, %v6165
    %v6458 = vpack.c.b16 %v6170, %v6166
    %v6459 = vpack.c.b16 %v6175, %v6171
    %v6460 = vpack.c.b16 %v6176, %v6172
    %v6461 = vpack.c.b16 %v6177, %v6173
    %v6462 = vpack.c.b16 %v6178, %v6174
    %v6463 = vpack.c.b16 %v6183, %v6179
    %v6464 = vpack.c.b16 %v6184, %v6180
    %v6465 = vpack.c.b16 %v6185, %v6181
    %v6466 = vpack.c.b16 %v6186, %v6182
    %v6467 = vpack.c.b16 %v6191, %v6187
    %v6468 = vpack.c.b16 %v6192, %v6188
    %v6469 = vpack.c.b16 %v6193, %v6189
    %v6470 = vpack.c.b16 %v6194, %v6190
    %v6471 = vpack.c.b16 %v6199, %v6195
    %v6472 = vpack.c.b16 %v6200, %v6196
    %v6473 = vpack.c.b16 %v6201, %v6197
    %v6474 = vpack.c.b16 %v6202, %v6198
    %v6475 = vpack.c.b16 %v6207, %v6203
    %v6476 = vpack.c.b16 %v6208, %v6204
    %v6477 = vpack.c.b16 %v6209, %v6205
    %v6478 = vpack.c.b16 %v6210, %v6206
    %v6479 = vpack.c.b16 %v6215, %v6211
    %v6480 = vpack.c.b16 %v6216, %v6212
    %v6481 = vpack.c.b16 %v6217, %v6213
    %v6482 = vpack.c.b16 %v6218, %v6214
    %v6483 = vpack.c.b16 %v6223, %v6219
    %v6484 = vpack.c.b16 %v6224, %v6220
    %v6485 = vpack.c.b16 %v6225, %v6221
    %v6486 = vpack.c.b16 %v6226, %v6222
    %v6487 = vpack.c.b16 %v6231, %v6227
    %v6488 = vpack.c.b16 %v6232, %v6228
    %v6489 = vpack.c.b16 %v6233, %v6229
    %v6490 = vpack.c.b16 %v6234, %v6230
    %6747 = vmatprep.subr.bf16.mxu0 %v6236
    %6748 = vmatpush1.bf16.msra.mxu0 %v6235
    %6749 = vmatprep.subr.bf16.mxu0 %v6240
    %6750 = vmatpush1.bf16.msra.mxu0 %v6239
    %6751 = vmatprep.subr.bf16.mxu0 %v6244
    %6752 = vmatpush1.bf16.msra.mxu0 %v6243
    %6753 = vmatprep.subr.bf16.mxu0 %v6248
    %6754 = vmatpush1.bf16.msra.mxu0 %v6247
    %6755 = vmatprep.subr.bf16.mxu0 %v6252
    %6756 = vmatpush1.bf16.msra.mxu0 %v6251
    %6757 = vmatprep.subr.bf16.mxu0 %v6256
    %6758 = vmatpush1.bf16.msra.mxu0 %v6255
    %6759 = vmatprep.subr.bf16.mxu0 %v6260
    %6760 = vmatpush1.bf16.msra.mxu0 %v6259
    %6761 = vmatprep.subr.bf16.mxu0 %v6264
    %6762 = vmatpush1.bf16.msra.mxu0 %v6263
    %6763 = vmatprep.subr.bf16.mxu0 %v6268
    %6764 = vmatpush1.bf16.msra.mxu0 %v6267
    %6765 = vmatprep.subr.bf16.mxu0 %v6272
    %6766 = vmatpush1.bf16.msra.mxu0 %v6271
    %6767 = vmatprep.subr.bf16.mxu0 %v6276
    %6768 = vmatpush1.bf16.msra.mxu0 %v6275
    %6769 = vmatprep.subr.bf16.mxu0 %v6280
    %6770 = vmatpush1.bf16.msra.mxu0 %v6279
    %6771 = vmatprep.subr.bf16.mxu0 %v6284
    %6772 = vmatpush1.bf16.msra.mxu0 %v6283
    %6773 = vmatprep.subr.bf16.mxu0 %v6288
    %6774 = vmatpush1.bf16.msra.mxu0 %v6287
    %6775 = vmatprep.subr.bf16.mxu0 %v6292
    %6776 = vmatpush1.bf16.msra.mxu0 %v6291
    %6777 = vmatprep.subr.bf16.mxu0 %v6296
    %6778 = vmatpush1.bf16.msra.mxu0 %v6295
    %6779 = vmatprep.mubr.bf16.mxu0 %v5127
    %6780 = vmatmul.mubr.bf16.gmra.mrb[0].mxu0 %v5126
    %v6781 = vpop.f32.mrb[0].mxu0
    %v6782 = vadd.f32 %v5450, %v6781
    %v6783 = vpop.f32.mrb[0].mxu0
    %v6784 = vadd.f32 %v5454, %v6783
    %v6785 = vpop.f32.mrb[0].mxu0
    %v6786 = vadd.f32 %v5450, %v6785
    %v6787 = vpop.f32.mrb[0].mxu0
    %v6788 = vadd.f32 %v5454, %v6787
    %6789 = vmatprep.mubr.bf16.mxu0 %v5135
    %6790 = vmatmul.mubr.bf16.gmra.mrb[0].mxu0 %v5134
    %v6791 = vpop.f32.mrb[0].mxu0
    %v6792 = vadd.f32 %v5450, %v6791
    %v6793 = vpop.f32.mrb[0].mxu0
    %v6794 = vadd.f32 %v5454, %v6793
    %v6795 = vpop.f32.mrb[0].mxu0
    %v6796 = vadd.f32 %v5450, %v6795
    %v6797 = vpop.f32.mrb[0].mxu0
    %v6798 = vadd.f32 %v5454, %v6797
    %6799 = vmatprep.mubr.bf16.mxu0 %v5143
    %6800 = vmatmul.mubr.bf16.gmra.mrb[0].mxu0 %v5142
    %v6801 = vpop.f32.mrb[0].mxu0
    %v6802 = vadd.f32 %v5450, %v6801
    %v6803 = vpop.f32.mrb[0].mxu0
    %v6804 = vadd.f32 %v5454, %v6803
    %v6805 = vpop.f32.mrb[0].mxu0
    %v6806 = vadd.f32 %v5450, %v6805
    %v6807 = vpop.f32.mrb[0].mxu0
    %v6808 = vadd.f32 %v5454, %v6807
    %6809 = vmatprep.mubr.bf16.mxu0 %v5151
    %6810 = vmatmul.mubr.bf16.gmra.mrb[0].mxu0 %v5150
    %v6811 = vpop.f32.mrb[0].mxu0
    %v6812 = vadd.f32 %v5450, %v6811
    %v6813 = vpop.f32.mrb[0].mxu0
    %v6814 = vadd.f32 %v5454, %v6813
    %v6815 = vpop.f32.mrb[0].mxu0
    %v6816 = vadd.f32 %v5450, %v6815
    %v6817 = vpop.f32.mrb[0].mxu0
    %v6818 = vadd.f32 %v5454, %v6817
    %6819 = vmatprep.mubr.bf16.mxu0 %v5159
    %6820 = vmatmul.mubr.bf16.gmra.mrb[0].mxu0 %v5158
    %v6821 = vpop.f32.mrb[0].mxu0
    %v6822 = vadd.f32 %v5450, %v6821
    %v6823 = vpop.f32.mrb[0].mxu0
    %v6824 = vadd.f32 %v5454, %v6823
    %v6825 = vpop.f32.mrb[0].mxu0
    %v6826 = vadd.f32 %v5450, %v6825
    %v6827 = vpop.f32.mrb[0].mxu0
    %v6828 = vadd.f32 %v5454, %v6827
    %6829 = vmatprep.mubr.bf16.mxu0 %v5167
    %6830 = vmatmul.mubr.bf16.gmra.mrb[0].mxu0 %v5166
    %v6831 = vpop.f32.mrb[0].mxu0
    %v6832 = vadd.f32 %v5450, %v6831
    %v6833 = vpop.f32.mrb[0].mxu0
    %v6834 = vadd.f32 %v5454, %v6833
    %v6835 = vpop.f32.mrb[0].mxu0
    %v6836 = vadd.f32 %v5450, %v6835
    %v6837 = vpop.f32.mrb[0].mxu0
    %v6838 = vadd.f32 %v5454, %v6837
    %6839 = vmatprep.mubr.bf16.mxu0 %v5175
    %6840 = vmatmul.mubr.bf16.gmra.mrb[0].mxu0 %v5174
    %v6841 = vpop.f32.mrb[0].mxu0
    %v6842 = vadd.f32 %v5450, %v6841
    %v6843 = vpop.f32.mrb[0].mxu0
    %v6844 = vadd.f32 %v5454, %v6843
    %v6845 = vpop.f32.mrb[0].mxu0
    %v6846 = vadd.f32 %v5450, %v6845
    %v6847 = vpop.f32.mrb[0].mxu0
    %v6848 = vadd.f32 %v5454, %v6847
    %6849 = vmatprep.mubr.bf16.mxu0 %v5183
    %6850 = vmatmul.mubr.bf16.gmra.mrb[0].mxu0 %v5182
    %v6851 = vpop.f32.mrb[0].mxu0
    %v6852 = vadd.f32 %v5450, %v6851
    %v6853 = vpop.f32.mrb[0].mxu0
    %v6854 = vadd.f32 %v5454, %v6853
    %v6855 = vpop.f32.mrb[0].mxu0
    %v6856 = vadd.f32 %v5450, %v6855
    %v6857 = vpop.f32.mrb[0].mxu0
    %v6858 = vadd.f32 %v5454, %v6857
    %6859 = vdwg.mxu0
    %6860 = vmatprep.subr.bf16.mxu0 %v6300
    %6861 = vmatpush1.bf16.msra.mxu0 %v6299
    %6862 = vmatprep.subr.bf16.mxu0 %v6304
    %6863 = vmatpush1.bf16.msra.mxu0 %v6303
    %6864 = vmatprep.subr.bf16.mxu0 %v6308
    %6865 = vmatpush1.bf16.msra.mxu0 %v6307
    %6866 = vmatprep.subr.bf16.mxu0 %v6312
    %6867 = vmatpush1.bf16.msra.mxu0 %v6311
    %6868 = vmatprep.subr.bf16.mxu0 %v6316
    %6869 = vmatpush1.bf16.msra.mxu0 %v6315
    %6870 = vmatprep.subr.bf16.mxu0 %v6320
    %6871 = vmatpush1.bf16.msra.mxu0 %v6319
    %6872 = vmatprep.subr.bf16.mxu0 %v6324
    %6873 = vmatpush1.bf16.msra.mxu0 %v6323
    %6874 = vmatprep.subr.bf16.mxu0 %v6328
    %6875 = vmatpush1.bf16.msra.mxu0 %v6327
    %6876 = vmatprep.subr.bf16.mxu0 %v6332
    %6877 = vmatpush1.bf16.msra.mxu0 %v6331
    %6878 = vmatprep.subr.bf16.mxu0 %v6336
    %6879 = vmatpush1.bf16.msra.mxu0 %v6335
    %6880 = vmatprep.subr.bf16.mxu0 %v6340
    %6881 = vmatpush1.bf16.msra.mxu0 %v6339
    %6882 = vmatprep.subr.bf16.mxu0 %v6344
    %6883 = vmatpush1.bf16.msra.mxu0 %v6343
    %6884 = vmatprep.subr.bf16.mxu0 %v6348
    %6885 = vmatpush1.bf16.msra.mxu0 %v6347
    %6886 = vmatprep.subr.bf16.mxu0 %v6352
    %6887 = vmatpush1.bf16.msra.mxu0 %v6351
    %6888 = vmatprep.subr.bf16.mxu0 %v6356
    %6889 = vmatpush1.bf16.msra.mxu0 %v6355
    %6890 = vmatprep.subr.bf16.mxu0 %v6360
    %6891 = vmatpush1.bf16.msra.mxu0 %v6359
    %6892 = vmatprep.mubr.bf16.mxu0 %v5129
    %6893 = vmatmul.mubr.bf16.gmra.mrb[0].mxu0 %v5128
    %v6894 = vpop.f32.mrb[0].mxu0
    %v6895 = vadd.f32 %v6782, %v6894
    %v6896 = vpop.f32.mrb[0].mxu0
    %v6897 = vadd.f32 %v6784, %v6896
    %v6898 = vpop.f32.mrb[0].mxu0
    %v6899 = vadd.f32 %v6786, %v6898
    %v6900 = vpop.f32.mrb[0].mxu0
    %v6901 = vadd.f32 %v6788, %v6900
    %6902 = vmatprep.mubr.bf16.mxu0 %v5137
    %6903 = vmatmul.mubr.bf16.gmra.mrb[0].mxu0 %v5136
    %v6904 = vpop.f32.mrb[0].mxu0
    %v6905 = vadd.f32 %v6792, %v6904
    %v6906 = vpop.f32.mrb[0].mxu0
    %v6907 = vadd.f32 %v6794, %v6906
    %v6908 = vpop.f32.mrb[0].mxu0
    %v6909 = vadd.f32 %v6796, %v6908
    %v6910 = vpop.f32.mrb[0].mxu0
    %v6911 = vadd.f32 %v6798, %v6910
    %6912 = vmatprep.mubr.bf16.mxu0 %v5145
    %6913 = vmatmul.mubr.bf16.gmra.mrb[0].mxu0 %v5144
    %v6914 = vpop.f32.mrb[0].mxu0
    %v6915 = vadd.f32 %v6802, %v6914
    %v6916 = vpop.f32.mrb[0].mxu0
    %v6917 = vadd.f32 %v6804, %v6916
    %v6918 = vpop.f32.mrb[0].mxu0
    %v6919 = vadd.f32 %v6806, %v6918
    %v6920 = vpop.f32.mrb[0].mxu0
    %v6921 = vadd.f32 %v6808, %v6920
    %6922 = vmatprep.mubr.bf16.mxu0 %v5153
    %6923 = vmatmul.mubr.bf16.gmra.mrb[0].mxu0 %v5152
    %v6924 = vpop.f32.mrb[0].mxu0
    %v6925 = vadd.f32 %v6812, %v6924
    %v6926 = vpop.f32.mrb[0].mxu0
    %v6927 = vadd.f32 %v6814, %v6926
    %v6928 = vpop.f32.mrb[0].mxu0
    %v6929 = vadd.f32 %v6816, %v6928
    %v6930 = vpop.f32.mrb[0].mxu0
    %v6931 = vadd.f32 %v6818, %v6930
    %6932 = vmatprep.mubr.bf16.mxu0 %v5161
    %6933 = vmatmul.mubr.bf16.gmra.mrb[0].mxu0 %v5160
    %v6934 = vpop.f32.mrb[0].mxu0
    %v6935 = vadd.f32 %v6822, %v6934
    %v6936 = vpop.f32.mrb[0].mxu0
    %v6937 = vadd.f32 %v6824, %v6936
    %v6938 = vpop.f32.mrb[0].mxu0
    %v6939 = vadd.f32 %v6826, %v6938
    %v6940 = vpop.f32.mrb[0].mxu0
    %v6941 = vadd.f32 %v6828, %v6940
    %6942 = vmatprep.mubr.bf16.mxu0 %v5169
    %6943 = vmatmul.mubr.bf16.gmra.mrb[0].mxu0 %v5168
    %v6944 = vpop.f32.mrb[0].mxu0
    %v6945 = vadd.f32 %v6832, %v6944
    %v6946 = vpop.f32.mrb[0].mxu0
    %v6947 = vadd.f32 %v6834, %v6946
    %v6948 = vpop.f32.mrb[0].mxu0
    %v6949 = vadd.f32 %v6836, %v6948
    %v6950 = vpop.f32.mrb[0].mxu0
    %v6951 = vadd.f32 %v6838, %v6950
    %6952 = vmatprep.mubr.bf16.mxu0 %v5177
    %6953 = vmatmul.mubr.bf16.gmra.mrb[0].mxu0 %v5176
    %v6954 = vpop.f32.mrb[0].mxu0
    %v6955 = vadd.f32 %v6842, %v6954
    %v6956 = vpop.f32.mrb[0].mxu0
    %v6957 = vadd.f32 %v6844, %v6956
    %v6958 = vpop.f32.mrb[0].mxu0
    %v6959 = vadd.f32 %v6846, %v6958
    %v6960 = vpop.f32.mrb[0].mxu0
    %v6961 = vadd.f32 %v6848, %v6960
    %6962 = vmatprep.mubr.bf16.mxu0 %v5185
    %6963 = vmatmul.mubr.bf16.gmra.mrb[0].mxu0 %v5184
    %v6964 = vpop.f32.mrb[0].mxu0
    %v6965 = vadd.f32 %v6852, %v6964
    %v6966 = vpop.f32.mrb[0].mxu0
    %v6967 = vadd.f32 %v6854, %v6966
    %v6968 = vpop.f32.mrb[0].mxu0
    %v6969 = vadd.f32 %v6856, %v6968
    %v6970 = vpop.f32.mrb[0].mxu0
    %v6971 = vadd.f32 %v6858, %v6970
    %6972 = vdwg.mxu0
    %6973 = vmatprep.subr.bf16.mxu0 %v6364
    %6974 = vmatpush1.bf16.msra.mxu0 %v6363
    %6975 = vmatprep.subr.bf16.mxu0 %v6368
    %6976 = vmatpush1.bf16.msra.mxu0 %v6367
    %6977 = vmatprep.subr.bf16.mxu0 %v6372
    %6978 = vmatpush1.bf16.msra.mxu0 %v6371
    %6979 = vmatprep.subr.bf16.mxu0 %v6376
    %6980 = vmatpush1.bf16.msra.mxu0 %v6375
    %6981 = vmatprep.subr.bf16.mxu0 %v6380
    %6982 = vmatpush1.bf16.msra.mxu0 %v6379
    %6983 = vmatprep.subr.bf16.mxu0 %v6384
    %6984 = vmatpush1.bf16.msra.mxu0 %v6383
    %6985 = vmatprep.subr.bf16.mxu0 %v6388
    %6986 = vmatpush1.bf16.msra.mxu0 %v6387
    %6987 = vmatprep.subr.bf16.mxu0 %v6392
    %6988 = vmatpush1.bf16.msra.mxu0 %v6391
    %6989 = vmatprep.subr.bf16.mxu0 %v6396
    %6990 = vmatpush1.bf16.msra.mxu0 %v6395
    %6991 = vmatprep.subr.bf16.mxu0 %v6400
    %6992 = vmatpush1.bf16.msra.mxu0 %v6399
    %6993 = vmatprep.subr.bf16.mxu0 %v6404
    %6994 = vmatpush1.bf16.msra.mxu0 %v6403
    %6995 = vmatprep.subr.bf16.mxu0 %v6408
    %6996 = vmatpush1.bf16.msra.mxu0 %v6407
    %6997 = vmatprep.subr.bf16.mxu0 %v6412
    %6998 = vmatpush1.bf16.msra.mxu0 %v6411
    %6999 = vmatprep.subr.bf16.mxu0 %v6416
    %7000 = vmatpush1.bf16.msra.mxu0 %v6415
    %7001 = vmatprep.subr.bf16.mxu0 %v6420
    %7002 = vmatpush1.bf16.msra.mxu0 %v6419
    %7003 = vmatprep.subr.bf16.mxu0 %v6424
    %7004 = vmatpush1.bf16.msra.mxu0 %v6423
    %7005 = vmatprep.mubr.bf16.mxu0 %v5131
    %7006 = vmatmul.mubr.bf16.gmra.mrb[0].mxu0 %v5130
    %v7007 = vpop.f32.mrb[0].mxu0
    %v7008 = vadd.f32 %v6895, %v7007
    %v7009 = vpop.f32.mrb[0].mxu0
    %v7010 = vadd.f32 %v6897, %v7009
    %v7011 = vpop.f32.mrb[0].mxu0
    %v7012 = vadd.f32 %v6899, %v7011
    %v7013 = vpop.f32.mrb[0].mxu0
    %v7014 = vadd.f32 %v6901, %v7013
    %7015 = vmatprep.mubr.bf16.mxu0 %v5139
    %7016 = vmatmul.mubr.bf16.gmra.mrb[0].mxu0 %v5138
    %v7017 = vpop.f32.mrb[0].mxu0
    %v7018 = vadd.f32 %v6905, %v7017
    %v7019 = vpop.f32.mrb[0].mxu0
    %v7020 = vadd.f32 %v6907, %v7019
    %v7021 = vpop.f32.mrb[0].mxu0
    %v7022 = vadd.f32 %v6909, %v7021
    %v7023 = vpop.f32.mrb[0].mxu0
    %v7024 = vadd.f32 %v6911, %v7023
    %7025 = vmatprep.mubr.bf16.mxu0 %v5147
    %7026 = vmatmul.mubr.bf16.gmra.mrb[0].mxu0 %v5146
    %v7027 = vpop.f32.mrb[0].mxu0
    %v7028 = vadd.f32 %v6915, %v7027
    %v7029 = vpop.f32.mrb[0].mxu0
    %v7030 = vadd.f32 %v6917, %v7029
    %v7031 = vpop.f32.mrb[0].mxu0
    %v7032 = vadd.f32 %v6919, %v7031
    %v7033 = vpop.f32.mrb[0].mxu0
    %v7034 = vadd.f32 %v6921, %v7033
    %7035 = vmatprep.mubr.bf16.mxu0 %v5155
    %7036 = vmatmul.mubr.bf16.gmra.mrb[0].mxu0 %v5154
    %v7037 = vpop.f32.mrb[0].mxu0
    %v7038 = vadd.f32 %v6925, %v7037
    %v7039 = vpop.f32.mrb[0].mxu0
    %v7040 = vadd.f32 %v6927, %v7039
    %v7041 = vpop.f32.mrb[0].mxu0
    %v7042 = vadd.f32 %v6929, %v7041
    %v7043 = vpop.f32.mrb[0].mxu0
    %v7044 = vadd.f32 %v6931, %v7043
    %7045 = vmatprep.mubr.bf16.mxu0 %v5163
    %7046 = vmatmul.mubr.bf16.gmra.mrb[0].mxu0 %v5162
    %v7047 = vpop.f32.mrb[0].mxu0
    %v7048 = vadd.f32 %v6935, %v7047
    %v7049 = vpop.f32.mrb[0].mxu0
    %v7050 = vadd.f32 %v6937, %v7049
    %v7051 = vpop.f32.mrb[0].mxu0
    %v7052 = vadd.f32 %v6939, %v7051
    %v7053 = vpop.f32.mrb[0].mxu0
    %v7054 = vadd.f32 %v6941, %v7053
    %7055 = vmatprep.mubr.bf16.mxu0 %v5171
    %7056 = vmatmul.mubr.bf16.gmra.mrb[0].mxu0 %v5170
    %v7057 = vpop.f32.mrb[0].mxu0
    %v7058 = vadd.f32 %v6945, %v7057
    %v7059 = vpop.f32.mrb[0].mxu0
    %v7060 = vadd.f32 %v6947, %v7059
    %v7061 = vpop.f32.mrb[0].mxu0
    %v7062 = vadd.f32 %v6949, %v7061
    %v7063 = vpop.f32.mrb[0].mxu0
    %v7064 = vadd.f32 %v6951, %v7063
    %7065 = vmatprep.mubr.bf16.mxu0 %v5179
    %7066 = vmatmul.mubr.bf16.gmra.mrb[0].mxu0 %v5178
    %v7067 = vpop.f32.mrb[0].mxu0
    %v7068 = vadd.f32 %v6955, %v7067
    %v7069 = vpop.f32.mrb[0].mxu0
    %v7070 = vadd.f32 %v6957, %v7069
    %v7071 = vpop.f32.mrb[0].mxu0
    %v7072 = vadd.f32 %v6959, %v7071
    %v7073 = vpop.f32.mrb[0].mxu0
    %v7074 = vadd.f32 %v6961, %v7073
    %7075 = vmatprep.mubr.bf16.mxu0 %v5187
    %7076 = vmatmul.mubr.bf16.gmra.mrb[0].mxu0 %v5186
    %v7077 = vpop.f32.mrb[0].mxu0
    %v7078 = vadd.f32 %v6965, %v7077
    %v7079 = vpop.f32.mrb[0].mxu0
    %v7080 = vadd.f32 %v6967, %v7079
    %v7081 = vpop.f32.mrb[0].mxu0
    %v7082 = vadd.f32 %v6969, %v7081
    %v7083 = vpop.f32.mrb[0].mxu0
    %v7084 = vadd.f32 %v6971, %v7083
    %7085 = vdwg.mxu0
    %7086 = vmatprep.subr.bf16.mxu0 %v6428
    %7087 = vmatpush1.bf16.msra.mxu0 %v6427
    %7088 = vmatprep.subr.bf16.mxu0 %v6432
    %7089 = vmatpush1.bf16.msra.mxu0 %v6431
    %7090 = vmatprep.subr.bf16.mxu0 %v6436
    %7091 = vmatpush1.bf16.msra.mxu0 %v6435
    %7092 = vmatprep.subr.bf16.mxu0 %v6440
    %7093 = vmatpush1.bf16.msra.mxu0 %v6439
    %7094 = vmatprep.subr.bf16.mxu0 %v6444
    %7095 = vmatpush1.bf16.msra.mxu0 %v6443
    %7096 = vmatprep.subr.bf16.mxu0 %v6448
    %7097 = vmatpush1.bf16.msra.mxu0 %v6447
    %7098 = vmatprep.subr.bf16.mxu0 %v6452
    %7099 = vmatpush1.bf16.msra.mxu0 %v6451
    %7100 = vmatprep.subr.bf16.mxu0 %v6456
    %7101 = vmatpush1.bf16.msra.mxu0 %v6455
    %7102 = vmatprep.subr.bf16.mxu0 %v6460
    %7103 = vmatpush1.bf16.msra.mxu0 %v6459
    %7104 = vmatprep.subr.bf16.mxu0 %v6464
    %7105 = vmatpush1.bf16.msra.mxu0 %v6463
    %7106 = vmatprep.subr.bf16.mxu0 %v6468
    %7107 = vmatpush1.bf16.msra.mxu0 %v6467
    %7108 = vmatprep.subr.bf16.mxu0 %v6472
    %7109 = vmatpush1.bf16.msra.mxu0 %v6471
    %7110 = vmatprep.subr.bf16.mxu0 %v6476
    %7111 = vmatpush1.bf16.msra.mxu0 %v6475
    %7112 = vmatprep.subr.bf16.mxu0 %v6480
    %7113 = vmatpush1.bf16.msra.mxu0 %v6479
    %7114 = vmatprep.subr.bf16.mxu0 %v6484
    %7115 = vmatpush1.bf16.msra.mxu0 %v6483
    %7116 = vmatprep.subr.bf16.mxu0 %v6488
    %7117 = vmatpush1.bf16.msra.mxu0 %v6487
    %7118 = vmatprep.mubr.bf16.mxu0 %v5133
    %7119 = vmatmul.mubr.bf16.gmra.mrb[0].mxu0 %v5132
    %v7120 = vpop.f32.mrb[0].mxu0
    %v7121 = vadd.f32 %v7008, %v7120
    %v7122 = vpop.f32.mrb[0].mxu0
    %v7123 = vadd.f32 %v7010, %v7122
    %v7124 = vpop.f32.mrb[0].mxu0
    %v7125 = vadd.f32 %v7012, %v7124
    %v7126 = vpop.f32.mrb[0].mxu0
    %v7127 = vadd.f32 %v7014, %v7126
    %7128 = vmatprep.mubr.bf16.mxu0 %v5141
    %7129 = vmatmul.mubr.bf16.gmra.mrb[0].mxu0 %v5140
    %v7130 = vpop.f32.mrb[0].mxu0
    %v7131 = vadd.f32 %v7018, %v7130
    %v7132 = vpop.f32.mrb[0].mxu0
    %v7133 = vadd.f32 %v7020, %v7132
    %v7134 = vpop.f32.mrb[0].mxu0
    %v7135 = vadd.f32 %v7022, %v7134
    %v7136 = vpop.f32.mrb[0].mxu0
    %v7137 = vadd.f32 %v7024, %v7136
    %7138 = vmatprep.mubr.bf16.mxu0 %v5149
    %7139 = vmatmul.mubr.bf16.gmra.mrb[0].mxu0 %v5148
    %v7140 = vpop.f32.mrb[0].mxu0
    %v7141 = vadd.f32 %v7028, %v7140
    %v7142 = vpop.f32.mrb[0].mxu0
    %v7143 = vadd.f32 %v7030, %v7142
    %v7144 = vpop.f32.mrb[0].mxu0
    %v7145 = vadd.f32 %v7032, %v7144
    %v7146 = vpop.f32.mrb[0].mxu0
    %v7147 = vadd.f32 %v7034, %v7146
    %7148 = vmatprep.mubr.bf16.mxu0 %v5157
    %7149 = vmatmul.mubr.bf16.gmra.mrb[0].mxu0 %v5156
    %v7150 = vpop.f32.mrb[0].mxu0
    %v7151 = vadd.f32 %v7038, %v7150
    %v7152 = vpop.f32.mrb[0].mxu0
    %v7153 = vadd.f32 %v7040, %v7152
    %v7154 = vpop.f32.mrb[0].mxu0
    %v7155 = vadd.f32 %v7042, %v7154
    %v7156 = vpop.f32.mrb[0].mxu0
    %v7157 = vadd.f32 %v7044, %v7156
    %7158 = vmatprep.mubr.bf16.mxu0 %v5165
    %7159 = vmatmul.mubr.bf16.gmra.mrb[0].mxu0 %v5164
    %v7160 = vpop.f32.mrb[0].mxu0
    %v7161 = vadd.f32 %v7048, %v7160
    %v7162 = vpop.f32.mrb[0].mxu0
    %v7163 = vadd.f32 %v7050, %v7162
    %v7164 = vpop.f32.mrb[0].mxu0
    %v7165 = vadd.f32 %v7052, %v7164
    %v7166 = vpop.f32.mrb[0].mxu0
    %v7167 = vadd.f32 %v7054, %v7166
    %7168 = vmatprep.mubr.bf16.mxu0 %v5173
    %7169 = vmatmul.mubr.bf16.gmra.mrb[0].mxu0 %v5172
    %v7170 = vpop.f32.mrb[0].mxu0
    %v7171 = vadd.f32 %v7058, %v7170
    %v7172 = vpop.f32.mrb[0].mxu0
    %v7173 = vadd.f32 %v7060, %v7172
    %v7174 = vpop.f32.mrb[0].mxu0
    %v7175 = vadd.f32 %v7062, %v7174
    %v7176 = vpop.f32.mrb[0].mxu0
    %v7177 = vadd.f32 %v7064, %v7176
    %7178 = vmatprep.mubr.bf16.mxu0 %v5181
    %7179 = vmatmul.mubr.bf16.gmra.mrb[0].mxu0 %v5180
    %v7180 = vpop.f32.mrb[0].mxu0
    %v7181 = vadd.f32 %v7068, %v7180
    %v7182 = vpop.f32.mrb[0].mxu0
    %v7183 = vadd.f32 %v7070, %v7182
    %v7184 = vpop.f32.mrb[0].mxu0
    %v7185 = vadd.f32 %v7072, %v7184
    %v7186 = vpop.f32.mrb[0].mxu0
    %v7187 = vadd.f32 %v7074, %v7186
    %7188 = vmatprep.mubr.bf16.mxu0 %v5189
    %7189 = vmatmul.mubr.bf16.gmra.mrb[0].mxu0 %v5188
    %v7190 = vpop.f32.mrb[0].mxu0
    %v7191 = vadd.f32 %v7078, %v7190
    %v7192 = vpop.f32.mrb[0].mxu0
    %v7193 = vadd.f32 %v7080, %v7192
    %v7194 = vpop.f32.mrb[0].mxu0
    %v7195 = vadd.f32 %v7082, %v7194
    %v7196 = vpop.f32.mrb[0].mxu0
    %v7197 = vadd.f32 %v7084, %v7196
    %7198 = vdwg.mxu0
    %7199 = vmatprep.subr.bf16.mxu0 %v6238
    %7200 = vmatpush1.bf16.msra.mxu0 %v6237
    %7201 = vmatprep.subr.bf16.mxu0 %v6242
    %7202 = vmatpush1.bf16.msra.mxu0 %v6241
    %7203 = vmatprep.subr.bf16.mxu0 %v6246
    %7204 = vmatpush1.bf16.msra.mxu0 %v6245
    %7205 = vmatprep.subr.bf16.mxu0 %v6250
    %7206 = vmatpush1.bf16.msra.mxu0 %v6249
    %7207 = vmatprep.subr.bf16.mxu0 %v6254
    %7208 = vmatpush1.bf16.msra.mxu0 %v6253
    %7209 = vmatprep.subr.bf16.mxu0 %v6258
    %7210 = vmatpush1.bf16.msra.mxu0 %v6257
    %7211 = vmatprep.subr.bf16.mxu0 %v6262
    %7212 = vmatpush1.bf16.msra.mxu0 %v6261
    %7213 = vmatprep.subr.bf16.mxu0 %v6266
    %7214 = vmatpush1.bf16.msra.mxu0 %v6265
    %7215 = vmatprep.subr.bf16.mxu0 %v6270
    %7216 = vmatpush1.bf16.msra.mxu0 %v6269
    %7217 = vmatprep.subr.bf16.mxu0 %v6274
    %7218 = vmatpush1.bf16.msra.mxu0 %v6273
    %7219 = vmatprep.subr.bf16.mxu0 %v6278
    %7220 = vmatpush1.bf16.msra.mxu0 %v6277
    %7221 = vmatprep.subr.bf16.mxu0 %v6282
    %7222 = vmatpush1.bf16.msra.mxu0 %v6281
    %7223 = vmatprep.subr.bf16.mxu0 %v6286
    %7224 = vmatpush1.bf16.msra.mxu0 %v6285
    %7225 = vmatprep.subr.bf16.mxu0 %v6290
    %7226 = vmatpush1.bf16.msra.mxu0 %v6289
    %7227 = vmatprep.subr.bf16.mxu0 %v6294
    %7228 = vmatpush1.bf16.msra.mxu0 %v6293
    %7229 = vmatprep.subr.bf16.mxu0 %v6298
    %7230 = vmatpush1.bf16.msra.mxu0 %v6297
    %7231 = vmatprep.mubr.bf16.mxu0 %v5127
    %7232 = vmatmul.mubr.bf16.gmra.mrb[0].mxu0 %v5126
    %v7233 = vpop.f32.mrb[0].mxu0
    %v7234 = vadd.f32 %v5458, %v7233
    %v7235 = vpop.f32.mrb[0].mxu0
    %v7236 = vadd.f32 %v5462, %v7235
    %v7237 = vpop.f32.mrb[0].mxu0
    %v7238 = vadd.f32 %v5458, %v7237
    %v7239 = vpop.f32.mrb[0].mxu0
    %v7240 = vadd.f32 %v5462, %v7239
    %7241 = vmatprep.mubr.bf16.mxu0 %v5135
    %7242 = vmatmul.mubr.bf16.gmra.mrb[0].mxu0 %v5134
    %v7243 = vpop.f32.mrb[0].mxu0
    %v7244 = vadd.f32 %v5458, %v7243
    %v7245 = vpop.f32.mrb[0].mxu0
    %v7246 = vadd.f32 %v5462, %v7245
    %v7247 = vpop.f32.mrb[0].mxu0
    %v7248 = vadd.f32 %v5458, %v7247
    %v7249 = vpop.f32.mrb[0].mxu0
    %v7250 = vadd.f32 %v5462, %v7249
    %7251 = vmatprep.mubr.bf16.mxu0 %v5143
    %7252 = vmatmul.mubr.bf16.gmra.mrb[0].mxu0 %v5142
    %v7253 = vpop.f32.mrb[0].mxu0
    %v7254 = vadd.f32 %v5458, %v7253
    %v7255 = vpop.f32.mrb[0].mxu0
    %v7256 = vadd.f32 %v5462, %v7255
    %v7257 = vpop.f32.mrb[0].mxu0
    %v7258 = vadd.f32 %v5458, %v7257
    %v7259 = vpop.f32.mrb[0].mxu0
    %v7260 = vadd.f32 %v5462, %v7259
    %7261 = vmatprep.mubr.bf16.mxu0 %v5151
    %7262 = vmatmul.mubr.bf16.gmra.mrb[0].mxu0 %v5150
    %v7263 = vpop.f32.mrb[0].mxu0
    %v7264 = vadd.f32 %v5458, %v7263
    %v7265 = vpop.f32.mrb[0].mxu0
    %v7266 = vadd.f32 %v5462, %v7265
    %v7267 = vpop.f32.mrb[0].mxu0
    %v7268 = vadd.f32 %v5458, %v7267
    %v7269 = vpop.f32.mrb[0].mxu0
    %v7270 = vadd.f32 %v5462, %v7269
    %7271 = vmatprep.mubr.bf16.mxu0 %v5159
    %7272 = vmatmul.mubr.bf16.gmra.mrb[0].mxu0 %v5158
    %v7273 = vpop.f32.mrb[0].mxu0
    %v7274 = vadd.f32 %v5458, %v7273
    %v7275 = vpop.f32.mrb[0].mxu0
    %v7276 = vadd.f32 %v5462, %v7275
    %v7277 = vpop.f32.mrb[0].mxu0
    %v7278 = vadd.f32 %v5458, %v7277
    %v7279 = vpop.f32.mrb[0].mxu0
    %v7280 = vadd.f32 %v5462, %v7279
    %7281 = vmatprep.mubr.bf16.mxu0 %v5167
    %7282 = vmatmul.mubr.bf16.gmra.mrb[0].mxu0 %v5166
    %v7283 = vpop.f32.mrb[0].mxu0
    %v7284 = vadd.f32 %v5458, %v7283
    %v7285 = vpop.f32.mrb[0].mxu0
    %v7286 = vadd.f32 %v5462, %v7285
    %v7287 = vpop.f32.mrb[0].mxu0
    %v7288 = vadd.f32 %v5458, %v7287
    %v7289 = vpop.f32.mrb[0].mxu0
    %v7290 = vadd.f32 %v5462, %v7289
    %7291 = vmatprep.mubr.bf16.mxu0 %v5175
    %7292 = vmatmul.mubr.bf16.gmra.mrb[0].mxu0 %v5174
    %v7293 = vpop.f32.mrb[0].mxu0
    %v7294 = vadd.f32 %v5458, %v7293
    %v7295 = vpop.f32.mrb[0].mxu0
    %v7296 = vadd.f32 %v5462, %v7295
    %v7297 = vpop.f32.mrb[0].mxu0
    %v7298 = vadd.f32 %v5458, %v7297
    %v7299 = vpop.f32.mrb[0].mxu0
    %v7300 = vadd.f32 %v5462, %v7299
    %7301 = vmatprep.mubr.bf16.mxu0 %v5183
    %7302 = vmatmul.mubr.bf16.gmra.mrb[0].mxu0 %v5182
    %v7303 = vpop.f32.mrb[0].mxu0
    %v7304 = vadd.f32 %v5458, %v7303
    %v7305 = vpop.f32.mrb[0].mxu0
    %v7306 = vadd.f32 %v5462, %v7305
    %v7307 = vpop.f32.mrb[0].mxu0
    %v7308 = vadd.f32 %v5458, %v7307
    %v7309 = vpop.f32.mrb[0].mxu0
    %v7310 = vadd.f32 %v5462, %v7309
    %7311 = vdwg.mxu0
    %7312 = vmatprep.subr.bf16.mxu0 %v6302
    %7313 = vmatpush1.bf16.msra.mxu0 %v6301
    %7314 = vmatprep.subr.bf16.mxu0 %v6306
    %7315 = vmatpush1.bf16.msra.mxu0 %v6305
    %7316 = vmatprep.subr.bf16.mxu0 %v6310
    %7317 = vmatpush1.bf16.msra.mxu0 %v6309
    %7318 = vmatprep.subr.bf16.mxu0 %v6314
    %7319 = vmatpush1.bf16.msra.mxu0 %v6313
    %7320 = vmatprep.subr.bf16.mxu0 %v6318
    %7321 = vmatpush1.bf16.msra.mxu0 %v6317
    %7322 = vmatprep.subr.bf16.mxu0 %v6322
    %7323 = vmatpush1.bf16.msra.mxu0 %v6321
    %7324 = vmatprep.subr.bf16.mxu0 %v6326
    %7325 = vmatpush1.bf16.msra.mxu0 %v6325
    %7326 = vmatprep.subr.bf16.mxu0 %v6330
    %7327 = vmatpush1.bf16.msra.mxu0 %v6329
    %7328 = vmatprep.subr.bf16.mxu0 %v6334
    %7329 = vmatpush1.bf16.msra.mxu0 %v6333
    %7330 = vmatprep.subr.bf16.mxu0 %v6338
    %7331 = vmatpush1.bf16.msra.mxu0 %v6337
    %7332 = vmatprep.subr.bf16.mxu0 %v6342
    %7333 = vmatpush1.bf16.msra.mxu0 %v6341
    %7334 = vmatprep.subr.bf16.mxu0 %v6346
    %7335 = vmatpush1.bf16.msra.mxu0 %v6345
    %7336 = vmatprep.subr.bf16.mxu0 %v6350
    %7337 = vmatpush1.bf16.msra.mxu0 %v6349
    %7338 = vmatprep.subr.bf16.mxu0 %v6354
    %7339 = vmatpush1.bf16.msra.mxu0 %v6353
    %7340 = vmatprep.subr.bf16.mxu0 %v6358
    %7341 = vmatpush1.bf16.msra.mxu0 %v6357
    %7342 = vmatprep.subr.bf16.mxu0 %v6362
    %7343 = vmatpush1.bf16.msra.mxu0 %v6361
    %7344 = vmatprep.mubr.bf16.mxu0 %v5129
    %7345 = vmatmul.mubr.bf16.gmra.mrb[0].mxu0 %v5128
    %v7346 = vpop.f32.mrb[0].mxu0
    %v7347 = vadd.f32 %v7234, %v7346
    %v7348 = vpop.f32.mrb[0].mxu0
    %v7349 = vadd.f32 %v7236, %v7348
    %v7350 = vpop.f32.mrb[0].mxu0
    %v7351 = vadd.f32 %v7238, %v7350
    %v7352 = vpop.f32.mrb[0].mxu0
    %v7353 = vadd.f32 %v7240, %v7352
    %7354 = vmatprep.mubr.bf16.mxu0 %v5137
    %7355 = vmatmul.mubr.bf16.gmra.mrb[0].mxu0 %v5136
    %v7356 = vpop.f32.mrb[0].mxu0
    %v7357 = vadd.f32 %v7244, %v7356
    %v7358 = vpop.f32.mrb[0].mxu0
    %v7359 = vadd.f32 %v7246, %v7358
    %v7360 = vpop.f32.mrb[0].mxu0
    %v7361 = vadd.f32 %v7248, %v7360
    %v7362 = vpop.f32.mrb[0].mxu0
    %v7363 = vadd.f32 %v7250, %v7362
    %7364 = vmatprep.mubr.bf16.mxu0 %v5145
    %7365 = vmatmul.mubr.bf16.gmra.mrb[0].mxu0 %v5144
    %v7366 = vpop.f32.mrb[0].mxu0
    %v7367 = vadd.f32 %v7254, %v7366
    %v7368 = vpop.f32.mrb[0].mxu0
    %v7369 = vadd.f32 %v7256, %v7368
    %v7370 = vpop.f32.mrb[0].mxu0
    %v7371 = vadd.f32 %v7258, %v7370
    %v7372 = vpop.f32.mrb[0].mxu0
    %v7373 = vadd.f32 %v7260, %v7372
    %7374 = vmatprep.mubr.bf16.mxu0 %v5153
    %7375 = vmatmul.mubr.bf16.gmra.mrb[0].mxu0 %v5152
    %v7376 = vpop.f32.mrb[0].mxu0
    %v7377 = vadd.f32 %v7264, %v7376
    %v7378 = vpop.f32.mrb[0].mxu0
    %v7379 = vadd.f32 %v7266, %v7378
    %v7380 = vpop.f32.mrb[0].mxu0
    %v7381 = vadd.f32 %v7268, %v7380
    %v7382 = vpop.f32.mrb[0].mxu0
    %v7383 = vadd.f32 %v7270, %v7382
    %7384 = vmatprep.mubr.bf16.mxu0 %v5161
    %7385 = vmatmul.mubr.bf16.gmra.mrb[0].mxu0 %v5160
    %v7386 = vpop.f32.mrb[0].mxu0
    %v7387 = vadd.f32 %v7274, %v7386
    %v7388 = vpop.f32.mrb[0].mxu0
    %v7389 = vadd.f32 %v7276, %v7388
    %v7390 = vpop.f32.mrb[0].mxu0
    %v7391 = vadd.f32 %v7278, %v7390
    %v7392 = vpop.f32.mrb[0].mxu0
    %v7393 = vadd.f32 %v7280, %v7392
    %7394 = vmatprep.mubr.bf16.mxu0 %v5169
    %7395 = vmatmul.mubr.bf16.gmra.mrb[0].mxu0 %v5168
    %v7396 = vpop.f32.mrb[0].mxu0
    %v7397 = vadd.f32 %v7284, %v7396
    %v7398 = vpop.f32.mrb[0].mxu0
    %v7399 = vadd.f32 %v7286, %v7398
    %v7400 = vpop.f32.mrb[0].mxu0
    %v7401 = vadd.f32 %v7288, %v7400
    %v7402 = vpop.f32.mrb[0].mxu0
    %v7403 = vadd.f32 %v7290, %v7402
    %7404 = vmatprep.mubr.bf16.mxu0 %v5177
    %7405 = vmatmul.mubr.bf16.gmra.mrb[0].mxu0 %v5176
    %v7406 = vpop.f32.mrb[0].mxu0
    %v7407 = vadd.f32 %v7294, %v7406
    %v7408 = vpop.f32.mrb[0].mxu0
    %v7409 = vadd.f32 %v7296, %v7408
    %v7410 = vpop.f32.mrb[0].mxu0
    %v7411 = vadd.f32 %v7298, %v7410
    %v7412 = vpop.f32.mrb[0].mxu0
    %v7413 = vadd.f32 %v7300, %v7412
    %7414 = vmatprep.mubr.bf16.mxu0 %v5185
    %7415 = vmatmul.mubr.bf16.gmra.mrb[0].mxu0 %v5184
    %v7416 = vpop.f32.mrb[0].mxu0
    %v7417 = vadd.f32 %v7304, %v7416
    %v7418 = vpop.f32.mrb[0].mxu0
    %v7419 = vadd.f32 %v7306, %v7418
    %v7420 = vpop.f32.mrb[0].mxu0
    %v7421 = vadd.f32 %v7308, %v7420
    %v7422 = vpop.f32.mrb[0].mxu0
    %v7423 = vadd.f32 %v7310, %v7422
    %7424 = vdwg.mxu0
    %7425 = vmatprep.subr.bf16.mxu0 %v6366
    %7426 = vmatpush1.bf16.msra.mxu0 %v6365
    %7427 = vmatprep.subr.bf16.mxu0 %v6370
    %7428 = vmatpush1.bf16.msra.mxu0 %v6369
    %7429 = vmatprep.subr.bf16.mxu0 %v6374
    %7430 = vmatpush1.bf16.msra.mxu0 %v6373
    %7431 = vmatprep.subr.bf16.mxu0 %v6378
    %7432 = vmatpush1.bf16.msra.mxu0 %v6377
    %7433 = vmatprep.subr.bf16.mxu0 %v6382
    %7434 = vmatpush1.bf16.msra.mxu0 %v6381
    %7435 = vmatprep.subr.bf16.mxu0 %v6386
    %7436 = vmatpush1.bf16.msra.mxu0 %v6385
    %7437 = vmatprep.subr.bf16.mxu0 %v6390
    %7438 = vmatpush1.bf16.msra.mxu0 %v6389
    %7439 = vmatprep.subr.bf16.mxu0 %v6394
    %7440 = vmatpush1.bf16.msra.mxu0 %v6393
    %7441 = vmatprep.subr.bf16.mxu0 %v6398
    %7442 = vmatpush1.bf16.msra.mxu0 %v6397
    %7443 = vmatprep.subr.bf16.mxu0 %v6402
    %7444 = vmatpush1.bf16.msra.mxu0 %v6401
    %7445 = vmatprep.subr.bf16.mxu0 %v6406
    %7446 = vmatpush1.bf16.msra.mxu0 %v6405
    %7447 = vmatprep.subr.bf16.mxu0 %v6410
    %7448 = vmatpush1.bf16.msra.mxu0 %v6409
    %7449 = vmatprep.subr.bf16.mxu0 %v6414
    %7450 = vmatpush1.bf16.msra.mxu0 %v6413
    %7451 = vmatprep.subr.bf16.mxu0 %v6418
    %7452 = vmatpush1.bf16.msra.mxu0 %v6417
    %7453 = vmatprep.subr.bf16.mxu0 %v6422
    %7454 = vmatpush1.bf16.msra.mxu0 %v6421
    %7455 = vmatprep.subr.bf16.mxu0 %v6426
    %7456 = vmatpush1.bf16.msra.mxu0 %v6425
    %7457 = vmatprep.mubr.bf16.mxu0 %v5131
    %7458 = vmatmul.mubr.bf16.gmra.mrb[0].mxu0 %v5130
    %v7459 = vpop.f32.mrb[0].mxu0
    %v7460 = vadd.f32 %v7347, %v7459
    %v7461 = vpop.f32.mrb[0].mxu0
    %v7462 = vadd.f32 %v7349, %v7461
    %v7463 = vpop.f32.mrb[0].mxu0
    %v7464 = vadd.f32 %v7351, %v7463
    %v7465 = vpop.f32.mrb[0].mxu0
    %v7466 = vadd.f32 %v7353, %v7465
    %7467 = vmatprep.mubr.bf16.mxu0 %v5139
    %7468 = vmatmul.mubr.bf16.gmra.mrb[0].mxu0 %v5138
    %v7469 = vpop.f32.mrb[0].mxu0
    %v7470 = vadd.f32 %v7357, %v7469
    %v7471 = vpop.f32.mrb[0].mxu0
    %v7472 = vadd.f32 %v7359, %v7471
    %v7473 = vpop.f32.mrb[0].mxu0
    %v7474 = vadd.f32 %v7361, %v7473
    %v7475 = vpop.f32.mrb[0].mxu0
    %v7476 = vadd.f32 %v7363, %v7475
    %7477 = vmatprep.mubr.bf16.mxu0 %v5147
    %7478 = vmatmul.mubr.bf16.gmra.mrb[0].mxu0 %v5146
    %v7479 = vpop.f32.mrb[0].mxu0
    %v7480 = vadd.f32 %v7367, %v7479
    %v7481 = vpop.f32.mrb[0].mxu0
    %v7482 = vadd.f32 %v7369, %v7481
    %v7483 = vpop.f32.mrb[0].mxu0
    %v7484 = vadd.f32 %v7371, %v7483
    %v7485 = vpop.f32.mrb[0].mxu0
    %v7486 = vadd.f32 %v7373, %v7485
    %7487 = vmatprep.mubr.bf16.mxu0 %v5155
    %7488 = vmatmul.mubr.bf16.gmra.mrb[0].mxu0 %v5154
    %v7489 = vpop.f32.mrb[0].mxu0
    %v7490 = vadd.f32 %v7377, %v7489
    %v7491 = vpop.f32.mrb[0].mxu0
    %v7492 = vadd.f32 %v7379, %v7491
    %v7493 = vpop.f32.mrb[0].mxu0
    %v7494 = vadd.f32 %v7381, %v7493
    %v7495 = vpop.f32.mrb[0].mxu0
    %v7496 = vadd.f32 %v7383, %v7495
    %7497 = vmatprep.mubr.bf16.mxu0 %v5163
    %7498 = vmatmul.mubr.bf16.gmra.mrb[0].mxu0 %v5162
    %v7499 = vpop.f32.mrb[0].mxu0
    %v7500 = vadd.f32 %v7387, %v7499
    %v7501 = vpop.f32.mrb[0].mxu0
    %v7502 = vadd.f32 %v7389, %v7501
    %v7503 = vpop.f32.mrb[0].mxu0
    %v7504 = vadd.f32 %v7391, %v7503
    %v7505 = vpop.f32.mrb[0].mxu0
    %v7506 = vadd.f32 %v7393, %v7505
    %7507 = vmatprep.mubr.bf16.mxu0 %v5171
    %7508 = vmatmul.mubr.bf16.gmra.mrb[0].mxu0 %v5170
    %v7509 = vpop.f32.mrb[0].mxu0
    %v7510 = vadd.f32 %v7397, %v7509
    %v7511 = vpop.f32.mrb[0].mxu0
    %v7512 = vadd.f32 %v7399, %v7511
    %v7513 = vpop.f32.mrb[0].mxu0
    %v7514 = vadd.f32 %v7401, %v7513
    %v7515 = vpop.f32.mrb[0].mxu0
    %v7516 = vadd.f32 %v7403, %v7515
    %7517 = vmatprep.mubr.bf16.mxu0 %v5179
    %7518 = vmatmul.mubr.bf16.gmra.mrb[0].mxu0 %v5178
    %v7519 = vpop.f32.mrb[0].mxu0
    %v7520 = vadd.f32 %v7407, %v7519
    %v7521 = vpop.f32.mrb[0].mxu0
    %v7522 = vadd.f32 %v7409, %v7521
    %v7523 = vpop.f32.mrb[0].mxu0
    %v7524 = vadd.f32 %v7411, %v7523
    %v7525 = vpop.f32.mrb[0].mxu0
    %v7526 = vadd.f32 %v7413, %v7525
    %7527 = vmatprep.mubr.bf16.mxu0 %v5187
    %7528 = vmatmul.mubr.bf16.gmra.mrb[0].mxu0 %v5186
    %v7529 = vpop.f32.mrb[0].mxu0
    %v7530 = vadd.f32 %v7417, %v7529
    %v7531 = vpop.f32.mrb[0].mxu0
    %v7532 = vadd.f32 %v7419, %v7531
    %v7533 = vpop.f32.mrb[0].mxu0
    %v7534 = vadd.f32 %v7421, %v7533
    %v7535 = vpop.f32.mrb[0].mxu0
    %v7536 = vadd.f32 %v7423, %v7535
    %7537 = vdwg.mxu0
    %7538 = vmatprep.subr.bf16.mxu0 %v6430
    %7539 = vmatpush1.bf16.msra.mxu0 %v6429
    %7540 = vmatprep.subr.bf16.mxu0 %v6434
    %7541 = vmatpush1.bf16.msra.mxu0 %v6433
    %7542 = vmatprep.subr.bf16.mxu0 %v6438
    %7543 = vmatpush1.bf16.msra.mxu0 %v6437
    %7544 = vmatprep.subr.bf16.mxu0 %v6442
    %7545 = vmatpush1.bf16.msra.mxu0 %v6441
    %7546 = vmatprep.subr.bf16.mxu0 %v6446
    %7547 = vmatpush1.bf16.msra.mxu0 %v6445
    %7548 = vmatprep.subr.bf16.mxu0 %v6450
    %7549 = vmatpush1.bf16.msra.mxu0 %v6449
    %7550 = vmatprep.subr.bf16.mxu0 %v6454
    %7551 = vmatpush1.bf16.msra.mxu0 %v6453
    %7552 = vmatprep.subr.bf16.mxu0 %v6458
    %7553 = vmatpush1.bf16.msra.mxu0 %v6457
    %7554 = vmatprep.subr.bf16.mxu0 %v6462
    %7555 = vmatpush1.bf16.msra.mxu0 %v6461
    %7556 = vmatprep.subr.bf16.mxu0 %v6466
    %7557 = vmatpush1.bf16.msra.mxu0 %v6465
    %7558 = vmatprep.subr.bf16.mxu0 %v6470
    %7559 = vmatpush1.bf16.msra.mxu0 %v6469
    %7560 = vmatprep.subr.bf16.mxu0 %v6474
    %7561 = vmatpush1.bf16.msra.mxu0 %v6473
    %7562 = vmatprep.subr.bf16.mxu0 %v6478
    %7563 = vmatpush1.bf16.msra.mxu0 %v6477
    %7564 = vmatprep.subr.bf16.mxu0 %v6482
    %7565 = vmatpush1.bf16.msra.mxu0 %v6481
    %7566 = vmatprep.subr.bf16.mxu0 %v6486
    %7567 = vmatpush1.bf16.msra.mxu0 %v6485
    %7568 = vmatprep.subr.bf16.mxu0 %v6490
    %7569 = vmatpush1.bf16.msra.mxu0 %v6489
    %7570 = vmatprep.mubr.bf16.mxu0 %v5133
    %7571 = vmatmul.mubr.bf16.gmra.mrb[0].mxu0 %v5132
    %v7572 = vpop.f32.mrb[0].mxu0
    %v7573 = vadd.f32 %v7460, %v7572
    %v7574 = vpop.f32.mrb[0].mxu0
    %v7575 = vadd.f32 %v7462, %v7574
    %v7576 = vpop.f32.mrb[0].mxu0
    %v7577 = vadd.f32 %v7464, %v7576
    %v7578 = vpop.f32.mrb[0].mxu0
    %v7579 = vadd.f32 %v7466, %v7578
    %7580 = vmatprep.mubr.bf16.mxu0 %v5141
    %7581 = vmatmul.mubr.bf16.gmra.mrb[0].mxu0 %v5140
    %v7582 = vpop.f32.mrb[0].mxu0
    %v7583 = vadd.f32 %v7470, %v7582
    %v7584 = vpop.f32.mrb[0].mxu0
    %v7585 = vadd.f32 %v7472, %v7584
    %v7586 = vpop.f32.mrb[0].mxu0
    %v7587 = vadd.f32 %v7474, %v7586
    %v7588 = vpop.f32.mrb[0].mxu0
    %v7589 = vadd.f32 %v7476, %v7588
    %7590 = vmatprep.mubr.bf16.mxu0 %v5149
    %7591 = vmatmul.mubr.bf16.gmra.mrb[0].mxu0 %v5148
    %v7592 = vpop.f32.mrb[0].mxu0
    %v7593 = vadd.f32 %v7480, %v7592
    %v7594 = vpop.f32.mrb[0].mxu0
    %v7595 = vadd.f32 %v7482, %v7594
    %v7596 = vpop.f32.mrb[0].mxu0
    %v7597 = vadd.f32 %v7484, %v7596
    %v7598 = vpop.f32.mrb[0].mxu0
    %v7599 = vadd.f32 %v7486, %v7598
    %7600 = vmatprep.mubr.bf16.mxu0 %v5157
    %7601 = vmatmul.mubr.bf16.gmra.mrb[0].mxu0 %v5156
    %v7602 = vpop.f32.mrb[0].mxu0
    %v7603 = vadd.f32 %v7490, %v7602
    %v7604 = vpop.f32.mrb[0].mxu0
    %v7605 = vadd.f32 %v7492, %v7604
    %v7606 = vpop.f32.mrb[0].mxu0
    %v7607 = vadd.f32 %v7494, %v7606
    %v7608 = vpop.f32.mrb[0].mxu0
    %v7609 = vadd.f32 %v7496, %v7608
    %7610 = vmatprep.mubr.bf16.mxu0 %v5165
    %7611 = vmatmul.mubr.bf16.gmra.mrb[0].mxu0 %v5164
    %v7612 = vpop.f32.mrb[0].mxu0
    %v7613 = vadd.f32 %v7500, %v7612
    %v7614 = vpop.f32.mrb[0].mxu0
    %v7615 = vadd.f32 %v7502, %v7614
    %v7616 = vpop.f32.mrb[0].mxu0
    %v7617 = vadd.f32 %v7504, %v7616
    %v7618 = vpop.f32.mrb[0].mxu0
    %v7619 = vadd.f32 %v7506, %v7618
    %7620 = vmatprep.mubr.bf16.mxu0 %v5173
    %7621 = vmatmul.mubr.bf16.gmra.mrb[0].mxu0 %v5172
    %v7622 = vpop.f32.mrb[0].mxu0
    %v7623 = vadd.f32 %v7510, %v7622
    %v7624 = vpop.f32.mrb[0].mxu0
    %v7625 = vadd.f32 %v7512, %v7624
    %v7626 = vpop.f32.mrb[0].mxu0
    %v7627 = vadd.f32 %v7514, %v7626
    %v7628 = vpop.f32.mrb[0].mxu0
    %v7629 = vadd.f32 %v7516, %v7628
    %7630 = vmatprep.mubr.bf16.mxu0 %v5181
    %7631 = vmatmul.mubr.bf16.gmra.mrb[0].mxu0 %v5180
    %v7632 = vpop.f32.mrb[0].mxu0
    %v7633 = vadd.f32 %v7520, %v7632
    %v7634 = vpop.f32.mrb[0].mxu0
    %v7635 = vadd.f32 %v7522, %v7634
    %v7636 = vpop.f32.mrb[0].mxu0
    %v7637 = vadd.f32 %v7524, %v7636
    %v7638 = vpop.f32.mrb[0].mxu0
    %v7639 = vadd.f32 %v7526, %v7638
    %7640 = vmatprep.mubr.bf16.mxu0 %v5189
    %7641 = vmatmul.mubr.bf16.gmra.mrb[0].mxu0 %v5188
    %v7642 = vpop.f32.mrb[0].mxu0
    %v7643 = vadd.f32 %v7530, %v7642
    %v7644 = vpop.f32.mrb[0].mxu0
    %v7645 = vadd.f32 %v7532, %v7644
    %v7646 = vpop.f32.mrb[0].mxu0
    %v7647 = vadd.f32 %v7534, %v7646
    %v7648 = vpop.f32.mrb[0].mxu0
    %v7649 = vadd.f32 %v7536, %v7648
    %7650 = vdwg.mxu0
    %v7651 = vmax.f32 %v7121, 0.0
    %v7652 = vmax.f32 %v7123, 0.0
    %v7653 = vmax.f32 %v7573, 0.0
    %v7654 = vmax.f32 %v7575, 0.0
    %v7655 = vmax.f32 %v7125, 0.0
    %v7656 = vmax.f32 %v7127, 0.0
    %v7657 = vmax.f32 %v7577, 0.0
    %v7658 = vmax.f32 %v7579, 0.0
    %v7659 = vmax.f32 %v7131, 0.0
    %v7660 = vmax.f32 %v7133, 0.0
    %v7661 = vmax.f32 %v7583, 0.0
    %v7662 = vmax.f32 %v7585, 0.0
    %v7663 = vmax.f32 %v7135, 0.0
    %v7664 = vmax.f32 %v7137, 0.0
    %v7665 = vmax.f32 %v7587, 0.0
    %v7666 = vmax.f32 %v7589, 0.0
    %v7667 = vmax.f32 %v7141, 0.0
    %v7668 = vmax.f32 %v7143, 0.0
    %v7669 = vmax.f32 %v7593, 0.0
    %v7670 = vmax.f32 %v7595, 0.0
    %v7671 = vmax.f32 %v7145, 0.0
    %v7672 = vmax.f32 %v7147, 0.0
    %v7673 = vmax.f32 %v7597, 0.0
    %v7674 = vmax.f32 %v7599, 0.0
    %v7675 = vmax.f32 %v7151, 0.0
    %v7676 = vmax.f32 %v7153, 0.0
    %v7677 = vmax.f32 %v7603, 0.0
    %v7678 = vmax.f32 %v7605, 0.0
    %v7679 = vmax.f32 %v7155, 0.0
    %v7680 = vmax.f32 %v7157, 0.0
    %v7681 = vmax.f32 %v7607, 0.0
    %v7682 = vmax.f32 %v7609, 0.0
    %v7683 = vmax.f32 %v7161, 0.0
    %v7684 = vmax.f32 %v7163, 0.0
    %v7685 = vmax.f32 %v7613, 0.0
    %v7686 = vmax.f32 %v7615, 0.0
    %v7687 = vmax.f32 %v7165, 0.0
    %v7688 = vmax.f32 %v7167, 0.0
    %v7689 = vmax.f32 %v7617, 0.0
    %v7690 = vmax.f32 %v7619, 0.0
    %v7691 = vmax.f32 %v7171, 0.0
    %v7692 = vmax.f32 %v7173, 0.0
    %v7693 = vmax.f32 %v7623, 0.0
    %v7694 = vmax.f32 %v7625, 0.0
    %v7695 = vmax.f32 %v7175, 0.0
    %v7696 = vmax.f32 %v7177, 0.0
    %v7697 = vmax.f32 %v7627, 0.0
    %v7698 = vmax.f32 %v7629, 0.0
    %v7699 = vmax.f32 %v7181, 0.0
    %v7700 = vmax.f32 %v7183, 0.0
    %v7701 = vmax.f32 %v7633, 0.0
    %v7702 = vmax.f32 %v7635, 0.0
    %v7703 = vmax.f32 %v7185, 0.0
    %v7704 = vmax.f32 %v7187, 0.0
    %v7705 = vmax.f32 %v7637, 0.0
    %v7706 = vmax.f32 %v7639, 0.0
    %v7707 = vmax.f32 %v7191, 0.0
    %v7708 = vmax.f32 %v7193, 0.0
    %v7709 = vmax.f32 %v7643, 0.0
    %v7710 = vmax.f32 %v7645, 0.0
    %v7711 = vmax.f32 %v7195, 0.0
    %v7712 = vmax.f32 %v7197, 0.0
    %v7713 = vmax.f32 %v7647, 0.0
    %v7714 = vmax.f32 %v7649, 0.0
    %v7715 = vpack.c.bf16 %v7655, %v7651
    %v7716 = vpack.c.bf16 %v7656, %v7652
    %v7717 = vpack.c.bf16 %v7657, %v7653
    %v7718 = vpack.c.bf16 %v7658, %v7654
    %v7719 = vpack.c.bf16 %v7663, %v7659
    %v7720 = vpack.c.bf16 %v7664, %v7660
    %v7721 = vpack.c.bf16 %v7665, %v7661
    %v7722 = vpack.c.bf16 %v7666, %v7662
    %v7723 = vpack.c.bf16 %v7671, %v7667
    %v7724 = vpack.c.bf16 %v7672, %v7668
    %v7725 = vpack.c.bf16 %v7673, %v7669
    %v7726 = vpack.c.bf16 %v7674, %v7670
    %v7727 = vpack.c.bf16 %v7679, %v7675
    %v7728 = vpack.c.bf16 %v7680, %v7676
    %v7729 = vpack.c.bf16 %v7681, %v7677
    %v7730 = vpack.c.bf16 %v7682, %v7678
    %v7731 = vpack.c.bf16 %v7687, %v7683
    %v7732 = vpack.c.bf16 %v7688, %v7684
    %v7733 = vpack.c.bf16 %v7689, %v7685
    %v7734 = vpack.c.bf16 %v7690, %v7686
    %v7735 = vpack.c.bf16 %v7695, %v7691
    %v7736 = vpack.c.bf16 %v7696, %v7692
    %v7737 = vpack.c.bf16 %v7697, %v7693
    %v7738 = vpack.c.bf16 %v7698, %v7694
    %v7739 = vpack.c.bf16 %v7703, %v7699
    %v7740 = vpack.c.bf16 %v7704, %v7700
    %v7741 = vpack.c.bf16 %v7705, %v7701
    %v7742 = vpack.c.bf16 %v7706, %v7702
    %v7743 = vpack.c.bf16 %v7711, %v7707
    %v7744 = vpack.c.bf16 %v7712, %v7708
    %v7745 = vpack.c.bf16 %v7713, %v7709
    %v7746 = vpack.c.bf16 %v7714, %v7710
    %v7747 = vld [vmem:[#allocation8] sm:$0xff]
    %v7748 = vld [vmem:[#allocation8 + $0x8] sm:$0xff]
    %v7749 = vld [vmem:[#allocation8 + $0x10] sm:$0xff]
    %v7750 = vld [vmem:[#allocation8 + $0x18] sm:$0xff]
    %v7751 = vld [vmem:[#allocation8 + $0x20] sm:$0xff]
    %v7752 = vld [vmem:[#allocation8 + $0x28] sm:$0xff]
    %v7753 = vld [vmem:[#allocation8 + $0x30] sm:$0xff]
    %v7754 = vld [vmem:[#allocation8 + $0x38] sm:$0xff]
    %v7755 = vld [vmem:[#allocation8 + $0x40] sm:$0xff]
    %v7756 = vld [vmem:[#allocation8 + $0x48] sm:$0xff]
    %v7757 = vld [vmem:[#allocation8 + $0x50] sm:$0xff]
    %v7758 = vld [vmem:[#allocation8 + $0x58] sm:$0xff]
    %v7759 = vld [vmem:[#allocation8 + $0x60] sm:$0xff]
    %v7760 = vld [vmem:[#allocation8 + $0x68] sm:$0xff]
    %v7761 = vld [vmem:[#allocation8 + $0x70] sm:$0xff]
    %v7762 = vld [vmem:[#allocation8 + $0x78] sm:$0xff]
    %v7763 = vld [vmem:[#allocation8 + $0x80] sm:$0xff]
    %v7764 = vld [vmem:[#allocation8 + $0x88] sm:$0xff]
    %v7765 = vld [vmem:[#allocation8 + $0x90] sm:$0xff]
    %v7766 = vld [vmem:[#allocation8 + $0x98] sm:$0xff]
    %v7767 = vld [vmem:[#allocation8 + $0xa0] sm:$0xff]
    %v7768 = vld [vmem:[#allocation8 + $0xa8] sm:$0xff]
    %v7769 = vld [vmem:[#allocation8 + $0xb0] sm:$0xff]
    %v7770 = vld [vmem:[#allocation8 + $0xb8] sm:$0xff]
    %v7771 = vld [vmem:[#allocation8 + $0xc0] sm:$0xff]
    %v7772 = vld [vmem:[#allocation8 + $0xc8] sm:$0xff]
    %v7773 = vld [vmem:[#allocation8 + $0xd0] sm:$0xff]
    %v7774 = vld [vmem:[#allocation8 + $0xd8] sm:$0xff]
    %v7775 = vld [vmem:[#allocation8 + $0xe0] sm:$0xff]
    %v7776 = vld [vmem:[#allocation8 + $0xe8] sm:$0xff]
    %v7777 = vld [vmem:[#allocation8 + $0xf0] sm:$0xff]
    %v7778 = vld [vmem:[#allocation8 + $0xf8] sm:$0xff]
    %v7779 = vld [vmem:[#allocation8 + $0x100] sm:$0xff]
    %v7780 = vld [vmem:[#allocation8 + $0x108] sm:$0xff]
    %v7781 = vld [vmem:[#allocation8 + $0x110] sm:$0xff]
    %v7782 = vld [vmem:[#allocation8 + $0x118] sm:$0xff]
    %v7783 = vld [vmem:[#allocation8 + $0x120] sm:$0xff]
    %v7784 = vld [vmem:[#allocation8 + $0x128] sm:$0xff]
    %v7785 = vld [vmem:[#allocation8 + $0x130] sm:$0xff]
    %v7786 = vld [vmem:[#allocation8 + $0x138] sm:$0xff]
    %v7787 = vld [vmem:[#allocation8 + $0x140] sm:$0xff]
    %v7788 = vld [vmem:[#allocation8 + $0x148] sm:$0xff]
    %v7789 = vld [vmem:[#allocation8 + $0x150] sm:$0xff]
    %v7790 = vld [vmem:[#allocation8 + $0x158] sm:$0xff]
    %v7791 = vld [vmem:[#allocation8 + $0x160] sm:$0xff]
    %v7792 = vld [vmem:[#allocation8 + $0x168] sm:$0xff]
    %v7793 = vld [vmem:[#allocation8 + $0x170] sm:$0xff]
    %v7794 = vld [vmem:[#allocation8 + $0x178] sm:$0xff]
    %v7795 = vld [vmem:[#allocation8 + $0x180] sm:$0xff]
    %v7796 = vld [vmem:[#allocation8 + $0x188] sm:$0xff]
    %v7797 = vld [vmem:[#allocation8 + $0x190] sm:$0xff]
    %v7798 = vld [vmem:[#allocation8 + $0x198] sm:$0xff]
    %v7799 = vld [vmem:[#allocation8 + $0x1a0] sm:$0xff]
    %v7800 = vld [vmem:[#allocation8 + $0x1a8] sm:$0xff]
    %v7801 = vld [vmem:[#allocation8 + $0x1b0] sm:$0xff]
    %v7802 = vld [vmem:[#allocation8 + $0x1b8] sm:$0xff]
    %v7803 = vld [vmem:[#allocation8 + $0x1c0] sm:$0xff]
    %v7804 = vld [vmem:[#allocation8 + $0x1c8] sm:$0xff]
    %v7805 = vld [vmem:[#allocation8 + $0x1d0] sm:$0xff]
    %v7806 = vld [vmem:[#allocation8 + $0x1d8] sm:$0xff]
    %v7807 = vld [vmem:[#allocation8 + $0x1e0] sm:$0xff]
    %v7808 = vld [vmem:[#allocation8 + $0x1e8] sm:$0xff]
    %v7809 = vld [vmem:[#allocation8 + $0x1f0] sm:$0xff]
    %v7810 = vld [vmem:[#allocation8 + $0x1f8] sm:$0xff]
    %v7812 = vlaneseq
    %v7813 = vshrl.u32 %v7812, 7
    %v7814 = vsub.s32 0, %v7813
    %v7815 = vrot.slane %v107, %v7814
    %v7816 = vlaneseq
    %v7817 = vshrl.u32 %v7816, 7
    %v7818 = vsub.s32 1, %v7817
    %v7819 = vrot.slane %v107, %v7818
    %v7886 = vunpack.c.l.b16 %v7747
    %v7887 = vunpack.c.h.b16 %v7747
    %v7888 = vunpack.c.l.b16 %v7748
    %v7889 = vunpack.c.h.b16 %v7748
    %v7890 = vunpack.c.l.b16 %v7749
    %v7891 = vunpack.c.h.b16 %v7749
    %v7892 = vunpack.c.l.b16 %v7750
    %v7893 = vunpack.c.h.b16 %v7750
    %v7894 = vunpack.c.l.b16 %v7751
    %v7895 = vunpack.c.h.b16 %v7751
    %v7896 = vunpack.c.l.b16 %v7752
    %v7897 = vunpack.c.h.b16 %v7752
    %v7898 = vunpack.c.l.b16 %v7753
    %v7899 = vunpack.c.h.b16 %v7753
    %v7900 = vunpack.c.l.b16 %v7754
    %v7901 = vunpack.c.h.b16 %v7754
    %v7902 = vunpack.c.l.b16 %v7755
    %v7903 = vunpack.c.h.b16 %v7755
    %v7904 = vunpack.c.l.b16 %v7756
    %v7905 = vunpack.c.h.b16 %v7756
    %v7906 = vunpack.c.l.b16 %v7757
    %v7907 = vunpack.c.h.b16 %v7757
    %v7908 = vunpack.c.l.b16 %v7758
    %v7909 = vunpack.c.h.b16 %v7758
    %v7910 = vunpack.c.l.b16 %v7759
    %v7911 = vunpack.c.h.b16 %v7759
    %v7912 = vunpack.c.l.b16 %v7760
    %v7913 = vunpack.c.h.b16 %v7760
    %v7914 = vunpack.c.l.b16 %v7761
    %v7915 = vunpack.c.h.b16 %v7761
    %v7916 = vunpack.c.l.b16 %v7762
    %v7917 = vunpack.c.h.b16 %v7762
    %v7918 = vunpack.c.l.b16 %v7763
    %v7919 = vunpack.c.h.b16 %v7763
    %v7920 = vunpack.c.l.b16 %v7764
    %v7921 = vunpack.c.h.b16 %v7764
    %v7922 = vunpack.c.l.b16 %v7765
    %v7923 = vunpack.c.h.b16 %v7765
    %v7924 = vunpack.c.l.b16 %v7766
    %v7925 = vunpack.c.h.b16 %v7766
    %v7926 = vunpack.c.l.b16 %v7767
    %v7927 = vunpack.c.h.b16 %v7767
    %v7928 = vunpack.c.l.b16 %v7768
    %v7929 = vunpack.c.h.b16 %v7768
    %v7930 = vunpack.c.l.b16 %v7769
    %v7931 = vunpack.c.h.b16 %v7769
    %v7932 = vunpack.c.l.b16 %v7770
    %v7933 = vunpack.c.h.b16 %v7770
    %v7934 = vunpack.c.l.b16 %v7771
    %v7935 = vunpack.c.h.b16 %v7771
    %v7936 = vunpack.c.l.b16 %v7772
    %v7937 = vunpack.c.h.b16 %v7772
    %v7938 = vunpack.c.l.b16 %v7773
    %v7939 = vunpack.c.h.b16 %v7773
    %v7940 = vunpack.c.l.b16 %v7774
    %v7941 = vunpack.c.h.b16 %v7774
    %v7942 = vunpack.c.l.b16 %v7775
    %v7943 = vunpack.c.h.b16 %v7775
    %v7944 = vunpack.c.l.b16 %v7776
    %v7945 = vunpack.c.h.b16 %v7776
    %v7946 = vunpack.c.l.b16 %v7777
    %v7947 = vunpack.c.h.b16 %v7777
    %v7948 = vunpack.c.l.b16 %v7778
    %v7949 = vunpack.c.h.b16 %v7778
    %v7950 = vunpack.c.l.b16 %v7779
    %v7951 = vunpack.c.h.b16 %v7779
    %v7952 = vunpack.c.l.b16 %v7780
    %v7953 = vunpack.c.h.b16 %v7780
    %v7954 = vunpack.c.l.b16 %v7781
    %v7955 = vunpack.c.h.b16 %v7781
    %v7956 = vunpack.c.l.b16 %v7782
    %v7957 = vunpack.c.h.b16 %v7782
    %v7958 = vunpack.c.l.b16 %v7783
    %v7959 = vunpack.c.h.b16 %v7783
    %v7960 = vunpack.c.l.b16 %v7784
    %v7961 = vunpack.c.h.b16 %v7784
    %v7962 = vunpack.c.l.b16 %v7785
    %v7963 = vunpack.c.h.b16 %v7785
    %v7964 = vunpack.c.l.b16 %v7786
    %v7965 = vunpack.c.h.b16 %v7786
    %v7966 = vunpack.c.l.b16 %v7787
    %v7967 = vunpack.c.h.b16 %v7787
    %v7968 = vunpack.c.l.b16 %v7788
    %v7969 = vunpack.c.h.b16 %v7788
    %v7970 = vunpack.c.l.b16 %v7789
    %v7971 = vunpack.c.h.b16 %v7789
    %v7972 = vunpack.c.l.b16 %v7790
    %v7973 = vunpack.c.h.b16 %v7790
    %v7974 = vunpack.c.l.b16 %v7791
    %v7975 = vunpack.c.h.b16 %v7791
    %v7976 = vunpack.c.l.b16 %v7792
    %v7977 = vunpack.c.h.b16 %v7792
    %v7978 = vunpack.c.l.b16 %v7793
    %v7979 = vunpack.c.h.b16 %v7793
    %v7980 = vunpack.c.l.b16 %v7794
    %v7981 = vunpack.c.h.b16 %v7794
    %v7982 = vunpack.c.l.b16 %v7795
    %v7983 = vunpack.c.h.b16 %v7795
    %v7984 = vunpack.c.l.b16 %v7796
    %v7985 = vunpack.c.h.b16 %v7796
    %v7986 = vunpack.c.l.b16 %v7797
    %v7987 = vunpack.c.h.b16 %v7797
    %v7988 = vunpack.c.l.b16 %v7798
    %v7989 = vunpack.c.h.b16 %v7798
    %v7990 = vunpack.c.l.b16 %v7799
    %v7991 = vunpack.c.h.b16 %v7799
    %v7992 = vunpack.c.l.b16 %v7800
    %v7993 = vunpack.c.h.b16 %v7800
    %v7994 = vunpack.c.l.b16 %v7801
    %v7995 = vunpack.c.h.b16 %v7801
    %v7996 = vunpack.c.l.b16 %v7802
    %v7997 = vunpack.c.h.b16 %v7802
    %v7998 = vunpack.c.l.b16 %v7803
    %v7999 = vunpack.c.h.b16 %v7803
    %v8000 = vunpack.c.l.b16 %v7804
    %v8001 = vunpack.c.h.b16 %v7804
    %v8002 = vunpack.c.l.b16 %v7805
    %v8003 = vunpack.c.h.b16 %v7805
    %v8004 = vunpack.c.l.b16 %v7806
    %v8005 = vunpack.c.h.b16 %v7806
    %v8006 = vunpack.c.l.b16 %v7807
    %v8007 = vunpack.c.h.b16 %v7807
    %v8008 = vunpack.c.l.b16 %v7808
    %v8009 = vunpack.c.h.b16 %v7808
    %v8010 = vunpack.c.l.b16 %v7809
    %v8011 = vunpack.c.h.b16 %v7809
    %v8012 = vunpack.c.l.b16 %v7810
    %v8013 = vunpack.c.h.b16 %v7810
    %v8014 = vpack.c.b16 %v7888, %v7886
    %v8015 = vpack.c.b16 %v7889, %v7887
    %v8016 = vpack.c.b16 %v7892, %v7890
    %v8017 = vpack.c.b16 %v7893, %v7891
    %v8018 = vpack.c.b16 %v7896, %v7894
    %v8019 = vpack.c.b16 %v7897, %v7895
    %v8020 = vpack.c.b16 %v7900, %v7898
    %v8021 = vpack.c.b16 %v7901, %v7899
    %v8022 = vpack.c.b16 %v7904, %v7902
    %v8023 = vpack.c.b16 %v7905, %v7903
    %v8024 = vpack.c.b16 %v7908, %v7906
    %v8025 = vpack.c.b16 %v7909, %v7907
    %v8026 = vpack.c.b16 %v7912, %v7910
    %v8027 = vpack.c.b16 %v7913, %v7911
    %v8028 = vpack.c.b16 %v7916, %v7914
    %v8029 = vpack.c.b16 %v7917, %v7915
    %v8030 = vpack.c.b16 %v7920, %v7918
    %v8031 = vpack.c.b16 %v7921, %v7919
    %v8032 = vpack.c.b16 %v7924, %v7922
    %v8033 = vpack.c.b16 %v7925, %v7923
    %v8034 = vpack.c.b16 %v7928, %v7926
    %v8035 = vpack.c.b16 %v7929, %v7927
    %v8036 = vpack.c.b16 %v7932, %v7930
    %v8037 = vpack.c.b16 %v7933, %v7931
    %v8038 = vpack.c.b16 %v7936, %v7934
    %v8039 = vpack.c.b16 %v7937, %v7935
    %v8040 = vpack.c.b16 %v7940, %v7938
    %v8041 = vpack.c.b16 %v7941, %v7939
    %v8042 = vpack.c.b16 %v7944, %v7942
    %v8043 = vpack.c.b16 %v7945, %v7943
    %v8044 = vpack.c.b16 %v7948, %v7946
    %v8045 = vpack.c.b16 %v7949, %v7947
    %v8046 = vpack.c.b16 %v7952, %v7950
    %v8047 = vpack.c.b16 %v7953, %v7951
    %v8048 = vpack.c.b16 %v7956, %v7954
    %v8049 = vpack.c.b16 %v7957, %v7955
    %v8050 = vpack.c.b16 %v7960, %v7958
    %v8051 = vpack.c.b16 %v7961, %v7959
    %v8052 = vpack.c.b16 %v7964, %v7962
    %v8053 = vpack.c.b16 %v7965, %v7963
    %v8054 = vpack.c.b16 %v7968, %v7966
    %v8055 = vpack.c.b16 %v7969, %v7967
    %v8056 = vpack.c.b16 %v7972, %v7970
    %v8057 = vpack.c.b16 %v7973, %v7971
    %v8058 = vpack.c.b16 %v7976, %v7974
    %v8059 = vpack.c.b16 %v7977, %v7975
    %v8060 = vpack.c.b16 %v7980, %v7978
    %v8061 = vpack.c.b16 %v7981, %v7979
    %v8062 = vpack.c.b16 %v7984, %v7982
    %v8063 = vpack.c.b16 %v7985, %v7983
    %v8064 = vpack.c.b16 %v7988, %v7986
    %v8065 = vpack.c.b16 %v7989, %v7987
    %v8066 = vpack.c.b16 %v7992, %v7990
    %v8067 = vpack.c.b16 %v7993, %v7991
    %v8068 = vpack.c.b16 %v7996, %v7994
    %v8069 = vpack.c.b16 %v7997, %v7995
    %v8070 = vpack.c.b16 %v8000, %v7998
    %v8071 = vpack.c.b16 %v8001, %v7999
    %v8072 = vpack.c.b16 %v8004, %v8002
    %v8073 = vpack.c.b16 %v8005, %v8003
    %v8074 = vpack.c.b16 %v8008, %v8006
    %v8075 = vpack.c.b16 %v8009, %v8007
    %v8076 = vpack.c.b16 %v8012, %v8010
    %v8077 = vpack.c.b16 %v8013, %v8011
    %8142 = vmatprep.subr.bf16.mxu0 %v8015
    %8143 = vmatpush1.bf16.msra.mxu0 %v8014
    %8144 = vmatprep.subr.bf16.mxu0 %v8017
    %8145 = vmatpush1.bf16.msra.mxu0 %v8016
    %8146 = vmatprep.subr.bf16.mxu0 %v8019
    %8147 = vmatpush1.bf16.msra.mxu0 %v8018
    %8148 = vmatprep.subr.bf16.mxu0 %v8021
    %8149 = vmatpush1.bf16.msra.mxu0 %v8020
    %8150 = vmatprep.subr.bf16.mxu0 %v8023
    %8151 = vmatpush1.bf16.msra.mxu0 %v8022
    %8152 = vmatprep.subr.bf16.mxu0 %v8025
    %8153 = vmatpush1.bf16.msra.mxu0 %v8024
    %8154 = vmatprep.subr.bf16.mxu0 %v8027
    %8155 = vmatpush1.bf16.msra.mxu0 %v8026
    %8156 = vmatprep.subr.bf16.mxu0 %v8029
    %8157 = vmatpush1.bf16.msra.mxu0 %v8028
    %8158 = vmatprep.subr.bf16.mxu0 %v8031
    %8159 = vmatpush1.bf16.msra.mxu0 %v8030
    %8160 = vmatprep.subr.bf16.mxu0 %v8033
    %8161 = vmatpush1.bf16.msra.mxu0 %v8032
    %8162 = vmatprep.subr.bf16.mxu0 %v8035
    %8163 = vmatpush1.bf16.msra.mxu0 %v8034
    %8164 = vmatprep.subr.bf16.mxu0 %v8037
    %8165 = vmatpush1.bf16.msra.mxu0 %v8036
    %8166 = vmatprep.subr.bf16.mxu0 %v8039
    %8167 = vmatpush1.bf16.msra.mxu0 %v8038
    %8168 = vmatprep.subr.bf16.mxu0 %v8041
    %8169 = vmatpush1.bf16.msra.mxu0 %v8040
    %8170 = vmatprep.subr.bf16.mxu0 %v8043
    %8171 = vmatpush1.bf16.msra.mxu0 %v8042
    %8172 = vmatprep.subr.bf16.mxu0 %v8045
    %8173 = vmatpush1.bf16.msra.mxu0 %v8044
    %8174 = vmatprep.mubr.bf16.mxu0 %v7716
    %8175 = vmatmul.mubr.bf16.gmra.mrb[0].mxu0 %v7715
    %v8176 = vpop.f32.mrb[0].mxu0
    %v8177 = vadd.f32 %v7815, %v8176
    %v8178 = vpop.f32.mrb[0].mxu0
    %v8179 = vadd.f32 %v7819, %v8178
    %v8180 = vpop.f32.mrb[0].mxu0
    %v8181 = vadd.f32 %v7815, %v8180
    %v8182 = vpop.f32.mrb[0].mxu0
    %v8183 = vadd.f32 %v7819, %v8182
    %8184 = vmatprep.mubr.bf16.mxu0 %v7720
    %8185 = vmatmul.mubr.bf16.gmra.mrb[0].mxu0 %v7719
    %v8186 = vpop.f32.mrb[0].mxu0
    %v8187 = vadd.f32 %v7815, %v8186
    %v8188 = vpop.f32.mrb[0].mxu0
    %v8189 = vadd.f32 %v7819, %v8188
    %v8190 = vpop.f32.mrb[0].mxu0
    %v8191 = vadd.f32 %v7815, %v8190
    %v8192 = vpop.f32.mrb[0].mxu0
    %v8193 = vadd.f32 %v7819, %v8192
    %8194 = vmatprep.mubr.bf16.mxu0 %v7724
    %8195 = vmatmul.mubr.bf16.gmra.mrb[0].mxu0 %v7723
    %v8196 = vpop.f32.mrb[0].mxu0
    %v8197 = vadd.f32 %v7815, %v8196
    %v8198 = vpop.f32.mrb[0].mxu0
    %v8199 = vadd.f32 %v7819, %v8198
    %v8200 = vpop.f32.mrb[0].mxu0
    %v8201 = vadd.f32 %v7815, %v8200
    %v8202 = vpop.f32.mrb[0].mxu0
    %v8203 = vadd.f32 %v7819, %v8202
    %8204 = vmatprep.mubr.bf16.mxu0 %v7728
    %8205 = vmatmul.mubr.bf16.gmra.mrb[0].mxu0 %v7727
    %v8206 = vpop.f32.mrb[0].mxu0
    %v8207 = vadd.f32 %v7815, %v8206
    %v8208 = vpop.f32.mrb[0].mxu0
    %v8209 = vadd.f32 %v7819, %v8208
    %v8210 = vpop.f32.mrb[0].mxu0
    %v8211 = vadd.f32 %v7815, %v8210
    %v8212 = vpop.f32.mrb[0].mxu0
    %v8213 = vadd.f32 %v7819, %v8212
    %8214 = vmatprep.mubr.bf16.mxu0 %v7732
    %8215 = vmatmul.mubr.bf16.gmra.mrb[0].mxu0 %v7731
    %v8216 = vpop.f32.mrb[0].mxu0
    %v8217 = vadd.f32 %v7815, %v8216
    %v8218 = vpop.f32.mrb[0].mxu0
    %v8219 = vadd.f32 %v7819, %v8218
    %v8220 = vpop.f32.mrb[0].mxu0
    %v8221 = vadd.f32 %v7815, %v8220
    %v8222 = vpop.f32.mrb[0].mxu0
    %v8223 = vadd.f32 %v7819, %v8222
    %8224 = vmatprep.mubr.bf16.mxu0 %v7736
    %8225 = vmatmul.mubr.bf16.gmra.mrb[0].mxu0 %v7735
    %v8226 = vpop.f32.mrb[0].mxu0
    %v8227 = vadd.f32 %v7815, %v8226
    %v8228 = vpop.f32.mrb[0].mxu0
    %v8229 = vadd.f32 %v7819, %v8228
    %v8230 = vpop.f32.mrb[0].mxu0
    %v8231 = vadd.f32 %v7815, %v8230
    %v8232 = vpop.f32.mrb[0].mxu0
    %v8233 = vadd.f32 %v7819, %v8232
    %8234 = vmatprep.mubr.bf16.mxu0 %v7740
    %8235 = vmatmul.mubr.bf16.gmra.mrb[0].mxu0 %v7739
    %v8236 = vpop.f32.mrb[0].mxu0
    %v8237 = vadd.f32 %v7815, %v8236
    %v8238 = vpop.f32.mrb[0].mxu0
    %v8239 = vadd.f32 %v7819, %v8238
    %v8240 = vpop.f32.mrb[0].mxu0
    %v8241 = vadd.f32 %v7815, %v8240
    %v8242 = vpop.f32.mrb[0].mxu0
    %v8243 = vadd.f32 %v7819, %v8242
    %8244 = vmatprep.mubr.bf16.mxu0 %v7744
    %8245 = vmatmul.mubr.bf16.gmra.mrb[0].mxu0 %v7743
    %v8246 = vpop.f32.mrb[0].mxu0
    %v8247 = vadd.f32 %v7815, %v8246
    %v8248 = vpop.f32.mrb[0].mxu0
    %v8249 = vadd.f32 %v7819, %v8248
    %v8250 = vpop.f32.mrb[0].mxu0
    %v8251 = vadd.f32 %v7815, %v8250
    %v8252 = vpop.f32.mrb[0].mxu0
    %v8253 = vadd.f32 %v7819, %v8252
    %8254 = vdwg.mxu0
    %8255 = vmatprep.subr.bf16.mxu0 %v8047
    %8256 = vmatpush1.bf16.msra.mxu0 %v8046
    %8257 = vmatprep.subr.bf16.mxu0 %v8049
    %8258 = vmatpush1.bf16.msra.mxu0 %v8048
    %8259 = vmatprep.subr.bf16.mxu0 %v8051
    %8260 = vmatpush1.bf16.msra.mxu0 %v8050
    %8261 = vmatprep.subr.bf16.mxu0 %v8053
    %8262 = vmatpush1.bf16.msra.mxu0 %v8052
    %8263 = vmatprep.subr.bf16.mxu0 %v8055
    %8264 = vmatpush1.bf16.msra.mxu0 %v8054
    %8265 = vmatprep.subr.bf16.mxu0 %v8057
    %8266 = vmatpush1.bf16.msra.mxu0 %v8056
    %8267 = vmatprep.subr.bf16.mxu0 %v8059
    %8268 = vmatpush1.bf16.msra.mxu0 %v8058
    %8269 = vmatprep.subr.bf16.mxu0 %v8061
    %8270 = vmatpush1.bf16.msra.mxu0 %v8060
    %8271 = vmatprep.subr.bf16.mxu0 %v8063
    %8272 = vmatpush1.bf16.msra.mxu0 %v8062
    %8273 = vmatprep.subr.bf16.mxu0 %v8065
    %8274 = vmatpush1.bf16.msra.mxu0 %v8064
    %8275 = vmatprep.subr.bf16.mxu0 %v8067
    %8276 = vmatpush1.bf16.msra.mxu0 %v8066
    %8277 = vmatprep.subr.bf16.mxu0 %v8069
    %8278 = vmatpush1.bf16.msra.mxu0 %v8068
    %8279 = vmatprep.subr.bf16.mxu0 %v8071
    %8280 = vmatpush1.bf16.msra.mxu0 %v8070
    %8281 = vmatprep.subr.bf16.mxu0 %v8073
    %8282 = vmatpush1.bf16.msra.mxu0 %v8072
    %8283 = vmatprep.subr.bf16.mxu0 %v8075
    %8284 = vmatpush1.bf16.msra.mxu0 %v8074
    %8285 = vmatprep.subr.bf16.mxu0 %v8077
    %8286 = vmatpush1.bf16.msra.mxu0 %v8076
    %8287 = vmatprep.mubr.bf16.mxu0 %v7718
    %8288 = vmatmul.mubr.bf16.gmra.mrb[0].mxu0 %v7717
    %v8289 = vpop.f32.mrb[0].mxu0
    %v8290 = vadd.f32 %v8177, %v8289
    %v8291 = vpop.f32.mrb[0].mxu0
    %v8292 = vadd.f32 %v8179, %v8291
    %v8293 = vpop.f32.mrb[0].mxu0
    %v8294 = vadd.f32 %v8181, %v8293
    %v8295 = vpop.f32.mrb[0].mxu0
    %v8296 = vadd.f32 %v8183, %v8295
    %8297 = vmatprep.mubr.bf16.mxu0 %v7722
    %8298 = vmatmul.mubr.bf16.gmra.mrb[0].mxu0 %v7721
    %v8299 = vpop.f32.mrb[0].mxu0
    %v8300 = vadd.f32 %v8187, %v8299
    %v8301 = vpop.f32.mrb[0].mxu0
    %v8302 = vadd.f32 %v8189, %v8301
    %v8303 = vpop.f32.mrb[0].mxu0
    %v8304 = vadd.f32 %v8191, %v8303
    %v8305 = vpop.f32.mrb[0].mxu0
    %v8306 = vadd.f32 %v8193, %v8305
    %8307 = vmatprep.mubr.bf16.mxu0 %v7726
    %8308 = vmatmul.mubr.bf16.gmra.mrb[0].mxu0 %v7725
    %v8309 = vpop.f32.mrb[0].mxu0
    %v8310 = vadd.f32 %v8197, %v8309
    %v8311 = vpop.f32.mrb[0].mxu0
    %v8312 = vadd.f32 %v8199, %v8311
    %v8313 = vpop.f32.mrb[0].mxu0
    %v8314 = vadd.f32 %v8201, %v8313
    %v8315 = vpop.f32.mrb[0].mxu0
    %v8316 = vadd.f32 %v8203, %v8315
    %8317 = vmatprep.mubr.bf16.mxu0 %v7730
    %8318 = vmatmul.mubr.bf16.gmra.mrb[0].mxu0 %v7729
    %v8319 = vpop.f32.mrb[0].mxu0
    %v8320 = vadd.f32 %v8207, %v8319
    %v8321 = vpop.f32.mrb[0].mxu0
    %v8322 = vadd.f32 %v8209, %v8321
    %v8323 = vpop.f32.mrb[0].mxu0
    %v8324 = vadd.f32 %v8211, %v8323
    %v8325 = vpop.f32.mrb[0].mxu0
    %v8326 = vadd.f32 %v8213, %v8325
    %8327 = vmatprep.mubr.bf16.mxu0 %v7734
    %8328 = vmatmul.mubr.bf16.gmra.mrb[0].mxu0 %v7733
    %v8329 = vpop.f32.mrb[0].mxu0
    %v8330 = vadd.f32 %v8217, %v8329
    %v8331 = vpop.f32.mrb[0].mxu0
    %v8332 = vadd.f32 %v8219, %v8331
    %v8333 = vpop.f32.mrb[0].mxu0
    %v8334 = vadd.f32 %v8221, %v8333
    %v8335 = vpop.f32.mrb[0].mxu0
    %v8336 = vadd.f32 %v8223, %v8335
    %8337 = vmatprep.mubr.bf16.mxu0 %v7738
    %8338 = vmatmul.mubr.bf16.gmra.mrb[0].mxu0 %v7737
    %v8339 = vpop.f32.mrb[0].mxu0
    %v8340 = vadd.f32 %v8227, %v8339
    %v8341 = vpop.f32.mrb[0].mxu0
    %v8342 = vadd.f32 %v8229, %v8341
    %v8343 = vpop.f32.mrb[0].mxu0
    %v8344 = vadd.f32 %v8231, %v8343
    %v8345 = vpop.f32.mrb[0].mxu0
    %v8346 = vadd.f32 %v8233, %v8345
    %8347 = vmatprep.mubr.bf16.mxu0 %v7742
    %8348 = vmatmul.mubr.bf16.gmra.mrb[0].mxu0 %v7741
    %v8349 = vpop.f32.mrb[0].mxu0
    %v8350 = vadd.f32 %v8237, %v8349
    %v8351 = vpop.f32.mrb[0].mxu0
    %v8352 = vadd.f32 %v8239, %v8351
    %v8353 = vpop.f32.mrb[0].mxu0
    %v8354 = vadd.f32 %v8241, %v8353
    %v8355 = vpop.f32.mrb[0].mxu0
    %v8356 = vadd.f32 %v8243, %v8355
    %8357 = vmatprep.mubr.bf16.mxu0 %v7746
    %8358 = vmatmul.mubr.bf16.gmra.mrb[0].mxu0 %v7745
    %v8359 = vpop.f32.mrb[0].mxu0
    %v8360 = vadd.f32 %v8247, %v8359
    %v8361 = vpop.f32.mrb[0].mxu0
    %v8362 = vadd.f32 %v8249, %v8361
    %v8363 = vpop.f32.mrb[0].mxu0
    %v8364 = vadd.f32 %v8251, %v8363
    %v8365 = vpop.f32.mrb[0].mxu0
    %v8366 = vadd.f32 %v8253, %v8365
    %8367 = vdwg.mxu0
    %v8368 = vmax.f32 %v8290, 0.0
    %v8369 = vmax.f32 %v8292, 0.0
    %v8370 = vmax.f32 %v8294, 0.0
    %v8371 = vmax.f32 %v8296, 0.0
    %v8372 = vmax.f32 %v8300, 0.0
    %v8373 = vmax.f32 %v8302, 0.0
    %v8374 = vmax.f32 %v8304, 0.0
    %v8375 = vmax.f32 %v8306, 0.0
    %v8376 = vmax.f32 %v8310, 0.0
    %v8377 = vmax.f32 %v8312, 0.0
    %v8378 = vmax.f32 %v8314, 0.0
    %v8379 = vmax.f32 %v8316, 0.0
    %v8380 = vmax.f32 %v8320, 0.0
    %v8381 = vmax.f32 %v8322, 0.0
    %v8382 = vmax.f32 %v8324, 0.0
    %v8383 = vmax.f32 %v8326, 0.0
    %v8384 = vmax.f32 %v8330, 0.0
    %v8385 = vmax.f32 %v8332, 0.0
    %v8386 = vmax.f32 %v8334, 0.0
    %v8387 = vmax.f32 %v8336, 0.0
    %v8388 = vmax.f32 %v8340, 0.0
    %v8389 = vmax.f32 %v8342, 0.0
    %v8390 = vmax.f32 %v8344, 0.0
    %v8391 = vmax.f32 %v8346, 0.0
    %v8392 = vmax.f32 %v8350, 0.0
    %v8393 = vmax.f32 %v8352, 0.0
    %v8394 = vmax.f32 %v8354, 0.0
    %v8395 = vmax.f32 %v8356, 0.0
    %v8396 = vmax.f32 %v8360, 0.0
    %v8397 = vmax.f32 %v8362, 0.0
    %v8398 = vmax.f32 %v8364, 0.0
    %v8399 = vmax.f32 %v8366, 0.0
    %v8400 = vpack.c.bf16 %v8370, %v8368
    %v8401 = vpack.c.bf16 %v8371, %v8369
    %v8402 = vpack.c.bf16 %v8374, %v8372
    %v8403 = vpack.c.bf16 %v8375, %v8373
    %v8404 = vpack.c.bf16 %v8378, %v8376
    %v8405 = vpack.c.bf16 %v8379, %v8377
    %v8406 = vpack.c.bf16 %v8382, %v8380
    %v8407 = vpack.c.bf16 %v8383, %v8381
    %v8408 = vpack.c.bf16 %v8386, %v8384
    %v8409 = vpack.c.bf16 %v8387, %v8385
    %v8410 = vpack.c.bf16 %v8390, %v8388
    %v8411 = vpack.c.bf16 %v8391, %v8389
    %v8412 = vpack.c.bf16 %v8394, %v8392
    %v8413 = vpack.c.bf16 %v8395, %v8393
    %v8414 = vpack.c.bf16 %v8398, %v8396
    %v8415 = vpack.c.bf16 %v8399, %v8397
    %v8416 = vld [vmem:[#allocation10] sm:$0xf]
    %v8417 = vld [vmem:[#allocation10 + $0x4] sm:$0xf]
    %v8418 = vld [vmem:[#allocation10 + $0x8] sm:$0xf]
    %v8419 = vld [vmem:[#allocation10 + $0xc] sm:$0xf]
    %v8420 = vld [vmem:[#allocation10 + $0x10] sm:$0xf]
    %v8421 = vld [vmem:[#allocation10 + $0x14] sm:$0xf]
    %v8422 = vld [vmem:[#allocation10 + $0x18] sm:$0xf]
    %v8423 = vld [vmem:[#allocation10 + $0x1c] sm:$0xf]
    %v8424 = vld [vmem:[#allocation10 + $0x20] sm:$0xf]
    %v8425 = vld [vmem:[#allocation10 + $0x24] sm:$0xf]
    %v8426 = vld [vmem:[#allocation10 + $0x28] sm:$0xf]
    %v8427 = vld [vmem:[#allocation10 + $0x2c] sm:$0xf]
    %v8428 = vld [vmem:[#allocation10 + $0x30] sm:$0xf]
    %v8429 = vld [vmem:[#allocation10 + $0x34] sm:$0xf]
    %v8430 = vld [vmem:[#allocation10 + $0x38] sm:$0xf]
    %v8431 = vld [vmem:[#allocation10 + $0x3c] sm:$0xf]
    %v8432 = vld [vmem:[#allocation10 + $0x40] sm:$0xf]
    %v8433 = vld [vmem:[#allocation10 + $0x44] sm:$0xf]
    %v8434 = vld [vmem:[#allocation10 + $0x48] sm:$0xf]
    %v8435 = vld [vmem:[#allocation10 + $0x4c] sm:$0xf]
    %v8436 = vld [vmem:[#allocation10 + $0x50] sm:$0xf]
    %v8437 = vld [vmem:[#allocation10 + $0x54] sm:$0xf]
    %v8438 = vld [vmem:[#allocation10 + $0x58] sm:$0xf]
    %v8439 = vld [vmem:[#allocation10 + $0x5c] sm:$0xf]
    %v8440 = vld [vmem:[#allocation10 + $0x60] sm:$0xf]
    %v8441 = vld [vmem:[#allocation10 + $0x64] sm:$0xf]
    %v8442 = vld [vmem:[#allocation10 + $0x68] sm:$0xf]
    %v8443 = vld [vmem:[#allocation10 + $0x6c] sm:$0xf]
    %v8444 = vld [vmem:[#allocation10 + $0x70] sm:$0xf]
    %v8445 = vld [vmem:[#allocation10 + $0x74] sm:$0xf]
    %v8446 = vld [vmem:[#allocation10 + $0x78] sm:$0xf]
    %v8447 = vld [vmem:[#allocation10 + $0x7c] sm:$0xf]
    %v8449 = vlaneseq
    %v8450 = vshrl.u32 %v8449, 7
    %v8451 = vsub.s32 0, %v8450
    %v8452 = vrot.slane %v108, %v8451
    %v8486 = vunpack.c.l.b16 %v8416
    %v8487 = vunpack.c.l.b16 %v8417
    %v8488 = vunpack.c.l.b16 %v8418
    %v8489 = vunpack.c.l.b16 %v8419
    %v8490 = vunpack.c.l.b16 %v8420
    %v8491 = vunpack.c.l.b16 %v8421
    %v8492 = vunpack.c.l.b16 %v8422
    %v8493 = vunpack.c.l.b16 %v8423
    %v8494 = vunpack.c.l.b16 %v8424
    %v8495 = vunpack.c.l.b16 %v8425
    %v8496 = vunpack.c.l.b16 %v8426
    %v8497 = vunpack.c.l.b16 %v8427
    %v8498 = vunpack.c.l.b16 %v8428
    %v8499 = vunpack.c.l.b16 %v8429
    %v8500 = vunpack.c.l.b16 %v8430
    %v8501 = vunpack.c.l.b16 %v8431
    %v8502 = vunpack.c.l.b16 %v8432
    %v8503 = vunpack.c.l.b16 %v8433
    %v8504 = vunpack.c.l.b16 %v8434
    %v8505 = vunpack.c.l.b16 %v8435
    %v8506 = vunpack.c.l.b16 %v8436
    %v8507 = vunpack.c.l.b16 %v8437
    %v8508 = vunpack.c.l.b16 %v8438
    %v8509 = vunpack.c.l.b16 %v8439
    %v8510 = vunpack.c.l.b16 %v8440
    %v8511 = vunpack.c.l.b16 %v8441
    %v8512 = vunpack.c.l.b16 %v8442
    %v8513 = vunpack.c.l.b16 %v8443
    %v8514 = vunpack.c.l.b16 %v8444
    %v8515 = vunpack.c.l.b16 %v8445
    %v8516 = vunpack.c.l.b16 %v8446
    %v8517 = vunpack.c.l.b16 %v8447
    %v8518 = vpack.c.b16 %v8487, %v8486
    %v8519 = vpack.c.b16 %v8489, %v8488
    %v8520 = vpack.c.b16 %v8491, %v8490
    %v8521 = vpack.c.b16 %v8493, %v8492
    %v8522 = vpack.c.b16 %v8495, %v8494
    %v8523 = vpack.c.b16 %v8497, %v8496
    %v8524 = vpack.c.b16 %v8499, %v8498
    %v8525 = vpack.c.b16 %v8501, %v8500
    %v8526 = vpack.c.b16 %v8503, %v8502
    %v8527 = vpack.c.b16 %v8505, %v8504
    %v8528 = vpack.c.b16 %v8507, %v8506
    %v8529 = vpack.c.b16 %v8509, %v8508
    %v8530 = vpack.c.b16 %v8511, %v8510
    %v8531 = vpack.c.b16 %v8513, %v8512
    %v8532 = vpack.c.b16 %v8515, %v8514
    %v8533 = vpack.c.b16 %v8517, %v8516
    %8550 = vmatprep.subr.bf16.mxu0 0
    %8551 = vmatpush1.bf16.msra.mxu0 %v8518
    %8552 = vmatprep.subr.bf16.mxu0 0
    %8553 = vmatpush1.bf16.msra.mxu0 %v8519
    %8554 = vmatprep.subr.bf16.mxu0 0
    %8555 = vmatpush1.bf16.msra.mxu0 %v8520
    %8556 = vmatprep.subr.bf16.mxu0 0
    %8557 = vmatpush1.bf16.msra.mxu0 %v8521
    %8558 = vmatprep.subr.bf16.mxu0 0
    %8559 = vmatpush1.bf16.msra.mxu0 %v8522
    %8560 = vmatprep.subr.bf16.mxu0 0
    %8561 = vmatpush1.bf16.msra.mxu0 %v8523
    %8562 = vmatprep.subr.bf16.mxu0 0
    %8563 = vmatpush1.bf16.msra.mxu0 %v8524
    %8564 = vmatprep.subr.bf16.mxu0 0
    %8565 = vmatpush1.bf16.msra.mxu0 %v8525
    %8566 = vmatprep.subr.bf16.mxu0 0
    %8567 = vmatpush1.bf16.msra.mxu0 %v8526
    %8568 = vmatprep.subr.bf16.mxu0 0
    %8569 = vmatpush1.bf16.msra.mxu0 %v8527
    %8570 = vmatprep.subr.bf16.mxu0 0
    %8571 = vmatpush1.bf16.msra.mxu0 %v8528
    %8572 = vmatprep.subr.bf16.mxu0 0
    %8573 = vmatpush1.bf16.msra.mxu0 %v8529
    %8574 = vmatprep.subr.bf16.mxu0 0
    %8575 = vmatpush1.bf16.msra.mxu0 %v8530
    %8576 = vmatprep.subr.bf16.mxu0 0
    %8577 = vmatpush1.bf16.msra.mxu0 %v8531
    %8578 = vmatprep.subr.bf16.mxu0 0
    %8579 = vmatpush1.bf16.msra.mxu0 %v8532
    %8580 = vmatprep.subr.bf16.mxu0 0
    %8581 = vmatpush1.bf16.msra.mxu0 %v8533
    %8582 = vmatprep.mubr.bf16.mxu0 %v8401
    %8583 = vmatmul.mubr.bf16.gmra.mrb[0].mxu0 %v8400
    %v8584 = vpop.f32.mrb[0].mxu0
    %v8585 = vadd.f32 %v8452, %v8584
    %v8586 = vpop.f32.mrb[0].mxu0
    %v8587 = vpop.f32.mrb[0].mxu0
    %v8588 = vadd.f32 %v8452, %v8587
    %v8589 = vpop.f32.mrb[0].mxu0
    %8590 = vmatprep.mubr.bf16.mxu0 %v8403
    %8591 = vmatmul.mubr.bf16.gmra.mrb[0].mxu0 %v8402
    %v8592 = vpop.f32.mrb[0].mxu0
    %v8593 = vadd.f32 %v8452, %v8592
    %v8594 = vpop.f32.mrb[0].mxu0
    %v8595 = vpop.f32.mrb[0].mxu0
    %v8596 = vadd.f32 %v8452, %v8595
    %v8597 = vpop.f32.mrb[0].mxu0
    %8598 = vmatprep.mubr.bf16.mxu0 %v8405
    %8599 = vmatmul.mubr.bf16.gmra.mrb[0].mxu0 %v8404
    %v8600 = vpop.f32.mrb[0].mxu0
    %v8601 = vadd.f32 %v8452, %v8600
    %v8602 = vpop.f32.mrb[0].mxu0
    %v8603 = vpop.f32.mrb[0].mxu0
    %v8604 = vadd.f32 %v8452, %v8603
    %v8605 = vpop.f32.mrb[0].mxu0
    %8606 = vmatprep.mubr.bf16.mxu0 %v8407
    %8607 = vmatmul.mubr.bf16.gmra.mrb[0].mxu0 %v8406
    %v8608 = vpop.f32.mrb[0].mxu0
    %v8609 = vadd.f32 %v8452, %v8608
    %v8610 = vpop.f32.mrb[0].mxu0
    %v8611 = vpop.f32.mrb[0].mxu0
    %v8612 = vadd.f32 %v8452, %v8611
    %v8613 = vpop.f32.mrb[0].mxu0
    %8614 = vmatprep.mubr.bf16.mxu0 %v8409
    %8615 = vmatmul.mubr.bf16.gmra.mrb[0].mxu0 %v8408
    %v8616 = vpop.f32.mrb[0].mxu0
    %v8617 = vadd.f32 %v8452, %v8616
    %v8618 = vpop.f32.mrb[0].mxu0
    %v8619 = vpop.f32.mrb[0].mxu0
    %v8620 = vadd.f32 %v8452, %v8619
    %v8621 = vpop.f32.mrb[0].mxu0
    %8622 = vmatprep.mubr.bf16.mxu0 %v8411
    %8623 = vmatmul.mubr.bf16.gmra.mrb[0].mxu0 %v8410
    %v8624 = vpop.f32.mrb[0].mxu0
    %v8625 = vadd.f32 %v8452, %v8624
    %v8626 = vpop.f32.mrb[0].mxu0
    %v8627 = vpop.f32.mrb[0].mxu0
    %v8628 = vadd.f32 %v8452, %v8627
    %v8629 = vpop.f32.mrb[0].mxu0
    %8630 = vmatprep.mubr.bf16.mxu0 %v8413
    %8631 = vmatmul.mubr.bf16.gmra.mrb[0].mxu0 %v8412
    %v8632 = vpop.f32.mrb[0].mxu0
    %v8633 = vadd.f32 %v8452, %v8632
    %v8634 = vpop.f32.mrb[0].mxu0
    %v8635 = vpop.f32.mrb[0].mxu0
    %v8636 = vadd.f32 %v8452, %v8635
    %v8637 = vpop.f32.mrb[0].mxu0
    %8638 = vmatprep.mubr.bf16.mxu0 %v8415
    %8639 = vmatmul.mubr.bf16.gmra.mrb[0].mxu0 %v8414
    %v8640 = vpop.f32.mrb[0].mxu0
    %v8641 = vadd.f32 %v8452, %v8640
    %v8642 = vpop.f32.mrb[0].mxu0
    %v8643 = vpop.f32.mrb[0].mxu0
    %v8644 = vadd.f32 %v8452, %v8643
    %v8645 = vpop.f32.mrb[0].mxu0
    %8646 = vdwg.mxu0
    %v8647 = vxor.u32 %v8585, 2147483648
    %v8648 = vxor.u32 %v8588, 2147483648
    %v8649 = vxor.u32 %v8593, 2147483648
    %v8650 = vxor.u32 %v8596, 2147483648
    %v8651 = vxor.u32 %v8601, 2147483648
    %v8652 = vxor.u32 %v8604, 2147483648
    %v8653 = vxor.u32 %v8609, 2147483648
    %v8654 = vxor.u32 %v8612, 2147483648
    %v8655 = vxor.u32 %v8617, 2147483648
    %v8656 = vxor.u32 %v8620, 2147483648
    %v8657 = vxor.u32 %v8625, 2147483648
    %v8658 = vxor.u32 %v8628, 2147483648
    %v8659 = vxor.u32 %v8633, 2147483648
    %v8660 = vxor.u32 %v8636, 2147483648
    %v8661 = vxor.u32 %v8641, 2147483648
    %v8662 = vxor.u32 %v8644, 2147483648
    %v8663 = vmul.f32 %v8647, 1.442695
    %v8664 = vpow.pop %v8663
    %v8665 = vmul.f32 %v8648, 1.442695
    %v8666 = vpow.pop %v8665
    %v8667 = vmul.f32 %v8649, 1.442695
    %v8668 = vpow.pop %v8667
    %v8669 = vmul.f32 %v8650, 1.442695
    %v8670 = vpow.pop %v8669
    %v8671 = vmul.f32 %v8651, 1.442695
    %v8672 = vpow.pop %v8671
    %v8673 = vmul.f32 %v8652, 1.442695
    %v8674 = vpow.pop %v8673
    %v8675 = vmul.f32 %v8653, 1.442695
    %v8676 = vpow.pop %v8675
    %v8677 = vmul.f32 %v8654, 1.442695
    %v8678 = vpow.pop %v8677
    %v8679 = vmul.f32 %v8655, 1.442695
    %v8680 = vpow.pop %v8679
    %v8681 = vmul.f32 %v8656, 1.442695
    %v8682 = vpow.pop %v8681
    %v8683 = vmul.f32 %v8657, 1.442695
    %v8684 = vpow.pop %v8683
    %v8685 = vmul.f32 %v8658, 1.442695
    %v8686 = vpow.pop %v8685
    %v8687 = vmul.f32 %v8659, 1.442695
    %v8688 = vpow.pop %v8687
    %v8689 = vmul.f32 %v8660, 1.442695
    %v8690 = vpow.pop %v8689
    %v8691 = vmul.f32 %v8661, 1.442695
    %v8692 = vpow.pop %v8691
    %v8693 = vmul.f32 %v8662, 1.442695
    %v8694 = vpow.pop %v8693
    %v8695 = vadd.f32 %v8664, 1.0
    %v8696 = vadd.f32 %v8666, 1.0
    %v8697 = vadd.f32 %v8668, 1.0
    %v8698 = vadd.f32 %v8670, 1.0
    %v8699 = vadd.f32 %v8672, 1.0
    %v8700 = vadd.f32 %v8674, 1.0
    %v8701 = vadd.f32 %v8676, 1.0
    %v8702 = vadd.f32 %v8678, 1.0
    %v8703 = vadd.f32 %v8680, 1.0
    %v8704 = vadd.f32 %v8682, 1.0
    %v8705 = vadd.f32 %v8684, 1.0
    %v8706 = vadd.f32 %v8686, 1.0
    %v8707 = vadd.f32 %v8688, 1.0
    %v8708 = vadd.f32 %v8690, 1.0
    %v8709 = vadd.f32 %v8692, 1.0
    %v8710 = vadd.f32 %v8694, 1.0
    %v8711 = vrcp.pop %v8695
    %v8712 = vmul.f32 1.0, %v8711
    %v8713 = vrcp.pop %v8696
    %v8714 = vmul.f32 1.0, %v8713
    %v8715 = vrcp.pop %v8697
    %v8716 = vmul.f32 1.0, %v8715
    %v8717 = vrcp.pop %v8698
    %v8718 = vmul.f32 1.0, %v8717
    %v8719 = vrcp.pop %v8699
    %v8720 = vmul.f32 1.0, %v8719
    %v8721 = vrcp.pop %v8700
    %v8722 = vmul.f32 1.0, %v8721
    %v8723 = vrcp.pop %v8701
    %v8724 = vmul.f32 1.0, %v8723
    %v8725 = vrcp.pop %v8702
    %v8726 = vmul.f32 1.0, %v8725
    %v8727 = vrcp.pop %v8703
    %v8728 = vmul.f32 1.0, %v8727
    %v8729 = vrcp.pop %v8704
    %v8730 = vmul.f32 1.0, %v8729
    %v8731 = vrcp.pop %v8705
    %v8732 = vmul.f32 1.0, %v8731
    %v8733 = vrcp.pop %v8706
    %v8734 = vmul.f32 1.0, %v8733
    %v8735 = vrcp.pop %v8707
    %v8736 = vmul.f32 1.0, %v8735
    %v8737 = vrcp.pop %v8708
    %v8738 = vmul.f32 1.0, %v8737
    %v8739 = vrcp.pop %v8709
    %v8740 = vmul.f32 1.0, %v8739
    %v8741 = vrcp.pop %v8710
    %v8742 = vmul.f32 1.0, %v8741
    %8743 = vst [vmem:[#allocation13] sm:$0xff] %v8712
    %8744 = vst [vmem:[#allocation13 + $0x8] sm:$0xff] %v8714
    %8745 = vst [vmem:[#allocation13 + $0x10] sm:$0xff] %v8716
    %8746 = vst [vmem:[#allocation13 + $0x18] sm:$0xff] %v8718
    %8747 = vst [vmem:[#allocation13 + $0x20] sm:$0xff] %v8720
    %8748 = vst [vmem:[#allocation13 + $0x28] sm:$0xff] %v8722
    %8749 = vst [vmem:[#allocation13 + $0x30] sm:$0xff] %v8724
    %8750 = vst [vmem:[#allocation13 + $0x38] sm:$0xff] %v8726
    %8751 = vst [vmem:[#allocation13 + $0x40] sm:$0xff] %v8728
    %8752 = vst [vmem:[#allocation13 + $0x48] sm:$0xff] %v8730
    %8753 = vst [vmem:[#allocation13 + $0x50] sm:$0xff] %v8732
    %8754 = vst [vmem:[#allocation13 + $0x58] sm:$0xff] %v8734
    %8755 = vst [vmem:[#allocation13 + $0x60] sm:$0xff] %v8736
    %8756 = vst [vmem:[#allocation13 + $0x68] sm:$0xff] %v8738
    %8757 = vst [vmem:[#allocation13 + $0x70] sm:$0xff] %v8740
    %8758 = vst [vmem:[#allocation13 + $0x78] sm:$0xff] %v8742
    // Predicated region
    $region50: #{tpu_custom_call.1} parent=1 // pred_check
      _
    $region51: #{tpu_custom_call.1} parent=1 // pred_check_branch
      %8760 = sbr.rel (0) target = $region53
    $region52: #{tpu_custom_call.1} parent=1 // pred_region
      %s8762 = ssub.s32 2048, 2048
      %8763 = vsyncadd [#allocation4], %s8762
      %s8764 = sshll.u32 [#allocation13], 4
      %s8765 = int_to_ptr.vmem [resolvable:$true] %s8764
      %8770 = dma.vmem_to_hbm [thread:$0]  %s8765, 2048, %s6, [#allocation4], 128, 128, 8
    $region53: #{tpu_custom_call.1} parent=1 // pred_fallthru
      _
    // Predicated region
    $region54: #{tpu_custom_call.1} parent=1 // pred_check
      _
    $region55: #{tpu_custom_call.1} parent=1 // pred_check_branch
      %8772 = sbr.rel (0) target = $region57
    $region56: #{tpu_custom_call.1} parent=1 // pred_region
      %8773 = dma.done [#allocation4], 2048
    $region57: #{tpu_custom_call.1} parent=1 // pred_fallthru
      _
    %8774 = vsyncpa [#allocation3], 1
    %8775 = vsyncpa [#allocation6], 1
    %8776 = vsyncpa [#allocation9], 1
    %8777 = vsyncpa [#allocation12], 1
    %8778 = vsyncpa [#allocation4], 1

</llo_original>
